<compile_context>
chip_gen: v5e
topology: v5e:2x2
jax: 0.10.0
libtpu: 0.0.40
codegen_flags: <defaults>
</compile_context>

<pallas_src>
import jax
import jax.numpy as jnp
from jax.experimental import pallas as pl
from jax.experimental.pallas import tpu as pltpu

D = 64     # transformer hidden width
FF = 128   # MLP hidden width (>= D so the packed vector buffer can hold b1)

# Column indices of the packed small-parameter buffer, shape (FF, N_VEC_COLS) f32.
(C_BE, C_LN1G, C_LN1B, C_LN2G, C_LN2B, C_B2, C_B1, C_BOUT,
 C_WE_VAL, C_WE_PX, C_WE_PY, C_WOUT) = range(12)
N_VEC_COLS = 16


def _layernorm_f(x, g, b, eps=1e-5):
    # Feature dim is axis 0 in the lane-dense (features, N) layout.
    mu = jnp.mean(x, axis=0, keepdims=True)
    var = jnp.mean((x - mu) * (x - mu), axis=0, keepdims=True)
    return (x - mu) * jax.lax.rsqrt(var + eps) * g + b


def embed_qkv_kernel(x_ref, pos_ref, vecs_ref, wqkv_ref,
                     h_ref, q_ref, kt_ref, v1_ref):
    """Stage 1: point embedding + LN1 + fused QKV for one (batch, query-tile)."""
    f32, bf16 = jnp.float32, jnp.bfloat16
    tq = x_ref.shape[-1]
    vecs = vecs_ref[...]                                   # (FF, N_VEC_COLS)

    def col(c, rows=D):
        return vecs[:rows, c:c + 1]                        # (rows, 1)

    x_val = x_ref[0]                                       # (1, TQ)
    px = pos_ref[0:1, :]                                   # (1, TQ)
    py = pos_ref[1:2, :]                                   # (1, TQ)

    # K=3 point embedding: three rank-1 VPU multiply-adds (not worth the MXU).
    h = (col(C_WE_VAL) * x_val + col(C_WE_PX) * px + col(C_WE_PY) * py
         + col(C_BE))                                      # (D, TQ) f32
    h_ref[0] = h

    x1 = _layernorm_f(h, col(C_LN1G), col(C_LN1B))
    qkv = jnp.dot(wqkv_ref[...], x1.astype(bf16),
                  preferred_element_type=f32)              # (3D, TQ) f32

    # q rows of wqkv already carry the 1/sqrt(D) scale (folded in pack_params).
    q_ref[0] = qkv[0:D].astype(bf16)
    # k is written sequence-major (TQ, D): one small producer-side transpose so
    # the O(N^2) score matmul in stage 2 needs no transpose at all.
    kt_ref[0] = jnp.transpose(qkv[D:2 * D]).astype(bf16)
    # v with an appended ones row: PV matmul then yields the softmax row-sum
    # for free in its extra output row (M dim is MXU-padded anyway).
    v1_ref[0, 0:D, :] = qkv[2 * D:3 * D].astype(bf16)
    v1_ref[0, D:D + 1, :] = jnp.ones((1, tq), bf16)


def attn_mlp_kernel(h_ref, q_ref, kt_ref, v1_ref, vecs_ref,
                    wo_ref, w1_ref, w2_ref, out_ref):
    """Stage 2: attention for one query tile vs. full KV, MLP, output head."""
    f32, bf16 = jnp.float32, jnp.bfloat16
    vecs = vecs_ref[...]

    def col(c, rows=D):
        return vecs[:rows, c:c + 1]

    h = h_ref[0]                                           # (D, TQ)   f32
    q = q_ref[0]                                           # (D, TQ)   bf16 (pre-scaled)
    kt = kt_ref[0]                                         # (N, D)    bf16
    v1 = v1_ref[0]                                         # (D+1, N)  bf16

    # scores (N_k, TQ): plain lhs@rhs MXU matmul (keys already sequence-major).
    sT = jnp.dot(kt, q, preferred_element_type=f32)
    m = jnp.max(sT, axis=0, keepdims=True)                 # (1, TQ)
    p = jnp.exp(sT - m).astype(bf16)                       # (N, TQ) bf16 probs
    av = jnp.dot(v1, p, preferred_element_type=f32)        # (D+1, TQ) f32
    # last row of av is the softmax denominator (ones-row trick).
    a = av[0:D] * pl.reciprocal(av[D:D + 1], approx=True)  # normalize D rows

    h = h + jnp.dot(wo_ref[...], a.astype(bf16), preferred_element_type=f32)

    # ---- MLP block (pre-LN) ----
    x2 = _layernorm_f(h, col(C_LN2G), col(C_LN2B))
    u = jnp.dot(w1_ref[...], x2.astype(bf16),
                preferred_element_type=f32) + col(C_B1, rows=FF)   # (FF, TQ)
    u = jax.nn.gelu(u)
    h = h + jnp.dot(w2_ref[...], u.astype(bf16),
                    preferred_element_type=f32) + col(C_B2)        # (D, TQ)

    # ---- output projection to 1 channel: weighted sublane reduce ----
    y = jnp.sum(col(C_WOUT) * h, axis=0, keepdims=True) \
        + vecs[0:1, C_BOUT:C_BOUT + 1]                     # (1, TQ)
    out_ref[0] = y                                         # lane-dense store


def init_params(key):
    """Placeholder inner-model parameters in their natural (PyTorch) orientation."""
    ks = jax.random.split(key, 8)
    std = 0.02
    return {
        "we":   jax.random.normal(ks[0], (3, D), jnp.float32) * std,
        "be":   jnp.zeros((1, D), jnp.float32),
        "ln1g": jnp.ones((1, D), jnp.float32),
        "ln1b": jnp.zeros((1, D), jnp.float32),
        "wq":   jax.random.normal(ks[1], (D, D), jnp.float32) * std,
        "wk":   jax.random.normal(ks[2], (D, D), jnp.float32) * std,
        "wv":   jax.random.normal(ks[3], (D, D), jnp.float32) * std,
        "wo":   jax.random.normal(ks[4], (D, D), jnp.float32) * std,
        "ln2g": jnp.ones((1, D), jnp.float32),
        "ln2b": jnp.zeros((1, D), jnp.float32),
        "w1":   jax.random.normal(ks[5], (D, FF), jnp.float32) * std,
        "b1":   jnp.zeros((1, FF), jnp.float32),
        "w2":   jax.random.normal(ks[6], (FF, D), jnp.float32) * std,
        "b2":   jnp.zeros((1, D), jnp.float32),
        "wout": jax.random.normal(ks[7], (D, 1), jnp.float32) * std,
        "bout": jnp.zeros((1, 1), jnp.float32),
    }


def pack_params(p):
    """One-time host-side repacking into the kernel's lane-dense layout."""
    vecs = jnp.zeros((FF, N_VEC_COLS), jnp.float32)
    vecs = vecs.at[:D, C_BE].set(p["be"].reshape(-1))
    vecs = vecs.at[:D, C_LN1G].set(p["ln1g"].reshape(-1))
    vecs = vecs.at[:D, C_LN1B].set(p["ln1b"].reshape(-1))
    vecs = vecs.at[:D, C_LN2G].set(p["ln2g"].reshape(-1))
    vecs = vecs.at[:D, C_LN2B].set(p["ln2b"].reshape(-1))
    vecs = vecs.at[:D, C_B2].set(p["b2"].reshape(-1))
    vecs = vecs.at[:FF, C_B1].set(p["b1"].reshape(-1))
    vecs = vecs.at[0, C_BOUT].set(p["bout"].reshape(-1)[0])
    vecs = vecs.at[:D, C_WE_VAL].set(p["we"][0])
    vecs = vecs.at[:D, C_WE_PX].set(p["we"][1])
    vecs = vecs.at[:D, C_WE_PY].set(p["we"][2])
    vecs = vecs.at[:D, C_WOUT].set(p["wout"].reshape(-1))

    # Fold the 1/sqrt(D) attention scale into the q rows at pack time (free).
    scale = float(D) ** -0.5
    wqkv_t = jnp.concatenate([p["wq"].T * scale, p["wk"].T, p["wv"].T],
                             axis=0).astype(jnp.bfloat16)   # (3D, D)
    wo_t = p["wo"].T.astype(jnp.bfloat16)                   # (D, D)
    w1_t = p["w1"].T.astype(jnp.bfloat16)                   # (FF, D)
    w2_t = p["w2"].T.astype(jnp.bfloat16)                   # (D, FF)
    return (vecs, wqkv_t, wo_t, w1_t, w2_t)


def _pick_tq(n):
    # >=256 queries/tile keeps the MXU lane dim full (v6e/v7x); shrink only for
    # very large N so the (N, tq) f32 score slab stays well under scoped VMEM.
    cap = 512 if n <= 4096 else 256
    for t in (512, 256, 128):
        if t <= cap and n % t == 0:
            return t
    return n


def run_inner_model(x_flat, pos, packed):
    """x_flat: (B, 1, N) f32 values; pos: (2, N) f32 grid -> (B, 1, N) f32."""
    B, _, N = x_flat.shape
    vecs, wqkv_t, wo_t, w1_t, w2_t = packed
    tq = _pick_tq(N)
    n_qt = N // tq

    cparams = pltpu.CompilerParams(
        dimension_semantics=("parallel", "parallel"),
        vmem_limit_bytes=64 * 1024 * 1024)

    def const_spec(shape):
        nd = len(shape)
        return pl.BlockSpec(shape, lambda b, j, _nd=nd: (0,) * _nd)

    # ---- stage 1: embedding + LN1 + fused QKV (per batch x query tile) ----
    h, q, kt, v1 = pl.pallas_call(
        embed_qkv_kernel,
        out_shape=(jax.ShapeDtypeStruct((B, D, N), jnp.float32),
                   jax.ShapeDtypeStruct((B, D, N), jnp.bfloat16),
                   jax.ShapeDtypeStruct((B, N, D), jnp.bfloat16),
                   jax.ShapeDtypeStruct((B, D + 1, N), jnp.bfloat16)),
        grid=(B, n_qt),
        in_specs=[pl.BlockSpec((1, 1, tq), lambda b, j: (b, 0, j)),
                  pl.BlockSpec((2, tq), lambda b, j: (0, j)),
                  const_spec(vecs.shape),
                  const_spec(wqkv_t.shape)],
        out_specs=(pl.BlockSpec((1, D, tq), lambda b, j: (b, 0, j)),
                   pl.BlockSpec((1, D, tq), lambda b, j: (b, 0, j)),
                   pl.BlockSpec((1, tq, D), lambda b, j: (b, j, 0)),
                   pl.BlockSpec((1, D + 1, tq), lambda b, j: (b, 0, j))),
        compiler_params=cparams,
    )(x_flat, pos, vecs, wqkv_t)

    # ---- stage 2: tiled attention + MLP + output head ----
    y = pl.pallas_call(
        attn_mlp_kernel,
        out_shape=jax.ShapeDtypeStruct((B, 1, N), jnp.float32),
        grid=(B, n_qt),
        in_specs=[pl.BlockSpec((1, D, tq), lambda b, j: (b, 0, j)),       # h tile
                  pl.BlockSpec((1, D, tq), lambda b, j: (b, 0, j)),       # q tile
                  pl.BlockSpec((1, N, D), lambda b, j: (b, 0, 0)),        # full K (seq-major)
                  pl.BlockSpec((1, D + 1, N), lambda b, j: (b, 0, 0)),    # full V + ones row
                  const_spec(vecs.shape), const_spec(wo_t.shape),
                  const_spec(w1_t.shape), const_spec(w2_t.shape)],
        out_specs=pl.BlockSpec((1, 1, tq), lambda b, j: (b, 0, j)),
        compiler_params=cparams,
    )(h, q, kt, v1, vecs, wo_t, w1_t, w2_t)
    return y


@jax.jit
def model_wrapper_forward(x_nchw, packed):
    """ModelWrapper.forward: (B, 1, H, W) -> (B, 1, H, W)."""
    B, C, H, W = x_nchw.shape
    assert C == 1, "Darcy input is a single scalar field"
    # x.permute(0,2,3,1).reshape(B,-1,1) with C==1 is just a contiguous reshape.
    x_flat = x_nchw.reshape(B, 1, H * W).astype(jnp.float32)        # (B, 1, N)
    # torch.meshgrid(linspace(0,1,H), linspace(0,1,W)) ('ij'), built once on host.
    lh = jnp.linspace(0.0, 1.0, H)
    lw = jnp.linspace(0.0, 1.0, W)
    pxg, pyg = jnp.meshgrid(lh, lw, indexing="ij")
    pos = jnp.stack([pxg.reshape(-1), pyg.reshape(-1)],
                    axis=0).astype(jnp.float32)                     # (2, N)
    y = run_inner_model(x_flat, pos, packed)                        # (B, 1, N)
    # y.reshape(B, ny, nx, -1).permute(0,3,1,2) with out_channels == 1:
    return y.reshape(B, 1, H, W)


def reference_forward(x_nchw, p):
    """Pure-JAX reference with the original (N, D) math, for correctness."""
    B, C, H, W = x_nchw.shape
    x = jnp.transpose(x_nchw, (0, 2, 3, 1)).reshape(B, -1, 1)
    lh = jnp.linspace(0.0, 1.0, H)
    lw = jnp.linspace(0.0, 1.0, W)
    pxg, pyg = jnp.meshgrid(lh, lw, indexing="ij")
    pos = jnp.tile(jnp.stack([pxg, pyg], axis=-1).reshape(1, -1, 2), (B, 1, 1))
    feat = jnp.concatenate([x, pos], axis=-1).astype(jnp.float32)

    def ln(z, g, b, eps=1e-5):
        mu = z.mean(-1, keepdims=True)
        var = ((z - mu) ** 2).mean(-1, keepdims=True)
        return (z - mu) * jax.lax.rsqrt(var + eps) * g + b

    h = feat @ p["we"] + p["be"]
    x1 = ln(h, p["ln1g"], p["ln1b"])
    q, k, v = x1 @ p["wq"], x1 @ p["wk"], x1 @ p["wv"]
    s = (q @ jnp.swapaxes(k, -1, -2)) * (float(D) ** -0.5)
    pa = jax.nn.softmax(s, axis=-1)
    h = h + (pa @ v) @ p["wo"]
    x2 = ln(h, p["ln2g"], p["ln2b"])
    u = jax.nn.gelu(x2 @ p["w1"] + p["b1"])
    h = h + u @ p["w2"] + p["b2"]
    y = h @ p["wout"] + p["bout"]
    return jnp.transpose(y.reshape(B, H, W, -1), (0, 3, 1, 2))


if __name__ == "__main__":
    B, C, H, W = 2, 1, 32, 32          # N = H*W = 1024 -> TQ=512, 2 query tiles
    key = jax.random.PRNGKey(0)
    x = jax.random.normal(key, (B, C, H, W), jnp.float32)

    params = init_params(jax.random.PRNGKey(42))
    packed = pack_params(params)

    y = model_wrapper_forward(x, packed)
    y = jax.block_until_ready(y)

    assert y.shape == (B, 1, H, W), y.shape
    assert y.dtype == jnp.float32
    assert bool(jnp.all(jnp.isfinite(y)))

    # correctness vs. pure-JAX f32 reference
    # (bf16 matmuls, bf16 softmax probs, approx reciprocal -> loose tolerance)
    y_ref = reference_forward(x, params)
    max_err = float(jnp.max(jnp.abs(y - y_ref)))
    assert max_err < 5e-3, f"max abs err vs reference = {max_err}"

    print("KERNEL_OK")
</pallas_src>

<mosaic_0001>
module attributes {stable_mosaic.version = 11 : i64} {
  func.func @embed_qkv_kernel(%arg0: i32, %arg1: i32, %arg2: memref<1x1x512xf32, #tpu.memory_space<vmem>>, %arg3: memref<2x512xf32, #tpu.memory_space<vmem>>, %arg4: memref<128x16xf32, #tpu.memory_space<vmem>>, %arg5: memref<192x64xbf16, #tpu.memory_space<vmem>>, %arg6: memref<1x64x512xf32, #tpu.memory_space<vmem>>, %arg7: memref<1x64x512xbf16, #tpu.memory_space<vmem>>, %arg8: memref<1x512x64xbf16, #tpu.memory_space<vmem>>, %arg9: memref<1x65x512xbf16, #tpu.memory_space<vmem>>) attributes {dimension_semantics = [#tpu.dimension_semantics<parallel>, #tpu.dimension_semantics<parallel>], iteration_bounds = array<i64: 2, 2>, scalar_prefetch = 0 : i64, scratch_operands = 0 : i64, tpu.core_type = #tpu.core_type<tc>, window_params = [{transform_indices = @transform_0, window_bounds = array<i64: 1, 1, 512>}, {transform_indices = @transform_1, window_bounds = array<i64: 2, 512>}, {pipeline_mode = #tpu.pipeline_mode<synchronous>, transform_indices = @transform_2, window_bounds = array<i64: 128, 16>}, {pipeline_mode = #tpu.pipeline_mode<synchronous>, transform_indices = @transform_3, window_bounds = array<i64: 192, 64>}, {transform_indices = @transform_4, window_bounds = array<i64: 1, 64, 512>}, {transform_indices = @transform_5, window_bounds = array<i64: 1, 64, 512>}, {transform_indices = @transform_6, window_bounds = array<i64: 1, 512, 64>}, {transform_indices = @transform_7, window_bounds = array<i64: 1, 65, 512>}]} {
    %c0 = arith.constant 0 : index
    %c0_0 = arith.constant 0 : index
    %0 = vector.load %arg4[%c0, %c0_0] : memref<128x16xf32, #tpu.memory_space<vmem>>, vector<128x16xf32>
    %c0_1 = arith.constant 0 : index
    %c0_2 = arith.constant 0 : index
    %c0_3 = arith.constant 0 : index
    %1 = vector.load %arg2[%c0_1, %c0_2, %c0_3] : memref<1x1x512xf32, #tpu.memory_space<vmem>>, vector<1x1x512xf32>
    %2 = vector.shape_cast %1 : vector<1x1x512xf32> to vector<1x512xf32>
    %c0_4 = arith.constant 0 : index
    %c0_5 = arith.constant 0 : index
    %3 = vector.load %arg3[%c0_4, %c0_5] : memref<2x512xf32, #tpu.memory_space<vmem>>, vector<1x512xf32>
    %c1 = arith.constant 1 : index
    %c0_6 = arith.constant 0 : index
    %4 = vector.load %arg3[%c1, %c0_6] : memref<2x512xf32, #tpu.memory_space<vmem>>, vector<1x512xf32>
    %5 = vector.extract_strided_slice %0 {offsets = [0, 8], sizes = [64, 1], strides = [1, 1]} : vector<128x16xf32> to vector<64x1xf32>
    %6 = vector.broadcast %5 : vector<64x1xf32> to vector<64x512xf32>
    %7 = vector.broadcast %2 : vector<1x512xf32> to vector<64x512xf32>
    %8 = arith.mulf %6, %7 : vector<64x512xf32>
    %9 = vector.extract_strided_slice %0 {offsets = [0, 9], sizes = [64, 1], strides = [1, 1]} : vector<128x16xf32> to vector<64x1xf32>
    %10 = vector.broadcast %9 : vector<64x1xf32> to vector<64x512xf32>
    %11 = vector.broadcast %3 : vector<1x512xf32> to vector<64x512xf32>
    %12 = arith.mulf %10, %11 : vector<64x512xf32>
    %13 = arith.addf %8, %12 : vector<64x512xf32>
    %14 = vector.extract_strided_slice %0 {offsets = [0, 10], sizes = [64, 1], strides = [1, 1]} : vector<128x16xf32> to vector<64x1xf32>
    %15 = vector.broadcast %14 : vector<64x1xf32> to vector<64x512xf32>
    %16 = vector.broadcast %4 : vector<1x512xf32> to vector<64x512xf32>
    %17 = arith.mulf %15, %16 : vector<64x512xf32>
    %18 = arith.addf %13, %17 : vector<64x512xf32>
    %19 = vector.extract_strided_slice %0 {offsets = [0, 0], sizes = [64, 1], strides = [1, 1]} : vector<128x16xf32> to vector<64x1xf32>
    %20 = vector.broadcast %19 : vector<64x1xf32> to vector<64x512xf32>
    %21 = arith.addf %18, %20 : vector<64x512xf32>
    %c0_7 = arith.constant 0 : index
    %c0_8 = arith.constant 0 : index
    %c0_9 = arith.constant 0 : index
    %22 = vector.load %arg6[%c0_7, %c0_8, %c0_9] : memref<1x64x512xf32, #tpu.memory_space<vmem>>, vector<1x64x512xf32>
    %23 = vector.shape_cast %22 : vector<1x64x512xf32> to vector<64x512xf32>
    %24 = vector.shape_cast %21 : vector<64x512xf32> to vector<1x64x512xf32>
    tpu.vector_store %arg6[%c0_7, %c0_8, %c0_9], %24 {strides = array<i32>} : memref<1x64x512xf32, #tpu.memory_space<vmem>>, vector<1x64x512xf32>,
    %25 = vector.extract_strided_slice %0 {offsets = [0, 1], sizes = [64, 1], strides = [1, 1]} : vector<128x16xf32> to vector<64x1xf32>
    %26 = vector.extract_strided_slice %0 {offsets = [0, 2], sizes = [64, 1], strides = [1, 1]} : vector<128x16xf32> to vector<64x1xf32>
    %cst = arith.constant dense<0.000000e+00> : vector<512xf32>
    %27 = vector.multi_reduction <add>, %21, %cst [0] : vector<64x512xf32> to vector<512xf32>
    %28 = vector.shape_cast %27 : vector<512xf32> to vector<1x512xf32>
    %cst_10 = arith.constant 6.400000e+01 : f32
    %29 = vector.broadcast %cst_10 : f32 to vector<1x512xf32>
    %30 = arith.divf %28, %29 : vector<1x512xf32>
    %31 = vector.broadcast %30 : vector<1x512xf32> to vector<64x512xf32>
    %32 = arith.subf %21, %31 : vector<64x512xf32>
    %33 = vector.broadcast %30 : vector<1x512xf32> to vector<64x512xf32>
    %34 = arith.subf %21, %33 : vector<64x512xf32>
    %35 = arith.mulf %32, %34 : vector<64x512xf32>
    %cst_11 = arith.constant dense<0.000000e+00> : vector<512xf32>
    %36 = vector.multi_reduction <add>, %35, %cst_11 [0] : vector<64x512xf32> to vector<512xf32>
    %37 = vector.shape_cast %36 : vector<512xf32> to vector<1x512xf32>
    %cst_12 = arith.constant 6.400000e+01 : f32
    %38 = vector.broadcast %cst_12 : f32 to vector<1x512xf32>
    %39 = arith.divf %37, %38 : vector<1x512xf32>
    %40 = vector.broadcast %30 : vector<1x512xf32> to vector<64x512xf32>
    %41 = arith.subf %21, %40 : vector<64x512xf32>
    %cst_13 = arith.constant 9.99999974E-6 : f32
    %42 = vector.broadcast %cst_13 : f32 to vector<1x512xf32>
    %43 = arith.addf %39, %42 : vector<1x512xf32>
    %44 = math.rsqrt %43 : vector<1x512xf32>
    %45 = vector.broadcast %44 : vector<1x512xf32> to vector<64x512xf32>
    %46 = arith.mulf %41, %45 : vector<64x512xf32>
    %47 = vector.broadcast %25 : vector<64x1xf32> to vector<64x512xf32>
    %48 = arith.mulf %46, %47 : vector<64x512xf32>
    %49 = vector.broadcast %26 : vector<64x1xf32> to vector<64x512xf32>
    %50 = arith.addf %48, %49 : vector<64x512xf32>
    %c0_14 = arith.constant 0 : index
    %c0_15 = arith.constant 0 : index
    %51 = vector.load %arg5[%c0_14, %c0_15] : memref<192x64xbf16, #tpu.memory_space<vmem>>, vector<192x64xbf16>
    %52 = arith.truncf %50 : vector<64x512xf32> to vector<64x512xbf16>
    %cst_16 = arith.constant dense<0.000000e+00> : vector<192x512xf32>
    %53 = tpu.matmul %51, %52, %cst_16 {dimension_numbers = #tpu.dot_dimension_numbers<[1], [0], [0], [1], [0, 0, 1, 1], [], []>} : vector<192x64xbf16>, vector<64x512xbf16>, vector<192x512xf32> -> vector<192x512xf32>
    %54 = vector.extract_strided_slice %53 {offsets = [0, 0], sizes = [64, 512], strides = [1, 1]} : vector<192x512xf32> to vector<64x512xf32>
    %55 = arith.truncf %54 : vector<64x512xf32> to vector<64x512xbf16>
    %c0_17 = arith.constant 0 : index
    %c0_18 = arith.constant 0 : index
    %c0_19 = arith.constant 0 : index
    %56 = vector.load %arg7[%c0_17, %c0_18, %c0_19] : memref<1x64x512xbf16, #tpu.memory_space<vmem>>, vector<1x64x512xbf16>
    %57 = vector.shape_cast %56 : vector<1x64x512xbf16> to vector<64x512xbf16>
    %58 = vector.shape_cast %55 : vector<64x512xbf16> to vector<1x64x512xbf16>
    tpu.vector_store %arg7[%c0_17, %c0_18, %c0_19], %58 {strides = array<i32>} : memref<1x64x512xbf16, #tpu.memory_space<vmem>>, vector<1x64x512xbf16>,
    %59 = vector.extract_strided_slice %53 {offsets = [64, 0], sizes = [64, 512], strides = [1, 1]} : vector<192x512xf32> to vector<64x512xf32>
    %60 = tpu.transpose %59, [1, 0] : vector<64x512xf32> -> vector<512x64xf32>
    %61 = arith.truncf %60 : vector<512x64xf32> to vector<512x64xbf16>
    %c0_20 = arith.constant 0 : index
    %c0_21 = arith.constant 0 : index
    %c0_22 = arith.constant 0 : index
    %62 = vector.load %arg8[%c0_20, %c0_21, %c0_22] : memref<1x512x64xbf16, #tpu.memory_space<vmem>>, vector<1x512x64xbf16>
    %63 = vector.shape_cast %62 : vector<1x512x64xbf16> to vector<512x64xbf16>
    %64 = vector.shape_cast %61 : vector<512x64xbf16> to vector<1x512x64xbf16>
    tpu.vector_store %arg8[%c0_20, %c0_21, %c0_22], %64 {strides = array<i32>} : memref<1x512x64xbf16, #tpu.memory_space<vmem>>, vector<1x512x64xbf16>,
    %65 = vector.extract_strided_slice %53 {offsets = [128, 0], sizes = [64, 512], strides = [1, 1]} : vector<192x512xf32> to vector<64x512xf32>
    %66 = arith.truncf %65 : vector<64x512xf32> to vector<64x512xbf16>
    %c0_23 = arith.constant 0 : index
    %c0_24 = arith.constant 0 : index
    %c0_25 = arith.constant 0 : index
    %67 = vector.load %arg9[%c0_23, %c0_24, %c0_25] : memref<1x65x512xbf16, #tpu.memory_space<vmem>>, vector<1x64x512xbf16>
    %68 = vector.shape_cast %67 : vector<1x64x512xbf16> to vector<64x512xbf16>
    %69 = vector.shape_cast %66 : vector<64x512xbf16> to vector<1x64x512xbf16>
    tpu.vector_store %arg9[%c0_23, %c0_24, %c0_25], %69 {strides = array<i32>} : memref<1x65x512xbf16, #tpu.memory_space<vmem>>, vector<1x64x512xbf16>,
    %cst_26 = arith.constant 1.000000e+00 : bf16
    %70 = vector.broadcast %cst_26 : bf16 to vector<1x512xbf16>
    %c0_27 = arith.constant 0 : index
    %c64 = arith.constant 64 : index
    %c0_28 = arith.constant 0 : index
    %71 = vector.load %arg9[%c0_27, %c64, %c0_28] : memref<1x65x512xbf16, #tpu.memory_space<vmem>>, vector<1x1x512xbf16>
    %72 = vector.shape_cast %71 : vector<1x1x512xbf16> to vector<1x512xbf16>
    %73 = vector.shape_cast %70 : vector<1x512xbf16> to vector<1x1x512xbf16>
    tpu.vector_store %arg9[%c0_27, %c64, %c0_28], %73 {strides = array<i32>} : memref<1x65x512xbf16, #tpu.memory_space<vmem>>, vector<1x1x512xbf16>,
    return
  }
  func.func @transform_0(%arg0: i32, %arg1: i32) -> (i32, i32, i32) {
    %c0_i32 = arith.constant 0 : i32
    %c0_i32_0 = arith.constant 0 : i32
    return %arg0, %c0_i32, %arg1 : i32, i32, i32
  }
  func.func @transform_1(%arg0: i32, %arg1: i32) -> (i32, i32) {
    %c0_i32 = arith.constant 0 : i32
    %c0_i32_0 = arith.constant 0 : i32
    return %c0_i32, %arg1 : i32, i32
  }
  func.func @transform_2(%arg0: i32, %arg1: i32) -> (i32, i32) {
    %c0_i32 = arith.constant 0 : i32
    %c0_i32_0 = arith.constant 0 : i32
    %c0_i32_1 = arith.constant 0 : i32
    return %c0_i32, %c0_i32_0 : i32, i32
  }
  func.func @transform_3(%arg0: i32, %arg1: i32) -> (i32, i32) {
    %c0_i32 = arith.constant 0 : i32
    %c0_i32_0 = arith.constant 0 : i32
    %c0_i32_1 = arith.constant 0 : i32
    return %c0_i32, %c0_i32_0 : i32, i32
  }
  func.func @transform_4(%arg0: i32, %arg1: i32) -> (i32, i32, i32) {
    %c0_i32 = arith.constant 0 : i32
    %c0_i32_0 = arith.constant 0 : i32
    return %arg0, %c0_i32, %arg1 : i32, i32, i32
  }
  func.func @transform_5(%arg0: i32, %arg1: i32) -> (i32, i32, i32) {
    %c0_i32 = arith.constant 0 : i32
    %c0_i32_0 = arith.constant 0 : i32
    return %arg0, %c0_i32, %arg1 : i32, i32, i32
  }
  func.func @transform_6(%arg0: i32, %arg1: i32) -> (i32, i32, i32) {
    %c0_i32 = arith.constant 0 : i32
    %c0_i32_0 = arith.constant 0 : i32
    return %arg0, %arg1, %c0_i32 : i32, i32, i32
  }
  func.func @transform_7(%arg0: i32, %arg1: i32) -> (i32, i32, i32) {
    %c0_i32 = arith.constant 0 : i32
    %c0_i32_0 = arith.constant 0 : i32
    return %arg0, %c0_i32, %arg1 : i32, i32, i32
  }
}

module attributes {stable_mosaic.version = 11 : i64} {
  func.func @attn_mlp_kernel(%arg0: i32, %arg1: i32, %arg2: memref<1x64x512xf32, #tpu.memory_space<vmem>>, %arg3: memref<1x64x512xbf16, #tpu.memory_space<vmem>>, %arg4: memref<1x1024x64xbf16, #tpu.memory_space<vmem>>, %arg5: memref<1x65x1024xbf16, #tpu.memory_space<vmem>>, %arg6: memref<128x16xf32, #tpu.memory_space<vmem>>, %arg7: memref<64x64xbf16, #tpu.memory_space<vmem>>, %arg8: memref<128x64xbf16, #tpu.memory_space<vmem>>, %arg9: memref<64x128xbf16, #tpu.memory_space<vmem>>, %arg10: memref<1x1x512xf32, #tpu.memory_space<vmem>>) attributes {dimension_semantics = [#tpu.dimension_semantics<parallel>, #tpu.dimension_semantics<parallel>], iteration_bounds = array<i64: 2, 2>, scalar_prefetch = 0 : i64, scratch_operands = 0 : i64, tpu.core_type = #tpu.core_type<tc>, window_params = [{transform_indices = @transform_0, window_bounds = array<i64: 1, 64, 512>}, {transform_indices = @transform_1, window_bounds = array<i64: 1, 64, 512>}, {transform_indices = @transform_2, window_bounds = array<i64: 1, 1024, 64>}, {transform_indices = @transform_3, window_bounds = array<i64: 1, 65, 1024>}, {pipeline_mode = #tpu.pipeline_mode<synchronous>, transform_indices = @transform_4, window_bounds = array<i64: 128, 16>}, {pipeline_mode = #tpu.pipeline_mode<synchronous>, transform_indices = @transform_5, window_bounds = array<i64: 64, 64>}, {pipeline_mode = #tpu.pipeline_mode<synchronous>, transform_indices = @transform_6, window_bounds = array<i64: 128, 64>}, {pipeline_mode = #tpu.pipeline_mode<synchronous>, transform_indices = @transform_7, window_bounds = array<i64: 64, 128>}, {transform_indices = @transform_8, window_bounds = array<i64: 1, 1, 512>}]} {
    %c0 = arith.constant 0 : index
    %c0_0 = arith.constant 0 : index
    %0 = vector.load %arg6[%c0, %c0_0] : memref<128x16xf32, #tpu.memory_space<vmem>>, vector<128x16xf32>
    %c0_1 = arith.constant 0 : index
    %c0_2 = arith.constant 0 : index
    %c0_3 = arith.constant 0 : index
    %1 = vector.load %arg2[%c0_1, %c0_2, %c0_3] : memref<1x64x512xf32, #tpu.memory_space<vmem>>, vector<1x64x512xf32>
    %2 = vector.shape_cast %1 : vector<1x64x512xf32> to vector<64x512xf32>
    %c0_4 = arith.constant 0 : index
    %c0_5 = arith.constant 0 : index
    %c0_6 = arith.constant 0 : index
    %3 = vector.load %arg3[%c0_4, %c0_5, %c0_6] : memref<1x64x512xbf16, #tpu.memory_space<vmem>>, vector<1x64x512xbf16>
    %4 = vector.shape_cast %3 : vector<1x64x512xbf16> to vector<64x512xbf16>
    %c0_7 = arith.constant 0 : index
    %c0_8 = arith.constant 0 : index
    %c0_9 = arith.constant 0 : index
    %5 = vector.load %arg4[%c0_7, %c0_8, %c0_9] : memref<1x1024x64xbf16, #tpu.memory_space<vmem>>, vector<1x1024x64xbf16>
    %6 = vector.shape_cast %5 : vector<1x1024x64xbf16> to vector<1024x64xbf16>
    %c0_10 = arith.constant 0 : index
    %c0_11 = arith.constant 0 : index
    %c0_12 = arith.constant 0 : index
    %7 = vector.load %arg5[%c0_10, %c0_11, %c0_12] : memref<1x65x1024xbf16, #tpu.memory_space<vmem>>, vector<1x65x1024xbf16>
    %8 = vector.shape_cast %7 : vector<1x65x1024xbf16> to vector<65x1024xbf16>
    %cst = arith.constant dense<0.000000e+00> : vector<1024x512xf32>
    %9 = tpu.matmul %6, %4, %cst {dimension_numbers = #tpu.dot_dimension_numbers<[1], [0], [0], [1], [0, 0, 1, 1], [], []>} : vector<1024x64xbf16>, vector<64x512xbf16>, vector<1024x512xf32> -> vector<1024x512xf32>
    %cst_13 = arith.constant dense<0xFF800000> : vector<512xf32>
    %10 = vector.multi_reduction <maximumf>, %9, %cst_13 [0] : vector<1024x512xf32> to vector<512xf32>
    %11 = vector.shape_cast %10 : vector<512xf32> to vector<1x512xf32>
    %12 = vector.broadcast %11 : vector<1x512xf32> to vector<1024x512xf32>
    %13 = arith.subf %9, %12 : vector<1024x512xf32>
    %14 = math.exp %13 : vector<1024x512xf32>
    %15 = arith.truncf %14 : vector<1024x512xf32> to vector<1024x512xbf16>
    %cst_14 = arith.constant dense<0.000000e+00> : vector<65x512xf32>
    %16 = tpu.matmul %8, %15, %cst_14 {dimension_numbers = #tpu.dot_dimension_numbers<[1], [0], [0], [1], [0, 0, 1, 1], [], []>} : vector<65x1024xbf16>, vector<1024x512xbf16>, vector<65x512xf32> -> vector<65x512xf32>
    %17 = vector.extract_strided_slice %16 {offsets = [0, 0], sizes = [64, 512], strides = [1, 1]} : vector<65x512xf32> to vector<64x512xf32>
    %18 = vector.extract_strided_slice %16 {offsets = [64, 0], sizes = [1, 512], strides = [1, 1]} : vector<65x512xf32> to vector<1x512xf32>
    %19 = tpu.reciprocal %18 {approx = true} : vector<1x512xf32> -> vector<1x512xf32>
    %20 = vector.broadcast %19 : vector<1x512xf32> to vector<64x512xf32>
    %21 = arith.mulf %17, %20 : vector<64x512xf32>
    %c0_15 = arith.constant 0 : index
    %c0_16 = arith.constant 0 : index
    %22 = vector.load %arg7[%c0_15, %c0_16] : memref<64x64xbf16, #tpu.memory_space<vmem>>, vector<64x64xbf16>
    %23 = arith.truncf %21 : vector<64x512xf32> to vector<64x512xbf16>
    %cst_17 = arith.constant dense<0.000000e+00> : vector<64x512xf32>
    %24 = tpu.matmul %22, %23, %cst_17 {dimension_numbers = #tpu.dot_dimension_numbers<[1], [0], [0], [1], [0, 0, 1, 1], [], []>} : vector<64x64xbf16>, vector<64x512xbf16>, vector<64x512xf32> -> vector<64x512xf32>
    %25 = arith.addf %2, %24 : vector<64x512xf32>
    %26 = vector.extract_strided_slice %0 {offsets = [0, 3], sizes = [64, 1], strides = [1, 1]} : vector<128x16xf32> to vector<64x1xf32>
    %27 = vector.extract_strided_slice %0 {offsets = [0, 4], sizes = [64, 1], strides = [1, 1]} : vector<128x16xf32> to vector<64x1xf32>
    %cst_18 = arith.constant dense<0.000000e+00> : vector<512xf32>
    %28 = vector.multi_reduction <add>, %25, %cst_18 [0] : vector<64x512xf32> to vector<512xf32>
    %29 = vector.shape_cast %28 : vector<512xf32> to vector<1x512xf32>
    %cst_19 = arith.constant 6.400000e+01 : f32
    %30 = vector.broadcast %cst_19 : f32 to vector<1x512xf32>
    %31 = arith.divf %29, %30 : vector<1x512xf32>
    %32 = vector.broadcast %31 : vector<1x512xf32> to vector<64x512xf32>
    %33 = arith.subf %25, %32 : vector<64x512xf32>
    %34 = vector.broadcast %31 : vector<1x512xf32> to vector<64x512xf32>
    %35 = arith.subf %25, %34 : vector<64x512xf32>
    %36 = arith.mulf %33, %35 : vector<64x512xf32>
    %cst_20 = arith.constant dense<0.000000e+00> : vector<512xf32>
    %37 = vector.multi_reduction <add>, %36, %cst_20 [0] : vector<64x512xf32> to vector<512xf32>
    %38 = vector.shape_cast %37 : vector<512xf32> to vector<1x512xf32>
    %cst_21 = arith.constant 6.400000e+01 : f32
    %39 = vector.broadcast %cst_21 : f32 to vector<1x512xf32>
    %40 = arith.divf %38, %39 : vector<1x512xf32>
    %41 = vector.broadcast %31 : vector<1x512xf32> to vector<64x512xf32>
    %42 = arith.subf %25, %41 : vector<64x512xf32>
    %cst_22 = arith.constant 9.99999974E-6 : f32
    %43 = vector.broadcast %cst_22 : f32 to vector<1x512xf32>
    %44 = arith.addf %40, %43 : vector<1x512xf32>
    %45 = math.rsqrt %44 : vector<1x512xf32>
    %46 = vector.broadcast %45 : vector<1x512xf32> to vector<64x512xf32>
    %47 = arith.mulf %42, %46 : vector<64x512xf32>
    %48 = vector.broadcast %26 : vector<64x1xf32> to vector<64x512xf32>
    %49 = arith.mulf %47, %48 : vector<64x512xf32>
    %50 = vector.broadcast %27 : vector<64x1xf32> to vector<64x512xf32>
    %51 = arith.addf %49, %50 : vector<64x512xf32>
    %c0_23 = arith.constant 0 : index
    %c0_24 = arith.constant 0 : index
    %52 = vector.load %arg8[%c0_23, %c0_24] : memref<128x64xbf16, #tpu.memory_space<vmem>>, vector<128x64xbf16>
    %53 = arith.truncf %51 : vector<64x512xf32> to vector<64x512xbf16>
    %cst_25 = arith.constant dense<0.000000e+00> : vector<128x512xf32>
    %54 = tpu.matmul %52, %53, %cst_25 {dimension_numbers = #tpu.dot_dimension_numbers<[1], [0], [0], [1], [0, 0, 1, 1], [], []>} : vector<128x64xbf16>, vector<64x512xbf16>, vector<128x512xf32> -> vector<128x512xf32>
    %55 = vector.extract_strided_slice %0 {offsets = [0, 6], sizes = [128, 1], strides = [1, 1]} : vector<128x16xf32> to vector<128x1xf32>
    %56 = vector.broadcast %55 : vector<128x1xf32> to vector<128x512xf32>
    %57 = arith.addf %54, %56 : vector<128x512xf32>
    %58 = arith.mulf %57, %57 : vector<128x512xf32>
    %59 = arith.mulf %57, %58 : vector<128x512xf32>
    %cst_26 = arith.constant 4.471500e-02 : f32
    %60 = vector.broadcast %cst_26 : f32 to vector<128x512xf32>
    %61 = arith.mulf %60, %59 : vector<128x512xf32>
    %62 = arith.addf %57, %61 : vector<128x512xf32>
    %cst_27 = arith.constant 0.797884583 : f32
    %63 = vector.broadcast %cst_27 : f32 to vector<128x512xf32>
    %64 = arith.mulf %63, %62 : vector<128x512xf32>
    %65 = math.tanh %64 : vector<128x512xf32>
    %cst_28 = arith.constant 1.000000e+00 : f32
    %66 = vector.broadcast %cst_28 : f32 to vector<128x512xf32>
    %67 = arith.addf %66, %65 : vector<128x512xf32>
    %cst_29 = arith.constant 5.000000e-01 : f32
    %68 = vector.broadcast %cst_29 : f32 to vector<128x512xf32>
    %69 = arith.mulf %68, %67 : vector<128x512xf32>
    %70 = arith.mulf %57, %69 : vector<128x512xf32>
    %c0_30 = arith.constant 0 : index
    %c0_31 = arith.constant 0 : index
    %71 = vector.load %arg9[%c0_30, %c0_31] : memref<64x128xbf16, #tpu.memory_space<vmem>>, vector<64x128xbf16>
    %72 = arith.truncf %70 : vector<128x512xf32> to vector<128x512xbf16>
    %cst_32 = arith.constant dense<0.000000e+00> : vector<64x512xf32>
    %73 = tpu.matmul %71, %72, %cst_32 {dimension_numbers = #tpu.dot_dimension_numbers<[1], [0], [0], [1], [0, 0, 1, 1], [], []>} : vector<64x128xbf16>, vector<128x512xbf16>, vector<64x512xf32> -> vector<64x512xf32>
    %74 = arith.addf %25, %73 : vector<64x512xf32>
    %75 = vector.extract_strided_slice %0 {offsets = [0, 5], sizes = [64, 1], strides = [1, 1]} : vector<128x16xf32> to vector<64x1xf32>
    %76 = vector.broadcast %75 : vector<64x1xf32> to vector<64x512xf32>
    %77 = arith.addf %74, %76 : vector<64x512xf32>
    %78 = vector.extract_strided_slice %0 {offsets = [0, 11], sizes = [64, 1], strides = [1, 1]} : vector<128x16xf32> to vector<64x1xf32>
    %79 = vector.broadcast %78 : vector<64x1xf32> to vector<64x512xf32>
    %80 = arith.mulf %79, %77 : vector<64x512xf32>
    %cst_33 = arith.constant dense<0.000000e+00> : vector<512xf32>
    %81 = vector.multi_reduction <add>, %80, %cst_33 [0] : vector<64x512xf32> to vector<512xf32>
    %82 = vector.shape_cast %81 : vector<512xf32> to vector<1x512xf32>
    %83 = vector.extract_strided_slice %0 {offsets = [0, 7], sizes = [1, 1], strides = [1, 1]} : vector<128x16xf32> to vector<1x1xf32>
    %84 = vector.broadcast %83 : vector<1x1xf32> to vector<1x512xf32>
    %85 = arith.addf %82, %84 : vector<1x512xf32>
    %c0_34 = arith.constant 0 : index
    %c0_35 = arith.constant 0 : index
    %c0_36 = arith.constant 0 : index
    %86 = vector.load %arg10[%c0_34, %c0_35, %c0_36] : memref<1x1x512xf32, #tpu.memory_space<vmem>>, vector<1x1x512xf32>
    %87 = vector.shape_cast %86 : vector<1x1x512xf32> to vector<1x512xf32>
    %88 = vector.shape_cast %85 : vector<1x512xf32> to vector<1x1x512xf32>
    tpu.vector_store %arg10[%c0_34, %c0_35, %c0_36], %88 {strides = array<i32>} : memref<1x1x512xf32, #tpu.memory_space<vmem>>, vector<1x1x512xf32>,
    return
  }
  func.func @transform_0(%arg0: i32, %arg1: i32) -> (i32, i32, i32) {
    %c0_i32 = arith.constant 0 : i32
    %c0_i32_0 = arith.constant 0 : i32
    return %arg0, %c0_i32, %arg1 : i32, i32, i32
  }
  func.func @transform_1(%arg0: i32, %arg1: i32) -> (i32, i32, i32) {
    %c0_i32 = arith.constant 0 : i32
    %c0_i32_0 = arith.constant 0 : i32
    return %arg0, %c0_i32, %arg1 : i32, i32, i32
  }
  func.func @transform_2(%arg0: i32, %arg1: i32) -> (i32, i32, i32) {
    %c0_i32 = arith.constant 0 : i32
    %c0_i32_0 = arith.constant 0 : i32
    %c0_i32_1 = arith.constant 0 : i32
    return %arg0, %c0_i32, %c0_i32_0 : i32, i32, i32
  }
  func.func @transform_3(%arg0: i32, %arg1: i32) -> (i32, i32, i32) {
    %c0_i32 = arith.constant 0 : i32
    %c0_i32_0 = arith.constant 0 : i32
    %c0_i32_1 = arith.constant 0 : i32
    return %arg0, %c0_i32, %c0_i32_0 : i32, i32, i32
  }
  func.func @transform_4(%arg0: i32, %arg1: i32) -> (i32, i32) {
    %c0_i32 = arith.constant 0 : i32
    %c0_i32_0 = arith.constant 0 : i32
    %c0_i32_1 = arith.constant 0 : i32
    return %c0_i32, %c0_i32_0 : i32, i32
  }
  func.func @transform_5(%arg0: i32, %arg1: i32) -> (i32, i32) {
    %c0_i32 = arith.constant 0 : i32
    %c0_i32_0 = arith.constant 0 : i32
    %c0_i32_1 = arith.constant 0 : i32
    return %c0_i32, %c0_i32_0 : i32, i32
  }
  func.func @transform_6(%arg0: i32, %arg1: i32) -> (i32, i32) {
    %c0_i32 = arith.constant 0 : i32
    %c0_i32_0 = arith.constant 0 : i32
    %c0_i32_1 = arith.constant 0 : i32
    return %c0_i32, %c0_i32_0 : i32, i32
  }
  func.func @transform_7(%arg0: i32, %arg1: i32) -> (i32, i32) {
    %c0_i32 = arith.constant 0 : i32
    %c0_i32_0 = arith.constant 0 : i32
    %c0_i32_1 = arith.constant 0 : i32
    return %c0_i32, %c0_i32_0 : i32, i32
  }
  func.func @transform_8(%arg0: i32, %arg1: i32) -> (i32, i32, i32) {
    %c0_i32 = arith.constant 0 : i32
    %c0_i32_0 = arith.constant 0 : i32
    return %arg0, %c0_i32, %arg1 : i32, i32, i32
  }
}

</mosaic_0001>

<llo_original>
// kernel: model_wrapper_forward.2
$region0: #{model_wrapper_forward.2}
  #allocation0 [shape = 'u32[]', space=smem, size = 0x4, offset = 0x4, fixed_abs, tag = 'smem constant byte address 0x4 - core index']
  #allocation1 [shape = 'u32[72,128]{1,0:T(1,128)}', space=vmem, size = 0x9000, scoped, tag = 'internal scratch']
  %s0 = inlined_call_operand.vmem [shape: f32[2,1,1024], index: 0, kind: input, shape index: {}]
  %s1 = inlined_call_operand.vmem [shape: f32[2,1024], index: 1, kind: input, shape index: {}]
  %s2 = inlined_call_operand.vmem [shape: f32[128,16], index: 2, kind: input, shape index: {}]
  %s3 = inlined_call_operand.vmem [shape: bf16[192,64], index: 3, kind: input, shape index: {}]
  %s4 = inlined_call_operand.vmem [shape: f32[2,64,1024], index: 4, kind: output, shape index: {0}]
  %s5 = inlined_call_operand.vmem [shape: bf16[2,64,1024], index: 5, kind: output, shape index: {1}]
  %s6 = inlined_call_operand.vmem [shape: bf16[2,1024,64], index: 6, kind: output, shape index: {2}]
  %s7 = inlined_call_operand.vmem [shape: bf16[2,65,1024], index: 7, kind: output, shape index: {3}]
  %8 = xla_tuple %s4, %s5, %s6, %s7
  %s9 = sld [smem:[#allocation0]]
  $region130: #{model_wrapper_forward.2} parent=0
    _
  %s11 = ssub.s32 1, %s9
  %s12 = scalar_select 0, %s11, %s9
  $region1: #{model_wrapper_forward.2} parent=0
    #allocation2 [shape = 'u8[262144]{0}', space=vmem, size = 0x40000, scoped, tag = 'output window, operand 0']
    #allocation3 [shape = 'u8[131072]{0}', space=vmem, size = 0x20000, scoped, tag = 'output window, operand 1']
    #allocation4 [shape = 'u8[147456]{0}', space=vmem, size = 0x24000, scoped, tag = 'output window, operand 3']
    loop: start=0, step=1, limit=6
    $region2: #{model_wrapper_forward.2} parent=1 // loop_pre_header
      _
    $region3: #{model_wrapper_forward.2} parent=1 // loop_header
      %s14 = sphi 0, %s18
      %p15 = scmp.ge.s32.totalorder %s14, 6
      %s21 = sphi 0, %s33
      %s22 = sphi 0, %s29
      %s23 = sphi 0, %s21
      %s24 = sphi 0, %s22
      %s25 = sphi 0, %s23
      %s26 = sphi 0, %s24
      %s38 = sphi 0, %s40
      %s41 = sphi 0, %s38
      %s42 = sphi 0, %s41
      %s58 = sphi 0, %s42
      %s64 = sphi 0, %s66
      %s67 = sphi 0, %s64
      %s68 = sphi 0, %s67
      %s84 = sphi 0, %s68
      %s88 = sphi 0, %s88
      %s90 = sphi 0, %s88
      %s91 = sphi 0, %s90
      %s105 = sphi 0, %s91
      %s109 = sphi 0, %s109
      %s111 = sphi 0, %s109
      %s112 = sphi 0, %s111
      %s126 = sphi 0, %s112
      %s134 = sphi 0, %s136
      %s137 = sphi 0, %s134
      %s138 = sphi 0, %s137
      %s154 = sphi 0, %s138
      %s162 = sphi 0, %s164
      %s165 = sphi 0, %s162
      %s166 = sphi 0, %s165
      %s182 = sphi 0, %s166
      %s190 = sphi 0, %s192
      %s193 = sphi 0, %s190
      %s194 = sphi 0, %s193
      %s210 = sphi 0, %s194
      %s218 = sphi 0, %s220
      %s221 = sphi 0, %s218
      %s222 = sphi 0, %s221
      %s238 = sphi 0, %s222
    $region4: #{model_wrapper_forward.2} parent=1 // loop_header_branch
      %17 = sbr.rel (%p15) target = $region8
    $region5: #{model_wrapper_forward.2} parent=1 // loop_body
      %s19 = ssub.s32 %s14, 1
      %s20 = ssub.s32 %s14, 2
      %s27 = sadd.s32 1, %s22
      %p28 = scmp.ge.s32.totalorder %s27, 2
      %s29 = scalar_select %p28, 0, %s27
      %s30 = sadd.s32 1, %s21
      %s31 = scalar_select %p28, %s30, %s21
      %p32 = scmp.ge.s32.totalorder %s31, 2
      %s33 = scalar_select %p32, 0, %s31
      %s34 = ssub.s32 %s21, %s33
      %s35 = ssub.s32 %s22, %s29
      %s36 = sor.u32 %s34, %s35
      %p37 = scmp.eq.s32.totalorder %s36, 0
      %s39 = sadd.s32 %s38, 1
      %s40 = scalar_select %p37, %s38, %s39
      %p43 = pneg %p37
      %p44 = scmp.eq.s32.totalorder %s14, 3
      %p45 = por %p43, %p44
      %p46 = scmp.ne.s32.totalorder %s38, %s41
      %p47 = scmp.eq.s32.totalorder %s14, 0
      %p48 = por %p46, %p47
      %p49 = scmp.ne.s32.totalorder %s38, %s41
      %p50 = scmp.eq.s32.totalorder %s19, 3
      %p51 = por %p49, %p50
      %p52 = scmp.ne.s32.totalorder %s41, %s42
      %p53 = scmp.eq.s32.totalorder %s19, 0
      %p54 = por %p52, %p53
      %p55 = scmp.ne.s32.totalorder %s41, %s42
      %p56 = scmp.eq.s32.totalorder %s20, 3
      %p57 = por %p55, %p56
      %p59 = scmp.ne.s32.totalorder %s42, %s58
      %p60 = scmp.eq.s32.totalorder %s20, 0
      %p61 = por %p59, %p60
      %s62 = ssub.s32 %s22, %s29
      %p63 = scmp.eq.s32.totalorder %s62, 0
      %s65 = sadd.s32 %s64, 1
      %s66 = scalar_select %p63, %s64, %s65
      %p69 = pneg %p63
      %p70 = scmp.eq.s32.totalorder %s14, 3
      %p71 = por %p69, %p70
      %p72 = scmp.ne.s32.totalorder %s64, %s67
      %p73 = scmp.eq.s32.totalorder %s14, 0
      %p74 = por %p72, %p73
      %p75 = scmp.ne.s32.totalorder %s64, %s67
      %p76 = scmp.eq.s32.totalorder %s19, 3
      %p77 = por %p75, %p76
      %p78 = scmp.ne.s32.totalorder %s67, %s68
      %p79 = scmp.eq.s32.totalorder %s19, 0
      %p80 = por %p78, %p79
      %p81 = scmp.ne.s32.totalorder %s67, %s68
      %p82 = scmp.eq.s32.totalorder %s20, 3
      %p83 = por %p81, %p82
      %p85 = scmp.ne.s32.totalorder %s68, %s84
      %p86 = scmp.eq.s32.totalorder %s20, 0
      %p87 = por %p85, %p86
      %s89 = sadd.s32 %s88, 1
      %p92 = scmp.eq.s32.totalorder %s14, 3
      %p93 = scmp.ne.s32.totalorder %s88, %s90
      %p94 = scmp.eq.s32.totalorder %s14, 0
      %p95 = por %p93, %p94
      %p96 = scmp.ne.s32.totalorder %s88, %s90
      %p97 = scmp.eq.s32.totalorder %s19, 3
      %p98 = por %p96, %p97
      %p99 = scmp.ne.s32.totalorder %s90, %s91
      %p100 = scmp.eq.s32.totalorder %s19, 0
      %p101 = por %p99, %p100
      %p102 = scmp.ne.s32.totalorder %s90, %s91
      %p103 = scmp.eq.s32.totalorder %s20, 3
      %p104 = por %p102, %p103
      %p106 = scmp.ne.s32.totalorder %s91, %s105
      %p107 = scmp.eq.s32.totalorder %s20, 0
      %p108 = por %p106, %p107
      %s110 = sadd.s32 %s109, 1
      %p113 = scmp.eq.s32.totalorder %s14, 3
      %p114 = scmp.ne.s32.totalorder %s109, %s111
      %p115 = scmp.eq.s32.totalorder %s14, 0
      %p116 = por %p114, %p115
      %p117 = scmp.ne.s32.totalorder %s109, %s111
      %p118 = scmp.eq.s32.totalorder %s19, 3
      %p119 = por %p117, %p118
      %p120 = scmp.ne.s32.totalorder %s111, %s112
      %p121 = scmp.eq.s32.totalorder %s19, 0
      %p122 = por %p120, %p121
      %p123 = scmp.ne.s32.totalorder %s111, %s112
      %p124 = scmp.eq.s32.totalorder %s20, 3
      %p125 = por %p123, %p124
      %p127 = scmp.ne.s32.totalorder %s112, %s126
      %p128 = scmp.eq.s32.totalorder %s20, 0
      %p129 = por %p127, %p128
      %s130 = ssub.s32 %s21, %s33
      %s131 = ssub.s32 %s22, %s29
      %s132 = sor.u32 %s130, %s131
      %p133 = scmp.eq.s32.totalorder %s132, 0
      %s135 = sadd.s32 %s134, 1
      %s136 = scalar_select %p133, %s134, %s135
      %p139 = pneg %p133
      %p140 = scmp.eq.s32.totalorder %s14, 3
      %p141 = por %p139, %p140
      %p142 = scmp.ne.s32.totalorder %s134, %s137
      %p143 = scmp.eq.s32.totalorder %s14, 0
      %p144 = por %p142, %p143
      %p145 = scmp.ne.s32.totalorder %s134, %s137
      %p146 = scmp.eq.s32.totalorder %s19, 3
      %p147 = por %p145, %p146
      %p148 = scmp.ne.s32.totalorder %s137, %s138
      %p149 = scmp.eq.s32.totalorder %s19, 0
      %p150 = por %p148, %p149
      %p151 = scmp.ne.s32.totalorder %s137, %s138
      %p152 = scmp.eq.s32.totalorder %s20, 3
      %p153 = por %p151, %p152
      %p155 = scmp.ne.s32.totalorder %s138, %s154
      %p156 = scmp.eq.s32.totalorder %s20, 0
      %p157 = por %p155, %p156
      %s158 = ssub.s32 %s21, %s33
      %s159 = ssub.s32 %s22, %s29
      %s160 = sor.u32 %s158, %s159
      %p161 = scmp.eq.s32.totalorder %s160, 0
      %s163 = sadd.s32 %s162, 1
      %s164 = scalar_select %p161, %s162, %s163
      %p167 = pneg %p161
      %p168 = scmp.eq.s32.totalorder %s14, 3
      %p169 = por %p167, %p168
      %p170 = scmp.ne.s32.totalorder %s162, %s165
      %p171 = scmp.eq.s32.totalorder %s14, 0
      %p172 = por %p170, %p171
      %p173 = scmp.ne.s32.totalorder %s162, %s165
      %p174 = scmp.eq.s32.totalorder %s19, 3
      %p175 = por %p173, %p174
      %p176 = scmp.ne.s32.totalorder %s165, %s166
      %p177 = scmp.eq.s32.totalorder %s19, 0
      %p178 = por %p176, %p177
      %p179 = scmp.ne.s32.totalorder %s165, %s166
      %p180 = scmp.eq.s32.totalorder %s20, 3
      %p181 = por %p179, %p180
      %p183 = scmp.ne.s32.totalorder %s166, %s182
      %p184 = scmp.eq.s32.totalorder %s20, 0
      %p185 = por %p183, %p184
      %s186 = ssub.s32 %s21, %s33
      %s187 = ssub.s32 %s22, %s29
      %s188 = sor.u32 %s186, %s187
      %p189 = scmp.eq.s32.totalorder %s188, 0
      %s191 = sadd.s32 %s190, 1
      %s192 = scalar_select %p189, %s190, %s191
      %p195 = pneg %p189
      %p196 = scmp.eq.s32.totalorder %s14, 3
      %p197 = por %p195, %p196
      %p198 = scmp.ne.s32.totalorder %s190, %s193
      %p199 = scmp.eq.s32.totalorder %s14, 0
      %p200 = por %p198, %p199
      %p201 = scmp.ne.s32.totalorder %s190, %s193
      %p202 = scmp.eq.s32.totalorder %s19, 3
      %p203 = por %p201, %p202
      %p204 = scmp.ne.s32.totalorder %s193, %s194
      %p205 = scmp.eq.s32.totalorder %s19, 0
      %p206 = por %p204, %p205
      %p207 = scmp.ne.s32.totalorder %s193, %s194
      %p208 = scmp.eq.s32.totalorder %s20, 3
      %p209 = por %p207, %p208
      %p211 = scmp.ne.s32.totalorder %s194, %s210
      %p212 = scmp.eq.s32.totalorder %s20, 0
      %p213 = por %p211, %p212
      %s214 = ssub.s32 %s21, %s33
      %s215 = ssub.s32 %s22, %s29
      %s216 = sor.u32 %s214, %s215
      %p217 = scmp.eq.s32.totalorder %s216, 0
      %s219 = sadd.s32 %s218, 1
      %s220 = scalar_select %p217, %s218, %s219
      %p223 = pneg %p217
      %p224 = scmp.eq.s32.totalorder %s14, 3
      %p225 = por %p223, %p224
      %p226 = scmp.ne.s32.totalorder %s218, %s221
      %p227 = scmp.eq.s32.totalorder %s14, 0
      %p228 = por %p226, %p227
      %p229 = scmp.ne.s32.totalorder %s218, %s221
      %p230 = scmp.eq.s32.totalorder %s19, 3
      %p231 = por %p229, %p230
      %p232 = scmp.ne.s32.totalorder %s221, %s222
      %p233 = scmp.eq.s32.totalorder %s19, 0
      %p234 = por %p232, %p233
      %p235 = scmp.ne.s32.totalorder %s221, %s222
      %p236 = scmp.eq.s32.totalorder %s20, 3
      %p237 = por %p235, %p236
      %p239 = scmp.ne.s32.totalorder %s222, %s238
      %p240 = scmp.eq.s32.totalorder %s20, 0
      %p241 = por %p239, %p240
      %p242 = scmp.le.s32.totalorder 1, %s14
      %p243 = scmp.lt.s32.totalorder %s14, 5
      %p244 = pnand %p242, %p243
      %p245 = pneg %p244
      // Predicated region
      $region9: #{model_wrapper_forward.2} parent=5 // pred_check
        _
      $region10: #{model_wrapper_forward.2} parent=5 // pred_check_branch
        %247 = sbr.rel (%p244) target = $region12
      $region11: #{model_wrapper_forward.2} parent=5 // pred_region
        %s248 = ssub.s32 %s14, 1
        // Predicated region
        $region13: #{model_wrapper_forward.2} parent=11 // pred_check
          %p249 = pneg %p101
        $region14: #{model_wrapper_forward.2} parent=11 // pred_check_branch
          %251 = sbr.rel (%p249) target = $region16
        $region15: #{model_wrapper_forward.2} parent=11 // pred_region
          _
        $region16: #{model_wrapper_forward.2} parent=11 // pred_fallthru
          _
        // Predicated region
        $region17: #{model_wrapper_forward.2} parent=11 // pred_check
          %p252 = pneg %p122
        $region18: #{model_wrapper_forward.2} parent=11 // pred_check_branch
          %254 = sbr.rel (%p252) target = $region20
        $region19: #{model_wrapper_forward.2} parent=11 // pred_region
          _
        $region20: #{model_wrapper_forward.2} parent=11 // pred_fallthru
          _
      $region12: #{model_wrapper_forward.2} parent=5 // pred_fallthru
        _
      %p255 = scmp.lt.s32.totalorder %s14, 4
      // Predicated region
      $region21: #{model_wrapper_forward.2} parent=5 // pred_check
        %p256 = pneg %p255
      $region22: #{model_wrapper_forward.2} parent=5 // pred_check_branch
        %258 = sbr.rel (%p256) target = $region24
      $region23: #{model_wrapper_forward.2} parent=5 // pred_region
        // Predicated region
        $region25: #{model_wrapper_forward.2} parent=23 // pred_check
          %p259 = pneg %p48
        $region26: #{model_wrapper_forward.2} parent=23 // pred_check_branch
          %261 = sbr.rel (%p259) target = $region28
        $region27: #{model_wrapper_forward.2} parent=23 // pred_region
          %s262 = smul.u32 4, %s22
          %p263 = scmp.lt.s32.totalorder %s21, 1
          %s264 = scalar_select %p263, %s21, 1
          %p265 = scmp.lt.s32.totalorder %s262, 7
          %s266 = scalar_select %p265, %s262, 7
          %s267 = smul.addr %s264, 8
          %s268 = sadd.s32 %s266, %s267
          %s269 = scalar_lea.vmem %s0, %s268
          %s270 = smul.u32 4, %s22
        $region28: #{model_wrapper_forward.2} parent=23 // pred_fallthru
          _
        // Predicated region
        $region29: #{model_wrapper_forward.2} parent=23 // pred_check
          %p271 = pneg %p74
        $region30: #{model_wrapper_forward.2} parent=23 // pred_check_branch
          %273 = sbr.rel (%p271) target = $region32
        $region31: #{model_wrapper_forward.2} parent=23 // pred_region
          %s274 = smul.u32 4, %s22
          %p275 = scmp.lt.s32.totalorder %s274, 7
          %s276 = scalar_select %p275, %s274, 7
          %s277 = smul.addr %s276, 2
          %s278 = scalar_lea.vmem %s1, %s277
          %s279 = smul.u32 4, %s22
        $region32: #{model_wrapper_forward.2} parent=23 // pred_fallthru
          _
      $region24: #{model_wrapper_forward.2} parent=5 // pred_fallthru
        _
      %p280 = scmp.le.s32.totalorder 1, %s14
      %p281 = scmp.lt.s32.totalorder %s14, 5
      %p282 = pnand %p280, %p281
      %p283 = pneg %p282
      // Predicated region
      $region33: #{model_wrapper_forward.2} parent=5 // pred_check
        _
      $region34: #{model_wrapper_forward.2} parent=5 // pred_check_branch
        %285 = sbr.rel (%p282) target = $region36
      $region35: #{model_wrapper_forward.2} parent=5 // pred_region
        %s286 = ssub.s32 %s14, 1
        %s287 = smul.u32 4, %s24
        %p288 = scmp.lt.s32.totalorder %s23, 1
        %s289 = scalar_select %p288, %s23, 1
        %p290 = scmp.lt.s32.totalorder %s287, 7
        %s291 = scalar_select %p290, %s287, 7
        %s292 = smul.addr %s289, 8
        %s293 = sadd.s32 %s291, %s292
        %s294 = scalar_lea.vmem %s0, %s293
        %p295 = pneg %p54
        %p296 = pneg %p51
        %s297 = smul.u32 4, %s24
        %p298 = scmp.lt.s32.totalorder %s297, 7
        %s299 = scalar_select %p298, %s297, 7
        %s300 = smul.addr %s299, 2
        %s301 = scalar_lea.vmem %s1, %s300
        %p302 = pneg %p80
        %p303 = pneg %p77
        %p304 = pneg %p101
        %p305 = pneg %p98
        %p306 = pneg %p122
        %p307 = pneg %p119
        %p308 = pneg %p150
        %p309 = pneg %p147
        %s310 = sand.u32 %s137, 1
        %s311 = sand.u32 %s137, 1
        %s312 = smul.addr %s311, 256
        %s313 = scalar_lea.vmem [#allocation2], %s312
        %p314 = pneg %p178
        %p315 = pneg %p175
        %s316 = sand.u32 %s165, 1
        %s317 = sand.u32 %s165, 1
        %s318 = smul.addr %s317, 128
        %s319 = scalar_lea.vmem [#allocation3], %s318
        %p320 = pneg %p206
        %p321 = pneg %p203
        %s322 = smul.u32 64, %s24
        %p323 = scmp.lt.s32.totalorder %s23, 1
        %s324 = scalar_select %p323, %s23, 1
        %p325 = scmp.lt.s32.totalorder %s322, 127
        %s326 = scalar_select %p325, %s322, 127
        %s327 = smul.addr %s324, 128
        %s328 = sadd.s32 %s326, %s327
        %s329 = smul.addr %s328, 4
        %s330 = scalar_lea.vmem %s6, %s329
        %p331 = pneg %p234
        %p332 = pneg %p231
        %s333 = sand.u32 %s221, 1
        %s334 = sand.u32 %s221, 1
        %s335 = smul.addr %s334, 144
        %s336 = scalar_lea.vmem [#allocation4], %s335
        %s337 = smul.u32 4, %s24
        %p338 = scmp.lt.s32.totalorder %s23, 1
        %s339 = scalar_select %p338, %s23, 1
        %p340 = scmp.lt.s32.totalorder %s337, 7
        %s341 = scalar_select %p340, %s337, 7
        %s342 = smul.addr %s339, 8
        %s343 = sadd.s32 %s341, %s342
        %s344 = scalar_lea.vmem %s0, %s343
        %s345 = smul.u32 4, %s24
        %s346 = smul.u32 4, %s24
        %p347 = scmp.lt.s32.totalorder %s346, 7
        %s348 = scalar_select %p347, %s346, 7
        %s349 = smul.addr %s348, 2
        %s350 = scalar_lea.vmem %s1, %s349
        %s351 = smul.u32 4, %s24
        %s352 = smul.u32 4, %s24
        %s353 = smul.u32 4, %s24
        %s354 = smul.u32 64, %s24
        %p355 = scmp.lt.s32.totalorder %s23, 1
        %s356 = scalar_select %p355, %s23, 1
        %p357 = scmp.lt.s32.totalorder %s354, 127
        %s358 = scalar_select %p357, %s354, 127
        %s359 = smul.addr %s356, 128
        %s360 = sadd.s32 %s358, %s359
        %s361 = smul.addr %s360, 4
        %s362 = scalar_lea.vmem %s6, %s361
        %s363 = smul.u32 64, %s24
        %s364 = smul.u32 4, %s24
        %v367 = vld [vmem:[%s2] sm:$0xff]
        %v368 = vld [vmem:[%s2 + $0x8] sm:$0xff]
        %v369 = vld [vmem:[%s2 + $0x10] sm:$0xff]
        %v370 = vld [vmem:[%s2 + $0x18] sm:$0xff]
        %v371 = vld [vmem:[%s2 + $0x20] sm:$0xff]
        %v372 = vld [vmem:[%s2 + $0x28] sm:$0xff]
        %v373 = vld [vmem:[%s2 + $0x30] sm:$0xff]
        %v374 = vld [vmem:[%s2 + $0x38] sm:$0xff]
        %v375 = vld [vmem:[%s344] sm:$0xf]
        %v376 = vld [vmem:[%s350] ss:$2 sm:$0xf]
        %s377 = scalar_lea.vmem %s350, 1
        %v378 = vld [vmem:[%s377] ss:$2 sm:$0xf]
        %380 = vset.pattern.permute.xlu0 8
        %381 = vperm.xlu0 %380, %v367
        %v382 = vpop.permute.xlu0 %381
        %385 = vset.pattern.permute.xlu0 8
        %386 = vperm.xlu0 %385, %v368
        %v387 = vpop.permute.xlu0 %386
        %390 = vset.pattern.permute.xlu0 8
        %391 = vperm.xlu0 %390, %v369
        %v392 = vpop.permute.xlu0 %391
        %395 = vset.pattern.permute.xlu0 8
        %396 = vperm.xlu0 %395, %v370
        %v397 = vpop.permute.xlu0 %396
        %400 = vset.pattern.permute.xlu0 8
        %401 = vperm.xlu0 %400, %v371
        %v402 = vpop.permute.xlu0 %401
        %405 = vset.pattern.permute.xlu0 8
        %406 = vperm.xlu0 %405, %v372
        %v407 = vpop.permute.xlu0 %406
        %410 = vset.pattern.permute.xlu0 8
        %411 = vperm.xlu0 %410, %v373
        %v412 = vpop.permute.xlu0 %411
        %415 = vset.pattern.permute.xlu0 8
        %416 = vperm.xlu0 %415, %v374
        %v417 = vpop.permute.xlu0 %416
        %v420 = vperm.slane %v375, 0
        %v421 = vperm.slane %v375, 1
        %v422 = vperm.slane %v375, 2
        %v423 = vperm.slane %v375, 3
        %v428 = vmul.f32 %v382, %v420
        %v429 = vmul.f32 %v382, %v421
        %v430 = vmul.f32 %v382, %v422
        %v431 = vmul.f32 %v382, %v423
        %v432 = vmul.f32 %v387, %v420
        %v433 = vmul.f32 %v387, %v421
        %v434 = vmul.f32 %v387, %v422
        %v435 = vmul.f32 %v387, %v423
        %v436 = vmul.f32 %v392, %v420
        %v437 = vmul.f32 %v392, %v421
        %v438 = vmul.f32 %v392, %v422
        %v439 = vmul.f32 %v392, %v423
        %v440 = vmul.f32 %v397, %v420
        %v441 = vmul.f32 %v397, %v421
        %v442 = vmul.f32 %v397, %v422
        %v443 = vmul.f32 %v397, %v423
        %v444 = vmul.f32 %v402, %v420
        %v445 = vmul.f32 %v402, %v421
        %v446 = vmul.f32 %v402, %v422
        %v447 = vmul.f32 %v402, %v423
        %v448 = vmul.f32 %v407, %v420
        %v449 = vmul.f32 %v407, %v421
        %v450 = vmul.f32 %v407, %v422
        %v451 = vmul.f32 %v407, %v423
        %v452 = vmul.f32 %v412, %v420
        %v453 = vmul.f32 %v412, %v421
        %v454 = vmul.f32 %v412, %v422
        %v455 = vmul.f32 %v412, %v423
        %v456 = vmul.f32 %v417, %v420
        %v457 = vmul.f32 %v417, %v421
        %v458 = vmul.f32 %v417, %v422
        %v459 = vmul.f32 %v417, %v423
        %460 = vset.pattern.permute.xlu0 9
        %461 = vperm.xlu0 %460, %v367
        %v462 = vpop.permute.xlu0 %461
        %464 = vset.pattern.permute.xlu0 9
        %465 = vperm.xlu0 %464, %v368
        %v466 = vpop.permute.xlu0 %465
        %468 = vset.pattern.permute.xlu0 9
        %469 = vperm.xlu0 %468, %v369
        %v470 = vpop.permute.xlu0 %469
        %472 = vset.pattern.permute.xlu0 9
        %473 = vperm.xlu0 %472, %v370
        %v474 = vpop.permute.xlu0 %473
        %476 = vset.pattern.permute.xlu0 9
        %477 = vperm.xlu0 %476, %v371
        %v478 = vpop.permute.xlu0 %477
        %480 = vset.pattern.permute.xlu0 9
        %481 = vperm.xlu0 %480, %v372
        %v482 = vpop.permute.xlu0 %481
        %484 = vset.pattern.permute.xlu0 9
        %485 = vperm.xlu0 %484, %v373
        %v486 = vpop.permute.xlu0 %485
        %488 = vset.pattern.permute.xlu0 9
        %489 = vperm.xlu0 %488, %v374
        %v490 = vpop.permute.xlu0 %489
        %v493 = vperm.slane %v376, 0
        %v494 = vperm.slane %v376, 1
        %v495 = vperm.slane %v376, 2
        %v496 = vperm.slane %v376, 3
        %v501 = vmul.f32 %v462, %v493
        %v502 = vmul.f32 %v462, %v494
        %v503 = vmul.f32 %v462, %v495
        %v504 = vmul.f32 %v462, %v496
        %v505 = vmul.f32 %v466, %v493
        %v506 = vmul.f32 %v466, %v494
        %v507 = vmul.f32 %v466, %v495
        %v508 = vmul.f32 %v466, %v496
        %v509 = vmul.f32 %v470, %v493
        %v510 = vmul.f32 %v470, %v494
        %v511 = vmul.f32 %v470, %v495
        %v512 = vmul.f32 %v470, %v496
        %v513 = vmul.f32 %v474, %v493
        %v514 = vmul.f32 %v474, %v494
        %v515 = vmul.f32 %v474, %v495
        %v516 = vmul.f32 %v474, %v496
        %v517 = vmul.f32 %v478, %v493
        %v518 = vmul.f32 %v478, %v494
        %v519 = vmul.f32 %v478, %v495
        %v520 = vmul.f32 %v478, %v496
        %v521 = vmul.f32 %v482, %v493
        %v522 = vmul.f32 %v482, %v494
        %v523 = vmul.f32 %v482, %v495
        %v524 = vmul.f32 %v482, %v496
        %v525 = vmul.f32 %v486, %v493
        %v526 = vmul.f32 %v486, %v494
        %v527 = vmul.f32 %v486, %v495
        %v528 = vmul.f32 %v486, %v496
        %v529 = vmul.f32 %v490, %v493
        %v530 = vmul.f32 %v490, %v494
        %v531 = vmul.f32 %v490, %v495
        %v532 = vmul.f32 %v490, %v496
        %v533 = vadd.f32 %v428, %v501
        %v534 = vadd.f32 %v429, %v502
        %v535 = vadd.f32 %v430, %v503
        %v536 = vadd.f32 %v431, %v504
        %v537 = vadd.f32 %v432, %v505
        %v538 = vadd.f32 %v433, %v506
        %v539 = vadd.f32 %v434, %v507
        %v540 = vadd.f32 %v435, %v508
        %v541 = vadd.f32 %v436, %v509
        %v542 = vadd.f32 %v437, %v510
        %v543 = vadd.f32 %v438, %v511
        %v544 = vadd.f32 %v439, %v512
        %v545 = vadd.f32 %v440, %v513
        %v546 = vadd.f32 %v441, %v514
        %v547 = vadd.f32 %v442, %v515
        %v548 = vadd.f32 %v443, %v516
        %v549 = vadd.f32 %v444, %v517
        %v550 = vadd.f32 %v445, %v518
        %v551 = vadd.f32 %v446, %v519
        %v552 = vadd.f32 %v447, %v520
        %v553 = vadd.f32 %v448, %v521
        %v554 = vadd.f32 %v449, %v522
        %v555 = vadd.f32 %v450, %v523
        %v556 = vadd.f32 %v451, %v524
        %v557 = vadd.f32 %v452, %v525
        %v558 = vadd.f32 %v453, %v526
        %v559 = vadd.f32 %v454, %v527
        %v560 = vadd.f32 %v455, %v528
        %v561 = vadd.f32 %v456, %v529
        %v562 = vadd.f32 %v457, %v530
        %v563 = vadd.f32 %v458, %v531
        %v564 = vadd.f32 %v459, %v532
        %565 = vset.pattern.permute.xlu0 10
        %566 = vperm.xlu0 %565, %v367
        %v567 = vpop.permute.xlu0 %566
        %569 = vset.pattern.permute.xlu0 10
        %570 = vperm.xlu0 %569, %v368
        %v571 = vpop.permute.xlu0 %570
        %573 = vset.pattern.permute.xlu0 10
        %574 = vperm.xlu0 %573, %v369
        %v575 = vpop.permute.xlu0 %574
        %577 = vset.pattern.permute.xlu0 10
        %578 = vperm.xlu0 %577, %v370
        %v579 = vpop.permute.xlu0 %578
        %581 = vset.pattern.permute.xlu0 10
        %582 = vperm.xlu0 %581, %v371
        %v583 = vpop.permute.xlu0 %582
        %585 = vset.pattern.permute.xlu0 10
        %586 = vperm.xlu0 %585, %v372
        %v587 = vpop.permute.xlu0 %586
        %589 = vset.pattern.permute.xlu0 10
        %590 = vperm.xlu0 %589, %v373
        %v591 = vpop.permute.xlu0 %590
        %593 = vset.pattern.permute.xlu0 10
        %594 = vperm.xlu0 %593, %v374
        %v595 = vpop.permute.xlu0 %594
        %v598 = vperm.slane %v378, 0
        %v599 = vperm.slane %v378, 1
        %v600 = vperm.slane %v378, 2
        %v601 = vperm.slane %v378, 3
        %v606 = vmul.f32 %v567, %v598
        %v607 = vmul.f32 %v567, %v599
        %v608 = vmul.f32 %v567, %v600
        %v609 = vmul.f32 %v567, %v601
        %v610 = vmul.f32 %v571, %v598
        %v611 = vmul.f32 %v571, %v599
        %v612 = vmul.f32 %v571, %v600
        %v613 = vmul.f32 %v571, %v601
        %v614 = vmul.f32 %v575, %v598
        %v615 = vmul.f32 %v575, %v599
        %v616 = vmul.f32 %v575, %v600
        %v617 = vmul.f32 %v575, %v601
        %v618 = vmul.f32 %v579, %v598
        %v619 = vmul.f32 %v579, %v599
        %v620 = vmul.f32 %v579, %v600
        %v621 = vmul.f32 %v579, %v601
        %v622 = vmul.f32 %v583, %v598
        %v623 = vmul.f32 %v583, %v599
        %v624 = vmul.f32 %v583, %v600
        %v625 = vmul.f32 %v583, %v601
        %v626 = vmul.f32 %v587, %v598
        %v627 = vmul.f32 %v587, %v599
        %v628 = vmul.f32 %v587, %v600
        %v629 = vmul.f32 %v587, %v601
        %v630 = vmul.f32 %v591, %v598
        %v631 = vmul.f32 %v591, %v599
        %v632 = vmul.f32 %v591, %v600
        %v633 = vmul.f32 %v591, %v601
        %v634 = vmul.f32 %v595, %v598
        %v635 = vmul.f32 %v595, %v599
        %v636 = vmul.f32 %v595, %v600
        %v637 = vmul.f32 %v595, %v601
        %v638 = vadd.f32 %v533, %v606
        %v639 = vadd.f32 %v534, %v607
        %v640 = vadd.f32 %v535, %v608
        %v641 = vadd.f32 %v536, %v609
        %v642 = vadd.f32 %v537, %v610
        %v643 = vadd.f32 %v538, %v611
        %v644 = vadd.f32 %v539, %v612
        %v645 = vadd.f32 %v540, %v613
        %v646 = vadd.f32 %v541, %v614
        %v647 = vadd.f32 %v542, %v615
        %v648 = vadd.f32 %v543, %v616
        %v649 = vadd.f32 %v544, %v617
        %v650 = vadd.f32 %v545, %v618
        %v651 = vadd.f32 %v546, %v619
        %v652 = vadd.f32 %v547, %v620
        %v653 = vadd.f32 %v548, %v621
        %v654 = vadd.f32 %v549, %v622
        %v655 = vadd.f32 %v550, %v623
        %v656 = vadd.f32 %v551, %v624
        %v657 = vadd.f32 %v552, %v625
        %v658 = vadd.f32 %v553, %v626
        %v659 = vadd.f32 %v554, %v627
        %v660 = vadd.f32 %v555, %v628
        %v661 = vadd.f32 %v556, %v629
        %v662 = vadd.f32 %v557, %v630
        %v663 = vadd.f32 %v558, %v631
        %v664 = vadd.f32 %v559, %v632
        %v665 = vadd.f32 %v560, %v633
        %v666 = vadd.f32 %v561, %v634
        %v667 = vadd.f32 %v562, %v635
        %v668 = vadd.f32 %v563, %v636
        %v669 = vadd.f32 %v564, %v637
        %670 = vset.pattern.permute.xlu0 0
        %671 = vperm.xlu0 %670, %v367
        %v672 = vpop.permute.xlu0 %671
        %674 = vset.pattern.permute.xlu0 0
        %675 = vperm.xlu0 %674, %v368
        %v676 = vpop.permute.xlu0 %675
        %678 = vset.pattern.permute.xlu0 0
        %679 = vperm.xlu0 %678, %v369
        %v680 = vpop.permute.xlu0 %679
        %682 = vset.pattern.permute.xlu0 0
        %683 = vperm.xlu0 %682, %v370
        %v684 = vpop.permute.xlu0 %683
        %686 = vset.pattern.permute.xlu0 0
        %687 = vperm.xlu0 %686, %v371
        %v688 = vpop.permute.xlu0 %687
        %690 = vset.pattern.permute.xlu0 0
        %691 = vperm.xlu0 %690, %v372
        %v692 = vpop.permute.xlu0 %691
        %694 = vset.pattern.permute.xlu0 0
        %695 = vperm.xlu0 %694, %v373
        %v696 = vpop.permute.xlu0 %695
        %698 = vset.pattern.permute.xlu0 0
        %699 = vperm.xlu0 %698, %v374
        %v700 = vpop.permute.xlu0 %699
        %v702 = vadd.f32 %v638, %v672
        %v703 = vadd.f32 %v639, %v672
        %v704 = vadd.f32 %v640, %v672
        %v705 = vadd.f32 %v641, %v672
        %v706 = vadd.f32 %v642, %v676
        %v707 = vadd.f32 %v643, %v676
        %v708 = vadd.f32 %v644, %v676
        %v709 = vadd.f32 %v645, %v676
        %v710 = vadd.f32 %v646, %v680
        %v711 = vadd.f32 %v647, %v680
        %v712 = vadd.f32 %v648, %v680
        %v713 = vadd.f32 %v649, %v680
        %v714 = vadd.f32 %v650, %v684
        %v715 = vadd.f32 %v651, %v684
        %v716 = vadd.f32 %v652, %v684
        %v717 = vadd.f32 %v653, %v684
        %v718 = vadd.f32 %v654, %v688
        %v719 = vadd.f32 %v655, %v688
        %v720 = vadd.f32 %v656, %v688
        %v721 = vadd.f32 %v657, %v688
        %v722 = vadd.f32 %v658, %v692
        %v723 = vadd.f32 %v659, %v692
        %v724 = vadd.f32 %v660, %v692
        %v725 = vadd.f32 %v661, %v692
        %v726 = vadd.f32 %v662, %v696
        %v727 = vadd.f32 %v663, %v696
        %v728 = vadd.f32 %v664, %v696
        %v729 = vadd.f32 %v665, %v696
        %v730 = vadd.f32 %v666, %v700
        %v731 = vadd.f32 %v667, %v700
        %v732 = vadd.f32 %v668, %v700
        %v733 = vadd.f32 %v669, %v700
        %734 = vst [vmem:[%s313] sm:$0xff] %v702
        %735 = vst [vmem:[%s313 + $0x8] sm:$0xff] %v703
        %736 = vst [vmem:[%s313 + $0x10] sm:$0xff] %v704
        %737 = vst [vmem:[%s313 + $0x18] sm:$0xff] %v705
        %738 = vst [vmem:[%s313 + $0x20] sm:$0xff] %v706
        %739 = vst [vmem:[%s313 + $0x28] sm:$0xff] %v707
        %740 = vst [vmem:[%s313 + $0x30] sm:$0xff] %v708
        %741 = vst [vmem:[%s313 + $0x38] sm:$0xff] %v709
        %742 = vst [vmem:[%s313 + $0x40] sm:$0xff] %v710
        %743 = vst [vmem:[%s313 + $0x48] sm:$0xff] %v711
        %744 = vst [vmem:[%s313 + $0x50] sm:$0xff] %v712
        %745 = vst [vmem:[%s313 + $0x58] sm:$0xff] %v713
        %746 = vst [vmem:[%s313 + $0x60] sm:$0xff] %v714
        %747 = vst [vmem:[%s313 + $0x68] sm:$0xff] %v715
        %748 = vst [vmem:[%s313 + $0x70] sm:$0xff] %v716
        %749 = vst [vmem:[%s313 + $0x78] sm:$0xff] %v717
        %750 = vst [vmem:[%s313 + $0x80] sm:$0xff] %v718
        %751 = vst [vmem:[%s313 + $0x88] sm:$0xff] %v719
        %752 = vst [vmem:[%s313 + $0x90] sm:$0xff] %v720
        %753 = vst [vmem:[%s313 + $0x98] sm:$0xff] %v721
        %754 = vst [vmem:[%s313 + $0xa0] sm:$0xff] %v722
        %755 = vst [vmem:[%s313 + $0xa8] sm:$0xff] %v723
        %756 = vst [vmem:[%s313 + $0xb0] sm:$0xff] %v724
        %757 = vst [vmem:[%s313 + $0xb8] sm:$0xff] %v725
        %758 = vst [vmem:[%s313 + $0xc0] sm:$0xff] %v726
        %759 = vst [vmem:[%s313 + $0xc8] sm:$0xff] %v727
        %760 = vst [vmem:[%s313 + $0xd0] sm:$0xff] %v728
        %761 = vst [vmem:[%s313 + $0xd8] sm:$0xff] %v729
        %762 = vst [vmem:[%s313 + $0xe0] sm:$0xff] %v730
        %763 = vst [vmem:[%s313 + $0xe8] sm:$0xff] %v731
        %764 = vst [vmem:[%s313 + $0xf0] sm:$0xff] %v732
        %765 = vst [vmem:[%s313 + $0xf8] sm:$0xff] %v733
        %v766 = vadd.f32 %v702, %v706
        %v767 = vadd.f32 %v766, %v710
        %v768 = vadd.f32 %v767, %v714
        %v769 = vadd.f32 %v768, %v718
        %v770 = vadd.f32 %v769, %v722
        %v771 = vadd.f32 %v770, %v726
        %v772 = vadd.f32 %v771, %v730
        %v773 = vrot.slane %v772, 4
        %v774 = vadd.f32 %v772, %v773
        %v775 = vrot.slane %v774, 2
        %v776 = vadd.f32 %v774, %v775
        %v777 = vrot.slane %v776, 1
        %v778 = vadd.f32 %v776, %v777
        %v779 = vadd.f32 %v703, %v707
        %v780 = vadd.f32 %v779, %v711
        %v781 = vadd.f32 %v780, %v715
        %v782 = vadd.f32 %v781, %v719
        %v783 = vadd.f32 %v782, %v723
        %v784 = vadd.f32 %v783, %v727
        %v785 = vadd.f32 %v784, %v731
        %v786 = vrot.slane %v785, 4
        %v787 = vadd.f32 %v785, %v786
        %v788 = vrot.slane %v787, 2
        %v789 = vadd.f32 %v787, %v788
        %v790 = vrot.slane %v789, 1
        %v791 = vadd.f32 %v789, %v790
        %v792 = vadd.f32 %v704, %v708
        %v793 = vadd.f32 %v792, %v712
        %v794 = vadd.f32 %v793, %v716
        %v795 = vadd.f32 %v794, %v720
        %v796 = vadd.f32 %v795, %v724
        %v797 = vadd.f32 %v796, %v728
        %v798 = vadd.f32 %v797, %v732
        %v799 = vrot.slane %v798, 4
        %v800 = vadd.f32 %v798, %v799
        %v801 = vrot.slane %v800, 2
        %v802 = vadd.f32 %v800, %v801
        %v803 = vrot.slane %v802, 1
        %v804 = vadd.f32 %v802, %v803
        %v805 = vadd.f32 %v705, %v709
        %v806 = vadd.f32 %v805, %v713
        %v807 = vadd.f32 %v806, %v717
        %v808 = vadd.f32 %v807, %v721
        %v809 = vadd.f32 %v808, %v725
        %v810 = vadd.f32 %v809, %v729
        %v811 = vadd.f32 %v810, %v733
        %v812 = vrot.slane %v811, 4
        %v813 = vadd.f32 %v811, %v812
        %v814 = vrot.slane %v813, 2
        %v815 = vadd.f32 %v813, %v814
        %v816 = vrot.slane %v815, 1
        %v817 = vadd.f32 %v815, %v816
        %v818 = vrcp.pop 64.0
        %v819 = vmul.f32 64.0, %v818
        %v820 = vsub.f32 1.0, %v819
        %v821 = vmul.f32 %v818, %v820
        %v822 = vadd.f32 %v818, %v821
        %vm823 = vweird.f32 %v818
        %v824 = vsel %vm823, %v818, %v822
        %v825 = vmul.f32 %v778, %v824
        %v826 = vmul.f32 %v791, %v824
        %v827 = vmul.f32 %v804, %v824
        %v828 = vmul.f32 %v817, %v824
        %v829 = vsub.f32 %v702, %v825
        %v830 = vsub.f32 %v703, %v826
        %v831 = vsub.f32 %v704, %v827
        %v832 = vsub.f32 %v705, %v828
        %v833 = vsub.f32 %v706, %v825
        %v834 = vsub.f32 %v707, %v826
        %v835 = vsub.f32 %v708, %v827
        %v836 = vsub.f32 %v709, %v828
        %v837 = vsub.f32 %v710, %v825
        %v838 = vsub.f32 %v711, %v826
        %v839 = vsub.f32 %v712, %v827
        %v840 = vsub.f32 %v713, %v828
        %v841 = vsub.f32 %v714, %v825
        %v842 = vsub.f32 %v715, %v826
        %v843 = vsub.f32 %v716, %v827
        %v844 = vsub.f32 %v717, %v828
        %v845 = vsub.f32 %v718, %v825
        %v846 = vsub.f32 %v719, %v826
        %v847 = vsub.f32 %v720, %v827
        %v848 = vsub.f32 %v721, %v828
        %v849 = vsub.f32 %v722, %v825
        %v850 = vsub.f32 %v723, %v826
        %v851 = vsub.f32 %v724, %v827
        %v852 = vsub.f32 %v725, %v828
        %v853 = vsub.f32 %v726, %v825
        %v854 = vsub.f32 %v727, %v826
        %v855 = vsub.f32 %v728, %v827
        %v856 = vsub.f32 %v729, %v828
        %v857 = vsub.f32 %v730, %v825
        %v858 = vsub.f32 %v731, %v826
        %v859 = vsub.f32 %v732, %v827
        %v860 = vsub.f32 %v733, %v828
        %v861 = vmul.f32 %v829, %v829
        %v862 = vmul.f32 %v830, %v830
        %v863 = vmul.f32 %v831, %v831
        %v864 = vmul.f32 %v832, %v832
        %v865 = vmul.f32 %v833, %v833
        %v866 = vmul.f32 %v834, %v834
        %v867 = vmul.f32 %v835, %v835
        %v868 = vmul.f32 %v836, %v836
        %v869 = vmul.f32 %v837, %v837
        %v870 = vmul.f32 %v838, %v838
        %v871 = vmul.f32 %v839, %v839
        %v872 = vmul.f32 %v840, %v840
        %v873 = vmul.f32 %v841, %v841
        %v874 = vmul.f32 %v842, %v842
        %v875 = vmul.f32 %v843, %v843
        %v876 = vmul.f32 %v844, %v844
        %v877 = vmul.f32 %v845, %v845
        %v878 = vmul.f32 %v846, %v846
        %v879 = vmul.f32 %v847, %v847
        %v880 = vmul.f32 %v848, %v848
        %v881 = vmul.f32 %v849, %v849
        %v882 = vmul.f32 %v850, %v850
        %v883 = vmul.f32 %v851, %v851
        %v884 = vmul.f32 %v852, %v852
        %v885 = vmul.f32 %v853, %v853
        %v886 = vmul.f32 %v854, %v854
        %v887 = vmul.f32 %v855, %v855
        %v888 = vmul.f32 %v856, %v856
        %v889 = vmul.f32 %v857, %v857
        %v890 = vmul.f32 %v858, %v858
        %v891 = vmul.f32 %v859, %v859
        %v892 = vmul.f32 %v860, %v860
        %v893 = vadd.f32 %v861, %v865
        %v894 = vadd.f32 %v893, %v869
        %v895 = vadd.f32 %v894, %v873
        %v896 = vadd.f32 %v895, %v877
        %v897 = vadd.f32 %v896, %v881
        %v898 = vadd.f32 %v897, %v885
        %v899 = vadd.f32 %v898, %v889
        %v900 = vrot.slane %v899, 4
        %v901 = vadd.f32 %v899, %v900
        %v902 = vrot.slane %v901, 2
        %v903 = vadd.f32 %v901, %v902
        %v904 = vrot.slane %v903, 1
        %v905 = vadd.f32 %v903, %v904
        %v906 = vadd.f32 %v862, %v866
        %v907 = vadd.f32 %v906, %v870
        %v908 = vadd.f32 %v907, %v874
        %v909 = vadd.f32 %v908, %v878
        %v910 = vadd.f32 %v909, %v882
        %v911 = vadd.f32 %v910, %v886
        %v912 = vadd.f32 %v911, %v890
        %v913 = vrot.slane %v912, 4
        %v914 = vadd.f32 %v912, %v913
        %v915 = vrot.slane %v914, 2
        %v916 = vadd.f32 %v914, %v915
        %v917 = vrot.slane %v916, 1
        %v918 = vadd.f32 %v916, %v917
        %v919 = vadd.f32 %v863, %v867
        %v920 = vadd.f32 %v919, %v871
        %v921 = vadd.f32 %v920, %v875
        %v922 = vadd.f32 %v921, %v879
        %v923 = vadd.f32 %v922, %v883
        %v924 = vadd.f32 %v923, %v887
        %v925 = vadd.f32 %v924, %v891
        %v926 = vrot.slane %v925, 4
        %v927 = vadd.f32 %v925, %v926
        %v928 = vrot.slane %v927, 2
        %v929 = vadd.f32 %v927, %v928
        %v930 = vrot.slane %v929, 1
        %v931 = vadd.f32 %v929, %v930
        %v932 = vadd.f32 %v864, %v868
        %v933 = vadd.f32 %v932, %v872
        %v934 = vadd.f32 %v933, %v876
        %v935 = vadd.f32 %v934, %v880
        %v936 = vadd.f32 %v935, %v884
        %v937 = vadd.f32 %v936, %v888
        %v938 = vadd.f32 %v937, %v892
        %v939 = vrot.slane %v938, 4
        %v940 = vadd.f32 %v938, %v939
        %v941 = vrot.slane %v940, 2
        %v942 = vadd.f32 %v940, %v941
        %v943 = vrot.slane %v942, 1
        %v944 = vadd.f32 %v942, %v943
        %v945 = vmul.f32 %v905, %v824
        %v946 = vmul.f32 %v918, %v824
        %v947 = vmul.f32 %v931, %v824
        %v948 = vmul.f32 %v944, %v824
        %v949 = vadd.f32 %v945, 1e-05
        %v950 = vadd.f32 %v946, 1e-05
        %v951 = vadd.f32 %v947, 1e-05
        %v952 = vadd.f32 %v948, 1e-05
        %v953 = vrsqrt.pop %v949
        %v954 = vmul.f32 %v953, %v949
        %v955 = vmul.f32 %v954, %v953
        %v956 = vmul.f32 0.5, %v955
        %v957 = vsub.f32 1.5, %v956
        %v958 = vmul.f32 %v953, %v957
        %vm959 = vweird.f32 %v949
        %vm960 = vweird.f32 %v953
        %vm961 = vmor %vm959, %vm960
        %v962 = vsel %vm961, %v953, %v958
        %v963 = vrsqrt.pop %v950
        %v964 = vmul.f32 %v963, %v950
        %v965 = vmul.f32 %v964, %v963
        %v966 = vmul.f32 0.5, %v965
        %v967 = vsub.f32 1.5, %v966
        %v968 = vmul.f32 %v963, %v967
        %vm969 = vweird.f32 %v950
        %vm970 = vweird.f32 %v963
        %vm971 = vmor %vm969, %vm970
        %v972 = vsel %vm971, %v963, %v968
        %v973 = vrsqrt.pop %v951
        %v974 = vmul.f32 %v973, %v951
        %v975 = vmul.f32 %v974, %v973
        %v976 = vmul.f32 0.5, %v975
        %v977 = vsub.f32 1.5, %v976
        %v978 = vmul.f32 %v973, %v977
        %vm979 = vweird.f32 %v951
        %vm980 = vweird.f32 %v973
        %vm981 = vmor %vm979, %vm980
        %v982 = vsel %vm981, %v973, %v978
        %v983 = vrsqrt.pop %v952
        %v984 = vmul.f32 %v983, %v952
        %v985 = vmul.f32 %v984, %v983
        %v986 = vmul.f32 0.5, %v985
        %v987 = vsub.f32 1.5, %v986
        %v988 = vmul.f32 %v983, %v987
        %vm989 = vweird.f32 %v952
        %vm990 = vweird.f32 %v983
        %vm991 = vmor %vm989, %vm990
        %v992 = vsel %vm991, %v983, %v988
        %v993 = vmul.f32 %v829, %v962
        %v994 = vmul.f32 %v830, %v972
        %v995 = vmul.f32 %v831, %v982
        %v996 = vmul.f32 %v832, %v992
        %v997 = vmul.f32 %v833, %v962
        %v998 = vmul.f32 %v834, %v972
        %v999 = vmul.f32 %v835, %v982
        %v1000 = vmul.f32 %v836, %v992
        %v1001 = vmul.f32 %v837, %v962
        %v1002 = vmul.f32 %v838, %v972
        %v1003 = vmul.f32 %v839, %v982
        %v1004 = vmul.f32 %v840, %v992
        %v1005 = vmul.f32 %v841, %v962
        %v1006 = vmul.f32 %v842, %v972
        %v1007 = vmul.f32 %v843, %v982
        %v1008 = vmul.f32 %v844, %v992
        %v1009 = vmul.f32 %v845, %v962
        %v1010 = vmul.f32 %v846, %v972
        %v1011 = vmul.f32 %v847, %v982
        %v1012 = vmul.f32 %v848, %v992
        %v1013 = vmul.f32 %v849, %v962
        %v1014 = vmul.f32 %v850, %v972
        %v1015 = vmul.f32 %v851, %v982
        %v1016 = vmul.f32 %v852, %v992
        %v1017 = vmul.f32 %v853, %v962
        %v1018 = vmul.f32 %v854, %v972
        %v1019 = vmul.f32 %v855, %v982
        %v1020 = vmul.f32 %v856, %v992
        %v1021 = vmul.f32 %v857, %v962
        %v1022 = vmul.f32 %v858, %v972
        %v1023 = vmul.f32 %v859, %v982
        %v1024 = vmul.f32 %v860, %v992
        %1025 = vset.pattern.permute.xlu0 1
        %1026 = vperm.xlu0 %1025, %v367
        %v1027 = vpop.permute.xlu0 %1026
        %1029 = vset.pattern.permute.xlu0 1
        %1030 = vperm.xlu0 %1029, %v368
        %v1031 = vpop.permute.xlu0 %1030
        %1033 = vset.pattern.permute.xlu0 1
        %1034 = vperm.xlu0 %1033, %v369
        %v1035 = vpop.permute.xlu0 %1034
        %1037 = vset.pattern.permute.xlu0 1
        %1038 = vperm.xlu0 %1037, %v370
        %v1039 = vpop.permute.xlu0 %1038
        %1041 = vset.pattern.permute.xlu0 1
        %1042 = vperm.xlu0 %1041, %v371
        %v1043 = vpop.permute.xlu0 %1042
        %1045 = vset.pattern.permute.xlu0 1
        %1046 = vperm.xlu0 %1045, %v372
        %v1047 = vpop.permute.xlu0 %1046
        %1049 = vset.pattern.permute.xlu0 1
        %1050 = vperm.xlu0 %1049, %v373
        %v1051 = vpop.permute.xlu0 %1050
        %1053 = vset.pattern.permute.xlu0 1
        %1054 = vperm.xlu0 %1053, %v374
        %v1055 = vpop.permute.xlu0 %1054
        %v1057 = vmul.f32 %v993, %v1027
        %v1058 = vmul.f32 %v994, %v1027
        %v1059 = vmul.f32 %v995, %v1027
        %v1060 = vmul.f32 %v996, %v1027
        %v1061 = vmul.f32 %v997, %v1031
        %v1062 = vmul.f32 %v998, %v1031
        %v1063 = vmul.f32 %v999, %v1031
        %v1064 = vmul.f32 %v1000, %v1031
        %v1065 = vmul.f32 %v1001, %v1035
        %v1066 = vmul.f32 %v1002, %v1035
        %v1067 = vmul.f32 %v1003, %v1035
        %v1068 = vmul.f32 %v1004, %v1035
        %v1069 = vmul.f32 %v1005, %v1039
        %v1070 = vmul.f32 %v1006, %v1039
        %v1071 = vmul.f32 %v1007, %v1039
        %v1072 = vmul.f32 %v1008, %v1039
        %v1073 = vmul.f32 %v1009, %v1043
        %v1074 = vmul.f32 %v1010, %v1043
        %v1075 = vmul.f32 %v1011, %v1043
        %v1076 = vmul.f32 %v1012, %v1043
        %v1077 = vmul.f32 %v1013, %v1047
        %v1078 = vmul.f32 %v1014, %v1047
        %v1079 = vmul.f32 %v1015, %v1047
        %v1080 = vmul.f32 %v1016, %v1047
        %v1081 = vmul.f32 %v1017, %v1051
        %v1082 = vmul.f32 %v1018, %v1051
        %v1083 = vmul.f32 %v1019, %v1051
        %v1084 = vmul.f32 %v1020, %v1051
        %v1085 = vmul.f32 %v1021, %v1055
        %v1086 = vmul.f32 %v1022, %v1055
        %v1087 = vmul.f32 %v1023, %v1055
        %v1088 = vmul.f32 %v1024, %v1055
        %1089 = vset.pattern.permute.xlu0 2
        %1090 = vperm.xlu0 %1089, %v367
        %v1091 = vpop.permute.xlu0 %1090
        %1093 = vset.pattern.permute.xlu0 2
        %1094 = vperm.xlu0 %1093, %v368
        %v1095 = vpop.permute.xlu0 %1094
        %1097 = vset.pattern.permute.xlu0 2
        %1098 = vperm.xlu0 %1097, %v369
        %v1099 = vpop.permute.xlu0 %1098
        %1101 = vset.pattern.permute.xlu0 2
        %1102 = vperm.xlu0 %1101, %v370
        %v1103 = vpop.permute.xlu0 %1102
        %1105 = vset.pattern.permute.xlu0 2
        %1106 = vperm.xlu0 %1105, %v371
        %v1107 = vpop.permute.xlu0 %1106
        %1109 = vset.pattern.permute.xlu0 2
        %1110 = vperm.xlu0 %1109, %v372
        %v1111 = vpop.permute.xlu0 %1110
        %1113 = vset.pattern.permute.xlu0 2
        %1114 = vperm.xlu0 %1113, %v373
        %v1115 = vpop.permute.xlu0 %1114
        %1117 = vset.pattern.permute.xlu0 2
        %1118 = vperm.xlu0 %1117, %v374
        %v1119 = vpop.permute.xlu0 %1118
        %v1121 = vadd.f32 %v1057, %v1091
        %v1122 = vadd.f32 %v1058, %v1091
        %v1123 = vadd.f32 %v1059, %v1091
        %v1124 = vadd.f32 %v1060, %v1091
        %v1125 = vadd.f32 %v1061, %v1095
        %v1126 = vadd.f32 %v1062, %v1095
        %v1127 = vadd.f32 %v1063, %v1095
        %v1128 = vadd.f32 %v1064, %v1095
        %v1129 = vadd.f32 %v1065, %v1099
        %v1130 = vadd.f32 %v1066, %v1099
        %v1131 = vadd.f32 %v1067, %v1099
        %v1132 = vadd.f32 %v1068, %v1099
        %v1133 = vadd.f32 %v1069, %v1103
        %v1134 = vadd.f32 %v1070, %v1103
        %v1135 = vadd.f32 %v1071, %v1103
        %v1136 = vadd.f32 %v1072, %v1103
        %v1137 = vadd.f32 %v1073, %v1107
        %v1138 = vadd.f32 %v1074, %v1107
        %v1139 = vadd.f32 %v1075, %v1107
        %v1140 = vadd.f32 %v1076, %v1107
        %v1141 = vadd.f32 %v1077, %v1111
        %v1142 = vadd.f32 %v1078, %v1111
        %v1143 = vadd.f32 %v1079, %v1111
        %v1144 = vadd.f32 %v1080, %v1111
        %v1145 = vadd.f32 %v1081, %v1115
        %v1146 = vadd.f32 %v1082, %v1115
        %v1147 = vadd.f32 %v1083, %v1115
        %v1148 = vadd.f32 %v1084, %v1115
        %v1149 = vadd.f32 %v1085, %v1119
        %v1150 = vadd.f32 %v1086, %v1119
        %v1151 = vadd.f32 %v1087, %v1119
        %v1152 = vadd.f32 %v1088, %v1119
        %v1153 = vld [vmem:[%s3] sm:$0xf]
        %v1154 = vld [vmem:[%s3 + $0x4] sm:$0xf]
        %v1155 = vld [vmem:[%s3 + $0x8] sm:$0xf]
        %v1156 = vld [vmem:[%s3 + $0xc] sm:$0xf]
        %v1157 = vld [vmem:[%s3 + $0x10] sm:$0xf]
        %v1158 = vld [vmem:[%s3 + $0x14] sm:$0xf]
        %v1159 = vld [vmem:[%s3 + $0x18] sm:$0xf]
        %v1160 = vld [vmem:[%s3 + $0x1c] sm:$0xf]
        %v1161 = vld [vmem:[%s3 + $0x20] sm:$0xf]
        %v1162 = vld [vmem:[%s3 + $0x24] sm:$0xf]
        %v1163 = vld [vmem:[%s3 + $0x28] sm:$0xf]
        %v1164 = vld [vmem:[%s3 + $0x2c] sm:$0xf]
        %v1165 = vld [vmem:[%s3 + $0x30] sm:$0xf]
        %v1166 = vld [vmem:[%s3 + $0x34] sm:$0xf]
        %v1167 = vld [vmem:[%s3 + $0x38] sm:$0xf]
        %v1168 = vld [vmem:[%s3 + $0x3c] sm:$0xf]
        %v1169 = vld [vmem:[%s3 + $0x40] sm:$0xf]
        %v1170 = vld [vmem:[%s3 + $0x44] sm:$0xf]
        %v1171 = vld [vmem:[%s3 + $0x48] sm:$0xf]
        %v1172 = vld [vmem:[%s3 + $0x4c] sm:$0xf]
        %v1173 = vld [vmem:[%s3 + $0x50] sm:$0xf]
        %v1174 = vld [vmem:[%s3 + $0x54] sm:$0xf]
        %v1175 = vld [vmem:[%s3 + $0x58] sm:$0xf]
        %v1176 = vld [vmem:[%s3 + $0x5c] sm:$0xf]
        %v1177 = vpack.c.bf16 %v1125, %v1121
        %v1178 = vpack.c.bf16 %v1126, %v1122
        %v1179 = vpack.c.bf16 %v1127, %v1123
        %v1180 = vpack.c.bf16 %v1128, %v1124
        %v1181 = vpack.c.bf16 %v1133, %v1129
        %v1182 = vpack.c.bf16 %v1134, %v1130
        %v1183 = vpack.c.bf16 %v1135, %v1131
        %v1184 = vpack.c.bf16 %v1136, %v1132
        %v1185 = vpack.c.bf16 %v1141, %v1137
        %v1186 = vpack.c.bf16 %v1142, %v1138
        %v1187 = vpack.c.bf16 %v1143, %v1139
        %v1188 = vpack.c.bf16 %v1144, %v1140
        %v1189 = vpack.c.bf16 %v1149, %v1145
        %v1190 = vpack.c.bf16 %v1150, %v1146
        %v1191 = vpack.c.bf16 %v1151, %v1147
        %v1192 = vpack.c.bf16 %v1152, %v1148
        %v1217 = vunpack.c.l.b16 %v1153
        %v1218 = vunpack.c.l.b16 %v1154
        %v1219 = vunpack.c.l.b16 %v1155
        %v1220 = vunpack.c.l.b16 %v1156
        %v1221 = vunpack.c.l.b16 %v1157
        %v1222 = vunpack.c.l.b16 %v1158
        %v1223 = vunpack.c.l.b16 %v1159
        %v1224 = vunpack.c.l.b16 %v1160
        %v1225 = vunpack.c.l.b16 %v1161
        %v1226 = vunpack.c.l.b16 %v1162
        %v1227 = vunpack.c.l.b16 %v1163
        %v1228 = vunpack.c.l.b16 %v1164
        %v1229 = vunpack.c.l.b16 %v1165
        %v1230 = vunpack.c.l.b16 %v1166
        %v1231 = vunpack.c.l.b16 %v1167
        %v1232 = vunpack.c.l.b16 %v1168
        %v1233 = vunpack.c.l.b16 %v1169
        %v1234 = vunpack.c.l.b16 %v1170
        %v1235 = vunpack.c.l.b16 %v1171
        %v1236 = vunpack.c.l.b16 %v1172
        %v1237 = vunpack.c.l.b16 %v1173
        %v1238 = vunpack.c.l.b16 %v1174
        %v1239 = vunpack.c.l.b16 %v1175
        %v1240 = vunpack.c.l.b16 %v1176
        %v1241 = vpack.c.b16 %v1218, %v1217
        %v1242 = vpack.c.b16 %v1220, %v1219
        %v1243 = vpack.c.b16 %v1222, %v1221
        %v1244 = vpack.c.b16 %v1224, %v1223
        %v1245 = vpack.c.b16 %v1226, %v1225
        %v1246 = vpack.c.b16 %v1228, %v1227
        %v1247 = vpack.c.b16 %v1230, %v1229
        %v1248 = vpack.c.b16 %v1232, %v1231
        %v1249 = vpack.c.b16 %v1234, %v1233
        %v1250 = vpack.c.b16 %v1236, %v1235
        %v1251 = vpack.c.b16 %v1238, %v1237
        %v1252 = vpack.c.b16 %v1240, %v1239
        %vm1253 = vcmask 523264
        %v1255 = vsel %vm1253, %v1241, 0
        %v1258 = vsel %vm1253, %v1242, 0
        %v1261 = vsel %vm1253, %v1243, 0
        %v1264 = vsel %vm1253, %v1244, 0
        %v1267 = vsel %vm1253, %v1245, 0
        %v1270 = vsel %vm1253, %v1246, 0
        %v1273 = vsel %vm1253, %v1247, 0
        %v1276 = vsel %vm1253, %v1248, 0
        %v1279 = vsel %vm1253, %v1249, 0
        %v1282 = vsel %vm1253, %v1250, 0
        %v1285 = vsel %vm1253, %v1251, 0
        %v1288 = vsel %vm1253, %v1252, 0
        %1290 = vmatpush.bf16.msra.mxu0 0
        %1291 = vmatpush.bf16.msra.mxu0 0
        %1292 = vmatpush.bf16.msra.mxu0 0
        %1293 = vmatpush.bf16.msra.mxu0 0
        %1294 = vmatpush.bf16.msra.mxu0 %v1189
        %1295 = vmatpush.bf16.msra.mxu0 %v1185
        %1296 = vmatpush.bf16.msra.mxu0 %v1181
        %1297 = vmatpush.bf16.msra.mxu0 %v1177
        %1298 = vmatmul.bf16.gmra.mxu0 %v1255
        %v1299 = vpop.f32.mrf.mxu0
        %v1300 = vadd.f32 0.0, %v1299
        %v1301 = vpop.f32.mrf.mxu0
        %v1302 = vadd.f32 0.0, %v1301
        %1303 = vmatmul.bf16.gmra.mxu0 %v1258
        %v1304 = vpop.f32.mrf.mxu0
        %v1305 = vadd.f32 0.0, %v1304
        %v1306 = vpop.f32.mrf.mxu0
        %v1307 = vadd.f32 0.0, %v1306
        %1308 = vmatmul.bf16.gmra.mxu0 %v1261
        %v1309 = vpop.f32.mrf.mxu0
        %v1310 = vadd.f32 0.0, %v1309
        %v1311 = vpop.f32.mrf.mxu0
        %v1312 = vadd.f32 0.0, %v1311
        %1313 = vmatmul.bf16.gmra.mxu0 %v1264
        %v1314 = vpop.f32.mrf.mxu0
        %v1315 = vadd.f32 0.0, %v1314
        %v1316 = vpop.f32.mrf.mxu0
        %v1317 = vadd.f32 0.0, %v1316
        %1318 = vmatmul.bf16.gmra.mxu0 %v1267
        %v1319 = vpop.f32.mrf.mxu0
        %v1320 = vadd.f32 0.0, %v1319
        %v1321 = vpop.f32.mrf.mxu0
        %v1322 = vadd.f32 0.0, %v1321
        %1323 = vmatmul.bf16.gmra.mxu0 %v1270
        %v1324 = vpop.f32.mrf.mxu0
        %v1325 = vadd.f32 0.0, %v1324
        %v1326 = vpop.f32.mrf.mxu0
        %v1327 = vadd.f32 0.0, %v1326
        %1328 = vmatmul.bf16.gmra.mxu0 %v1273
        %v1329 = vpop.f32.mrf.mxu0
        %v1330 = vadd.f32 0.0, %v1329
        %v1331 = vpop.f32.mrf.mxu0
        %v1332 = vadd.f32 0.0, %v1331
        %1333 = vmatmul.bf16.gmra.mxu0 %v1276
        %v1334 = vpop.f32.mrf.mxu0
        %v1335 = vadd.f32 0.0, %v1334
        %v1336 = vpop.f32.mrf.mxu0
        %v1337 = vadd.f32 0.0, %v1336
        %1338 = vmatmul.bf16.gmra.mxu0 %v1279
        %v1339 = vpop.f32.mrf.mxu0
        %v1340 = vadd.f32 0.0, %v1339
        %v1341 = vpop.f32.mrf.mxu0
        %v1342 = vadd.f32 0.0, %v1341
        %1343 = vmatmul.bf16.gmra.mxu0 %v1282
        %v1344 = vpop.f32.mrf.mxu0
        %v1345 = vadd.f32 0.0, %v1344
        %v1346 = vpop.f32.mrf.mxu0
        %v1347 = vadd.f32 0.0, %v1346
        %1348 = vmatmul.bf16.gmra.mxu0 %v1285
        %v1349 = vpop.f32.mrf.mxu0
        %v1350 = vadd.f32 0.0, %v1349
        %v1351 = vpop.f32.mrf.mxu0
        %v1352 = vadd.f32 0.0, %v1351
        %1353 = vmatmul.bf16.gmra.mxu0 %v1288
        %v1354 = vpop.f32.mrf.mxu0
        %v1355 = vadd.f32 0.0, %v1354
        %v1356 = vpop.f32.mrf.mxu0
        %v1357 = vadd.f32 0.0, %v1356
        %1358 = vdwg.mxu0
        %1359 = vmatpush.bf16.msra.mxu0 0
        %1360 = vmatpush.bf16.msra.mxu0 0
        %1361 = vmatpush.bf16.msra.mxu0 0
        %1362 = vmatpush.bf16.msra.mxu0 0
        %1363 = vmatpush.bf16.msra.mxu0 %v1190
        %1364 = vmatpush.bf16.msra.mxu0 %v1186
        %1365 = vmatpush.bf16.msra.mxu0 %v1182
        %1366 = vmatpush.bf16.msra.mxu0 %v1178
        %1367 = vmatmul.bf16.gmra.mxu0 %v1255
        %v1368 = vpop.f32.mrf.mxu0
        %v1369 = vadd.f32 0.0, %v1368
        %v1370 = vpop.f32.mrf.mxu0
        %v1371 = vadd.f32 0.0, %v1370
        %1372 = vmatmul.bf16.gmra.mxu0 %v1258
        %v1373 = vpop.f32.mrf.mxu0
        %v1374 = vadd.f32 0.0, %v1373
        %v1375 = vpop.f32.mrf.mxu0
        %v1376 = vadd.f32 0.0, %v1375
        %1377 = vmatmul.bf16.gmra.mxu0 %v1261
        %v1378 = vpop.f32.mrf.mxu0
        %v1379 = vadd.f32 0.0, %v1378
        %v1380 = vpop.f32.mrf.mxu0
        %v1381 = vadd.f32 0.0, %v1380
        %1382 = vmatmul.bf16.gmra.mxu0 %v1264
        %v1383 = vpop.f32.mrf.mxu0
        %v1384 = vadd.f32 0.0, %v1383
        %v1385 = vpop.f32.mrf.mxu0
        %v1386 = vadd.f32 0.0, %v1385
        %1387 = vmatmul.bf16.gmra.mxu0 %v1267
        %v1388 = vpop.f32.mrf.mxu0
        %v1389 = vadd.f32 0.0, %v1388
        %v1390 = vpop.f32.mrf.mxu0
        %v1391 = vadd.f32 0.0, %v1390
        %1392 = vmatmul.bf16.gmra.mxu0 %v1270
        %v1393 = vpop.f32.mrf.mxu0
        %v1394 = vadd.f32 0.0, %v1393
        %v1395 = vpop.f32.mrf.mxu0
        %v1396 = vadd.f32 0.0, %v1395
        %1397 = vmatmul.bf16.gmra.mxu0 %v1273
        %v1398 = vpop.f32.mrf.mxu0
        %v1399 = vadd.f32 0.0, %v1398
        %v1400 = vpop.f32.mrf.mxu0
        %v1401 = vadd.f32 0.0, %v1400
        %1402 = vmatmul.bf16.gmra.mxu0 %v1276
        %v1403 = vpop.f32.mrf.mxu0
        %v1404 = vadd.f32 0.0, %v1403
        %v1405 = vpop.f32.mrf.mxu0
        %v1406 = vadd.f32 0.0, %v1405
        %1407 = vmatmul.bf16.gmra.mxu0 %v1279
        %v1408 = vpop.f32.mrf.mxu0
        %v1409 = vadd.f32 0.0, %v1408
        %v1410 = vpop.f32.mrf.mxu0
        %v1411 = vadd.f32 0.0, %v1410
        %1412 = vmatmul.bf16.gmra.mxu0 %v1282
        %v1413 = vpop.f32.mrf.mxu0
        %v1414 = vadd.f32 0.0, %v1413
        %v1415 = vpop.f32.mrf.mxu0
        %v1416 = vadd.f32 0.0, %v1415
        %1417 = vmatmul.bf16.gmra.mxu0 %v1285
        %v1418 = vpop.f32.mrf.mxu0
        %v1419 = vadd.f32 0.0, %v1418
        %v1420 = vpop.f32.mrf.mxu0
        %v1421 = vadd.f32 0.0, %v1420
        %1422 = vmatmul.bf16.gmra.mxu0 %v1288
        %v1423 = vpop.f32.mrf.mxu0
        %v1424 = vadd.f32 0.0, %v1423
        %v1425 = vpop.f32.mrf.mxu0
        %v1426 = vadd.f32 0.0, %v1425
        %1427 = vdwg.mxu0
        %1428 = vmatpush.bf16.msra.mxu0 0
        %1429 = vmatpush.bf16.msra.mxu0 0
        %1430 = vmatpush.bf16.msra.mxu0 0
        %1431 = vmatpush.bf16.msra.mxu0 0
        %1432 = vmatpush.bf16.msra.mxu0 %v1191
        %1433 = vmatpush.bf16.msra.mxu0 %v1187
        %1434 = vmatpush.bf16.msra.mxu0 %v1183
        %1435 = vmatpush.bf16.msra.mxu0 %v1179
        %1436 = vmatmul.bf16.gmra.mxu0 %v1255
        %v1437 = vpop.f32.mrf.mxu0
        %v1438 = vadd.f32 0.0, %v1437
        %v1439 = vpop.f32.mrf.mxu0
        %v1440 = vadd.f32 0.0, %v1439
        %1441 = vmatmul.bf16.gmra.mxu0 %v1258
        %v1442 = vpop.f32.mrf.mxu0
        %v1443 = vadd.f32 0.0, %v1442
        %v1444 = vpop.f32.mrf.mxu0
        %v1445 = vadd.f32 0.0, %v1444
        %1446 = vmatmul.bf16.gmra.mxu0 %v1261
        %v1447 = vpop.f32.mrf.mxu0
        %v1448 = vadd.f32 0.0, %v1447
        %v1449 = vpop.f32.mrf.mxu0
        %v1450 = vadd.f32 0.0, %v1449
        %1451 = vmatmul.bf16.gmra.mxu0 %v1264
        %v1452 = vpop.f32.mrf.mxu0
        %v1453 = vadd.f32 0.0, %v1452
        %v1454 = vpop.f32.mrf.mxu0
        %v1455 = vadd.f32 0.0, %v1454
        %1456 = vmatmul.bf16.gmra.mxu0 %v1267
        %v1457 = vpop.f32.mrf.mxu0
        %v1458 = vadd.f32 0.0, %v1457
        %v1459 = vpop.f32.mrf.mxu0
        %v1460 = vadd.f32 0.0, %v1459
        %1461 = vmatmul.bf16.gmra.mxu0 %v1270
        %v1462 = vpop.f32.mrf.mxu0
        %v1463 = vadd.f32 0.0, %v1462
        %v1464 = vpop.f32.mrf.mxu0
        %v1465 = vadd.f32 0.0, %v1464
        %1466 = vmatmul.bf16.gmra.mxu0 %v1273
        %v1467 = vpop.f32.mrf.mxu0
        %v1468 = vadd.f32 0.0, %v1467
        %v1469 = vpop.f32.mrf.mxu0
        %v1470 = vadd.f32 0.0, %v1469
        %1471 = vmatmul.bf16.gmra.mxu0 %v1276
        %v1472 = vpop.f32.mrf.mxu0
        %v1473 = vadd.f32 0.0, %v1472
        %v1474 = vpop.f32.mrf.mxu0
        %v1475 = vadd.f32 0.0, %v1474
        %1476 = vmatmul.bf16.gmra.mxu0 %v1279
        %v1477 = vpop.f32.mrf.mxu0
        %v1478 = vadd.f32 0.0, %v1477
        %v1479 = vpop.f32.mrf.mxu0
        %v1480 = vadd.f32 0.0, %v1479
        %1481 = vmatmul.bf16.gmra.mxu0 %v1282
        %v1482 = vpop.f32.mrf.mxu0
        %v1483 = vadd.f32 0.0, %v1482
        %v1484 = vpop.f32.mrf.mxu0
        %v1485 = vadd.f32 0.0, %v1484
        %1486 = vmatmul.bf16.gmra.mxu0 %v1285
        %v1487 = vpop.f32.mrf.mxu0
        %v1488 = vadd.f32 0.0, %v1487
        %v1489 = vpop.f32.mrf.mxu0
        %v1490 = vadd.f32 0.0, %v1489
        %1491 = vmatmul.bf16.gmra.mxu0 %v1288
        %v1492 = vpop.f32.mrf.mxu0
        %v1493 = vadd.f32 0.0, %v1492
        %v1494 = vpop.f32.mrf.mxu0
        %v1495 = vadd.f32 0.0, %v1494
        %1496 = vdwg.mxu0
        %1497 = vmatpush.bf16.msra.mxu0 0
        %1498 = vmatpush.bf16.msra.mxu0 0
        %1499 = vmatpush.bf16.msra.mxu0 0
        %1500 = vmatpush.bf16.msra.mxu0 0
        %1501 = vmatpush.bf16.msra.mxu0 %v1192
        %1502 = vmatpush.bf16.msra.mxu0 %v1188
        %1503 = vmatpush.bf16.msra.mxu0 %v1184
        %1504 = vmatpush.bf16.msra.mxu0 %v1180
        %1505 = vmatmul.bf16.gmra.mxu0 %v1255
        %v1506 = vpop.f32.mrf.mxu0
        %v1507 = vadd.f32 0.0, %v1506
        %v1508 = vpop.f32.mrf.mxu0
        %v1509 = vadd.f32 0.0, %v1508
        %1510 = vmatmul.bf16.gmra.mxu0 %v1258
        %v1511 = vpop.f32.mrf.mxu0
        %v1512 = vadd.f32 0.0, %v1511
        %v1513 = vpop.f32.mrf.mxu0
        %v1514 = vadd.f32 0.0, %v1513
        %1515 = vmatmul.bf16.gmra.mxu0 %v1261
        %v1516 = vpop.f32.mrf.mxu0
        %v1517 = vadd.f32 0.0, %v1516
        %v1518 = vpop.f32.mrf.mxu0
        %v1519 = vadd.f32 0.0, %v1518
        %1520 = vmatmul.bf16.gmra.mxu0 %v1264
        %v1521 = vpop.f32.mrf.mxu0
        %v1522 = vadd.f32 0.0, %v1521
        %v1523 = vpop.f32.mrf.mxu0
        %v1524 = vadd.f32 0.0, %v1523
        %1525 = vmatmul.bf16.gmra.mxu0 %v1267
        %v1526 = vpop.f32.mrf.mxu0
        %v1527 = vadd.f32 0.0, %v1526
        %v1528 = vpop.f32.mrf.mxu0
        %v1529 = vadd.f32 0.0, %v1528
        %1530 = vmatmul.bf16.gmra.mxu0 %v1270
        %v1531 = vpop.f32.mrf.mxu0
        %v1532 = vadd.f32 0.0, %v1531
        %v1533 = vpop.f32.mrf.mxu0
        %v1534 = vadd.f32 0.0, %v1533
        %1535 = vmatmul.bf16.gmra.mxu0 %v1273
        %v1536 = vpop.f32.mrf.mxu0
        %v1537 = vadd.f32 0.0, %v1536
        %v1538 = vpop.f32.mrf.mxu0
        %v1539 = vadd.f32 0.0, %v1538
        %1540 = vmatmul.bf16.gmra.mxu0 %v1276
        %v1541 = vpop.f32.mrf.mxu0
        %v1542 = vadd.f32 0.0, %v1541
        %v1543 = vpop.f32.mrf.mxu0
        %v1544 = vadd.f32 0.0, %v1543
        %1545 = vmatmul.bf16.gmra.mxu0 %v1279
        %v1546 = vpop.f32.mrf.mxu0
        %v1547 = vadd.f32 0.0, %v1546
        %v1548 = vpop.f32.mrf.mxu0
        %v1549 = vadd.f32 0.0, %v1548
        %1550 = vmatmul.bf16.gmra.mxu0 %v1282
        %v1551 = vpop.f32.mrf.mxu0
        %v1552 = vadd.f32 0.0, %v1551
        %v1553 = vpop.f32.mrf.mxu0
        %v1554 = vadd.f32 0.0, %v1553
        %1555 = vmatmul.bf16.gmra.mxu0 %v1285
        %v1556 = vpop.f32.mrf.mxu0
        %v1557 = vadd.f32 0.0, %v1556
        %v1558 = vpop.f32.mrf.mxu0
        %v1559 = vadd.f32 0.0, %v1558
        %1560 = vmatmul.bf16.gmra.mxu0 %v1288
        %v1561 = vpop.f32.mrf.mxu0
        %v1562 = vadd.f32 0.0, %v1561
        %v1563 = vpop.f32.mrf.mxu0
        %v1564 = vadd.f32 0.0, %v1563
        %1565 = vdwg.mxu0
        %v1566 = vpack.c.bf16 %v1369, %v1300
        %v1567 = vpack.c.bf16 %v1507, %v1438
        %v1568 = vpack.c.bf16 %v1371, %v1302
        %v1569 = vpack.c.bf16 %v1509, %v1440
        %v1570 = vpack.c.bf16 %v1374, %v1305
        %v1571 = vpack.c.bf16 %v1512, %v1443
        %v1572 = vpack.c.bf16 %v1376, %v1307
        %v1573 = vpack.c.bf16 %v1514, %v1445
        %v1574 = vpack.c.bf16 %v1379, %v1310
        %v1575 = vpack.c.bf16 %v1517, %v1448
        %v1576 = vpack.c.bf16 %v1381, %v1312
        %v1577 = vpack.c.bf16 %v1519, %v1450
        %v1578 = vpack.c.bf16 %v1384, %v1315
        %v1579 = vpack.c.bf16 %v1522, %v1453
        %v1580 = vpack.c.bf16 %v1386, %v1317
        %v1581 = vpack.c.bf16 %v1524, %v1455
        %1582 = vst [vmem:[%s319] sm:$0xff] %v1566
        %1583 = vst [vmem:[%s319 + $0x8] sm:$0xff] %v1567
        %1584 = vst [vmem:[%s319 + $0x10] sm:$0xff] %v1568
        %1585 = vst [vmem:[%s319 + $0x18] sm:$0xff] %v1569
        %1586 = vst [vmem:[%s319 + $0x20] sm:$0xff] %v1570
        %1587 = vst [vmem:[%s319 + $0x28] sm:$0xff] %v1571
        %1588 = vst [vmem:[%s319 + $0x30] sm:$0xff] %v1572
        %1589 = vst [vmem:[%s319 + $0x38] sm:$0xff] %v1573
        %1590 = vst [vmem:[%s319 + $0x40] sm:$0xff] %v1574
        %1591 = vst [vmem:[%s319 + $0x48] sm:$0xff] %v1575
        %1592 = vst [vmem:[%s319 + $0x50] sm:$0xff] %v1576
        %1593 = vst [vmem:[%s319 + $0x58] sm:$0xff] %v1577
        %1594 = vst [vmem:[%s319 + $0x60] sm:$0xff] %v1578
        %1595 = vst [vmem:[%s319 + $0x68] sm:$0xff] %v1579
        %1596 = vst [vmem:[%s319 + $0x70] sm:$0xff] %v1580
        %1597 = vst [vmem:[%s319 + $0x78] sm:$0xff] %v1581
        %1598 = vxpose.xlu0.b32.start [1/16] %v1320, 128
        %1599 = vxpose.xlu0.b32.cont [2/16] %v1322, 128
        %1600 = vxpose.xlu0.b32.cont [3/16] %v1325, 128
        %1601 = vxpose.xlu0.b32.cont [4/16] %v1327, 128
        %1602 = vxpose.xlu0.b32.cont [5/16] %v1330, 128
        %1603 = vxpose.xlu0.b32.cont [6/16] %v1332, 128
        %1604 = vxpose.xlu0.b32.cont [7/16] %v1335, 128
        %1605 = vxpose.xlu0.b32.cont [8/16] %v1337, 128
        %1606 = vxpose.xlu0.b32.cont [9/16] 0.0, 128
        %1607 = vxpose.xlu0.b32.cont [10/16] 0.0, 128
        %1608 = vxpose.xlu0.b32.cont [11/16] 0.0, 128
        %1609 = vxpose.xlu0.b32.cont [12/16] 0.0, 128
        %1610 = vxpose.xlu0.b32.cont [13/16] 0.0, 128
        %1611 = vxpose.xlu0.b32.cont [14/16] 0.0, 128
        %1612 = vxpose.xlu0.b32.cont [15/16] 0.0, 128
        %1613 = vxpose.xlu0.b32.end [16/16] 0.0, 128
        %v1614 = vpop.trf.xlu0
        %v1615 = vpop.trf.xlu0
        %v1616 = vpop.trf.xlu0
        %v1617 = vpop.trf.xlu0
        %v1618 = vpop.trf.xlu0
        %v1619 = vpop.trf.xlu0
        %v1620 = vpop.trf.xlu0
        %v1621 = vpop.trf.xlu0
        %v1622 = vpop.trf.xlu0
        %v1623 = vpop.trf.xlu0
        %v1624 = vpop.trf.xlu0
        %v1625 = vpop.trf.xlu0
        %v1626 = vpop.trf.xlu0
        %v1627 = vpop.trf.xlu0
        %v1628 = vpop.trf.xlu0
        %v1629 = vpop.trf.xlu0
        %1630 = vxpose.xlu0.b32.start [1/16] %v1389, 128
        %1631 = vxpose.xlu0.b32.cont [2/16] %v1391, 128
        %1632 = vxpose.xlu0.b32.cont [3/16] %v1394, 128
        %1633 = vxpose.xlu0.b32.cont [4/16] %v1396, 128
        %1634 = vxpose.xlu0.b32.cont [5/16] %v1399, 128
        %1635 = vxpose.xlu0.b32.cont [6/16] %v1401, 128
        %1636 = vxpose.xlu0.b32.cont [7/16] %v1404, 128
        %1637 = vxpose.xlu0.b32.cont [8/16] %v1406, 128
        %1638 = vxpose.xlu0.b32.cont [9/16] 0.0, 128
        %1639 = vxpose.xlu0.b32.cont [10/16] 0.0, 128
        %1640 = vxpose.xlu0.b32.cont [11/16] 0.0, 128
        %1641 = vxpose.xlu0.b32.cont [12/16] 0.0, 128
        %1642 = vxpose.xlu0.b32.cont [13/16] 0.0, 128
        %1643 = vxpose.xlu0.b32.cont [14/16] 0.0, 128
        %1644 = vxpose.xlu0.b32.cont [15/16] 0.0, 128
        %1645 = vxpose.xlu0.b32.end [16/16] 0.0, 128
        %v1646 = vpop.trf.xlu0
        %v1647 = vpop.trf.xlu0
        %v1648 = vpop.trf.xlu0
        %v1649 = vpop.trf.xlu0
        %v1650 = vpop.trf.xlu0
        %v1651 = vpop.trf.xlu0
        %v1652 = vpop.trf.xlu0
        %v1653 = vpop.trf.xlu0
        %v1654 = vpop.trf.xlu0
        %v1655 = vpop.trf.xlu0
        %v1656 = vpop.trf.xlu0
        %v1657 = vpop.trf.xlu0
        %v1658 = vpop.trf.xlu0
        %v1659 = vpop.trf.xlu0
        %v1660 = vpop.trf.xlu0
        %v1661 = vpop.trf.xlu0
        %1662 = vxpose.xlu0.b32.start [1/16] %v1458, 128
        %1663 = vxpose.xlu0.b32.cont [2/16] %v1460, 128
        %1664 = vxpose.xlu0.b32.cont [3/16] %v1463, 128
        %1665 = vxpose.xlu0.b32.cont [4/16] %v1465, 128
        %1666 = vxpose.xlu0.b32.cont [5/16] %v1468, 128
        %1667 = vxpose.xlu0.b32.cont [6/16] %v1470, 128
        %1668 = vxpose.xlu0.b32.cont [7/16] %v1473, 128
        %1669 = vxpose.xlu0.b32.cont [8/16] %v1475, 128
        %1670 = vxpose.xlu0.b32.cont [9/16] 0.0, 128
        %1671 = vxpose.xlu0.b32.cont [10/16] 0.0, 128
        %1672 = vxpose.xlu0.b32.cont [11/16] 0.0, 128
        %1673 = vxpose.xlu0.b32.cont [12/16] 0.0, 128
        %1674 = vxpose.xlu0.b32.cont [13/16] 0.0, 128
        %1675 = vxpose.xlu0.b32.cont [14/16] 0.0, 128
        %1676 = vxpose.xlu0.b32.cont [15/16] 0.0, 128
        %1677 = vxpose.xlu0.b32.end [16/16] 0.0, 128
        %v1678 = vpop.trf.xlu0
        %v1679 = vpop.trf.xlu0
        %v1680 = vpop.trf.xlu0
        %v1681 = vpop.trf.xlu0
        %v1682 = vpop.trf.xlu0
        %v1683 = vpop.trf.xlu0
        %v1684 = vpop.trf.xlu0
        %v1685 = vpop.trf.xlu0
        %v1686 = vpop.trf.xlu0
        %v1687 = vpop.trf.xlu0
        %v1688 = vpop.trf.xlu0
        %v1689 = vpop.trf.xlu0
        %v1690 = vpop.trf.xlu0
        %v1691 = vpop.trf.xlu0
        %v1692 = vpop.trf.xlu0
        %v1693 = vpop.trf.xlu0
        %1694 = vxpose.xlu0.b32.start [1/16] %v1527, 128
        %1695 = vxpose.xlu0.b32.cont [2/16] %v1529, 128
        %1696 = vxpose.xlu0.b32.cont [3/16] %v1532, 128
        %1697 = vxpose.xlu0.b32.cont [4/16] %v1534, 128
        %1698 = vxpose.xlu0.b32.cont [5/16] %v1537, 128
        %1699 = vxpose.xlu0.b32.cont [6/16] %v1539, 128
        %1700 = vxpose.xlu0.b32.cont [7/16] %v1542, 128
        %1701 = vxpose.xlu0.b32.cont [8/16] %v1544, 128
        %1702 = vxpose.xlu0.b32.cont [9/16] 0.0, 128
        %1703 = vxpose.xlu0.b32.cont [10/16] 0.0, 128
        %1704 = vxpose.xlu0.b32.cont [11/16] 0.0, 128
        %1705 = vxpose.xlu0.b32.cont [12/16] 0.0, 128
        %1706 = vxpose.xlu0.b32.cont [13/16] 0.0, 128
        %1707 = vxpose.xlu0.b32.cont [14/16] 0.0, 128
        %1708 = vxpose.xlu0.b32.cont [15/16] 0.0, 128
        %1709 = vxpose.xlu0.b32.end [16/16] 0.0, 128
        %v1710 = vpop.trf.xlu0
        %v1711 = vpop.trf.xlu0
        %v1712 = vpop.trf.xlu0
        %v1713 = vpop.trf.xlu0
        %v1714 = vpop.trf.xlu0
        %v1715 = vpop.trf.xlu0
        %v1716 = vpop.trf.xlu0
        %v1717 = vpop.trf.xlu0
        %v1718 = vpop.trf.xlu0
        %v1719 = vpop.trf.xlu0
        %v1720 = vpop.trf.xlu0
        %v1721 = vpop.trf.xlu0
        %v1722 = vpop.trf.xlu0
        %v1723 = vpop.trf.xlu0
        %v1724 = vpop.trf.xlu0
        %v1725 = vpop.trf.xlu0
        %v1726 = vpack.c.bf16 %v1614, %v1614
        %v1727 = vpack.c.bf16 %v1615, %v1615
        %v1728 = vpack.c.bf16 %v1616, %v1616
        %v1729 = vpack.c.bf16 %v1617, %v1617
        %v1730 = vpack.c.bf16 %v1618, %v1618
        %v1731 = vpack.c.bf16 %v1619, %v1619
        %v1732 = vpack.c.bf16 %v1620, %v1620
        %v1733 = vpack.c.bf16 %v1621, %v1621
        %v1734 = vpack.c.bf16 %v1622, %v1622
        %v1735 = vpack.c.bf16 %v1623, %v1623
        %v1736 = vpack.c.bf16 %v1624, %v1624
        %v1737 = vpack.c.bf16 %v1625, %v1625
        %v1738 = vpack.c.bf16 %v1626, %v1626
        %v1739 = vpack.c.bf16 %v1627, %v1627
        %v1740 = vpack.c.bf16 %v1628, %v1628
        %v1741 = vpack.c.bf16 %v1629, %v1629
        %v1742 = vpack.c.bf16 %v1646, %v1646
        %v1743 = vpack.c.bf16 %v1647, %v1647
        %v1744 = vpack.c.bf16 %v1648, %v1648
        %v1745 = vpack.c.bf16 %v1649, %v1649
        %v1746 = vpack.c.bf16 %v1650, %v1650
        %v1747 = vpack.c.bf16 %v1651, %v1651
        %v1748 = vpack.c.bf16 %v1652, %v1652
        %v1749 = vpack.c.bf16 %v1653, %v1653
        %v1750 = vpack.c.bf16 %v1654, %v1654
        %v1751 = vpack.c.bf16 %v1655, %v1655
        %v1752 = vpack.c.bf16 %v1656, %v1656
        %v1753 = vpack.c.bf16 %v1657, %v1657
        %v1754 = vpack.c.bf16 %v1658, %v1658
        %v1755 = vpack.c.bf16 %v1659, %v1659
        %v1756 = vpack.c.bf16 %v1660, %v1660
        %v1757 = vpack.c.bf16 %v1661, %v1661
        %v1758 = vpack.c.bf16 %v1678, %v1678
        %v1759 = vpack.c.bf16 %v1679, %v1679
        %v1760 = vpack.c.bf16 %v1680, %v1680
        %v1761 = vpack.c.bf16 %v1681, %v1681
        %v1762 = vpack.c.bf16 %v1682, %v1682
        %v1763 = vpack.c.bf16 %v1683, %v1683
        %v1764 = vpack.c.bf16 %v1684, %v1684
        %v1765 = vpack.c.bf16 %v1685, %v1685
        %v1766 = vpack.c.bf16 %v1686, %v1686
        %v1767 = vpack.c.bf16 %v1687, %v1687
        %v1768 = vpack.c.bf16 %v1688, %v1688
        %v1769 = vpack.c.bf16 %v1689, %v1689
        %v1770 = vpack.c.bf16 %v1690, %v1690
        %v1771 = vpack.c.bf16 %v1691, %v1691
        %v1772 = vpack.c.bf16 %v1692, %v1692
        %v1773 = vpack.c.bf16 %v1693, %v1693
        %v1774 = vpack.c.bf16 %v1710, %v1710
        %v1775 = vpack.c.bf16 %v1711, %v1711
        %v1776 = vpack.c.bf16 %v1712, %v1712
        %v1777 = vpack.c.bf16 %v1713, %v1713
        %v1778 = vpack.c.bf16 %v1714, %v1714
        %v1779 = vpack.c.bf16 %v1715, %v1715
        %v1780 = vpack.c.bf16 %v1716, %v1716
        %v1781 = vpack.c.bf16 %v1717, %v1717
        %v1782 = vpack.c.bf16 %v1718, %v1718
        %v1783 = vpack.c.bf16 %v1719, %v1719
        %v1784 = vpack.c.bf16 %v1720, %v1720
        %v1785 = vpack.c.bf16 %v1721, %v1721
        %v1786 = vpack.c.bf16 %v1722, %v1722
        %v1787 = vpack.c.bf16 %v1723, %v1723
        %v1788 = vpack.c.bf16 %v1724, %v1724
        %v1789 = vpack.c.bf16 %v1725, %v1725
        %vm1790 = vcmask 519168
        %1791 = vst.msk [vmem:[%s362] sm:$0xf] %vm1790, %v1726
        %1792 = vst.msk [vmem:[%s362 + $0x4] sm:$0xf] %vm1790, %v1727
        %1793 = vst.msk [vmem:[%s362 + $0x8] sm:$0xf] %vm1790, %v1728
        %1794 = vst.msk [vmem:[%s362 + $0xc] sm:$0xf] %vm1790, %v1729
        %1795 = vst.msk [vmem:[%s362 + $0x10] sm:$0xf] %vm1790, %v1730
        %1796 = vst.msk [vmem:[%s362 + $0x14] sm:$0xf] %vm1790, %v1731
        %1797 = vst.msk [vmem:[%s362 + $0x18] sm:$0xf] %vm1790, %v1732
        %1798 = vst.msk [vmem:[%s362 + $0x1c] sm:$0xf] %vm1790, %v1733
        %1799 = vst.msk [vmem:[%s362 + $0x20] sm:$0xf] %vm1790, %v1734
        %1800 = vst.msk [vmem:[%s362 + $0x24] sm:$0xf] %vm1790, %v1735
        %1801 = vst.msk [vmem:[%s362 + $0x28] sm:$0xf] %vm1790, %v1736
        %1802 = vst.msk [vmem:[%s362 + $0x2c] sm:$0xf] %vm1790, %v1737
        %1803 = vst.msk [vmem:[%s362 + $0x30] sm:$0xf] %vm1790, %v1738
        %1804 = vst.msk [vmem:[%s362 + $0x34] sm:$0xf] %vm1790, %v1739
        %1805 = vst.msk [vmem:[%s362 + $0x38] sm:$0xf] %vm1790, %v1740
        %1806 = vst.msk [vmem:[%s362 + $0x3c] sm:$0xf] %vm1790, %v1741
        %1807 = vst.msk [vmem:[%s362 + $0x40] sm:$0xf] %vm1790, %v1742
        %1808 = vst.msk [vmem:[%s362 + $0x44] sm:$0xf] %vm1790, %v1743
        %1809 = vst.msk [vmem:[%s362 + $0x48] sm:$0xf] %vm1790, %v1744
        %1810 = vst.msk [vmem:[%s362 + $0x4c] sm:$0xf] %vm1790, %v1745
        %1811 = vst.msk [vmem:[%s362 + $0x50] sm:$0xf] %vm1790, %v1746
        %1812 = vst.msk [vmem:[%s362 + $0x54] sm:$0xf] %vm1790, %v1747
        %1813 = vst.msk [vmem:[%s362 + $0x58] sm:$0xf] %vm1790, %v1748
        %1814 = vst.msk [vmem:[%s362 + $0x5c] sm:$0xf] %vm1790, %v1749
        %1815 = vst.msk [vmem:[%s362 + $0x60] sm:$0xf] %vm1790, %v1750
        %1816 = vst.msk [vmem:[%s362 + $0x64] sm:$0xf] %vm1790, %v1751
        %1817 = vst.msk [vmem:[%s362 + $0x68] sm:$0xf] %vm1790, %v1752
        %1818 = vst.msk [vmem:[%s362 + $0x6c] sm:$0xf] %vm1790, %v1753
        %1819 = vst.msk [vmem:[%s362 + $0x70] sm:$0xf] %vm1790, %v1754
        %1820 = vst.msk [vmem:[%s362 + $0x74] sm:$0xf] %vm1790, %v1755
        %1821 = vst.msk [vmem:[%s362 + $0x78] sm:$0xf] %vm1790, %v1756
        %1822 = vst.msk [vmem:[%s362 + $0x7c] sm:$0xf] %vm1790, %v1757
        %1823 = vst.msk [vmem:[%s362 + $0x80] sm:$0xf] %vm1790, %v1758
        %1824 = vst.msk [vmem:[%s362 + $0x84] sm:$0xf] %vm1790, %v1759
        %1825 = vst.msk [vmem:[%s362 + $0x88] sm:$0xf] %vm1790, %v1760
        %1826 = vst.msk [vmem:[%s362 + $0x8c] sm:$0xf] %vm1790, %v1761
        %1827 = vst.msk [vmem:[%s362 + $0x90] sm:$0xf] %vm1790, %v1762
        %1828 = vst.msk [vmem:[%s362 + $0x94] sm:$0xf] %vm1790, %v1763
        %1829 = vst.msk [vmem:[%s362 + $0x98] sm:$0xf] %vm1790, %v1764
        %1830 = vst.msk [vmem:[%s362 + $0x9c] sm:$0xf] %vm1790, %v1765
        %1831 = vst.msk [vmem:[%s362 + $0xa0] sm:$0xf] %vm1790, %v1766
        %1832 = vst.msk [vmem:[%s362 + $0xa4] sm:$0xf] %vm1790, %v1767
        %1833 = vst.msk [vmem:[%s362 + $0xa8] sm:$0xf] %vm1790, %v1768
        %1834 = vst.msk [vmem:[%s362 + $0xac] sm:$0xf] %vm1790, %v1769
        %1835 = vst.msk [vmem:[%s362 + $0xb0] sm:$0xf] %vm1790, %v1770
        %1836 = vst.msk [vmem:[%s362 + $0xb4] sm:$0xf] %vm1790, %v1771
        %1837 = vst.msk [vmem:[%s362 + $0xb8] sm:$0xf] %vm1790, %v1772
        %1838 = vst.msk [vmem:[%s362 + $0xbc] sm:$0xf] %vm1790, %v1773
        %1839 = vst.msk [vmem:[%s362 + $0xc0] sm:$0xf] %vm1790, %v1774
        %1840 = vst.msk [vmem:[%s362 + $0xc4] sm:$0xf] %vm1790, %v1775
        %1841 = vst.msk [vmem:[%s362 + $0xc8] sm:$0xf] %vm1790, %v1776
        %1842 = vst.msk [vmem:[%s362 + $0xcc] sm:$0xf] %vm1790, %v1777
        %1843 = vst.msk [vmem:[%s362 + $0xd0] sm:$0xf] %vm1790, %v1778
        %1844 = vst.msk [vmem:[%s362 + $0xd4] sm:$0xf] %vm1790, %v1779
        %1845 = vst.msk [vmem:[%s362 + $0xd8] sm:$0xf] %vm1790, %v1780
        %1846 = vst.msk [vmem:[%s362 + $0xdc] sm:$0xf] %vm1790, %v1781
        %1847 = vst.msk [vmem:[%s362 + $0xe0] sm:$0xf] %vm1790, %v1782
        %1848 = vst.msk [vmem:[%s362 + $0xe4] sm:$0xf] %vm1790, %v1783
        %1849 = vst.msk [vmem:[%s362 + $0xe8] sm:$0xf] %vm1790, %v1784
        %1850 = vst.msk [vmem:[%s362 + $0xec] sm:$0xf] %vm1790, %v1785
        %1851 = vst.msk [vmem:[%s362 + $0xf0] sm:$0xf] %vm1790, %v1786
        %1852 = vst.msk [vmem:[%s362 + $0xf4] sm:$0xf] %vm1790, %v1787
        %1853 = vst.msk [vmem:[%s362 + $0xf8] sm:$0xf] %vm1790, %v1788
        %1854 = vst.msk [vmem:[%s362 + $0xfc] sm:$0xf] %vm1790, %v1789
        %v1855 = vpack.c.bf16 %v1409, %v1340
        %v1856 = vpack.c.bf16 %v1547, %v1478
        %v1857 = vpack.c.bf16 %v1411, %v1342
        %v1858 = vpack.c.bf16 %v1549, %v1480
        %v1859 = vpack.c.bf16 %v1414, %v1345
        %v1860 = vpack.c.bf16 %v1552, %v1483
        %v1861 = vpack.c.bf16 %v1416, %v1347
        %v1862 = vpack.c.bf16 %v1554, %v1485
        %v1863 = vpack.c.bf16 %v1419, %v1350
        %v1864 = vpack.c.bf16 %v1557, %v1488
        %v1865 = vpack.c.bf16 %v1421, %v1352
        %v1866 = vpack.c.bf16 %v1559, %v1490
        %v1867 = vpack.c.bf16 %v1424, %v1355
        %v1868 = vpack.c.bf16 %v1562, %v1493
        %v1869 = vpack.c.bf16 %v1426, %v1357
        %v1870 = vpack.c.bf16 %v1564, %v1495
        %1871 = vst [vmem:[%s336] sm:$0xff] %v1855
        %1872 = vst [vmem:[%s336 + $0x8] sm:$0xff] %v1856
        %1873 = vst [vmem:[%s336 + $0x10] sm:$0xff] %v1857
        %1874 = vst [vmem:[%s336 + $0x18] sm:$0xff] %v1858
        %1875 = vst [vmem:[%s336 + $0x20] sm:$0xff] %v1859
        %1876 = vst [vmem:[%s336 + $0x28] sm:$0xff] %v1860
        %1877 = vst [vmem:[%s336 + $0x30] sm:$0xff] %v1861
        %1878 = vst [vmem:[%s336 + $0x38] sm:$0xff] %v1862
        %1879 = vst [vmem:[%s336 + $0x40] sm:$0xff] %v1863
        %1880 = vst [vmem:[%s336 + $0x48] sm:$0xff] %v1864
        %1881 = vst [vmem:[%s336 + $0x50] sm:$0xff] %v1865
        %1882 = vst [vmem:[%s336 + $0x58] sm:$0xff] %v1866
        %1883 = vst [vmem:[%s336 + $0x60] sm:$0xff] %v1867
        %1884 = vst [vmem:[%s336 + $0x68] sm:$0xff] %v1868
        %1885 = vst [vmem:[%s336 + $0x70] sm:$0xff] %v1869
        %1886 = vst [vmem:[%s336 + $0x78] sm:$0xff] %v1870
        %vm1887 = vcmask 1040384
        %vm1888 = vsmask.f32 256
        %vm1889 = vmand %vm1887, %vm1888
        %vm1890 = vcmask 1044484
        %vm1891 = vsmask.f32 4352
        %vm1892 = vmand %vm1890, %vm1891
        %vm1893 = vmor %vm1892, %vm1889
        %v1894 = vld [vmem:[%s336 + $0x80] sm:$0x11]
        %v1895 = vsel %vm1893, 1065369472, %v1894
        %1896 = vst [vmem:[%s336 + $0x80] sm:$0x11] %v1895
        %v1897 = vld [vmem:[%s336 + $0x88] sm:$0x11]
        %v1898 = vsel %vm1893, 1065369472, %v1897
        %1899 = vst [vmem:[%s336 + $0x88] sm:$0x11] %v1898
        %s1900 = sand.u32 %s137, 1
        %s1901 = sand.u32 %s137, 1
        %s1902 = smul.addr %s1901, 256
        %s1903 = scalar_lea.vmem [#allocation2], %s1902
        %s1904 = sand.u32 %s165, 1
        %s1905 = sand.u32 %s165, 1
        %s1906 = smul.addr %s1905, 128
        %s1907 = scalar_lea.vmem [#allocation3], %s1906
        %s1908 = smul.u32 64, %s24
        %p1909 = scmp.lt.s32.totalorder %s23, 1
        %s1910 = scalar_select %p1909, %s23, 1
        %p1911 = scmp.lt.s32.totalorder %s1908, 127
        %s1912 = scalar_select %p1911, %s1908, 127
        %s1913 = smul.addr %s1910, 128
        %s1914 = sadd.s32 %s1912, %s1913
        %s1915 = smul.addr %s1914, 4
        %s1916 = scalar_lea.vmem %s6, %s1915
        %s1917 = sand.u32 %s221, 1
        %s1918 = sand.u32 %s221, 1
        %s1919 = smul.addr %s1918, 144
        %s1920 = scalar_lea.vmem [#allocation4], %s1919
        // Predicated region
        $region37: #{model_wrapper_forward.2} parent=35 // pred_check
          %p1921 = pneg %p147
        $region38: #{model_wrapper_forward.2} parent=35 // pred_check_branch
          %1923 = sbr.rel (%p1921) target = $region40
        $region39: #{model_wrapper_forward.2} parent=35 // pred_region
          %s1924 = smul.u32 4, %s24
          %s1925 = smul.addr %s23, 64
          %s1926 = sadd.s32 %s1924, %s1925
          %s1927 = smul.addr %s1926, 8
          %s1928 = scalar_lea.vmem %s4, %s1927
          // Predicated region
          $region41: #{model_wrapper_forward.2} parent=39 // pred_check
            _
          $region42: #{model_wrapper_forward.2} parent=39 // pred_check_branch
            %1930 = sbr.rel (0) target = $region44
          $region43: #{model_wrapper_forward.2} parent=39 // pred_region
            // Predicated region
            $region45: #{model_wrapper_forward.2} parent=43 // pred_check
              _
            $region46: #{model_wrapper_forward.2} parent=43 // pred_check_branch
              %1932 = sbr.rel (0) target = $region48
            $region47: #{model_wrapper_forward.2} parent=43 // pred_region
              loop: start=0, step=1, limit=1
              $region49: #{model_wrapper_forward.2} parent=47 // loop_pre_header
                _
              $region50: #{model_wrapper_forward.2} parent=47 // loop_header
                %s1934 = sphi 0, %s1938
                %p1935 = scmp.ge.s32.totalorder %s1934, 1
                %s1939 = sphi %s1903, %s1903
                %s1940 = sphi %s1928, %s1928
              $region51: #{model_wrapper_forward.2} parent=47 // loop_header_branch
                %1937 = sbr.rel (%p1935) target = $region55
              $region52: #{model_wrapper_forward.2} parent=47 // loop_body
                %v1941 = vld [vmem:[%s1939] sm:$0xff]
                %1942 = vst [vmem:[%s1940] sm:$0xff] %v1941
                %v1943 = vld [vmem:[%s1939 + $0x8] sm:$0xff]
                %1944 = vst [vmem:[%s1940 + $0x8] sm:$0xff] %v1943
                %v1945 = vld [vmem:[%s1939 + $0x10] sm:$0xff]
                %1946 = vst [vmem:[%s1940 + $0x10] sm:$0xff] %v1945
                %v1947 = vld [vmem:[%s1939 + $0x18] sm:$0xff]
                %1948 = vst [vmem:[%s1940 + $0x18] sm:$0xff] %v1947
                %v1949 = vld [vmem:[%s1939 + $0x20] sm:$0xff]
                %1950 = vst [vmem:[%s1940 + $0x40] sm:$0xff] %v1949
                %v1951 = vld [vmem:[%s1939 + $0x28] sm:$0xff]
                %1952 = vst [vmem:[%s1940 + $0x48] sm:$0xff] %v1951
                %v1953 = vld [vmem:[%s1939 + $0x30] sm:$0xff]
                %1954 = vst [vmem:[%s1940 + $0x50] sm:$0xff] %v1953
                %v1955 = vld [vmem:[%s1939 + $0x38] sm:$0xff]
                %1956 = vst [vmem:[%s1940 + $0x58] sm:$0xff] %v1955
                %v1957 = vld [vmem:[%s1939 + $0x40] sm:$0xff]
                %1958 = vst [vmem:[%s1940 + $0x80] sm:$0xff] %v1957
                %v1959 = vld [vmem:[%s1939 + $0x48] sm:$0xff]
                %1960 = vst [vmem:[%s1940 + $0x88] sm:$0xff] %v1959
                %v1961 = vld [vmem:[%s1939 + $0x50] sm:$0xff]
                %1962 = vst [vmem:[%s1940 + $0x90] sm:$0xff] %v1961
                %v1963 = vld [vmem:[%s1939 + $0x58] sm:$0xff]
                %1964 = vst [vmem:[%s1940 + $0x98] sm:$0xff] %v1963
                %v1965 = vld [vmem:[%s1939 + $0x60] sm:$0xff]
                %1966 = vst [vmem:[%s1940 + $0xc0] sm:$0xff] %v1965
                %v1967 = vld [vmem:[%s1939 + $0x68] sm:$0xff]
                %1968 = vst [vmem:[%s1940 + $0xc8] sm:$0xff] %v1967
                %v1969 = vld [vmem:[%s1939 + $0x70] sm:$0xff]
                %1970 = vst [vmem:[%s1940 + $0xd0] sm:$0xff] %v1969
                %v1971 = vld [vmem:[%s1939 + $0x78] sm:$0xff]
                %1972 = vst [vmem:[%s1940 + $0xd8] sm:$0xff] %v1971
                %v1973 = vld [vmem:[%s1939 + $0x80] sm:$0xff]
                %1974 = vst [vmem:[%s1940 + $0x100] sm:$0xff] %v1973
                %v1975 = vld [vmem:[%s1939 + $0x88] sm:$0xff]
                %1976 = vst [vmem:[%s1940 + $0x108] sm:$0xff] %v1975
                %v1977 = vld [vmem:[%s1939 + $0x90] sm:$0xff]
                %1978 = vst [vmem:[%s1940 + $0x110] sm:$0xff] %v1977
                %v1979 = vld [vmem:[%s1939 + $0x98] sm:$0xff]
                %1980 = vst [vmem:[%s1940 + $0x118] sm:$0xff] %v1979
                %v1981 = vld [vmem:[%s1939 + $0xa0] sm:$0xff]
                %1982 = vst [vmem:[%s1940 + $0x140] sm:$0xff] %v1981
                %v1983 = vld [vmem:[%s1939 + $0xa8] sm:$0xff]
                %1984 = vst [vmem:[%s1940 + $0x148] sm:$0xff] %v1983
                %v1985 = vld [vmem:[%s1939 + $0xb0] sm:$0xff]
                %1986 = vst [vmem:[%s1940 + $0x150] sm:$0xff] %v1985
                %v1987 = vld [vmem:[%s1939 + $0xb8] sm:$0xff]
                %1988 = vst [vmem:[%s1940 + $0x158] sm:$0xff] %v1987
                %v1989 = vld [vmem:[%s1939 + $0xc0] sm:$0xff]
                %1990 = vst [vmem:[%s1940 + $0x180] sm:$0xff] %v1989
                %v1991 = vld [vmem:[%s1939 + $0xc8] sm:$0xff]
                %1992 = vst [vmem:[%s1940 + $0x188] sm:$0xff] %v1991
                %v1993 = vld [vmem:[%s1939 + $0xd0] sm:$0xff]
                %1994 = vst [vmem:[%s1940 + $0x190] sm:$0xff] %v1993
                %v1995 = vld [vmem:[%s1939 + $0xd8] sm:$0xff]
                %1996 = vst [vmem:[%s1940 + $0x198] sm:$0xff] %v1995
                %v1997 = vld [vmem:[%s1939 + $0xe0] sm:$0xff]
                %1998 = vst [vmem:[%s1940 + $0x1c0] sm:$0xff] %v1997
                %v1999 = vld [vmem:[%s1939 + $0xe8] sm:$0xff]
                %2000 = vst [vmem:[%s1940 + $0x1c8] sm:$0xff] %v1999
                %v2001 = vld [vmem:[%s1939 + $0xf0] sm:$0xff]
                %2002 = vst [vmem:[%s1940 + $0x1d0] sm:$0xff] %v2001
                %v2003 = vld [vmem:[%s1939 + $0xf8] sm:$0xff]
                %2004 = vst [vmem:[%s1940 + $0x1d8] sm:$0xff] %v2003
              $region53: #{model_wrapper_forward.2} parent=47 // loop_footer
                %s1938 = sadd.s32 1, %s1934
              $region54: #{model_wrapper_forward.2} parent=47 // loop_footer_branch
                %1933 = sbr.rel target = $region50
              $region55: #{model_wrapper_forward.2} parent=47 // loop_exit
                _
            $region48: #{model_wrapper_forward.2} parent=43 // pred_fallthru
              _
            // Predicated region
            $region56: #{model_wrapper_forward.2} parent=43 // pred_check
              _
            $region57: #{model_wrapper_forward.2} parent=43 // pred_check_branch
              %2006 = sbr.rel target = $region59
            $region58: #{model_wrapper_forward.2} parent=43 // pred_region
              _
            $region59: #{model_wrapper_forward.2} parent=43 // pred_fallthru
              _
          $region44: #{model_wrapper_forward.2} parent=39 // pred_fallthru
            _
          %2007 = vnop
        $region40: #{model_wrapper_forward.2} parent=35 // pred_fallthru
          _
        // Predicated region
        $region60: #{model_wrapper_forward.2} parent=35 // pred_check
          %p2008 = pneg %p175
        $region61: #{model_wrapper_forward.2} parent=35 // pred_check_branch
          %2010 = sbr.rel (%p2008) target = $region63
        $region62: #{model_wrapper_forward.2} parent=35 // pred_region
          %s2011 = smul.u32 4, %s24
          %s2012 = smul.addr %s23, 64
          %s2013 = sadd.s32 %s2011, %s2012
          %s2014 = smul.addr %s2013, 4
          %s2015 = scalar_lea.vmem %s5, %s2014
          // Predicated region
          $region64: #{model_wrapper_forward.2} parent=62 // pred_check
            _
          $region65: #{model_wrapper_forward.2} parent=62 // pred_check_branch
            %2017 = sbr.rel (0) target = $region67
          $region66: #{model_wrapper_forward.2} parent=62 // pred_region
            // Predicated region
            $region68: #{model_wrapper_forward.2} parent=66 // pred_check
              _
            $region69: #{model_wrapper_forward.2} parent=66 // pred_check_branch
              %2019 = sbr.rel (0) target = $region71
            $region70: #{model_wrapper_forward.2} parent=66 // pred_region
              loop: start=0, step=1, limit=1
              $region72: #{model_wrapper_forward.2} parent=70 // loop_pre_header
                _
              $region73: #{model_wrapper_forward.2} parent=70 // loop_header
                %s2021 = sphi 0, %s2025
                %p2022 = scmp.ge.s32.totalorder %s2021, 1
                %s2026 = sphi %s1907, %s1907
                %s2027 = sphi %s2015, %s2015
              $region74: #{model_wrapper_forward.2} parent=70 // loop_header_branch
                %2024 = sbr.rel (%p2022) target = $region78
              $region75: #{model_wrapper_forward.2} parent=70 // loop_body
                %v2028 = vld [vmem:[%s2026] sm:$0xff]
                %2029 = vst [vmem:[%s2027] sm:$0xff] %v2028
                %v2030 = vld [vmem:[%s2026 + $0x8] sm:$0xff]
                %2031 = vst [vmem:[%s2027 + $0x8] sm:$0xff] %v2030
                %v2032 = vld [vmem:[%s2026 + $0x10] sm:$0xff]
                %2033 = vst [vmem:[%s2027 + $0x20] sm:$0xff] %v2032
                %v2034 = vld [vmem:[%s2026 + $0x18] sm:$0xff]
                %2035 = vst [vmem:[%s2027 + $0x28] sm:$0xff] %v2034
                %v2036 = vld [vmem:[%s2026 + $0x20] sm:$0xff]
                %2037 = vst [vmem:[%s2027 + $0x40] sm:$0xff] %v2036
                %v2038 = vld [vmem:[%s2026 + $0x28] sm:$0xff]
                %2039 = vst [vmem:[%s2027 + $0x48] sm:$0xff] %v2038
                %v2040 = vld [vmem:[%s2026 + $0x30] sm:$0xff]
                %2041 = vst [vmem:[%s2027 + $0x60] sm:$0xff] %v2040
                %v2042 = vld [vmem:[%s2026 + $0x38] sm:$0xff]
                %2043 = vst [vmem:[%s2027 + $0x68] sm:$0xff] %v2042
                %v2044 = vld [vmem:[%s2026 + $0x40] sm:$0xff]
                %2045 = vst [vmem:[%s2027 + $0x80] sm:$0xff] %v2044
                %v2046 = vld [vmem:[%s2026 + $0x48] sm:$0xff]
                %2047 = vst [vmem:[%s2027 + $0x88] sm:$0xff] %v2046
                %v2048 = vld [vmem:[%s2026 + $0x50] sm:$0xff]
                %2049 = vst [vmem:[%s2027 + $0xa0] sm:$0xff] %v2048
                %v2050 = vld [vmem:[%s2026 + $0x58] sm:$0xff]
                %2051 = vst [vmem:[%s2027 + $0xa8] sm:$0xff] %v2050
                %v2052 = vld [vmem:[%s2026 + $0x60] sm:$0xff]
                %2053 = vst [vmem:[%s2027 + $0xc0] sm:$0xff] %v2052
                %v2054 = vld [vmem:[%s2026 + $0x68] sm:$0xff]
                %2055 = vst [vmem:[%s2027 + $0xc8] sm:$0xff] %v2054
                %v2056 = vld [vmem:[%s2026 + $0x70] sm:$0xff]
                %2057 = vst [vmem:[%s2027 + $0xe0] sm:$0xff] %v2056
                %v2058 = vld [vmem:[%s2026 + $0x78] sm:$0xff]
                %2059 = vst [vmem:[%s2027 + $0xe8] sm:$0xff] %v2058
              $region76: #{model_wrapper_forward.2} parent=70 // loop_footer
                %s2025 = sadd.s32 1, %s2021
              $region77: #{model_wrapper_forward.2} parent=70 // loop_footer_branch
                %2020 = sbr.rel target = $region73
              $region78: #{model_wrapper_forward.2} parent=70 // loop_exit
                _
            $region71: #{model_wrapper_forward.2} parent=66 // pred_fallthru
              _
            // Predicated region
            $region79: #{model_wrapper_forward.2} parent=66 // pred_check
              _
            $region80: #{model_wrapper_forward.2} parent=66 // pred_check_branch
              %2061 = sbr.rel target = $region82
            $region81: #{model_wrapper_forward.2} parent=66 // pred_region
              _
            $region82: #{model_wrapper_forward.2} parent=66 // pred_fallthru
              _
          $region67: #{model_wrapper_forward.2} parent=62 // pred_fallthru
            _
          %2062 = vnop
        $region63: #{model_wrapper_forward.2} parent=35 // pred_fallthru
          _
        // Predicated region
        $region83: #{model_wrapper_forward.2} parent=35 // pred_check
          %p2063 = pneg %p203
        $region84: #{model_wrapper_forward.2} parent=35 // pred_check_branch
          %2065 = sbr.rel (%p2063) target = $region86
        $region85: #{model_wrapper_forward.2} parent=35 // pred_region
          %s2066 = smul.u32 64, %s24
        $region86: #{model_wrapper_forward.2} parent=35 // pred_fallthru
          _
        // Predicated region
        $region87: #{model_wrapper_forward.2} parent=35 // pred_check
          %p2067 = pneg %p231
        $region88: #{model_wrapper_forward.2} parent=35 // pred_check_branch
          %2069 = sbr.rel (%p2067) target = $region90
        $region89: #{model_wrapper_forward.2} parent=35 // pred_region
          %s2070 = smul.u32 4, %s24
          %s2071 = smul.addr %s23, 72
          %s2072 = sadd.s32 %s2070, %s2071
          %s2073 = smul.addr %s2072, 4
          %s2074 = scalar_lea.vmem %s7, %s2073
          // Predicated region
          $region91: #{model_wrapper_forward.2} parent=89 // pred_check
            _
          $region92: #{model_wrapper_forward.2} parent=89 // pred_check_branch
            %2076 = sbr.rel (0) target = $region94
          $region93: #{model_wrapper_forward.2} parent=89 // pred_region
            // Predicated region
            $region95: #{model_wrapper_forward.2} parent=93 // pred_check
              _
            $region96: #{model_wrapper_forward.2} parent=93 // pred_check_branch
              %2078 = sbr.rel (0) target = $region98
            $region97: #{model_wrapper_forward.2} parent=93 // pred_region
              loop: start=0, step=1, limit=1
              $region99: #{model_wrapper_forward.2} parent=97 // loop_pre_header
                _
              $region100: #{model_wrapper_forward.2} parent=97 // loop_header
                %s2080 = sphi 0, %s2084
                %p2081 = scmp.ge.s32.totalorder %s2080, 1
                %s2085 = sphi %s1920, %s1920
                %s2086 = sphi %s2074, %s2074
              $region101: #{model_wrapper_forward.2} parent=97 // loop_header_branch
                %2083 = sbr.rel (%p2081) target = $region105
              $region102: #{model_wrapper_forward.2} parent=97 // loop_body
                %v2087 = vld [vmem:[%s2085] sm:$0xff]
                %2088 = vst [vmem:[%s2086] sm:$0xff] %v2087
                %v2089 = vld [vmem:[%s2085 + $0x8] sm:$0xff]
                %2090 = vst [vmem:[%s2086 + $0x8] sm:$0xff] %v2089
                %v2091 = vld [vmem:[%s2085 + $0x10] sm:$0xff]
                %2092 = vst [vmem:[%s2086 + $0x20] sm:$0xff] %v2091
                %v2093 = vld [vmem:[%s2085 + $0x18] sm:$0xff]
                %2094 = vst [vmem:[%s2086 + $0x28] sm:$0xff] %v2093
                %v2095 = vld [vmem:[%s2085 + $0x20] sm:$0xff]
                %2096 = vst [vmem:[%s2086 + $0x40] sm:$0xff] %v2095
                %v2097 = vld [vmem:[%s2085 + $0x28] sm:$0xff]
                %2098 = vst [vmem:[%s2086 + $0x48] sm:$0xff] %v2097
                %v2099 = vld [vmem:[%s2085 + $0x30] sm:$0xff]
                %2100 = vst [vmem:[%s2086 + $0x60] sm:$0xff] %v2099
                %v2101 = vld [vmem:[%s2085 + $0x38] sm:$0xff]
                %2102 = vst [vmem:[%s2086 + $0x68] sm:$0xff] %v2101
                %v2103 = vld [vmem:[%s2085 + $0x40] sm:$0xff]
                %2104 = vst [vmem:[%s2086 + $0x80] sm:$0xff] %v2103
                %v2105 = vld [vmem:[%s2085 + $0x48] sm:$0xff]
                %2106 = vst [vmem:[%s2086 + $0x88] sm:$0xff] %v2105
                %v2107 = vld [vmem:[%s2085 + $0x50] sm:$0xff]
                %2108 = vst [vmem:[%s2086 + $0xa0] sm:$0xff] %v2107
                %v2109 = vld [vmem:[%s2085 + $0x58] sm:$0xff]
                %2110 = vst [vmem:[%s2086 + $0xa8] sm:$0xff] %v2109
                %v2111 = vld [vmem:[%s2085 + $0x60] sm:$0xff]
                %2112 = vst [vmem:[%s2086 + $0xc0] sm:$0xff] %v2111
                %v2113 = vld [vmem:[%s2085 + $0x68] sm:$0xff]
                %2114 = vst [vmem:[%s2086 + $0xc8] sm:$0xff] %v2113
                %v2115 = vld [vmem:[%s2085 + $0x70] sm:$0xff]
                %2116 = vst [vmem:[%s2086 + $0xe0] sm:$0xff] %v2115
                %v2117 = vld [vmem:[%s2085 + $0x78] sm:$0xff]
                %2118 = vst [vmem:[%s2086 + $0xe8] sm:$0xff] %v2117
                %v2119 = vld [vmem:[%s2085 + $0x80] sm:$0xff]
                %2120 = vst [vmem:[%s2086 + $0x100] sm:$0xff] %v2119
                %v2121 = vld [vmem:[%s2085 + $0x88] sm:$0xff]
                %2122 = vst [vmem:[%s2086 + $0x108] sm:$0xff] %v2121
              $region103: #{model_wrapper_forward.2} parent=97 // loop_footer
                %s2084 = sadd.s32 1, %s2080
              $region104: #{model_wrapper_forward.2} parent=97 // loop_footer_branch
                %2079 = sbr.rel target = $region100
              $region105: #{model_wrapper_forward.2} parent=97 // loop_exit
                _
            $region98: #{model_wrapper_forward.2} parent=93 // pred_fallthru
              _
            // Predicated region
            $region106: #{model_wrapper_forward.2} parent=93 // pred_check
              _
            $region107: #{model_wrapper_forward.2} parent=93 // pred_check_branch
              %2124 = sbr.rel target = $region109
            $region108: #{model_wrapper_forward.2} parent=93 // pred_region
              _
            $region109: #{model_wrapper_forward.2} parent=93 // pred_fallthru
              _
          $region94: #{model_wrapper_forward.2} parent=89 // pred_fallthru
            _
          %2125 = vnop
        $region90: #{model_wrapper_forward.2} parent=35 // pred_fallthru
          _
      $region36: #{model_wrapper_forward.2} parent=5 // pred_fallthru
        _
      %p2126 = scmp.le.s32.totalorder 2, %s14
      // Predicated region
      $region110: #{model_wrapper_forward.2} parent=5 // pred_check
        %p2127 = pneg %p2126
      $region111: #{model_wrapper_forward.2} parent=5 // pred_check_branch
        %2129 = sbr.rel (%p2127) target = $region113
      $region112: #{model_wrapper_forward.2} parent=5 // pred_region
        %s2130 = ssub.s32 %s14, 2
        // Predicated region
        $region114: #{model_wrapper_forward.2} parent=112 // pred_check
          %p2131 = pneg %p153
        $region115: #{model_wrapper_forward.2} parent=112 // pred_check_branch
          %2133 = sbr.rel (%p2131) target = $region117
        $region116: #{model_wrapper_forward.2} parent=112 // pred_region
          %s2134 = sand.u32 %s138, 1
          %s2135 = sand.u32 %s138, 1
          %s2136 = smul.addr %s2135, 256
          %s2137 = scalar_lea.vmem [#allocation2], %s2136
        $region117: #{model_wrapper_forward.2} parent=112 // pred_fallthru
          _
        // Predicated region
        $region118: #{model_wrapper_forward.2} parent=112 // pred_check
          %p2138 = pneg %p181
        $region119: #{model_wrapper_forward.2} parent=112 // pred_check_branch
          %2140 = sbr.rel (%p2138) target = $region121
        $region120: #{model_wrapper_forward.2} parent=112 // pred_region
          %s2141 = sand.u32 %s166, 1
          %s2142 = sand.u32 %s166, 1
          %s2143 = smul.addr %s2142, 128
          %s2144 = scalar_lea.vmem [#allocation3], %s2143
        $region121: #{model_wrapper_forward.2} parent=112 // pred_fallthru
          _
        // Predicated region
        $region122: #{model_wrapper_forward.2} parent=112 // pred_check
          %p2145 = pneg %p209
        $region123: #{model_wrapper_forward.2} parent=112 // pred_check_branch
          %2147 = sbr.rel (%p2145) target = $region125
        $region124: #{model_wrapper_forward.2} parent=112 // pred_region
          %s2148 = smul.u32 64, %s26
          %p2149 = scmp.lt.s32.totalorder %s25, 1
          %s2150 = scalar_select %p2149, %s25, 1
          %p2151 = scmp.lt.s32.totalorder %s2148, 127
          %s2152 = scalar_select %p2151, %s2148, 127
          %s2153 = smul.addr %s2150, 128
          %s2154 = sadd.s32 %s2152, %s2153
          %s2155 = smul.addr %s2154, 4
          %s2156 = scalar_lea.vmem %s6, %s2155
        $region125: #{model_wrapper_forward.2} parent=112 // pred_fallthru
          _
        // Predicated region
        $region126: #{model_wrapper_forward.2} parent=112 // pred_check
          %p2157 = pneg %p237
        $region127: #{model_wrapper_forward.2} parent=112 // pred_check_branch
          %2159 = sbr.rel (%p2157) target = $region129
        $region128: #{model_wrapper_forward.2} parent=112 // pred_region
          %s2160 = sand.u32 %s222, 1
          %s2161 = sand.u32 %s222, 1
          %s2162 = smul.addr %s2161, 144
          %s2163 = scalar_lea.vmem [#allocation4], %s2162
        $region129: #{model_wrapper_forward.2} parent=112 // pred_fallthru
          _
      $region113: #{model_wrapper_forward.2} parent=5 // pred_fallthru
        _
    $region6: #{model_wrapper_forward.2} parent=1 // loop_footer
      %s18 = sadd.s32 1, %s14
    $region7: #{model_wrapper_forward.2} parent=1 // loop_footer_branch
      %13 = sbr.rel target = $region3
    $region8: #{model_wrapper_forward.2} parent=1 // loop_exit
      _

// kernel: model_wrapper_forward.3
$region0: #{model_wrapper_forward.3}
  #allocation0 [shape = 'u32[]', space=smem, size = 0x4, offset = 0x4, fixed_abs, tag = 'smem constant byte address 0x4 - core index']
  #allocation1 [shape = 'u32[72,128]{1,0:T(1,128)}', space=vmem, size = 0x9000, scoped, tag = 'internal scratch']
  %s0 = inlined_call_operand.vmem [shape: f32[2,64,1024], index: 0, kind: input, shape index: {}]
  %s1 = inlined_call_operand.vmem [shape: bf16[2,64,1024], index: 1, kind: input, shape index: {}]
  %s2 = inlined_call_operand.vmem [shape: bf16[2,1024,64], index: 2, kind: input, shape index: {}]
  %s3 = inlined_call_operand.vmem [shape: bf16[2,65,1024], index: 3, kind: input, shape index: {}]
  %s4 = inlined_call_operand.vmem [shape: f32[128,16], index: 4, kind: input, shape index: {}]
  %s5 = inlined_call_operand.vmem [shape: bf16[64,64], index: 5, kind: input, shape index: {}]
  %s6 = inlined_call_operand.vmem [shape: bf16[128,64], index: 6, kind: input, shape index: {}]
  %s7 = inlined_call_operand.vmem [shape: bf16[64,128], index: 7, kind: input, shape index: {}]
  %s8 = inlined_call_operand.vmem [shape: f32[2,1,1024], index: 8, kind: output, shape index: {}]
  %s9 = sld [smem:[#allocation0]]
  $region111: #{model_wrapper_forward.3} parent=0
    _
  %s11 = ssub.s32 1, %s9
  %s12 = scalar_select 0, %s11, %s9
  $region1: #{model_wrapper_forward.3} parent=0
    #allocation2 [shape = 'u8[262144]{0}', space=vmem, size = 0x40000, scoped, tag = 'input window, operand 0']
    #allocation3 [shape = 'u8[131072]{0}', space=vmem, size = 0x20000, scoped, tag = 'input window, operand 1']
    loop: start=0, step=1, limit=6
    $region2: #{model_wrapper_forward.3} parent=1 // loop_pre_header
      _
    $region3: #{model_wrapper_forward.3} parent=1 // loop_header
      %s14 = sphi 0, %s18
      %p15 = scmp.ge.s32.totalorder %s14, 6
      %s21 = sphi 0, %s33
      %s22 = sphi 0, %s29
      %s23 = sphi 0, %s21
      %s24 = sphi 0, %s22
      %s25 = sphi 0, %s23
      %s26 = sphi 0, %s24
      %s38 = sphi 0, %s40
      %s41 = sphi 0, %s38
      %s42 = sphi 0, %s41
      %s58 = sphi 0, %s42
      %s66 = sphi 0, %s68
      %s69 = sphi 0, %s66
      %s70 = sphi 0, %s69
      %s86 = sphi 0, %s70
      %s92 = sphi 0, %s94
      %s95 = sphi 0, %s92
      %s96 = sphi 0, %s95
      %s112 = sphi 0, %s96
      %s118 = sphi 0, %s120
      %s121 = sphi 0, %s118
      %s122 = sphi 0, %s121
      %s138 = sphi 0, %s122
      %s142 = sphi 0, %s142
      %s144 = sphi 0, %s142
      %s145 = sphi 0, %s144
      %s159 = sphi 0, %s145
      %s163 = sphi 0, %s163
      %s165 = sphi 0, %s163
      %s166 = sphi 0, %s165
      %s180 = sphi 0, %s166
      %s184 = sphi 0, %s184
      %s186 = sphi 0, %s184
      %s187 = sphi 0, %s186
      %s201 = sphi 0, %s187
      %s205 = sphi 0, %s205
      %s207 = sphi 0, %s205
      %s208 = sphi 0, %s207
      %s222 = sphi 0, %s208
      %s230 = sphi 0, %s232
      %s233 = sphi 0, %s230
      %s234 = sphi 0, %s233
      %s250 = sphi 0, %s234
    $region4: #{model_wrapper_forward.3} parent=1 // loop_header_branch
      %17 = sbr.rel (%p15) target = $region8
    $region5: #{model_wrapper_forward.3} parent=1 // loop_body
      %s19 = ssub.s32 %s14, 1
      %s20 = ssub.s32 %s14, 2
      %s27 = sadd.s32 1, %s22
      %p28 = scmp.ge.s32.totalorder %s27, 2
      %s29 = scalar_select %p28, 0, %s27
      %s30 = sadd.s32 1, %s21
      %s31 = scalar_select %p28, %s30, %s21
      %p32 = scmp.ge.s32.totalorder %s31, 2
      %s33 = scalar_select %p32, 0, %s31
      %s34 = ssub.s32 %s21, %s33
      %s35 = ssub.s32 %s22, %s29
      %s36 = sor.u32 %s34, %s35
      %p37 = scmp.eq.s32.totalorder %s36, 0
      %s39 = sadd.s32 %s38, 1
      %s40 = scalar_select %p37, %s38, %s39
      %p43 = pneg %p37
      %p44 = scmp.eq.s32.totalorder %s14, 3
      %p45 = por %p43, %p44
      %p46 = scmp.ne.s32.totalorder %s38, %s41
      %p47 = scmp.eq.s32.totalorder %s14, 0
      %p48 = por %p46, %p47
      %p49 = scmp.ne.s32.totalorder %s38, %s41
      %p50 = scmp.eq.s32.totalorder %s19, 3
      %p51 = por %p49, %p50
      %p52 = scmp.ne.s32.totalorder %s41, %s42
      %p53 = scmp.eq.s32.totalorder %s19, 0
      %p54 = por %p52, %p53
      %p55 = scmp.ne.s32.totalorder %s41, %s42
      %p56 = scmp.eq.s32.totalorder %s20, 3
      %p57 = por %p55, %p56
      %p59 = scmp.ne.s32.totalorder %s42, %s58
      %p60 = scmp.eq.s32.totalorder %s20, 0
      %p61 = por %p59, %p60
      %s62 = ssub.s32 %s21, %s33
      %s63 = ssub.s32 %s22, %s29
      %s64 = sor.u32 %s62, %s63
      %p65 = scmp.eq.s32.totalorder %s64, 0
      %s67 = sadd.s32 %s66, 1
      %s68 = scalar_select %p65, %s66, %s67
      %p71 = pneg %p65
      %p72 = scmp.eq.s32.totalorder %s14, 3
      %p73 = por %p71, %p72
      %p74 = scmp.ne.s32.totalorder %s66, %s69
      %p75 = scmp.eq.s32.totalorder %s14, 0
      %p76 = por %p74, %p75
      %p77 = scmp.ne.s32.totalorder %s66, %s69
      %p78 = scmp.eq.s32.totalorder %s19, 3
      %p79 = por %p77, %p78
      %p80 = scmp.ne.s32.totalorder %s69, %s70
      %p81 = scmp.eq.s32.totalorder %s19, 0
      %p82 = por %p80, %p81
      %p83 = scmp.ne.s32.totalorder %s69, %s70
      %p84 = scmp.eq.s32.totalorder %s20, 3
      %p85 = por %p83, %p84
      %p87 = scmp.ne.s32.totalorder %s70, %s86
      %p88 = scmp.eq.s32.totalorder %s20, 0
      %p89 = por %p87, %p88
      %s90 = ssub.s32 %s21, %s33
      %p91 = scmp.eq.s32.totalorder %s90, 0
      %s93 = sadd.s32 %s92, 1
      %s94 = scalar_select %p91, %s92, %s93
      %p97 = pneg %p91
      %p98 = scmp.eq.s32.totalorder %s14, 3
      %p99 = por %p97, %p98
      %p100 = scmp.ne.s32.totalorder %s92, %s95
      %p101 = scmp.eq.s32.totalorder %s14, 0
      %p102 = por %p100, %p101
      %p103 = scmp.ne.s32.totalorder %s92, %s95
      %p104 = scmp.eq.s32.totalorder %s19, 3
      %p105 = por %p103, %p104
      %p106 = scmp.ne.s32.totalorder %s95, %s96
      %p107 = scmp.eq.s32.totalorder %s19, 0
      %p108 = por %p106, %p107
      %p109 = scmp.ne.s32.totalorder %s95, %s96
      %p110 = scmp.eq.s32.totalorder %s20, 3
      %p111 = por %p109, %p110
      %p113 = scmp.ne.s32.totalorder %s96, %s112
      %p114 = scmp.eq.s32.totalorder %s20, 0
      %p115 = por %p113, %p114
      %s116 = ssub.s32 %s21, %s33
      %p117 = scmp.eq.s32.totalorder %s116, 0
      %s119 = sadd.s32 %s118, 1
      %s120 = scalar_select %p117, %s118, %s119
      %p123 = pneg %p117
      %p124 = scmp.eq.s32.totalorder %s14, 3
      %p125 = por %p123, %p124
      %p126 = scmp.ne.s32.totalorder %s118, %s121
      %p127 = scmp.eq.s32.totalorder %s14, 0
      %p128 = por %p126, %p127
      %p129 = scmp.ne.s32.totalorder %s118, %s121
      %p130 = scmp.eq.s32.totalorder %s19, 3
      %p131 = por %p129, %p130
      %p132 = scmp.ne.s32.totalorder %s121, %s122
      %p133 = scmp.eq.s32.totalorder %s19, 0
      %p134 = por %p132, %p133
      %p135 = scmp.ne.s32.totalorder %s121, %s122
      %p136 = scmp.eq.s32.totalorder %s20, 3
      %p137 = por %p135, %p136
      %p139 = scmp.ne.s32.totalorder %s122, %s138
      %p140 = scmp.eq.s32.totalorder %s20, 0
      %p141 = por %p139, %p140
      %s143 = sadd.s32 %s142, 1
      %p146 = scmp.eq.s32.totalorder %s14, 3
      %p147 = scmp.ne.s32.totalorder %s142, %s144
      %p148 = scmp.eq.s32.totalorder %s14, 0
      %p149 = por %p147, %p148
      %p150 = scmp.ne.s32.totalorder %s142, %s144
      %p151 = scmp.eq.s32.totalorder %s19, 3
      %p152 = por %p150, %p151
      %p153 = scmp.ne.s32.totalorder %s144, %s145
      %p154 = scmp.eq.s32.totalorder %s19, 0
      %p155 = por %p153, %p154
      %p156 = scmp.ne.s32.totalorder %s144, %s145
      %p157 = scmp.eq.s32.totalorder %s20, 3
      %p158 = por %p156, %p157
      %p160 = scmp.ne.s32.totalorder %s145, %s159
      %p161 = scmp.eq.s32.totalorder %s20, 0
      %p162 = por %p160, %p161
      %s164 = sadd.s32 %s163, 1
      %p167 = scmp.eq.s32.totalorder %s14, 3
      %p168 = scmp.ne.s32.totalorder %s163, %s165
      %p169 = scmp.eq.s32.totalorder %s14, 0
      %p170 = por %p168, %p169
      %p171 = scmp.ne.s32.totalorder %s163, %s165
      %p172 = scmp.eq.s32.totalorder %s19, 3
      %p173 = por %p171, %p172
      %p174 = scmp.ne.s32.totalorder %s165, %s166
      %p175 = scmp.eq.s32.totalorder %s19, 0
      %p176 = por %p174, %p175
      %p177 = scmp.ne.s32.totalorder %s165, %s166
      %p178 = scmp.eq.s32.totalorder %s20, 3
      %p179 = por %p177, %p178
      %p181 = scmp.ne.s32.totalorder %s166, %s180
      %p182 = scmp.eq.s32.totalorder %s20, 0
      %p183 = por %p181, %p182
      %s185 = sadd.s32 %s184, 1
      %p188 = scmp.eq.s32.totalorder %s14, 3
      %p189 = scmp.ne.s32.totalorder %s184, %s186
      %p190 = scmp.eq.s32.totalorder %s14, 0
      %p191 = por %p189, %p190
      %p192 = scmp.ne.s32.totalorder %s184, %s186
      %p193 = scmp.eq.s32.totalorder %s19, 3
      %p194 = por %p192, %p193
      %p195 = scmp.ne.s32.totalorder %s186, %s187
      %p196 = scmp.eq.s32.totalorder %s19, 0
      %p197 = por %p195, %p196
      %p198 = scmp.ne.s32.totalorder %s186, %s187
      %p199 = scmp.eq.s32.totalorder %s20, 3
      %p200 = por %p198, %p199
      %p202 = scmp.ne.s32.totalorder %s187, %s201
      %p203 = scmp.eq.s32.totalorder %s20, 0
      %p204 = por %p202, %p203
      %s206 = sadd.s32 %s205, 1
      %p209 = scmp.eq.s32.totalorder %s14, 3
      %p210 = scmp.ne.s32.totalorder %s205, %s207
      %p211 = scmp.eq.s32.totalorder %s14, 0
      %p212 = por %p210, %p211
      %p213 = scmp.ne.s32.totalorder %s205, %s207
      %p214 = scmp.eq.s32.totalorder %s19, 3
      %p215 = por %p213, %p214
      %p216 = scmp.ne.s32.totalorder %s207, %s208
      %p217 = scmp.eq.s32.totalorder %s19, 0
      %p218 = por %p216, %p217
      %p219 = scmp.ne.s32.totalorder %s207, %s208
      %p220 = scmp.eq.s32.totalorder %s20, 3
      %p221 = por %p219, %p220
      %p223 = scmp.ne.s32.totalorder %s208, %s222
      %p224 = scmp.eq.s32.totalorder %s20, 0
      %p225 = por %p223, %p224
      %s226 = ssub.s32 %s21, %s33
      %s227 = ssub.s32 %s22, %s29
      %s228 = sor.u32 %s226, %s227
      %p229 = scmp.eq.s32.totalorder %s228, 0
      %s231 = sadd.s32 %s230, 1
      %s232 = scalar_select %p229, %s230, %s231
      %p235 = pneg %p229
      %p236 = scmp.eq.s32.totalorder %s14, 3
      %p237 = por %p235, %p236
      %p238 = scmp.ne.s32.totalorder %s230, %s233
      %p239 = scmp.eq.s32.totalorder %s14, 0
      %p240 = por %p238, %p239
      %p241 = scmp.ne.s32.totalorder %s230, %s233
      %p242 = scmp.eq.s32.totalorder %s19, 3
      %p243 = por %p241, %p242
      %p244 = scmp.ne.s32.totalorder %s233, %s234
      %p245 = scmp.eq.s32.totalorder %s19, 0
      %p246 = por %p244, %p245
      %p247 = scmp.ne.s32.totalorder %s233, %s234
      %p248 = scmp.eq.s32.totalorder %s20, 3
      %p249 = por %p247, %p248
      %p251 = scmp.ne.s32.totalorder %s234, %s250
      %p252 = scmp.eq.s32.totalorder %s20, 0
      %p253 = por %p251, %p252
      %p254 = scmp.le.s32.totalorder 1, %s14
      %p255 = scmp.lt.s32.totalorder %s14, 5
      %p256 = pnand %p254, %p255
      %p257 = pneg %p256
      // Predicated region
      $region9: #{model_wrapper_forward.3} parent=5 // pred_check
        _
      $region10: #{model_wrapper_forward.3} parent=5 // pred_check_branch
        %259 = sbr.rel (%p256) target = $region12
      $region11: #{model_wrapper_forward.3} parent=5 // pred_region
        %s260 = ssub.s32 %s14, 1
        // Predicated region
        $region13: #{model_wrapper_forward.3} parent=11 // pred_check
          %p261 = pneg %p155
        $region14: #{model_wrapper_forward.3} parent=11 // pred_check_branch
          %263 = sbr.rel (%p261) target = $region16
        $region15: #{model_wrapper_forward.3} parent=11 // pred_region
          _
        $region16: #{model_wrapper_forward.3} parent=11 // pred_fallthru
          _
        // Predicated region
        $region17: #{model_wrapper_forward.3} parent=11 // pred_check
          %p264 = pneg %p176
        $region18: #{model_wrapper_forward.3} parent=11 // pred_check_branch
          %266 = sbr.rel (%p264) target = $region20
        $region19: #{model_wrapper_forward.3} parent=11 // pred_region
          _
        $region20: #{model_wrapper_forward.3} parent=11 // pred_fallthru
          _
        // Predicated region
        $region21: #{model_wrapper_forward.3} parent=11 // pred_check
          %p267 = pneg %p197
        $region22: #{model_wrapper_forward.3} parent=11 // pred_check_branch
          %269 = sbr.rel (%p267) target = $region24
        $region23: #{model_wrapper_forward.3} parent=11 // pred_region
          _
        $region24: #{model_wrapper_forward.3} parent=11 // pred_fallthru
          _
        // Predicated region
        $region25: #{model_wrapper_forward.3} parent=11 // pred_check
          %p270 = pneg %p218
        $region26: #{model_wrapper_forward.3} parent=11 // pred_check_branch
          %272 = sbr.rel (%p270) target = $region28
        $region27: #{model_wrapper_forward.3} parent=11 // pred_region
          _
        $region28: #{model_wrapper_forward.3} parent=11 // pred_fallthru
          _
      $region12: #{model_wrapper_forward.3} parent=5 // pred_fallthru
        _
      %p273 = scmp.lt.s32.totalorder %s14, 4
      // Predicated region
      $region29: #{model_wrapper_forward.3} parent=5 // pred_check
        %p274 = pneg %p273
      $region30: #{model_wrapper_forward.3} parent=5 // pred_check_branch
        %276 = sbr.rel (%p274) target = $region32
      $region31: #{model_wrapper_forward.3} parent=5 // pred_region
        // Predicated region
        $region33: #{model_wrapper_forward.3} parent=31 // pred_check
          %p277 = pneg %p48
        $region34: #{model_wrapper_forward.3} parent=31 // pred_check_branch
          %279 = sbr.rel (%p277) target = $region36
        $region35: #{model_wrapper_forward.3} parent=31 // pred_region
          %s280 = sand.u32 %s38, 1
          %s281 = sand.u32 %s38, 1
          %s282 = smul.addr %s281, 256
          %s283 = scalar_lea.vmem [#allocation2], %s282
          %s284 = smul.u32 4, %s22
          %s285 = smul.addr %s21, 64
          %s286 = sadd.s32 %s284, %s285
          %s287 = smul.addr %s286, 8
          %s288 = scalar_lea.vmem %s0, %s287
          // Predicated region
          $region37: #{model_wrapper_forward.3} parent=35 // pred_check
            _
          $region38: #{model_wrapper_forward.3} parent=35 // pred_check_branch
            %290 = sbr.rel (0) target = $region40
          $region39: #{model_wrapper_forward.3} parent=35 // pred_region
            // Predicated region
            $region41: #{model_wrapper_forward.3} parent=39 // pred_check
              _
            $region42: #{model_wrapper_forward.3} parent=39 // pred_check_branch
              %292 = sbr.rel (0) target = $region44
            $region43: #{model_wrapper_forward.3} parent=39 // pred_region
              loop: start=0, step=1, limit=1
              $region45: #{model_wrapper_forward.3} parent=43 // loop_pre_header
                _
              $region46: #{model_wrapper_forward.3} parent=43 // loop_header
                %s294 = sphi 0, %s298
                %p295 = scmp.ge.s32.totalorder %s294, 1
                %s299 = sphi %s288, %s288
                %s300 = sphi %s283, %s283
              $region47: #{model_wrapper_forward.3} parent=43 // loop_header_branch
                %297 = sbr.rel (%p295) target = $region51
              $region48: #{model_wrapper_forward.3} parent=43 // loop_body
                %v301 = vld [vmem:[%s299] sm:$0xff]
                %302 = vst [vmem:[%s300] sm:$0xff] %v301
                %v303 = vld [vmem:[%s299 + $0x8] sm:$0xff]
                %304 = vst [vmem:[%s300 + $0x8] sm:$0xff] %v303
                %v305 = vld [vmem:[%s299 + $0x10] sm:$0xff]
                %306 = vst [vmem:[%s300 + $0x10] sm:$0xff] %v305
                %v307 = vld [vmem:[%s299 + $0x18] sm:$0xff]
                %308 = vst [vmem:[%s300 + $0x18] sm:$0xff] %v307
                %v309 = vld [vmem:[%s299 + $0x40] sm:$0xff]
                %310 = vst [vmem:[%s300 + $0x20] sm:$0xff] %v309
                %v311 = vld [vmem:[%s299 + $0x48] sm:$0xff]
                %312 = vst [vmem:[%s300 + $0x28] sm:$0xff] %v311
                %v313 = vld [vmem:[%s299 + $0x50] sm:$0xff]
                %314 = vst [vmem:[%s300 + $0x30] sm:$0xff] %v313
                %v315 = vld [vmem:[%s299 + $0x58] sm:$0xff]
                %316 = vst [vmem:[%s300 + $0x38] sm:$0xff] %v315
                %v317 = vld [vmem:[%s299 + $0x80] sm:$0xff]
                %318 = vst [vmem:[%s300 + $0x40] sm:$0xff] %v317
                %v319 = vld [vmem:[%s299 + $0x88] sm:$0xff]
                %320 = vst [vmem:[%s300 + $0x48] sm:$0xff] %v319
                %v321 = vld [vmem:[%s299 + $0x90] sm:$0xff]
                %322 = vst [vmem:[%s300 + $0x50] sm:$0xff] %v321
                %v323 = vld [vmem:[%s299 + $0x98] sm:$0xff]
                %324 = vst [vmem:[%s300 + $0x58] sm:$0xff] %v323
                %v325 = vld [vmem:[%s299 + $0xc0] sm:$0xff]
                %326 = vst [vmem:[%s300 + $0x60] sm:$0xff] %v325
                %v327 = vld [vmem:[%s299 + $0xc8] sm:$0xff]
                %328 = vst [vmem:[%s300 + $0x68] sm:$0xff] %v327
                %v329 = vld [vmem:[%s299 + $0xd0] sm:$0xff]
                %330 = vst [vmem:[%s300 + $0x70] sm:$0xff] %v329
                %v331 = vld [vmem:[%s299 + $0xd8] sm:$0xff]
                %332 = vst [vmem:[%s300 + $0x78] sm:$0xff] %v331
                %v333 = vld [vmem:[%s299 + $0x100] sm:$0xff]
                %334 = vst [vmem:[%s300 + $0x80] sm:$0xff] %v333
                %v335 = vld [vmem:[%s299 + $0x108] sm:$0xff]
                %336 = vst [vmem:[%s300 + $0x88] sm:$0xff] %v335
                %v337 = vld [vmem:[%s299 + $0x110] sm:$0xff]
                %338 = vst [vmem:[%s300 + $0x90] sm:$0xff] %v337
                %v339 = vld [vmem:[%s299 + $0x118] sm:$0xff]
                %340 = vst [vmem:[%s300 + $0x98] sm:$0xff] %v339
                %v341 = vld [vmem:[%s299 + $0x140] sm:$0xff]
                %342 = vst [vmem:[%s300 + $0xa0] sm:$0xff] %v341
                %v343 = vld [vmem:[%s299 + $0x148] sm:$0xff]
                %344 = vst [vmem:[%s300 + $0xa8] sm:$0xff] %v343
                %v345 = vld [vmem:[%s299 + $0x150] sm:$0xff]
                %346 = vst [vmem:[%s300 + $0xb0] sm:$0xff] %v345
                %v347 = vld [vmem:[%s299 + $0x158] sm:$0xff]
                %348 = vst [vmem:[%s300 + $0xb8] sm:$0xff] %v347
                %v349 = vld [vmem:[%s299 + $0x180] sm:$0xff]
                %350 = vst [vmem:[%s300 + $0xc0] sm:$0xff] %v349
                %v351 = vld [vmem:[%s299 + $0x188] sm:$0xff]
                %352 = vst [vmem:[%s300 + $0xc8] sm:$0xff] %v351
                %v353 = vld [vmem:[%s299 + $0x190] sm:$0xff]
                %354 = vst [vmem:[%s300 + $0xd0] sm:$0xff] %v353
                %v355 = vld [vmem:[%s299 + $0x198] sm:$0xff]
                %356 = vst [vmem:[%s300 + $0xd8] sm:$0xff] %v355
                %v357 = vld [vmem:[%s299 + $0x1c0] sm:$0xff]
                %358 = vst [vmem:[%s300 + $0xe0] sm:$0xff] %v357
                %v359 = vld [vmem:[%s299 + $0x1c8] sm:$0xff]
                %360 = vst [vmem:[%s300 + $0xe8] sm:$0xff] %v359
                %v361 = vld [vmem:[%s299 + $0x1d0] sm:$0xff]
                %362 = vst [vmem:[%s300 + $0xf0] sm:$0xff] %v361
                %v363 = vld [vmem:[%s299 + $0x1d8] sm:$0xff]
                %364 = vst [vmem:[%s300 + $0xf8] sm:$0xff] %v363
              $region49: #{model_wrapper_forward.3} parent=43 // loop_footer
                %s298 = sadd.s32 1, %s294
              $region50: #{model_wrapper_forward.3} parent=43 // loop_footer_branch
                %293 = sbr.rel target = $region46
              $region51: #{model_wrapper_forward.3} parent=43 // loop_exit
                _
            $region44: #{model_wrapper_forward.3} parent=39 // pred_fallthru
              _
            // Predicated region
            $region52: #{model_wrapper_forward.3} parent=39 // pred_check
              _
            $region53: #{model_wrapper_forward.3} parent=39 // pred_check_branch
              %366 = sbr.rel target = $region55
            $region54: #{model_wrapper_forward.3} parent=39 // pred_region
              _
            $region55: #{model_wrapper_forward.3} parent=39 // pred_fallthru
              _
          $region40: #{model_wrapper_forward.3} parent=35 // pred_fallthru
            _
          %367 = vnop
        $region36: #{model_wrapper_forward.3} parent=31 // pred_fallthru
          _
        // Predicated region
        $region56: #{model_wrapper_forward.3} parent=31 // pred_check
          %p368 = pneg %p76
        $region57: #{model_wrapper_forward.3} parent=31 // pred_check_branch
          %370 = sbr.rel (%p368) target = $region59
        $region58: #{model_wrapper_forward.3} parent=31 // pred_region
          %s371 = sand.u32 %s66, 1
          %s372 = sand.u32 %s66, 1
          %s373 = smul.addr %s372, 128
          %s374 = scalar_lea.vmem [#allocation3], %s373
          %s375 = smul.u32 4, %s22
          %s376 = smul.addr %s21, 64
          %s377 = sadd.s32 %s375, %s376
          %s378 = smul.addr %s377, 4
          %s379 = scalar_lea.vmem %s1, %s378
          // Predicated region
          $region60: #{model_wrapper_forward.3} parent=58 // pred_check
            _
          $region61: #{model_wrapper_forward.3} parent=58 // pred_check_branch
            %381 = sbr.rel (0) target = $region63
          $region62: #{model_wrapper_forward.3} parent=58 // pred_region
            // Predicated region
            $region64: #{model_wrapper_forward.3} parent=62 // pred_check
              _
            $region65: #{model_wrapper_forward.3} parent=62 // pred_check_branch
              %383 = sbr.rel (0) target = $region67
            $region66: #{model_wrapper_forward.3} parent=62 // pred_region
              loop: start=0, step=1, limit=1
              $region68: #{model_wrapper_forward.3} parent=66 // loop_pre_header
                _
              $region69: #{model_wrapper_forward.3} parent=66 // loop_header
                %s385 = sphi 0, %s389
                %p386 = scmp.ge.s32.totalorder %s385, 1
                %s390 = sphi %s379, %s379
                %s391 = sphi %s374, %s374
              $region70: #{model_wrapper_forward.3} parent=66 // loop_header_branch
                %388 = sbr.rel (%p386) target = $region74
              $region71: #{model_wrapper_forward.3} parent=66 // loop_body
                %v392 = vld [vmem:[%s390] sm:$0xff]
                %393 = vst [vmem:[%s391] sm:$0xff] %v392
                %v394 = vld [vmem:[%s390 + $0x8] sm:$0xff]
                %395 = vst [vmem:[%s391 + $0x8] sm:$0xff] %v394
                %v396 = vld [vmem:[%s390 + $0x20] sm:$0xff]
                %397 = vst [vmem:[%s391 + $0x10] sm:$0xff] %v396
                %v398 = vld [vmem:[%s390 + $0x28] sm:$0xff]
                %399 = vst [vmem:[%s391 + $0x18] sm:$0xff] %v398
                %v400 = vld [vmem:[%s390 + $0x40] sm:$0xff]
                %401 = vst [vmem:[%s391 + $0x20] sm:$0xff] %v400
                %v402 = vld [vmem:[%s390 + $0x48] sm:$0xff]
                %403 = vst [vmem:[%s391 + $0x28] sm:$0xff] %v402
                %v404 = vld [vmem:[%s390 + $0x60] sm:$0xff]
                %405 = vst [vmem:[%s391 + $0x30] sm:$0xff] %v404
                %v406 = vld [vmem:[%s390 + $0x68] sm:$0xff]
                %407 = vst [vmem:[%s391 + $0x38] sm:$0xff] %v406
                %v408 = vld [vmem:[%s390 + $0x80] sm:$0xff]
                %409 = vst [vmem:[%s391 + $0x40] sm:$0xff] %v408
                %v410 = vld [vmem:[%s390 + $0x88] sm:$0xff]
                %411 = vst [vmem:[%s391 + $0x48] sm:$0xff] %v410
                %v412 = vld [vmem:[%s390 + $0xa0] sm:$0xff]
                %413 = vst [vmem:[%s391 + $0x50] sm:$0xff] %v412
                %v414 = vld [vmem:[%s390 + $0xa8] sm:$0xff]
                %415 = vst [vmem:[%s391 + $0x58] sm:$0xff] %v414
                %v416 = vld [vmem:[%s390 + $0xc0] sm:$0xff]
                %417 = vst [vmem:[%s391 + $0x60] sm:$0xff] %v416
                %v418 = vld [vmem:[%s390 + $0xc8] sm:$0xff]
                %419 = vst [vmem:[%s391 + $0x68] sm:$0xff] %v418
                %v420 = vld [vmem:[%s390 + $0xe0] sm:$0xff]
                %421 = vst [vmem:[%s391 + $0x70] sm:$0xff] %v420
                %v422 = vld [vmem:[%s390 + $0xe8] sm:$0xff]
                %423 = vst [vmem:[%s391 + $0x78] sm:$0xff] %v422
              $region72: #{model_wrapper_forward.3} parent=66 // loop_footer
                %s389 = sadd.s32 1, %s385
              $region73: #{model_wrapper_forward.3} parent=66 // loop_footer_branch
                %384 = sbr.rel target = $region69
              $region74: #{model_wrapper_forward.3} parent=66 // loop_exit
                _
            $region67: #{model_wrapper_forward.3} parent=62 // pred_fallthru
              _
            // Predicated region
            $region75: #{model_wrapper_forward.3} parent=62 // pred_check
              _
            $region76: #{model_wrapper_forward.3} parent=62 // pred_check_branch
              %425 = sbr.rel target = $region78
            $region77: #{model_wrapper_forward.3} parent=62 // pred_region
              _
            $region78: #{model_wrapper_forward.3} parent=62 // pred_fallthru
              _
          $region63: #{model_wrapper_forward.3} parent=58 // pred_fallthru
            _
          %426 = vnop
        $region59: #{model_wrapper_forward.3} parent=31 // pred_fallthru
          _
        // Predicated region
        $region79: #{model_wrapper_forward.3} parent=31 // pred_check
          %p427 = pneg %p102
        $region80: #{model_wrapper_forward.3} parent=31 // pred_check_branch
          %429 = sbr.rel (%p427) target = $region82
        $region81: #{model_wrapper_forward.3} parent=31 // pred_region
          %p430 = scmp.lt.s32.totalorder %s21, 1
          %s431 = scalar_select %p430, %s21, 1
          %s432 = smul.addr %s431, 128
          %s433 = smul.addr %s432, 4
          %s434 = scalar_lea.vmem %s2, %s433
        $region82: #{model_wrapper_forward.3} parent=31 // pred_fallthru
          _
        // Predicated region
        $region83: #{model_wrapper_forward.3} parent=31 // pred_check
          %p435 = pneg %p128
        $region84: #{model_wrapper_forward.3} parent=31 // pred_check_branch
          %437 = sbr.rel (%p435) target = $region86
        $region85: #{model_wrapper_forward.3} parent=31 // pred_region
          %p438 = scmp.lt.s32.totalorder %s21, 1
          %s439 = scalar_select %p438, %s21, 1
          %s440 = smul.addr %s439, 72
          %s441 = smul.addr %s440, 4
          %s442 = scalar_lea.vmem %s3, %s441
        $region86: #{model_wrapper_forward.3} parent=31 // pred_fallthru
          _
      $region32: #{model_wrapper_forward.3} parent=5 // pred_fallthru
        _
      %p443 = scmp.le.s32.totalorder 1, %s14
      %p444 = scmp.lt.s32.totalorder %s14, 5
      %p445 = pnand %p443, %p444
      %p446 = pneg %p445
      // Predicated region
      $region87: #{model_wrapper_forward.3} parent=5 // pred_check
        _
      $region88: #{model_wrapper_forward.3} parent=5 // pred_check_branch
        %448 = sbr.rel (%p445) target = $region90
      $region89: #{model_wrapper_forward.3} parent=5 // pred_region
        %s449 = ssub.s32 %s14, 1
        %s450 = sand.u32 %s41, 1
        %s451 = sand.u32 %s41, 1
        %s452 = smul.addr %s451, 256
        %s453 = scalar_lea.vmem [#allocation2], %s452
        // Predicated region
        $region91: #{model_wrapper_forward.3} parent=89 // pred_check
          %p454 = pneg %p54
        $region92: #{model_wrapper_forward.3} parent=89 // pred_check_branch
          %456 = sbr.rel (%p454) target = $region94
        $region93: #{model_wrapper_forward.3} parent=89 // pred_region
          _
        $region94: #{model_wrapper_forward.3} parent=89 // pred_fallthru
          _
        %s457 = sand.u32 %s69, 1
        %s458 = sand.u32 %s69, 1
        %s459 = smul.addr %s458, 128
        %s460 = scalar_lea.vmem [#allocation3], %s459
        // Predicated region
        $region95: #{model_wrapper_forward.3} parent=89 // pred_check
          %p461 = pneg %p82
        $region96: #{model_wrapper_forward.3} parent=89 // pred_check_branch
          %463 = sbr.rel (%p461) target = $region98
        $region97: #{model_wrapper_forward.3} parent=89 // pred_region
          _
        $region98: #{model_wrapper_forward.3} parent=89 // pred_fallthru
          _
        %s464 = sand.u32 %s41, 1
        %s465 = sand.u32 %s41, 1
        %s466 = smul.addr %s465, 256
        %s467 = scalar_lea.vmem [#allocation2], %s466
        %p468 = pneg %p54
        %p469 = pneg %p51
        %s470 = sand.u32 %s69, 1
        %s471 = sand.u32 %s69, 1
        %s472 = smul.addr %s471, 128
        %s473 = scalar_lea.vmem [#allocation3], %s472
        %p474 = pneg %p82
        %p475 = pneg %p79
        %p476 = scmp.lt.s32.totalorder %s23, 1
        %s477 = scalar_select %p476, %s23, 1
        %s478 = smul.addr %s477, 128
        %s479 = smul.addr %s478, 4
        %s480 = scalar_lea.vmem %s2, %s479
        %p481 = pneg %p108
        %p482 = pneg %p105
        %p483 = scmp.lt.s32.totalorder %s23, 1
        %s484 = scalar_select %p483, %s23, 1
        %s485 = smul.addr %s484, 72
        %s486 = smul.addr %s485, 4
        %s487 = scalar_lea.vmem %s3, %s486
        %p488 = pneg %p134
        %p489 = pneg %p131
        %p490 = pneg %p155
        %p491 = pneg %p152
        %p492 = pneg %p176
        %p493 = pneg %p173
        %p494 = pneg %p197
        %p495 = pneg %p194
        %p496 = pneg %p218
        %p497 = pneg %p215
        %p498 = pneg %p246
        %p499 = pneg %p243
        %s500 = smul.u32 4, %s24
        %p501 = scmp.lt.s32.totalorder %s23, 1
        %s502 = scalar_select %p501, %s23, 1
        %p503 = scmp.lt.s32.totalorder %s500, 7
        %s504 = scalar_select %p503, %s500, 7
        %s505 = smul.addr %s502, 8
        %s506 = sadd.s32 %s504, %s505
        %s507 = scalar_lea.vmem %s8, %s506
        %s508 = smul.u32 4, %s24
        %s509 = smul.u32 4, %s24
        %p510 = scmp.lt.s32.totalorder %s23, 1
        %s511 = scalar_select %p510, %s23, 1
        %s512 = smul.addr %s511, 128
        %s513 = smul.addr %s512, 4
        %s514 = scalar_lea.vmem %s2, %s513
        %p515 = scmp.lt.s32.totalorder %s23, 1
        %s516 = scalar_select %p515, %s23, 1
        %s517 = smul.addr %s516, 72
        %s518 = smul.addr %s517, 4
        %s519 = scalar_lea.vmem %s3, %s518
        %s520 = smul.u32 4, %s24
        %p521 = scmp.lt.s32.totalorder %s23, 1
        %s522 = scalar_select %p521, %s23, 1
        %p523 = scmp.lt.s32.totalorder %s520, 7
        %s524 = scalar_select %p523, %s520, 7
        %s525 = smul.addr %s522, 8
        %s526 = sadd.s32 %s524, %s525
        %s527 = scalar_lea.vmem %s8, %s526
        %s528 = smul.u32 4, %s24
        %v530 = vld [vmem:[%s4] sm:$0xff]
        %v531 = vld [vmem:[%s4 + $0x8] sm:$0xff]
        %v532 = vld [vmem:[%s4 + $0x10] sm:$0xff]
        %v533 = vld [vmem:[%s4 + $0x18] sm:$0xff]
        %v534 = vld [vmem:[%s4 + $0x20] sm:$0xff]
        %v535 = vld [vmem:[%s4 + $0x28] sm:$0xff]
        %v536 = vld [vmem:[%s4 + $0x30] sm:$0xff]
        %v537 = vld [vmem:[%s4 + $0x38] sm:$0xff]
        %v538 = vld [vmem:[%s4 + $0x40] sm:$0xff]
        %v539 = vld [vmem:[%s4 + $0x48] sm:$0xff]
        %v540 = vld [vmem:[%s4 + $0x50] sm:$0xff]
        %v541 = vld [vmem:[%s4 + $0x58] sm:$0xff]
        %v542 = vld [vmem:[%s4 + $0x60] sm:$0xff]
        %v543 = vld [vmem:[%s4 + $0x68] sm:$0xff]
        %v544 = vld [vmem:[%s4 + $0x70] sm:$0xff]
        %v545 = vld [vmem:[%s4 + $0x78] sm:$0xff]
        %v546 = vld [vmem:[%s453] sm:$0xff]
        %v547 = vld [vmem:[%s453 + $0x8] sm:$0xff]
        %v548 = vld [vmem:[%s453 + $0x10] sm:$0xff]
        %v549 = vld [vmem:[%s453 + $0x18] sm:$0xff]
        %v550 = vld [vmem:[%s453 + $0x20] sm:$0xff]
        %v551 = vld [vmem:[%s453 + $0x28] sm:$0xff]
        %v552 = vld [vmem:[%s453 + $0x30] sm:$0xff]
        %v553 = vld [vmem:[%s453 + $0x38] sm:$0xff]
        %v554 = vld [vmem:[%s453 + $0x40] sm:$0xff]
        %v555 = vld [vmem:[%s453 + $0x48] sm:$0xff]
        %v556 = vld [vmem:[%s453 + $0x50] sm:$0xff]
        %v557 = vld [vmem:[%s453 + $0x58] sm:$0xff]
        %v558 = vld [vmem:[%s453 + $0x60] sm:$0xff]
        %v559 = vld [vmem:[%s453 + $0x68] sm:$0xff]
        %v560 = vld [vmem:[%s453 + $0x70] sm:$0xff]
        %v561 = vld [vmem:[%s453 + $0x78] sm:$0xff]
        %v562 = vld [vmem:[%s453 + $0x80] sm:$0xff]
        %v563 = vld [vmem:[%s453 + $0x88] sm:$0xff]
        %v564 = vld [vmem:[%s453 + $0x90] sm:$0xff]
        %v565 = vld [vmem:[%s453 + $0x98] sm:$0xff]
        %v566 = vld [vmem:[%s453 + $0xa0] sm:$0xff]
        %v567 = vld [vmem:[%s453 + $0xa8] sm:$0xff]
        %v568 = vld [vmem:[%s453 + $0xb0] sm:$0xff]
        %v569 = vld [vmem:[%s453 + $0xb8] sm:$0xff]
        %v570 = vld [vmem:[%s453 + $0xc0] sm:$0xff]
        %v571 = vld [vmem:[%s453 + $0xc8] sm:$0xff]
        %v572 = vld [vmem:[%s453 + $0xd0] sm:$0xff]
        %v573 = vld [vmem:[%s453 + $0xd8] sm:$0xff]
        %v574 = vld [vmem:[%s453 + $0xe0] sm:$0xff]
        %v575 = vld [vmem:[%s453 + $0xe8] sm:$0xff]
        %v576 = vld [vmem:[%s453 + $0xf0] sm:$0xff]
        %v577 = vld [vmem:[%s453 + $0xf8] sm:$0xff]
        %v578 = vld [vmem:[%s460] sm:$0xff]
        %v579 = vld [vmem:[%s460 + $0x8] sm:$0xff]
        %v580 = vld [vmem:[%s460 + $0x10] sm:$0xff]
        %v581 = vld [vmem:[%s460 + $0x18] sm:$0xff]
        %v582 = vld [vmem:[%s460 + $0x20] sm:$0xff]
        %v583 = vld [vmem:[%s460 + $0x28] sm:$0xff]
        %v584 = vld [vmem:[%s460 + $0x30] sm:$0xff]
        %v585 = vld [vmem:[%s460 + $0x38] sm:$0xff]
        %v586 = vld [vmem:[%s460 + $0x40] sm:$0xff]
        %v587 = vld [vmem:[%s460 + $0x48] sm:$0xff]
        %v588 = vld [vmem:[%s460 + $0x50] sm:$0xff]
        %v589 = vld [vmem:[%s460 + $0x58] sm:$0xff]
        %v590 = vld [vmem:[%s460 + $0x60] sm:$0xff]
        %v591 = vld [vmem:[%s460 + $0x68] sm:$0xff]
        %v592 = vld [vmem:[%s460 + $0x70] sm:$0xff]
        %v593 = vld [vmem:[%s460 + $0x78] sm:$0xff]
        %v594 = vld [vmem:[%s514] sm:$0xf]
        %v595 = vld [vmem:[%s514 + $0x4] sm:$0xf]
        %v596 = vld [vmem:[%s514 + $0x8] sm:$0xf]
        %v597 = vld [vmem:[%s514 + $0xc] sm:$0xf]
        %v598 = vld [vmem:[%s514 + $0x10] sm:$0xf]
        %v599 = vld [vmem:[%s514 + $0x14] sm:$0xf]
        %v600 = vld [vmem:[%s514 + $0x18] sm:$0xf]
        %v601 = vld [vmem:[%s514 + $0x1c] sm:$0xf]
        %v602 = vld [vmem:[%s514 + $0x20] sm:$0xf]
        %v603 = vld [vmem:[%s514 + $0x24] sm:$0xf]
        %v604 = vld [vmem:[%s514 + $0x28] sm:$0xf]
        %v605 = vld [vmem:[%s514 + $0x2c] sm:$0xf]
        %v606 = vld [vmem:[%s514 + $0x30] sm:$0xf]
        %v607 = vld [vmem:[%s514 + $0x34] sm:$0xf]
        %v608 = vld [vmem:[%s514 + $0x38] sm:$0xf]
        %v609 = vld [vmem:[%s514 + $0x3c] sm:$0xf]
        %v610 = vld [vmem:[%s514 + $0x40] sm:$0xf]
        %v611 = vld [vmem:[%s514 + $0x44] sm:$0xf]
        %v612 = vld [vmem:[%s514 + $0x48] sm:$0xf]
        %v613 = vld [vmem:[%s514 + $0x4c] sm:$0xf]
        %v614 = vld [vmem:[%s514 + $0x50] sm:$0xf]
        %v615 = vld [vmem:[%s514 + $0x54] sm:$0xf]
        %v616 = vld [vmem:[%s514 + $0x58] sm:$0xf]
        %v617 = vld [vmem:[%s514 + $0x5c] sm:$0xf]
        %v618 = vld [vmem:[%s514 + $0x60] sm:$0xf]
        %v619 = vld [vmem:[%s514 + $0x64] sm:$0xf]
        %v620 = vld [vmem:[%s514 + $0x68] sm:$0xf]
        %v621 = vld [vmem:[%s514 + $0x6c] sm:$0xf]
        %v622 = vld [vmem:[%s514 + $0x70] sm:$0xf]
        %v623 = vld [vmem:[%s514 + $0x74] sm:$0xf]
        %v624 = vld [vmem:[%s514 + $0x78] sm:$0xf]
        %v625 = vld [vmem:[%s514 + $0x7c] sm:$0xf]
        %v626 = vld [vmem:[%s514 + $0x80] sm:$0xf]
        %v627 = vld [vmem:[%s514 + $0x84] sm:$0xf]
        %v628 = vld [vmem:[%s514 + $0x88] sm:$0xf]
        %v629 = vld [vmem:[%s514 + $0x8c] sm:$0xf]
        %v630 = vld [vmem:[%s514 + $0x90] sm:$0xf]
        %v631 = vld [vmem:[%s514 + $0x94] sm:$0xf]
        %v632 = vld [vmem:[%s514 + $0x98] sm:$0xf]
        %v633 = vld [vmem:[%s514 + $0x9c] sm:$0xf]
        %v634 = vld [vmem:[%s514 + $0xa0] sm:$0xf]
        %v635 = vld [vmem:[%s514 + $0xa4] sm:$0xf]
        %v636 = vld [vmem:[%s514 + $0xa8] sm:$0xf]
        %v637 = vld [vmem:[%s514 + $0xac] sm:$0xf]
        %v638 = vld [vmem:[%s514 + $0xb0] sm:$0xf]
        %v639 = vld [vmem:[%s514 + $0xb4] sm:$0xf]
        %v640 = vld [vmem:[%s514 + $0xb8] sm:$0xf]
        %v641 = vld [vmem:[%s514 + $0xbc] sm:$0xf]
        %v642 = vld [vmem:[%s514 + $0xc0] sm:$0xf]
        %v643 = vld [vmem:[%s514 + $0xc4] sm:$0xf]
        %v644 = vld [vmem:[%s514 + $0xc8] sm:$0xf]
        %v645 = vld [vmem:[%s514 + $0xcc] sm:$0xf]
        %v646 = vld [vmem:[%s514 + $0xd0] sm:$0xf]
        %v647 = vld [vmem:[%s514 + $0xd4] sm:$0xf]
        %v648 = vld [vmem:[%s514 + $0xd8] sm:$0xf]
        %v649 = vld [vmem:[%s514 + $0xdc] sm:$0xf]
        %v650 = vld [vmem:[%s514 + $0xe0] sm:$0xf]
        %v651 = vld [vmem:[%s514 + $0xe4] sm:$0xf]
        %v652 = vld [vmem:[%s514 + $0xe8] sm:$0xf]
        %v653 = vld [vmem:[%s514 + $0xec] sm:$0xf]
        %v654 = vld [vmem:[%s514 + $0xf0] sm:$0xf]
        %v655 = vld [vmem:[%s514 + $0xf4] sm:$0xf]
        %v656 = vld [vmem:[%s514 + $0xf8] sm:$0xf]
        %v657 = vld [vmem:[%s514 + $0xfc] sm:$0xf]
        %v658 = vld [vmem:[%s514 + $0x100] sm:$0xf]
        %v659 = vld [vmem:[%s514 + $0x104] sm:$0xf]
        %v660 = vld [vmem:[%s514 + $0x108] sm:$0xf]
        %v661 = vld [vmem:[%s514 + $0x10c] sm:$0xf]
        %v662 = vld [vmem:[%s514 + $0x110] sm:$0xf]
        %v663 = vld [vmem:[%s514 + $0x114] sm:$0xf]
        %v664 = vld [vmem:[%s514 + $0x118] sm:$0xf]
        %v665 = vld [vmem:[%s514 + $0x11c] sm:$0xf]
        %v666 = vld [vmem:[%s514 + $0x120] sm:$0xf]
        %v667 = vld [vmem:[%s514 + $0x124] sm:$0xf]
        %v668 = vld [vmem:[%s514 + $0x128] sm:$0xf]
        %v669 = vld [vmem:[%s514 + $0x12c] sm:$0xf]
        %v670 = vld [vmem:[%s514 + $0x130] sm:$0xf]
        %v671 = vld [vmem:[%s514 + $0x134] sm:$0xf]
        %v672 = vld [vmem:[%s514 + $0x138] sm:$0xf]
        %v673 = vld [vmem:[%s514 + $0x13c] sm:$0xf]
        %v674 = vld [vmem:[%s514 + $0x140] sm:$0xf]
        %v675 = vld [vmem:[%s514 + $0x144] sm:$0xf]
        %v676 = vld [vmem:[%s514 + $0x148] sm:$0xf]
        %v677 = vld [vmem:[%s514 + $0x14c] sm:$0xf]
        %v678 = vld [vmem:[%s514 + $0x150] sm:$0xf]
        %v679 = vld [vmem:[%s514 + $0x154] sm:$0xf]
        %v680 = vld [vmem:[%s514 + $0x158] sm:$0xf]
        %v681 = vld [vmem:[%s514 + $0x15c] sm:$0xf]
        %v682 = vld [vmem:[%s514 + $0x160] sm:$0xf]
        %v683 = vld [vmem:[%s514 + $0x164] sm:$0xf]
        %v684 = vld [vmem:[%s514 + $0x168] sm:$0xf]
        %v685 = vld [vmem:[%s514 + $0x16c] sm:$0xf]
        %v686 = vld [vmem:[%s514 + $0x170] sm:$0xf]
        %v687 = vld [vmem:[%s514 + $0x174] sm:$0xf]
        %v688 = vld [vmem:[%s514 + $0x178] sm:$0xf]
        %v689 = vld [vmem:[%s514 + $0x17c] sm:$0xf]
        %v690 = vld [vmem:[%s514 + $0x180] sm:$0xf]
        %v691 = vld [vmem:[%s514 + $0x184] sm:$0xf]
        %v692 = vld [vmem:[%s514 + $0x188] sm:$0xf]
        %v693 = vld [vmem:[%s514 + $0x18c] sm:$0xf]
        %v694 = vld [vmem:[%s514 + $0x190] sm:$0xf]
        %v695 = vld [vmem:[%s514 + $0x194] sm:$0xf]
        %v696 = vld [vmem:[%s514 + $0x198] sm:$0xf]
        %v697 = vld [vmem:[%s514 + $0x19c] sm:$0xf]
        %v698 = vld [vmem:[%s514 + $0x1a0] sm:$0xf]
        %v699 = vld [vmem:[%s514 + $0x1a4] sm:$0xf]
        %v700 = vld [vmem:[%s514 + $0x1a8] sm:$0xf]
        %v701 = vld [vmem:[%s514 + $0x1ac] sm:$0xf]
        %v702 = vld [vmem:[%s514 + $0x1b0] sm:$0xf]
        %v703 = vld [vmem:[%s514 + $0x1b4] sm:$0xf]
        %v704 = vld [vmem:[%s514 + $0x1b8] sm:$0xf]
        %v705 = vld [vmem:[%s514 + $0x1bc] sm:$0xf]
        %v706 = vld [vmem:[%s514 + $0x1c0] sm:$0xf]
        %v707 = vld [vmem:[%s514 + $0x1c4] sm:$0xf]
        %v708 = vld [vmem:[%s514 + $0x1c8] sm:$0xf]
        %v709 = vld [vmem:[%s514 + $0x1cc] sm:$0xf]
        %v710 = vld [vmem:[%s514 + $0x1d0] sm:$0xf]
        %v711 = vld [vmem:[%s514 + $0x1d4] sm:$0xf]
        %v712 = vld [vmem:[%s514 + $0x1d8] sm:$0xf]
        %v713 = vld [vmem:[%s514 + $0x1dc] sm:$0xf]
        %v714 = vld [vmem:[%s514 + $0x1e0] sm:$0xf]
        %v715 = vld [vmem:[%s514 + $0x1e4] sm:$0xf]
        %v716 = vld [vmem:[%s514 + $0x1e8] sm:$0xf]
        %v717 = vld [vmem:[%s514 + $0x1ec] sm:$0xf]
        %v718 = vld [vmem:[%s514 + $0x1f0] sm:$0xf]
        %v719 = vld [vmem:[%s514 + $0x1f4] sm:$0xf]
        %v720 = vld [vmem:[%s514 + $0x1f8] sm:$0xf]
        %v721 = vld [vmem:[%s514 + $0x1fc] sm:$0xf]
        %v722 = vld [vmem:[%s519] sm:$0xff]
        %v723 = vld [vmem:[%s519 + $0x8] sm:$0xff]
        %v724 = vld [vmem:[%s519 + $0x10] sm:$0xff]
        %v725 = vld [vmem:[%s519 + $0x18] sm:$0xff]
        %v726 = vld [vmem:[%s519 + $0x20] sm:$0xff]
        %v727 = vld [vmem:[%s519 + $0x28] sm:$0xff]
        %v728 = vld [vmem:[%s519 + $0x30] sm:$0xff]
        %v729 = vld [vmem:[%s519 + $0x38] sm:$0xff]
        %v730 = vld [vmem:[%s519 + $0x40] sm:$0xff]
        %v731 = vld [vmem:[%s519 + $0x48] sm:$0xff]
        %v732 = vld [vmem:[%s519 + $0x50] sm:$0xff]
        %v733 = vld [vmem:[%s519 + $0x58] sm:$0xff]
        %v734 = vld [vmem:[%s519 + $0x60] sm:$0xff]
        %v735 = vld [vmem:[%s519 + $0x68] sm:$0xff]
        %v736 = vld [vmem:[%s519 + $0x70] sm:$0xff]
        %v737 = vld [vmem:[%s519 + $0x78] sm:$0xff]
        %v738 = vld [vmem:[%s519 + $0x80] sm:$0xff]
        %v739 = vld [vmem:[%s519 + $0x88] sm:$0xff]
        %v740 = vld [vmem:[%s519 + $0x90] sm:$0xff]
        %v741 = vld [vmem:[%s519 + $0x98] sm:$0xff]
        %v742 = vld [vmem:[%s519 + $0xa0] sm:$0xff]
        %v743 = vld [vmem:[%s519 + $0xa8] sm:$0xff]
        %v744 = vld [vmem:[%s519 + $0xb0] sm:$0xff]
        %v745 = vld [vmem:[%s519 + $0xb8] sm:$0xff]
        %v746 = vld [vmem:[%s519 + $0xc0] sm:$0xff]
        %v747 = vld [vmem:[%s519 + $0xc8] sm:$0xff]
        %v748 = vld [vmem:[%s519 + $0xd0] sm:$0xff]
        %v749 = vld [vmem:[%s519 + $0xd8] sm:$0xff]
        %v750 = vld [vmem:[%s519 + $0xe0] sm:$0xff]
        %v751 = vld [vmem:[%s519 + $0xe8] sm:$0xff]
        %v752 = vld [vmem:[%s519 + $0xf0] sm:$0xff]
        %v753 = vld [vmem:[%s519 + $0xf8] sm:$0xff]
        %v754 = vld [vmem:[%s519 + $0x100] sm:$0x11]
        %v755 = vld [vmem:[%s519 + $0x108] sm:$0x11]
        %v756 = vld [vmem:[%s519 + $0x110] sm:$0x11]
        %v757 = vld [vmem:[%s519 + $0x118] sm:$0x11]
        %v886 = vunpack.c.l.b16 %v594
        %v887 = vunpack.c.l.b16 %v595
        %v888 = vunpack.c.l.b16 %v596
        %v889 = vunpack.c.l.b16 %v597
        %v890 = vunpack.c.l.b16 %v598
        %v891 = vunpack.c.l.b16 %v599
        %v892 = vunpack.c.l.b16 %v600
        %v893 = vunpack.c.l.b16 %v601
        %v894 = vunpack.c.l.b16 %v602
        %v895 = vunpack.c.l.b16 %v603
        %v896 = vunpack.c.l.b16 %v604
        %v897 = vunpack.c.l.b16 %v605
        %v898 = vunpack.c.l.b16 %v606
        %v899 = vunpack.c.l.b16 %v607
        %v900 = vunpack.c.l.b16 %v608
        %v901 = vunpack.c.l.b16 %v609
        %v902 = vunpack.c.l.b16 %v610
        %v903 = vunpack.c.l.b16 %v611
        %v904 = vunpack.c.l.b16 %v612
        %v905 = vunpack.c.l.b16 %v613
        %v906 = vunpack.c.l.b16 %v614
        %v907 = vunpack.c.l.b16 %v615
        %v908 = vunpack.c.l.b16 %v616
        %v909 = vunpack.c.l.b16 %v617
        %v910 = vunpack.c.l.b16 %v618
        %v911 = vunpack.c.l.b16 %v619
        %v912 = vunpack.c.l.b16 %v620
        %v913 = vunpack.c.l.b16 %v621
        %v914 = vunpack.c.l.b16 %v622
        %v915 = vunpack.c.l.b16 %v623
        %v916 = vunpack.c.l.b16 %v624
        %v917 = vunpack.c.l.b16 %v625
        %v918 = vunpack.c.l.b16 %v626
        %v919 = vunpack.c.l.b16 %v627
        %v920 = vunpack.c.l.b16 %v628
        %v921 = vunpack.c.l.b16 %v629
        %v922 = vunpack.c.l.b16 %v630
        %v923 = vunpack.c.l.b16 %v631
        %v924 = vunpack.c.l.b16 %v632
        %v925 = vunpack.c.l.b16 %v633
        %v926 = vunpack.c.l.b16 %v634
        %v927 = vunpack.c.l.b16 %v635
        %v928 = vunpack.c.l.b16 %v636
        %v929 = vunpack.c.l.b16 %v637
        %v930 = vunpack.c.l.b16 %v638
        %v931 = vunpack.c.l.b16 %v639
        %v932 = vunpack.c.l.b16 %v640
        %v933 = vunpack.c.l.b16 %v641
        %v934 = vunpack.c.l.b16 %v642
        %v935 = vunpack.c.l.b16 %v643
        %v936 = vunpack.c.l.b16 %v644
        %v937 = vunpack.c.l.b16 %v645
        %v938 = vunpack.c.l.b16 %v646
        %v939 = vunpack.c.l.b16 %v647
        %v940 = vunpack.c.l.b16 %v648
        %v941 = vunpack.c.l.b16 %v649
        %v942 = vunpack.c.l.b16 %v650
        %v943 = vunpack.c.l.b16 %v651
        %v944 = vunpack.c.l.b16 %v652
        %v945 = vunpack.c.l.b16 %v653
        %v946 = vunpack.c.l.b16 %v654
        %v947 = vunpack.c.l.b16 %v655
        %v948 = vunpack.c.l.b16 %v656
        %v949 = vunpack.c.l.b16 %v657
        %v950 = vunpack.c.l.b16 %v658
        %v951 = vunpack.c.l.b16 %v659
        %v952 = vunpack.c.l.b16 %v660
        %v953 = vunpack.c.l.b16 %v661
        %v954 = vunpack.c.l.b16 %v662
        %v955 = vunpack.c.l.b16 %v663
        %v956 = vunpack.c.l.b16 %v664
        %v957 = vunpack.c.l.b16 %v665
        %v958 = vunpack.c.l.b16 %v666
        %v959 = vunpack.c.l.b16 %v667
        %v960 = vunpack.c.l.b16 %v668
        %v961 = vunpack.c.l.b16 %v669
        %v962 = vunpack.c.l.b16 %v670
        %v963 = vunpack.c.l.b16 %v671
        %v964 = vunpack.c.l.b16 %v672
        %v965 = vunpack.c.l.b16 %v673
        %v966 = vunpack.c.l.b16 %v674
        %v967 = vunpack.c.l.b16 %v675
        %v968 = vunpack.c.l.b16 %v676
        %v969 = vunpack.c.l.b16 %v677
        %v970 = vunpack.c.l.b16 %v678
        %v971 = vunpack.c.l.b16 %v679
        %v972 = vunpack.c.l.b16 %v680
        %v973 = vunpack.c.l.b16 %v681
        %v974 = vunpack.c.l.b16 %v682
        %v975 = vunpack.c.l.b16 %v683
        %v976 = vunpack.c.l.b16 %v684
        %v977 = vunpack.c.l.b16 %v685
        %v978 = vunpack.c.l.b16 %v686
        %v979 = vunpack.c.l.b16 %v687
        %v980 = vunpack.c.l.b16 %v688
        %v981 = vunpack.c.l.b16 %v689
        %v982 = vunpack.c.l.b16 %v690
        %v983 = vunpack.c.l.b16 %v691
        %v984 = vunpack.c.l.b16 %v692
        %v985 = vunpack.c.l.b16 %v693
        %v986 = vunpack.c.l.b16 %v694
        %v987 = vunpack.c.l.b16 %v695
        %v988 = vunpack.c.l.b16 %v696
        %v989 = vunpack.c.l.b16 %v697
        %v990 = vunpack.c.l.b16 %v698
        %v991 = vunpack.c.l.b16 %v699
        %v992 = vunpack.c.l.b16 %v700
        %v993 = vunpack.c.l.b16 %v701
        %v994 = vunpack.c.l.b16 %v702
        %v995 = vunpack.c.l.b16 %v703
        %v996 = vunpack.c.l.b16 %v704
        %v997 = vunpack.c.l.b16 %v705
        %v998 = vunpack.c.l.b16 %v706
        %v999 = vunpack.c.l.b16 %v707
        %v1000 = vunpack.c.l.b16 %v708
        %v1001 = vunpack.c.l.b16 %v709
        %v1002 = vunpack.c.l.b16 %v710
        %v1003 = vunpack.c.l.b16 %v711
        %v1004 = vunpack.c.l.b16 %v712
        %v1005 = vunpack.c.l.b16 %v713
        %v1006 = vunpack.c.l.b16 %v714
        %v1007 = vunpack.c.l.b16 %v715
        %v1008 = vunpack.c.l.b16 %v716
        %v1009 = vunpack.c.l.b16 %v717
        %v1010 = vunpack.c.l.b16 %v718
        %v1011 = vunpack.c.l.b16 %v719
        %v1012 = vunpack.c.l.b16 %v720
        %v1013 = vunpack.c.l.b16 %v721
        %v1014 = vpack.c.b16 %v887, %v886
        %v1015 = vpack.c.b16 %v889, %v888
        %v1016 = vpack.c.b16 %v891, %v890
        %v1017 = vpack.c.b16 %v893, %v892
        %v1018 = vpack.c.b16 %v895, %v894
        %v1019 = vpack.c.b16 %v897, %v896
        %v1020 = vpack.c.b16 %v899, %v898
        %v1021 = vpack.c.b16 %v901, %v900
        %v1022 = vpack.c.b16 %v903, %v902
        %v1023 = vpack.c.b16 %v905, %v904
        %v1024 = vpack.c.b16 %v907, %v906
        %v1025 = vpack.c.b16 %v909, %v908
        %v1026 = vpack.c.b16 %v911, %v910
        %v1027 = vpack.c.b16 %v913, %v912
        %v1028 = vpack.c.b16 %v915, %v914
        %v1029 = vpack.c.b16 %v917, %v916
        %v1030 = vpack.c.b16 %v919, %v918
        %v1031 = vpack.c.b16 %v921, %v920
        %v1032 = vpack.c.b16 %v923, %v922
        %v1033 = vpack.c.b16 %v925, %v924
        %v1034 = vpack.c.b16 %v927, %v926
        %v1035 = vpack.c.b16 %v929, %v928
        %v1036 = vpack.c.b16 %v931, %v930
        %v1037 = vpack.c.b16 %v933, %v932
        %v1038 = vpack.c.b16 %v935, %v934
        %v1039 = vpack.c.b16 %v937, %v936
        %v1040 = vpack.c.b16 %v939, %v938
        %v1041 = vpack.c.b16 %v941, %v940
        %v1042 = vpack.c.b16 %v943, %v942
        %v1043 = vpack.c.b16 %v945, %v944
        %v1044 = vpack.c.b16 %v947, %v946
        %v1045 = vpack.c.b16 %v949, %v948
        %v1046 = vpack.c.b16 %v951, %v950
        %v1047 = vpack.c.b16 %v953, %v952
        %v1048 = vpack.c.b16 %v955, %v954
        %v1049 = vpack.c.b16 %v957, %v956
        %v1050 = vpack.c.b16 %v959, %v958
        %v1051 = vpack.c.b16 %v961, %v960
        %v1052 = vpack.c.b16 %v963, %v962
        %v1053 = vpack.c.b16 %v965, %v964
        %v1054 = vpack.c.b16 %v967, %v966
        %v1055 = vpack.c.b16 %v969, %v968
        %v1056 = vpack.c.b16 %v971, %v970
        %v1057 = vpack.c.b16 %v973, %v972
        %v1058 = vpack.c.b16 %v975, %v974
        %v1059 = vpack.c.b16 %v977, %v976
        %v1060 = vpack.c.b16 %v979, %v978
        %v1061 = vpack.c.b16 %v981, %v980
        %v1062 = vpack.c.b16 %v983, %v982
        %v1063 = vpack.c.b16 %v985, %v984
        %v1064 = vpack.c.b16 %v987, %v986
        %v1065 = vpack.c.b16 %v989, %v988
        %v1066 = vpack.c.b16 %v991, %v990
        %v1067 = vpack.c.b16 %v993, %v992
        %v1068 = vpack.c.b16 %v995, %v994
        %v1069 = vpack.c.b16 %v997, %v996
        %v1070 = vpack.c.b16 %v999, %v998
        %v1071 = vpack.c.b16 %v1001, %v1000
        %v1072 = vpack.c.b16 %v1003, %v1002
        %v1073 = vpack.c.b16 %v1005, %v1004
        %v1074 = vpack.c.b16 %v1007, %v1006
        %v1075 = vpack.c.b16 %v1009, %v1008
        %v1076 = vpack.c.b16 %v1011, %v1010
        %v1077 = vpack.c.b16 %v1013, %v1012
        %v1094 = vunpack.c.l.b16 %v578
        %v1095 = vunpack.c.h.b16 %v578
        %v1096 = vunpack.c.l.b16 %v579
        %v1097 = vunpack.c.h.b16 %v579
        %v1098 = vunpack.c.l.b16 %v580
        %v1099 = vunpack.c.h.b16 %v580
        %v1100 = vunpack.c.l.b16 %v581
        %v1101 = vunpack.c.h.b16 %v581
        %v1102 = vunpack.c.l.b16 %v582
        %v1103 = vunpack.c.h.b16 %v582
        %v1104 = vunpack.c.l.b16 %v583
        %v1105 = vunpack.c.h.b16 %v583
        %v1106 = vunpack.c.l.b16 %v584
        %v1107 = vunpack.c.h.b16 %v584
        %v1108 = vunpack.c.l.b16 %v585
        %v1109 = vunpack.c.h.b16 %v585
        %v1110 = vunpack.c.l.b16 %v586
        %v1111 = vunpack.c.h.b16 %v586
        %v1112 = vunpack.c.l.b16 %v587
        %v1113 = vunpack.c.h.b16 %v587
        %v1114 = vunpack.c.l.b16 %v588
        %v1115 = vunpack.c.h.b16 %v588
        %v1116 = vunpack.c.l.b16 %v589
        %v1117 = vunpack.c.h.b16 %v589
        %v1118 = vunpack.c.l.b16 %v590
        %v1119 = vunpack.c.h.b16 %v590
        %v1120 = vunpack.c.l.b16 %v591
        %v1121 = vunpack.c.h.b16 %v591
        %v1122 = vunpack.c.l.b16 %v592
        %v1123 = vunpack.c.h.b16 %v592
        %v1124 = vunpack.c.l.b16 %v593
        %v1125 = vunpack.c.h.b16 %v593
        %v1126 = vpack.c.b16 %v1098, %v1094
        %v1127 = vpack.c.b16 %v1099, %v1095
        %v1128 = vpack.c.b16 %v1100, %v1096
        %v1129 = vpack.c.b16 %v1101, %v1097
        %v1130 = vpack.c.b16 %v1106, %v1102
        %v1131 = vpack.c.b16 %v1107, %v1103
        %v1132 = vpack.c.b16 %v1108, %v1104
        %v1133 = vpack.c.b16 %v1109, %v1105
        %v1134 = vpack.c.b16 %v1114, %v1110
        %v1135 = vpack.c.b16 %v1115, %v1111
        %v1136 = vpack.c.b16 %v1116, %v1112
        %v1137 = vpack.c.b16 %v1117, %v1113
        %v1138 = vpack.c.b16 %v1122, %v1118
        %v1139 = vpack.c.b16 %v1123, %v1119
        %v1140 = vpack.c.b16 %v1124, %v1120
        %v1141 = vpack.c.b16 %v1125, %v1121
        %vm1158 = vcmask 523264
        %v1160 = vsel %vm1158, %v1014, 0
        %v1163 = vsel %vm1158, %v1015, 0
        %v1166 = vsel %vm1158, %v1016, 0
        %v1169 = vsel %vm1158, %v1017, 0
        %v1172 = vsel %vm1158, %v1018, 0
        %v1175 = vsel %vm1158, %v1019, 0
        %v1178 = vsel %vm1158, %v1020, 0
        %v1181 = vsel %vm1158, %v1021, 0
        %v1184 = vsel %vm1158, %v1022, 0
        %v1187 = vsel %vm1158, %v1023, 0
        %v1190 = vsel %vm1158, %v1024, 0
        %v1193 = vsel %vm1158, %v1025, 0
        %v1196 = vsel %vm1158, %v1026, 0
        %v1199 = vsel %vm1158, %v1027, 0
        %v1202 = vsel %vm1158, %v1028, 0
        %v1205 = vsel %vm1158, %v1029, 0
        %v1208 = vsel %vm1158, %v1030, 0
        %v1211 = vsel %vm1158, %v1031, 0
        %v1214 = vsel %vm1158, %v1032, 0
        %v1217 = vsel %vm1158, %v1033, 0
        %v1220 = vsel %vm1158, %v1034, 0
        %v1223 = vsel %vm1158, %v1035, 0
        %v1226 = vsel %vm1158, %v1036, 0
        %v1229 = vsel %vm1158, %v1037, 0
        %v1232 = vsel %vm1158, %v1038, 0
        %v1235 = vsel %vm1158, %v1039, 0
        %v1238 = vsel %vm1158, %v1040, 0
        %v1241 = vsel %vm1158, %v1041, 0
        %v1244 = vsel %vm1158, %v1042, 0
        %v1247 = vsel %vm1158, %v1043, 0
        %v1250 = vsel %vm1158, %v1044, 0
        %v1253 = vsel %vm1158, %v1045, 0
        %v1256 = vsel %vm1158, %v1046, 0
        %v1259 = vsel %vm1158, %v1047, 0
        %v1262 = vsel %vm1158, %v1048, 0
        %v1265 = vsel %vm1158, %v1049, 0
        %v1268 = vsel %vm1158, %v1050, 0
        %v1271 = vsel %vm1158, %v1051, 0
        %v1274 = vsel %vm1158, %v1052, 0
        %v1277 = vsel %vm1158, %v1053, 0
        %v1280 = vsel %vm1158, %v1054, 0
        %v1283 = vsel %vm1158, %v1055, 0
        %v1286 = vsel %vm1158, %v1056, 0
        %v1289 = vsel %vm1158, %v1057, 0
        %v1292 = vsel %vm1158, %v1058, 0
        %v1295 = vsel %vm1158, %v1059, 0
        %v1298 = vsel %vm1158, %v1060, 0
        %v1301 = vsel %vm1158, %v1061, 0
        %v1304 = vsel %vm1158, %v1062, 0
        %v1307 = vsel %vm1158, %v1063, 0
        %v1310 = vsel %vm1158, %v1064, 0
        %v1313 = vsel %vm1158, %v1065, 0
        %v1316 = vsel %vm1158, %v1066, 0
        %v1319 = vsel %vm1158, %v1067, 0
        %v1322 = vsel %vm1158, %v1068, 0
        %v1325 = vsel %vm1158, %v1069, 0
        %v1328 = vsel %vm1158, %v1070, 0
        %v1331 = vsel %vm1158, %v1071, 0
        %v1334 = vsel %vm1158, %v1072, 0
        %v1337 = vsel %vm1158, %v1073, 0
        %v1340 = vsel %vm1158, %v1074, 0
        %v1343 = vsel %vm1158, %v1075, 0
        %v1346 = vsel %vm1158, %v1076, 0
        %v1349 = vsel %vm1158, %v1077, 0
        %1351 = vmatpush.bf16.msra.mxu0 0
        %1352 = vmatpush.bf16.msra.mxu0 0
        %1353 = vmatpush.bf16.msra.mxu0 0
        %1354 = vmatpush.bf16.msra.mxu0 0
        %1355 = vmatpush.bf16.msra.mxu0 %v1138
        %1356 = vmatpush.bf16.msra.mxu0 %v1134
        %1357 = vmatpush.bf16.msra.mxu0 %v1130
        %1358 = vmatpush.bf16.msra.mxu0 %v1126
        %1359 = vmatmul.bf16.gmra.mxu0 %v1160
        %v1360 = vpop.f32.mrf.mxu0
        %v1361 = vadd.f32 0.0, %v1360
        %v1362 = vpop.f32.mrf.mxu0
        %v1363 = vadd.f32 0.0, %v1362
        %1364 = vmatmul.bf16.gmra.mxu0 %v1163
        %v1365 = vpop.f32.mrf.mxu0
        %v1366 = vadd.f32 0.0, %v1365
        %v1367 = vpop.f32.mrf.mxu0
        %v1368 = vadd.f32 0.0, %v1367
        %1369 = vmatmul.bf16.gmra.mxu0 %v1166
        %v1370 = vpop.f32.mrf.mxu0
        %v1371 = vadd.f32 0.0, %v1370
        %v1372 = vpop.f32.mrf.mxu0
        %v1373 = vadd.f32 0.0, %v1372
        %1374 = vmatmul.bf16.gmra.mxu0 %v1169
        %v1375 = vpop.f32.mrf.mxu0
        %v1376 = vadd.f32 0.0, %v1375
        %v1377 = vpop.f32.mrf.mxu0
        %v1378 = vadd.f32 0.0, %v1377
        %1379 = vmatmul.bf16.gmra.mxu0 %v1172
        %v1380 = vpop.f32.mrf.mxu0
        %v1381 = vadd.f32 0.0, %v1380
        %v1382 = vpop.f32.mrf.mxu0
        %v1383 = vadd.f32 0.0, %v1382
        %1384 = vmatmul.bf16.gmra.mxu0 %v1175
        %v1385 = vpop.f32.mrf.mxu0
        %v1386 = vadd.f32 0.0, %v1385
        %v1387 = vpop.f32.mrf.mxu0
        %v1388 = vadd.f32 0.0, %v1387
        %1389 = vmatmul.bf16.gmra.mxu0 %v1178
        %v1390 = vpop.f32.mrf.mxu0
        %v1391 = vadd.f32 0.0, %v1390
        %v1392 = vpop.f32.mrf.mxu0
        %v1393 = vadd.f32 0.0, %v1392
        %1394 = vmatmul.bf16.gmra.mxu0 %v1181
        %v1395 = vpop.f32.mrf.mxu0
        %v1396 = vadd.f32 0.0, %v1395
        %v1397 = vpop.f32.mrf.mxu0
        %v1398 = vadd.f32 0.0, %v1397
        %1399 = vmatmul.bf16.gmra.mxu0 %v1184
        %v1400 = vpop.f32.mrf.mxu0
        %v1401 = vadd.f32 0.0, %v1400
        %v1402 = vpop.f32.mrf.mxu0
        %v1403 = vadd.f32 0.0, %v1402
        %1404 = vmatmul.bf16.gmra.mxu0 %v1187
        %v1405 = vpop.f32.mrf.mxu0
        %v1406 = vadd.f32 0.0, %v1405
        %v1407 = vpop.f32.mrf.mxu0
        %v1408 = vadd.f32 0.0, %v1407
        %1409 = vmatmul.bf16.gmra.mxu0 %v1190
        %v1410 = vpop.f32.mrf.mxu0
        %v1411 = vadd.f32 0.0, %v1410
        %v1412 = vpop.f32.mrf.mxu0
        %v1413 = vadd.f32 0.0, %v1412
        %1414 = vmatmul.bf16.gmra.mxu0 %v1193
        %v1415 = vpop.f32.mrf.mxu0
        %v1416 = vadd.f32 0.0, %v1415
        %v1417 = vpop.f32.mrf.mxu0
        %v1418 = vadd.f32 0.0, %v1417
        %1419 = vmatmul.bf16.gmra.mxu0 %v1196
        %v1420 = vpop.f32.mrf.mxu0
        %v1421 = vadd.f32 0.0, %v1420
        %v1422 = vpop.f32.mrf.mxu0
        %v1423 = vadd.f32 0.0, %v1422
        %1424 = vmatmul.bf16.gmra.mxu0 %v1199
        %v1425 = vpop.f32.mrf.mxu0
        %v1426 = vadd.f32 0.0, %v1425
        %v1427 = vpop.f32.mrf.mxu0
        %v1428 = vadd.f32 0.0, %v1427
        %1429 = vmatmul.bf16.gmra.mxu0 %v1202
        %v1430 = vpop.f32.mrf.mxu0
        %v1431 = vadd.f32 0.0, %v1430
        %v1432 = vpop.f32.mrf.mxu0
        %v1433 = vadd.f32 0.0, %v1432
        %1434 = vmatmul.bf16.gmra.mxu0 %v1205
        %v1435 = vpop.f32.mrf.mxu0
        %v1436 = vadd.f32 0.0, %v1435
        %v1437 = vpop.f32.mrf.mxu0
        %v1438 = vadd.f32 0.0, %v1437
        %1439 = vmatmul.bf16.gmra.mxu0 %v1208
        %v1440 = vpop.f32.mrf.mxu0
        %v1441 = vadd.f32 0.0, %v1440
        %v1442 = vpop.f32.mrf.mxu0
        %v1443 = vadd.f32 0.0, %v1442
        %1444 = vmatmul.bf16.gmra.mxu0 %v1211
        %v1445 = vpop.f32.mrf.mxu0
        %v1446 = vadd.f32 0.0, %v1445
        %v1447 = vpop.f32.mrf.mxu0
        %v1448 = vadd.f32 0.0, %v1447
        %1449 = vmatmul.bf16.gmra.mxu0 %v1214
        %v1450 = vpop.f32.mrf.mxu0
        %v1451 = vadd.f32 0.0, %v1450
        %v1452 = vpop.f32.mrf.mxu0
        %v1453 = vadd.f32 0.0, %v1452
        %1454 = vmatmul.bf16.gmra.mxu0 %v1217
        %v1455 = vpop.f32.mrf.mxu0
        %v1456 = vadd.f32 0.0, %v1455
        %v1457 = vpop.f32.mrf.mxu0
        %v1458 = vadd.f32 0.0, %v1457
        %1459 = vmatmul.bf16.gmra.mxu0 %v1220
        %v1460 = vpop.f32.mrf.mxu0
        %v1461 = vadd.f32 0.0, %v1460
        %v1462 = vpop.f32.mrf.mxu0
        %v1463 = vadd.f32 0.0, %v1462
        %1464 = vmatmul.bf16.gmra.mxu0 %v1223
        %v1465 = vpop.f32.mrf.mxu0
        %v1466 = vadd.f32 0.0, %v1465
        %v1467 = vpop.f32.mrf.mxu0
        %v1468 = vadd.f32 0.0, %v1467
        %1469 = vmatmul.bf16.gmra.mxu0 %v1226
        %v1470 = vpop.f32.mrf.mxu0
        %v1471 = vadd.f32 0.0, %v1470
        %v1472 = vpop.f32.mrf.mxu0
        %v1473 = vadd.f32 0.0, %v1472
        %1474 = vmatmul.bf16.gmra.mxu0 %v1229
        %v1475 = vpop.f32.mrf.mxu0
        %v1476 = vadd.f32 0.0, %v1475
        %v1477 = vpop.f32.mrf.mxu0
        %v1478 = vadd.f32 0.0, %v1477
        %1479 = vmatmul.bf16.gmra.mxu0 %v1232
        %v1480 = vpop.f32.mrf.mxu0
        %v1481 = vadd.f32 0.0, %v1480
        %v1482 = vpop.f32.mrf.mxu0
        %v1483 = vadd.f32 0.0, %v1482
        %1484 = vmatmul.bf16.gmra.mxu0 %v1235
        %v1485 = vpop.f32.mrf.mxu0
        %v1486 = vadd.f32 0.0, %v1485
        %v1487 = vpop.f32.mrf.mxu0
        %v1488 = vadd.f32 0.0, %v1487
        %1489 = vmatmul.bf16.gmra.mxu0 %v1238
        %v1490 = vpop.f32.mrf.mxu0
        %v1491 = vadd.f32 0.0, %v1490
        %v1492 = vpop.f32.mrf.mxu0
        %v1493 = vadd.f32 0.0, %v1492
        %1494 = vmatmul.bf16.gmra.mxu0 %v1241
        %v1495 = vpop.f32.mrf.mxu0
        %v1496 = vadd.f32 0.0, %v1495
        %v1497 = vpop.f32.mrf.mxu0
        %v1498 = vadd.f32 0.0, %v1497
        %1499 = vmatmul.bf16.gmra.mxu0 %v1244
        %v1500 = vpop.f32.mrf.mxu0
        %v1501 = vadd.f32 0.0, %v1500
        %v1502 = vpop.f32.mrf.mxu0
        %v1503 = vadd.f32 0.0, %v1502
        %1504 = vmatmul.bf16.gmra.mxu0 %v1247
        %v1505 = vpop.f32.mrf.mxu0
        %v1506 = vadd.f32 0.0, %v1505
        %v1507 = vpop.f32.mrf.mxu0
        %v1508 = vadd.f32 0.0, %v1507
        %1509 = vmatmul.bf16.gmra.mxu0 %v1250
        %v1510 = vpop.f32.mrf.mxu0
        %v1511 = vadd.f32 0.0, %v1510
        %v1512 = vpop.f32.mrf.mxu0
        %v1513 = vadd.f32 0.0, %v1512
        %1514 = vmatmul.bf16.gmra.mxu0 %v1253
        %v1515 = vpop.f32.mrf.mxu0
        %v1516 = vadd.f32 0.0, %v1515
        %v1517 = vpop.f32.mrf.mxu0
        %v1518 = vadd.f32 0.0, %v1517
        %1519 = vmatmul.bf16.gmra.mxu0 %v1256
        %v1520 = vpop.f32.mrf.mxu0
        %v1521 = vadd.f32 0.0, %v1520
        %v1522 = vpop.f32.mrf.mxu0
        %v1523 = vadd.f32 0.0, %v1522
        %1524 = vmatmul.bf16.gmra.mxu0 %v1259
        %v1525 = vpop.f32.mrf.mxu0
        %v1526 = vadd.f32 0.0, %v1525
        %v1527 = vpop.f32.mrf.mxu0
        %v1528 = vadd.f32 0.0, %v1527
        %1529 = vmatmul.bf16.gmra.mxu0 %v1262
        %v1530 = vpop.f32.mrf.mxu0
        %v1531 = vadd.f32 0.0, %v1530
        %v1532 = vpop.f32.mrf.mxu0
        %v1533 = vadd.f32 0.0, %v1532
        %1534 = vmatmul.bf16.gmra.mxu0 %v1265
        %v1535 = vpop.f32.mrf.mxu0
        %v1536 = vadd.f32 0.0, %v1535
        %v1537 = vpop.f32.mrf.mxu0
        %v1538 = vadd.f32 0.0, %v1537
        %1539 = vmatmul.bf16.gmra.mxu0 %v1268
        %v1540 = vpop.f32.mrf.mxu0
        %v1541 = vadd.f32 0.0, %v1540
        %v1542 = vpop.f32.mrf.mxu0
        %v1543 = vadd.f32 0.0, %v1542
        %1544 = vmatmul.bf16.gmra.mxu0 %v1271
        %v1545 = vpop.f32.mrf.mxu0
        %v1546 = vadd.f32 0.0, %v1545
        %v1547 = vpop.f32.mrf.mxu0
        %v1548 = vadd.f32 0.0, %v1547
        %1549 = vmatmul.bf16.gmra.mxu0 %v1274
        %v1550 = vpop.f32.mrf.mxu0
        %v1551 = vadd.f32 0.0, %v1550
        %v1552 = vpop.f32.mrf.mxu0
        %v1553 = vadd.f32 0.0, %v1552
        %1554 = vmatmul.bf16.gmra.mxu0 %v1277
        %v1555 = vpop.f32.mrf.mxu0
        %v1556 = vadd.f32 0.0, %v1555
        %v1557 = vpop.f32.mrf.mxu0
        %v1558 = vadd.f32 0.0, %v1557
        %1559 = vmatmul.bf16.gmra.mxu0 %v1280
        %v1560 = vpop.f32.mrf.mxu0
        %v1561 = vadd.f32 0.0, %v1560
        %v1562 = vpop.f32.mrf.mxu0
        %v1563 = vadd.f32 0.0, %v1562
        %1564 = vmatmul.bf16.gmra.mxu0 %v1283
        %v1565 = vpop.f32.mrf.mxu0
        %v1566 = vadd.f32 0.0, %v1565
        %v1567 = vpop.f32.mrf.mxu0
        %v1568 = vadd.f32 0.0, %v1567
        %1569 = vmatmul.bf16.gmra.mxu0 %v1286
        %v1570 = vpop.f32.mrf.mxu0
        %v1571 = vadd.f32 0.0, %v1570
        %v1572 = vpop.f32.mrf.mxu0
        %v1573 = vadd.f32 0.0, %v1572
        %1574 = vmatmul.bf16.gmra.mxu0 %v1289
        %v1575 = vpop.f32.mrf.mxu0
        %v1576 = vadd.f32 0.0, %v1575
        %v1577 = vpop.f32.mrf.mxu0
        %v1578 = vadd.f32 0.0, %v1577
        %1579 = vmatmul.bf16.gmra.mxu0 %v1292
        %v1580 = vpop.f32.mrf.mxu0
        %v1581 = vadd.f32 0.0, %v1580
        %v1582 = vpop.f32.mrf.mxu0
        %v1583 = vadd.f32 0.0, %v1582
        %1584 = vmatmul.bf16.gmra.mxu0 %v1295
        %v1585 = vpop.f32.mrf.mxu0
        %v1586 = vadd.f32 0.0, %v1585
        %v1587 = vpop.f32.mrf.mxu0
        %v1588 = vadd.f32 0.0, %v1587
        %1589 = vmatmul.bf16.gmra.mxu0 %v1298
        %v1590 = vpop.f32.mrf.mxu0
        %v1591 = vadd.f32 0.0, %v1590
        %v1592 = vpop.f32.mrf.mxu0
        %v1593 = vadd.f32 0.0, %v1592
        %1594 = vmatmul.bf16.gmra.mxu0 %v1301
        %v1595 = vpop.f32.mrf.mxu0
        %v1596 = vadd.f32 0.0, %v1595
        %v1597 = vpop.f32.mrf.mxu0
        %v1598 = vadd.f32 0.0, %v1597
        %1599 = vmatmul.bf16.gmra.mxu0 %v1304
        %v1600 = vpop.f32.mrf.mxu0
        %v1601 = vadd.f32 0.0, %v1600
        %v1602 = vpop.f32.mrf.mxu0
        %v1603 = vadd.f32 0.0, %v1602
        %1604 = vmatmul.bf16.gmra.mxu0 %v1307
        %v1605 = vpop.f32.mrf.mxu0
        %v1606 = vadd.f32 0.0, %v1605
        %v1607 = vpop.f32.mrf.mxu0
        %v1608 = vadd.f32 0.0, %v1607
        %1609 = vmatmul.bf16.gmra.mxu0 %v1310
        %v1610 = vpop.f32.mrf.mxu0
        %v1611 = vadd.f32 0.0, %v1610
        %v1612 = vpop.f32.mrf.mxu0
        %v1613 = vadd.f32 0.0, %v1612
        %1614 = vmatmul.bf16.gmra.mxu0 %v1313
        %v1615 = vpop.f32.mrf.mxu0
        %v1616 = vadd.f32 0.0, %v1615
        %v1617 = vpop.f32.mrf.mxu0
        %v1618 = vadd.f32 0.0, %v1617
        %1619 = vmatmul.bf16.gmra.mxu0 %v1316
        %v1620 = vpop.f32.mrf.mxu0
        %v1621 = vadd.f32 0.0, %v1620
        %v1622 = vpop.f32.mrf.mxu0
        %v1623 = vadd.f32 0.0, %v1622
        %1624 = vmatmul.bf16.gmra.mxu0 %v1319
        %v1625 = vpop.f32.mrf.mxu0
        %v1626 = vadd.f32 0.0, %v1625
        %v1627 = vpop.f32.mrf.mxu0
        %v1628 = vadd.f32 0.0, %v1627
        %1629 = vmatmul.bf16.gmra.mxu0 %v1322
        %v1630 = vpop.f32.mrf.mxu0
        %v1631 = vadd.f32 0.0, %v1630
        %v1632 = vpop.f32.mrf.mxu0
        %v1633 = vadd.f32 0.0, %v1632
        %1634 = vmatmul.bf16.gmra.mxu0 %v1325
        %v1635 = vpop.f32.mrf.mxu0
        %v1636 = vadd.f32 0.0, %v1635
        %v1637 = vpop.f32.mrf.mxu0
        %v1638 = vadd.f32 0.0, %v1637
        %1639 = vmatmul.bf16.gmra.mxu0 %v1328
        %v1640 = vpop.f32.mrf.mxu0
        %v1641 = vadd.f32 0.0, %v1640
        %v1642 = vpop.f32.mrf.mxu0
        %v1643 = vadd.f32 0.0, %v1642
        %1644 = vmatmul.bf16.gmra.mxu0 %v1331
        %v1645 = vpop.f32.mrf.mxu0
        %v1646 = vadd.f32 0.0, %v1645
        %v1647 = vpop.f32.mrf.mxu0
        %v1648 = vadd.f32 0.0, %v1647
        %1649 = vmatmul.bf16.gmra.mxu0 %v1334
        %v1650 = vpop.f32.mrf.mxu0
        %v1651 = vadd.f32 0.0, %v1650
        %v1652 = vpop.f32.mrf.mxu0
        %v1653 = vadd.f32 0.0, %v1652
        %1654 = vmatmul.bf16.gmra.mxu0 %v1337
        %v1655 = vpop.f32.mrf.mxu0
        %v1656 = vadd.f32 0.0, %v1655
        %v1657 = vpop.f32.mrf.mxu0
        %v1658 = vadd.f32 0.0, %v1657
        %1659 = vmatmul.bf16.gmra.mxu0 %v1340
        %v1660 = vpop.f32.mrf.mxu0
        %v1661 = vadd.f32 0.0, %v1660
        %v1662 = vpop.f32.mrf.mxu0
        %v1663 = vadd.f32 0.0, %v1662
        %1664 = vmatmul.bf16.gmra.mxu0 %v1343
        %v1665 = vpop.f32.mrf.mxu0
        %v1666 = vadd.f32 0.0, %v1665
        %v1667 = vpop.f32.mrf.mxu0
        %v1668 = vadd.f32 0.0, %v1667
        %1669 = vmatmul.bf16.gmra.mxu0 %v1346
        %v1670 = vpop.f32.mrf.mxu0
        %v1671 = vadd.f32 0.0, %v1670
        %v1672 = vpop.f32.mrf.mxu0
        %v1673 = vadd.f32 0.0, %v1672
        %1674 = vmatmul.bf16.gmra.mxu0 %v1349
        %v1675 = vpop.f32.mrf.mxu0
        %v1676 = vadd.f32 0.0, %v1675
        %v1677 = vpop.f32.mrf.mxu0
        %v1678 = vadd.f32 0.0, %v1677
        %1679 = vdwg.mxu0
        %1680 = vmatpush.bf16.msra.mxu0 0
        %1681 = vmatpush.bf16.msra.mxu0 0
        %1682 = vmatpush.bf16.msra.mxu0 0
        %1683 = vmatpush.bf16.msra.mxu0 0
        %1684 = vmatpush.bf16.msra.mxu0 %v1139
        %1685 = vmatpush.bf16.msra.mxu0 %v1135
        %1686 = vmatpush.bf16.msra.mxu0 %v1131
        %1687 = vmatpush.bf16.msra.mxu0 %v1127
        %1688 = vmatmul.bf16.gmra.mxu0 %v1160
        %v1689 = vpop.f32.mrf.mxu0
        %v1690 = vadd.f32 0.0, %v1689
        %v1691 = vpop.f32.mrf.mxu0
        %v1692 = vadd.f32 0.0, %v1691
        %1693 = vmatmul.bf16.gmra.mxu0 %v1163
        %v1694 = vpop.f32.mrf.mxu0
        %v1695 = vadd.f32 0.0, %v1694
        %v1696 = vpop.f32.mrf.mxu0
        %v1697 = vadd.f32 0.0, %v1696
        %1698 = vmatmul.bf16.gmra.mxu0 %v1166
        %v1699 = vpop.f32.mrf.mxu0
        %v1700 = vadd.f32 0.0, %v1699
        %v1701 = vpop.f32.mrf.mxu0
        %v1702 = vadd.f32 0.0, %v1701
        %1703 = vmatmul.bf16.gmra.mxu0 %v1169
        %v1704 = vpop.f32.mrf.mxu0
        %v1705 = vadd.f32 0.0, %v1704
        %v1706 = vpop.f32.mrf.mxu0
        %v1707 = vadd.f32 0.0, %v1706
        %1708 = vmatmul.bf16.gmra.mxu0 %v1172
        %v1709 = vpop.f32.mrf.mxu0
        %v1710 = vadd.f32 0.0, %v1709
        %v1711 = vpop.f32.mrf.mxu0
        %v1712 = vadd.f32 0.0, %v1711
        %1713 = vmatmul.bf16.gmra.mxu0 %v1175
        %v1714 = vpop.f32.mrf.mxu0
        %v1715 = vadd.f32 0.0, %v1714
        %v1716 = vpop.f32.mrf.mxu0
        %v1717 = vadd.f32 0.0, %v1716
        %1718 = vmatmul.bf16.gmra.mxu0 %v1178
        %v1719 = vpop.f32.mrf.mxu0
        %v1720 = vadd.f32 0.0, %v1719
        %v1721 = vpop.f32.mrf.mxu0
        %v1722 = vadd.f32 0.0, %v1721
        %1723 = vmatmul.bf16.gmra.mxu0 %v1181
        %v1724 = vpop.f32.mrf.mxu0
        %v1725 = vadd.f32 0.0, %v1724
        %v1726 = vpop.f32.mrf.mxu0
        %v1727 = vadd.f32 0.0, %v1726
        %1728 = vmatmul.bf16.gmra.mxu0 %v1184
        %v1729 = vpop.f32.mrf.mxu0
        %v1730 = vadd.f32 0.0, %v1729
        %v1731 = vpop.f32.mrf.mxu0
        %v1732 = vadd.f32 0.0, %v1731
        %1733 = vmatmul.bf16.gmra.mxu0 %v1187
        %v1734 = vpop.f32.mrf.mxu0
        %v1735 = vadd.f32 0.0, %v1734
        %v1736 = vpop.f32.mrf.mxu0
        %v1737 = vadd.f32 0.0, %v1736
        %1738 = vmatmul.bf16.gmra.mxu0 %v1190
        %v1739 = vpop.f32.mrf.mxu0
        %v1740 = vadd.f32 0.0, %v1739
        %v1741 = vpop.f32.mrf.mxu0
        %v1742 = vadd.f32 0.0, %v1741
        %1743 = vmatmul.bf16.gmra.mxu0 %v1193
        %v1744 = vpop.f32.mrf.mxu0
        %v1745 = vadd.f32 0.0, %v1744
        %v1746 = vpop.f32.mrf.mxu0
        %v1747 = vadd.f32 0.0, %v1746
        %1748 = vmatmul.bf16.gmra.mxu0 %v1196
        %v1749 = vpop.f32.mrf.mxu0
        %v1750 = vadd.f32 0.0, %v1749
        %v1751 = vpop.f32.mrf.mxu0
        %v1752 = vadd.f32 0.0, %v1751
        %1753 = vmatmul.bf16.gmra.mxu0 %v1199
        %v1754 = vpop.f32.mrf.mxu0
        %v1755 = vadd.f32 0.0, %v1754
        %v1756 = vpop.f32.mrf.mxu0
        %v1757 = vadd.f32 0.0, %v1756
        %1758 = vmatmul.bf16.gmra.mxu0 %v1202
        %v1759 = vpop.f32.mrf.mxu0
        %v1760 = vadd.f32 0.0, %v1759
        %v1761 = vpop.f32.mrf.mxu0
        %v1762 = vadd.f32 0.0, %v1761
        %1763 = vmatmul.bf16.gmra.mxu0 %v1205
        %v1764 = vpop.f32.mrf.mxu0
        %v1765 = vadd.f32 0.0, %v1764
        %v1766 = vpop.f32.mrf.mxu0
        %v1767 = vadd.f32 0.0, %v1766
        %1768 = vmatmul.bf16.gmra.mxu0 %v1208
        %v1769 = vpop.f32.mrf.mxu0
        %v1770 = vadd.f32 0.0, %v1769
        %v1771 = vpop.f32.mrf.mxu0
        %v1772 = vadd.f32 0.0, %v1771
        %1773 = vmatmul.bf16.gmra.mxu0 %v1211
        %v1774 = vpop.f32.mrf.mxu0
        %v1775 = vadd.f32 0.0, %v1774
        %v1776 = vpop.f32.mrf.mxu0
        %v1777 = vadd.f32 0.0, %v1776
        %1778 = vmatmul.bf16.gmra.mxu0 %v1214
        %v1779 = vpop.f32.mrf.mxu0
        %v1780 = vadd.f32 0.0, %v1779
        %v1781 = vpop.f32.mrf.mxu0
        %v1782 = vadd.f32 0.0, %v1781
        %1783 = vmatmul.bf16.gmra.mxu0 %v1217
        %v1784 = vpop.f32.mrf.mxu0
        %v1785 = vadd.f32 0.0, %v1784
        %v1786 = vpop.f32.mrf.mxu0
        %v1787 = vadd.f32 0.0, %v1786
        %1788 = vmatmul.bf16.gmra.mxu0 %v1220
        %v1789 = vpop.f32.mrf.mxu0
        %v1790 = vadd.f32 0.0, %v1789
        %v1791 = vpop.f32.mrf.mxu0
        %v1792 = vadd.f32 0.0, %v1791
        %1793 = vmatmul.bf16.gmra.mxu0 %v1223
        %v1794 = vpop.f32.mrf.mxu0
        %v1795 = vadd.f32 0.0, %v1794
        %v1796 = vpop.f32.mrf.mxu0
        %v1797 = vadd.f32 0.0, %v1796
        %1798 = vmatmul.bf16.gmra.mxu0 %v1226
        %v1799 = vpop.f32.mrf.mxu0
        %v1800 = vadd.f32 0.0, %v1799
        %v1801 = vpop.f32.mrf.mxu0
        %v1802 = vadd.f32 0.0, %v1801
        %1803 = vmatmul.bf16.gmra.mxu0 %v1229
        %v1804 = vpop.f32.mrf.mxu0
        %v1805 = vadd.f32 0.0, %v1804
        %v1806 = vpop.f32.mrf.mxu0
        %v1807 = vadd.f32 0.0, %v1806
        %1808 = vmatmul.bf16.gmra.mxu0 %v1232
        %v1809 = vpop.f32.mrf.mxu0
        %v1810 = vadd.f32 0.0, %v1809
        %v1811 = vpop.f32.mrf.mxu0
        %v1812 = vadd.f32 0.0, %v1811
        %1813 = vmatmul.bf16.gmra.mxu0 %v1235
        %v1814 = vpop.f32.mrf.mxu0
        %v1815 = vadd.f32 0.0, %v1814
        %v1816 = vpop.f32.mrf.mxu0
        %v1817 = vadd.f32 0.0, %v1816
        %1818 = vmatmul.bf16.gmra.mxu0 %v1238
        %v1819 = vpop.f32.mrf.mxu0
        %v1820 = vadd.f32 0.0, %v1819
        %v1821 = vpop.f32.mrf.mxu0
        %v1822 = vadd.f32 0.0, %v1821
        %1823 = vmatmul.bf16.gmra.mxu0 %v1241
        %v1824 = vpop.f32.mrf.mxu0
        %v1825 = vadd.f32 0.0, %v1824
        %v1826 = vpop.f32.mrf.mxu0
        %v1827 = vadd.f32 0.0, %v1826
        %1828 = vmatmul.bf16.gmra.mxu0 %v1244
        %v1829 = vpop.f32.mrf.mxu0
        %v1830 = vadd.f32 0.0, %v1829
        %v1831 = vpop.f32.mrf.mxu0
        %v1832 = vadd.f32 0.0, %v1831
        %1833 = vmatmul.bf16.gmra.mxu0 %v1247
        %v1834 = vpop.f32.mrf.mxu0
        %v1835 = vadd.f32 0.0, %v1834
        %v1836 = vpop.f32.mrf.mxu0
        %v1837 = vadd.f32 0.0, %v1836
        %1838 = vmatmul.bf16.gmra.mxu0 %v1250
        %v1839 = vpop.f32.mrf.mxu0
        %v1840 = vadd.f32 0.0, %v1839
        %v1841 = vpop.f32.mrf.mxu0
        %v1842 = vadd.f32 0.0, %v1841
        %1843 = vmatmul.bf16.gmra.mxu0 %v1253
        %v1844 = vpop.f32.mrf.mxu0
        %v1845 = vadd.f32 0.0, %v1844
        %v1846 = vpop.f32.mrf.mxu0
        %v1847 = vadd.f32 0.0, %v1846
        %1848 = vmatmul.bf16.gmra.mxu0 %v1256
        %v1849 = vpop.f32.mrf.mxu0
        %v1850 = vadd.f32 0.0, %v1849
        %v1851 = vpop.f32.mrf.mxu0
        %v1852 = vadd.f32 0.0, %v1851
        %1853 = vmatmul.bf16.gmra.mxu0 %v1259
        %v1854 = vpop.f32.mrf.mxu0
        %v1855 = vadd.f32 0.0, %v1854
        %v1856 = vpop.f32.mrf.mxu0
        %v1857 = vadd.f32 0.0, %v1856
        %1858 = vmatmul.bf16.gmra.mxu0 %v1262
        %v1859 = vpop.f32.mrf.mxu0
        %v1860 = vadd.f32 0.0, %v1859
        %v1861 = vpop.f32.mrf.mxu0
        %v1862 = vadd.f32 0.0, %v1861
        %1863 = vmatmul.bf16.gmra.mxu0 %v1265
        %v1864 = vpop.f32.mrf.mxu0
        %v1865 = vadd.f32 0.0, %v1864
        %v1866 = vpop.f32.mrf.mxu0
        %v1867 = vadd.f32 0.0, %v1866
        %1868 = vmatmul.bf16.gmra.mxu0 %v1268
        %v1869 = vpop.f32.mrf.mxu0
        %v1870 = vadd.f32 0.0, %v1869
        %v1871 = vpop.f32.mrf.mxu0
        %v1872 = vadd.f32 0.0, %v1871
        %1873 = vmatmul.bf16.gmra.mxu0 %v1271
        %v1874 = vpop.f32.mrf.mxu0
        %v1875 = vadd.f32 0.0, %v1874
        %v1876 = vpop.f32.mrf.mxu0
        %v1877 = vadd.f32 0.0, %v1876
        %1878 = vmatmul.bf16.gmra.mxu0 %v1274
        %v1879 = vpop.f32.mrf.mxu0
        %v1880 = vadd.f32 0.0, %v1879
        %v1881 = vpop.f32.mrf.mxu0
        %v1882 = vadd.f32 0.0, %v1881
        %1883 = vmatmul.bf16.gmra.mxu0 %v1277
        %v1884 = vpop.f32.mrf.mxu0
        %v1885 = vadd.f32 0.0, %v1884
        %v1886 = vpop.f32.mrf.mxu0
        %v1887 = vadd.f32 0.0, %v1886
        %1888 = vmatmul.bf16.gmra.mxu0 %v1280
        %v1889 = vpop.f32.mrf.mxu0
        %v1890 = vadd.f32 0.0, %v1889
        %v1891 = vpop.f32.mrf.mxu0
        %v1892 = vadd.f32 0.0, %v1891
        %1893 = vmatmul.bf16.gmra.mxu0 %v1283
        %v1894 = vpop.f32.mrf.mxu0
        %v1895 = vadd.f32 0.0, %v1894
        %v1896 = vpop.f32.mrf.mxu0
        %v1897 = vadd.f32 0.0, %v1896
        %1898 = vmatmul.bf16.gmra.mxu0 %v1286
        %v1899 = vpop.f32.mrf.mxu0
        %v1900 = vadd.f32 0.0, %v1899
        %v1901 = vpop.f32.mrf.mxu0
        %v1902 = vadd.f32 0.0, %v1901
        %1903 = vmatmul.bf16.gmra.mxu0 %v1289
        %v1904 = vpop.f32.mrf.mxu0
        %v1905 = vadd.f32 0.0, %v1904
        %v1906 = vpop.f32.mrf.mxu0
        %v1907 = vadd.f32 0.0, %v1906
        %1908 = vmatmul.bf16.gmra.mxu0 %v1292
        %v1909 = vpop.f32.mrf.mxu0
        %v1910 = vadd.f32 0.0, %v1909
        %v1911 = vpop.f32.mrf.mxu0
        %v1912 = vadd.f32 0.0, %v1911
        %1913 = vmatmul.bf16.gmra.mxu0 %v1295
        %v1914 = vpop.f32.mrf.mxu0
        %v1915 = vadd.f32 0.0, %v1914
        %v1916 = vpop.f32.mrf.mxu0
        %v1917 = vadd.f32 0.0, %v1916
        %1918 = vmatmul.bf16.gmra.mxu0 %v1298
        %v1919 = vpop.f32.mrf.mxu0
        %v1920 = vadd.f32 0.0, %v1919
        %v1921 = vpop.f32.mrf.mxu0
        %v1922 = vadd.f32 0.0, %v1921
        %1923 = vmatmul.bf16.gmra.mxu0 %v1301
        %v1924 = vpop.f32.mrf.mxu0
        %v1925 = vadd.f32 0.0, %v1924
        %v1926 = vpop.f32.mrf.mxu0
        %v1927 = vadd.f32 0.0, %v1926
        %1928 = vmatmul.bf16.gmra.mxu0 %v1304
        %v1929 = vpop.f32.mrf.mxu0
        %v1930 = vadd.f32 0.0, %v1929
        %v1931 = vpop.f32.mrf.mxu0
        %v1932 = vadd.f32 0.0, %v1931
        %1933 = vmatmul.bf16.gmra.mxu0 %v1307
        %v1934 = vpop.f32.mrf.mxu0
        %v1935 = vadd.f32 0.0, %v1934
        %v1936 = vpop.f32.mrf.mxu0
        %v1937 = vadd.f32 0.0, %v1936
        %1938 = vmatmul.bf16.gmra.mxu0 %v1310
        %v1939 = vpop.f32.mrf.mxu0
        %v1940 = vadd.f32 0.0, %v1939
        %v1941 = vpop.f32.mrf.mxu0
        %v1942 = vadd.f32 0.0, %v1941
        %1943 = vmatmul.bf16.gmra.mxu0 %v1313
        %v1944 = vpop.f32.mrf.mxu0
        %v1945 = vadd.f32 0.0, %v1944
        %v1946 = vpop.f32.mrf.mxu0
        %v1947 = vadd.f32 0.0, %v1946
        %1948 = vmatmul.bf16.gmra.mxu0 %v1316
        %v1949 = vpop.f32.mrf.mxu0
        %v1950 = vadd.f32 0.0, %v1949
        %v1951 = vpop.f32.mrf.mxu0
        %v1952 = vadd.f32 0.0, %v1951
        %1953 = vmatmul.bf16.gmra.mxu0 %v1319
        %v1954 = vpop.f32.mrf.mxu0
        %v1955 = vadd.f32 0.0, %v1954
        %v1956 = vpop.f32.mrf.mxu0
        %v1957 = vadd.f32 0.0, %v1956
        %1958 = vmatmul.bf16.gmra.mxu0 %v1322
        %v1959 = vpop.f32.mrf.mxu0
        %v1960 = vadd.f32 0.0, %v1959
        %v1961 = vpop.f32.mrf.mxu0
        %v1962 = vadd.f32 0.0, %v1961
        %1963 = vmatmul.bf16.gmra.mxu0 %v1325
        %v1964 = vpop.f32.mrf.mxu0
        %v1965 = vadd.f32 0.0, %v1964
        %v1966 = vpop.f32.mrf.mxu0
        %v1967 = vadd.f32 0.0, %v1966
        %1968 = vmatmul.bf16.gmra.mxu0 %v1328
        %v1969 = vpop.f32.mrf.mxu0
        %v1970 = vadd.f32 0.0, %v1969
        %v1971 = vpop.f32.mrf.mxu0
        %v1972 = vadd.f32 0.0, %v1971
        %1973 = vmatmul.bf16.gmra.mxu0 %v1331
        %v1974 = vpop.f32.mrf.mxu0
        %v1975 = vadd.f32 0.0, %v1974
        %v1976 = vpop.f32.mrf.mxu0
        %v1977 = vadd.f32 0.0, %v1976
        %1978 = vmatmul.bf16.gmra.mxu0 %v1334
        %v1979 = vpop.f32.mrf.mxu0
        %v1980 = vadd.f32 0.0, %v1979
        %v1981 = vpop.f32.mrf.mxu0
        %v1982 = vadd.f32 0.0, %v1981
        %1983 = vmatmul.bf16.gmra.mxu0 %v1337
        %v1984 = vpop.f32.mrf.mxu0
        %v1985 = vadd.f32 0.0, %v1984
        %v1986 = vpop.f32.mrf.mxu0
        %v1987 = vadd.f32 0.0, %v1986
        %1988 = vmatmul.bf16.gmra.mxu0 %v1340
        %v1989 = vpop.f32.mrf.mxu0
        %v1990 = vadd.f32 0.0, %v1989
        %v1991 = vpop.f32.mrf.mxu0
        %v1992 = vadd.f32 0.0, %v1991
        %1993 = vmatmul.bf16.gmra.mxu0 %v1343
        %v1994 = vpop.f32.mrf.mxu0
        %v1995 = vadd.f32 0.0, %v1994
        %v1996 = vpop.f32.mrf.mxu0
        %v1997 = vadd.f32 0.0, %v1996
        %1998 = vmatmul.bf16.gmra.mxu0 %v1346
        %v1999 = vpop.f32.mrf.mxu0
        %v2000 = vadd.f32 0.0, %v1999
        %v2001 = vpop.f32.mrf.mxu0
        %v2002 = vadd.f32 0.0, %v2001
        %2003 = vmatmul.bf16.gmra.mxu0 %v1349
        %v2004 = vpop.f32.mrf.mxu0
        %v2005 = vadd.f32 0.0, %v2004
        %v2006 = vpop.f32.mrf.mxu0
        %v2007 = vadd.f32 0.0, %v2006
        %2008 = vdwg.mxu0
        %2009 = vmatpush.bf16.msra.mxu0 0
        %2010 = vmatpush.bf16.msra.mxu0 0
        %2011 = vmatpush.bf16.msra.mxu0 0
        %2012 = vmatpush.bf16.msra.mxu0 0
        %2013 = vmatpush.bf16.msra.mxu0 %v1140
        %2014 = vmatpush.bf16.msra.mxu0 %v1136
        %2015 = vmatpush.bf16.msra.mxu0 %v1132
        %2016 = vmatpush.bf16.msra.mxu0 %v1128
        %2017 = vmatmul.bf16.gmra.mxu0 %v1160
        %v2018 = vpop.f32.mrf.mxu0
        %v2019 = vadd.f32 0.0, %v2018
        %v2020 = vpop.f32.mrf.mxu0
        %v2021 = vadd.f32 0.0, %v2020
        %2022 = vmatmul.bf16.gmra.mxu0 %v1163
        %v2023 = vpop.f32.mrf.mxu0
        %v2024 = vadd.f32 0.0, %v2023
        %v2025 = vpop.f32.mrf.mxu0
        %v2026 = vadd.f32 0.0, %v2025
        %2027 = vmatmul.bf16.gmra.mxu0 %v1166
        %v2028 = vpop.f32.mrf.mxu0
        %v2029 = vadd.f32 0.0, %v2028
        %v2030 = vpop.f32.mrf.mxu0
        %v2031 = vadd.f32 0.0, %v2030
        %2032 = vmatmul.bf16.gmra.mxu0 %v1169
        %v2033 = vpop.f32.mrf.mxu0
        %v2034 = vadd.f32 0.0, %v2033
        %v2035 = vpop.f32.mrf.mxu0
        %v2036 = vadd.f32 0.0, %v2035
        %2037 = vmatmul.bf16.gmra.mxu0 %v1172
        %v2038 = vpop.f32.mrf.mxu0
        %v2039 = vadd.f32 0.0, %v2038
        %v2040 = vpop.f32.mrf.mxu0
        %v2041 = vadd.f32 0.0, %v2040
        %2042 = vmatmul.bf16.gmra.mxu0 %v1175
        %v2043 = vpop.f32.mrf.mxu0
        %v2044 = vadd.f32 0.0, %v2043
        %v2045 = vpop.f32.mrf.mxu0
        %v2046 = vadd.f32 0.0, %v2045
        %2047 = vmatmul.bf16.gmra.mxu0 %v1178
        %v2048 = vpop.f32.mrf.mxu0
        %v2049 = vadd.f32 0.0, %v2048
        %v2050 = vpop.f32.mrf.mxu0
        %v2051 = vadd.f32 0.0, %v2050
        %2052 = vmatmul.bf16.gmra.mxu0 %v1181
        %v2053 = vpop.f32.mrf.mxu0
        %v2054 = vadd.f32 0.0, %v2053
        %v2055 = vpop.f32.mrf.mxu0
        %v2056 = vadd.f32 0.0, %v2055
        %2057 = vmatmul.bf16.gmra.mxu0 %v1184
        %v2058 = vpop.f32.mrf.mxu0
        %v2059 = vadd.f32 0.0, %v2058
        %v2060 = vpop.f32.mrf.mxu0
        %v2061 = vadd.f32 0.0, %v2060
        %2062 = vmatmul.bf16.gmra.mxu0 %v1187
        %v2063 = vpop.f32.mrf.mxu0
        %v2064 = vadd.f32 0.0, %v2063
        %v2065 = vpop.f32.mrf.mxu0
        %v2066 = vadd.f32 0.0, %v2065
        %2067 = vmatmul.bf16.gmra.mxu0 %v1190
        %v2068 = vpop.f32.mrf.mxu0
        %v2069 = vadd.f32 0.0, %v2068
        %v2070 = vpop.f32.mrf.mxu0
        %v2071 = vadd.f32 0.0, %v2070
        %2072 = vmatmul.bf16.gmra.mxu0 %v1193
        %v2073 = vpop.f32.mrf.mxu0
        %v2074 = vadd.f32 0.0, %v2073
        %v2075 = vpop.f32.mrf.mxu0
        %v2076 = vadd.f32 0.0, %v2075
        %2077 = vmatmul.bf16.gmra.mxu0 %v1196
        %v2078 = vpop.f32.mrf.mxu0
        %v2079 = vadd.f32 0.0, %v2078
        %v2080 = vpop.f32.mrf.mxu0
        %v2081 = vadd.f32 0.0, %v2080
        %2082 = vmatmul.bf16.gmra.mxu0 %v1199
        %v2083 = vpop.f32.mrf.mxu0
        %v2084 = vadd.f32 0.0, %v2083
        %v2085 = vpop.f32.mrf.mxu0
        %v2086 = vadd.f32 0.0, %v2085
        %2087 = vmatmul.bf16.gmra.mxu0 %v1202
        %v2088 = vpop.f32.mrf.mxu0
        %v2089 = vadd.f32 0.0, %v2088
        %v2090 = vpop.f32.mrf.mxu0
        %v2091 = vadd.f32 0.0, %v2090
        %2092 = vmatmul.bf16.gmra.mxu0 %v1205
        %v2093 = vpop.f32.mrf.mxu0
        %v2094 = vadd.f32 0.0, %v2093
        %v2095 = vpop.f32.mrf.mxu0
        %v2096 = vadd.f32 0.0, %v2095
        %2097 = vmatmul.bf16.gmra.mxu0 %v1208
        %v2098 = vpop.f32.mrf.mxu0
        %v2099 = vadd.f32 0.0, %v2098
        %v2100 = vpop.f32.mrf.mxu0
        %v2101 = vadd.f32 0.0, %v2100
        %2102 = vmatmul.bf16.gmra.mxu0 %v1211
        %v2103 = vpop.f32.mrf.mxu0
        %v2104 = vadd.f32 0.0, %v2103
        %v2105 = vpop.f32.mrf.mxu0
        %v2106 = vadd.f32 0.0, %v2105
        %2107 = vmatmul.bf16.gmra.mxu0 %v1214
        %v2108 = vpop.f32.mrf.mxu0
        %v2109 = vadd.f32 0.0, %v2108
        %v2110 = vpop.f32.mrf.mxu0
        %v2111 = vadd.f32 0.0, %v2110
        %2112 = vmatmul.bf16.gmra.mxu0 %v1217
        %v2113 = vpop.f32.mrf.mxu0
        %v2114 = vadd.f32 0.0, %v2113
        %v2115 = vpop.f32.mrf.mxu0
        %v2116 = vadd.f32 0.0, %v2115
        %2117 = vmatmul.bf16.gmra.mxu0 %v1220
        %v2118 = vpop.f32.mrf.mxu0
        %v2119 = vadd.f32 0.0, %v2118
        %v2120 = vpop.f32.mrf.mxu0
        %v2121 = vadd.f32 0.0, %v2120
        %2122 = vmatmul.bf16.gmra.mxu0 %v1223
        %v2123 = vpop.f32.mrf.mxu0
        %v2124 = vadd.f32 0.0, %v2123
        %v2125 = vpop.f32.mrf.mxu0
        %v2126 = vadd.f32 0.0, %v2125
        %2127 = vmatmul.bf16.gmra.mxu0 %v1226
        %v2128 = vpop.f32.mrf.mxu0
        %v2129 = vadd.f32 0.0, %v2128
        %v2130 = vpop.f32.mrf.mxu0
        %v2131 = vadd.f32 0.0, %v2130
        %2132 = vmatmul.bf16.gmra.mxu0 %v1229
        %v2133 = vpop.f32.mrf.mxu0
        %v2134 = vadd.f32 0.0, %v2133
        %v2135 = vpop.f32.mrf.mxu0
        %v2136 = vadd.f32 0.0, %v2135
        %2137 = vmatmul.bf16.gmra.mxu0 %v1232
        %v2138 = vpop.f32.mrf.mxu0
        %v2139 = vadd.f32 0.0, %v2138
        %v2140 = vpop.f32.mrf.mxu0
        %v2141 = vadd.f32 0.0, %v2140
        %2142 = vmatmul.bf16.gmra.mxu0 %v1235
        %v2143 = vpop.f32.mrf.mxu0
        %v2144 = vadd.f32 0.0, %v2143
        %v2145 = vpop.f32.mrf.mxu0
        %v2146 = vadd.f32 0.0, %v2145
        %2147 = vmatmul.bf16.gmra.mxu0 %v1238
        %v2148 = vpop.f32.mrf.mxu0
        %v2149 = vadd.f32 0.0, %v2148
        %v2150 = vpop.f32.mrf.mxu0
        %v2151 = vadd.f32 0.0, %v2150
        %2152 = vmatmul.bf16.gmra.mxu0 %v1241
        %v2153 = vpop.f32.mrf.mxu0
        %v2154 = vadd.f32 0.0, %v2153
        %v2155 = vpop.f32.mrf.mxu0
        %v2156 = vadd.f32 0.0, %v2155
        %2157 = vmatmul.bf16.gmra.mxu0 %v1244
        %v2158 = vpop.f32.mrf.mxu0
        %v2159 = vadd.f32 0.0, %v2158
        %v2160 = vpop.f32.mrf.mxu0
        %v2161 = vadd.f32 0.0, %v2160
        %2162 = vmatmul.bf16.gmra.mxu0 %v1247
        %v2163 = vpop.f32.mrf.mxu0
        %v2164 = vadd.f32 0.0, %v2163
        %v2165 = vpop.f32.mrf.mxu0
        %v2166 = vadd.f32 0.0, %v2165
        %2167 = vmatmul.bf16.gmra.mxu0 %v1250
        %v2168 = vpop.f32.mrf.mxu0
        %v2169 = vadd.f32 0.0, %v2168
        %v2170 = vpop.f32.mrf.mxu0
        %v2171 = vadd.f32 0.0, %v2170
        %2172 = vmatmul.bf16.gmra.mxu0 %v1253
        %v2173 = vpop.f32.mrf.mxu0
        %v2174 = vadd.f32 0.0, %v2173
        %v2175 = vpop.f32.mrf.mxu0
        %v2176 = vadd.f32 0.0, %v2175
        %2177 = vmatmul.bf16.gmra.mxu0 %v1256
        %v2178 = vpop.f32.mrf.mxu0
        %v2179 = vadd.f32 0.0, %v2178
        %v2180 = vpop.f32.mrf.mxu0
        %v2181 = vadd.f32 0.0, %v2180
        %2182 = vmatmul.bf16.gmra.mxu0 %v1259
        %v2183 = vpop.f32.mrf.mxu0
        %v2184 = vadd.f32 0.0, %v2183
        %v2185 = vpop.f32.mrf.mxu0
        %v2186 = vadd.f32 0.0, %v2185
        %2187 = vmatmul.bf16.gmra.mxu0 %v1262
        %v2188 = vpop.f32.mrf.mxu0
        %v2189 = vadd.f32 0.0, %v2188
        %v2190 = vpop.f32.mrf.mxu0
        %v2191 = vadd.f32 0.0, %v2190
        %2192 = vmatmul.bf16.gmra.mxu0 %v1265
        %v2193 = vpop.f32.mrf.mxu0
        %v2194 = vadd.f32 0.0, %v2193
        %v2195 = vpop.f32.mrf.mxu0
        %v2196 = vadd.f32 0.0, %v2195
        %2197 = vmatmul.bf16.gmra.mxu0 %v1268
        %v2198 = vpop.f32.mrf.mxu0
        %v2199 = vadd.f32 0.0, %v2198
        %v2200 = vpop.f32.mrf.mxu0
        %v2201 = vadd.f32 0.0, %v2200
        %2202 = vmatmul.bf16.gmra.mxu0 %v1271
        %v2203 = vpop.f32.mrf.mxu0
        %v2204 = vadd.f32 0.0, %v2203
        %v2205 = vpop.f32.mrf.mxu0
        %v2206 = vadd.f32 0.0, %v2205
        %2207 = vmatmul.bf16.gmra.mxu0 %v1274
        %v2208 = vpop.f32.mrf.mxu0
        %v2209 = vadd.f32 0.0, %v2208
        %v2210 = vpop.f32.mrf.mxu0
        %v2211 = vadd.f32 0.0, %v2210
        %2212 = vmatmul.bf16.gmra.mxu0 %v1277
        %v2213 = vpop.f32.mrf.mxu0
        %v2214 = vadd.f32 0.0, %v2213
        %v2215 = vpop.f32.mrf.mxu0
        %v2216 = vadd.f32 0.0, %v2215
        %2217 = vmatmul.bf16.gmra.mxu0 %v1280
        %v2218 = vpop.f32.mrf.mxu0
        %v2219 = vadd.f32 0.0, %v2218
        %v2220 = vpop.f32.mrf.mxu0
        %v2221 = vadd.f32 0.0, %v2220
        %2222 = vmatmul.bf16.gmra.mxu0 %v1283
        %v2223 = vpop.f32.mrf.mxu0
        %v2224 = vadd.f32 0.0, %v2223
        %v2225 = vpop.f32.mrf.mxu0
        %v2226 = vadd.f32 0.0, %v2225
        %2227 = vmatmul.bf16.gmra.mxu0 %v1286
        %v2228 = vpop.f32.mrf.mxu0
        %v2229 = vadd.f32 0.0, %v2228
        %v2230 = vpop.f32.mrf.mxu0
        %v2231 = vadd.f32 0.0, %v2230
        %2232 = vmatmul.bf16.gmra.mxu0 %v1289
        %v2233 = vpop.f32.mrf.mxu0
        %v2234 = vadd.f32 0.0, %v2233
        %v2235 = vpop.f32.mrf.mxu0
        %v2236 = vadd.f32 0.0, %v2235
        %2237 = vmatmul.bf16.gmra.mxu0 %v1292
        %v2238 = vpop.f32.mrf.mxu0
        %v2239 = vadd.f32 0.0, %v2238
        %v2240 = vpop.f32.mrf.mxu0
        %v2241 = vadd.f32 0.0, %v2240
        %2242 = vmatmul.bf16.gmra.mxu0 %v1295
        %v2243 = vpop.f32.mrf.mxu0
        %v2244 = vadd.f32 0.0, %v2243
        %v2245 = vpop.f32.mrf.mxu0
        %v2246 = vadd.f32 0.0, %v2245
        %2247 = vmatmul.bf16.gmra.mxu0 %v1298
        %v2248 = vpop.f32.mrf.mxu0
        %v2249 = vadd.f32 0.0, %v2248
        %v2250 = vpop.f32.mrf.mxu0
        %v2251 = vadd.f32 0.0, %v2250
        %2252 = vmatmul.bf16.gmra.mxu0 %v1301
        %v2253 = vpop.f32.mrf.mxu0
        %v2254 = vadd.f32 0.0, %v2253
        %v2255 = vpop.f32.mrf.mxu0
        %v2256 = vadd.f32 0.0, %v2255
        %2257 = vmatmul.bf16.gmra.mxu0 %v1304
        %v2258 = vpop.f32.mrf.mxu0
        %v2259 = vadd.f32 0.0, %v2258
        %v2260 = vpop.f32.mrf.mxu0
        %v2261 = vadd.f32 0.0, %v2260
        %2262 = vmatmul.bf16.gmra.mxu0 %v1307
        %v2263 = vpop.f32.mrf.mxu0
        %v2264 = vadd.f32 0.0, %v2263
        %v2265 = vpop.f32.mrf.mxu0
        %v2266 = vadd.f32 0.0, %v2265
        %2267 = vmatmul.bf16.gmra.mxu0 %v1310
        %v2268 = vpop.f32.mrf.mxu0
        %v2269 = vadd.f32 0.0, %v2268
        %v2270 = vpop.f32.mrf.mxu0
        %v2271 = vadd.f32 0.0, %v2270
        %2272 = vmatmul.bf16.gmra.mxu0 %v1313
        %v2273 = vpop.f32.mrf.mxu0
        %v2274 = vadd.f32 0.0, %v2273
        %v2275 = vpop.f32.mrf.mxu0
        %v2276 = vadd.f32 0.0, %v2275
        %2277 = vmatmul.bf16.gmra.mxu0 %v1316
        %v2278 = vpop.f32.mrf.mxu0
        %v2279 = vadd.f32 0.0, %v2278
        %v2280 = vpop.f32.mrf.mxu0
        %v2281 = vadd.f32 0.0, %v2280
        %2282 = vmatmul.bf16.gmra.mxu0 %v1319
        %v2283 = vpop.f32.mrf.mxu0
        %v2284 = vadd.f32 0.0, %v2283
        %v2285 = vpop.f32.mrf.mxu0
        %v2286 = vadd.f32 0.0, %v2285
        %2287 = vmatmul.bf16.gmra.mxu0 %v1322
        %v2288 = vpop.f32.mrf.mxu0
        %v2289 = vadd.f32 0.0, %v2288
        %v2290 = vpop.f32.mrf.mxu0
        %v2291 = vadd.f32 0.0, %v2290
        %2292 = vmatmul.bf16.gmra.mxu0 %v1325
        %v2293 = vpop.f32.mrf.mxu0
        %v2294 = vadd.f32 0.0, %v2293
        %v2295 = vpop.f32.mrf.mxu0
        %v2296 = vadd.f32 0.0, %v2295
        %2297 = vmatmul.bf16.gmra.mxu0 %v1328
        %v2298 = vpop.f32.mrf.mxu0
        %v2299 = vadd.f32 0.0, %v2298
        %v2300 = vpop.f32.mrf.mxu0
        %v2301 = vadd.f32 0.0, %v2300
        %2302 = vmatmul.bf16.gmra.mxu0 %v1331
        %v2303 = vpop.f32.mrf.mxu0
        %v2304 = vadd.f32 0.0, %v2303
        %v2305 = vpop.f32.mrf.mxu0
        %v2306 = vadd.f32 0.0, %v2305
        %2307 = vmatmul.bf16.gmra.mxu0 %v1334
        %v2308 = vpop.f32.mrf.mxu0
        %v2309 = vadd.f32 0.0, %v2308
        %v2310 = vpop.f32.mrf.mxu0
        %v2311 = vadd.f32 0.0, %v2310
        %2312 = vmatmul.bf16.gmra.mxu0 %v1337
        %v2313 = vpop.f32.mrf.mxu0
        %v2314 = vadd.f32 0.0, %v2313
        %v2315 = vpop.f32.mrf.mxu0
        %v2316 = vadd.f32 0.0, %v2315
        %2317 = vmatmul.bf16.gmra.mxu0 %v1340
        %v2318 = vpop.f32.mrf.mxu0
        %v2319 = vadd.f32 0.0, %v2318
        %v2320 = vpop.f32.mrf.mxu0
        %v2321 = vadd.f32 0.0, %v2320
        %2322 = vmatmul.bf16.gmra.mxu0 %v1343
        %v2323 = vpop.f32.mrf.mxu0
        %v2324 = vadd.f32 0.0, %v2323
        %v2325 = vpop.f32.mrf.mxu0
        %v2326 = vadd.f32 0.0, %v2325
        %2327 = vmatmul.bf16.gmra.mxu0 %v1346
        %v2328 = vpop.f32.mrf.mxu0
        %v2329 = vadd.f32 0.0, %v2328
        %v2330 = vpop.f32.mrf.mxu0
        %v2331 = vadd.f32 0.0, %v2330
        %2332 = vmatmul.bf16.gmra.mxu0 %v1349
        %v2333 = vpop.f32.mrf.mxu0
        %v2334 = vadd.f32 0.0, %v2333
        %v2335 = vpop.f32.mrf.mxu0
        %v2336 = vadd.f32 0.0, %v2335
        %2337 = vdwg.mxu0
        %2338 = vmatpush.bf16.msra.mxu0 0
        %2339 = vmatpush.bf16.msra.mxu0 0
        %2340 = vmatpush.bf16.msra.mxu0 0
        %2341 = vmatpush.bf16.msra.mxu0 0
        %2342 = vmatpush.bf16.msra.mxu0 %v1141
        %2343 = vmatpush.bf16.msra.mxu0 %v1137
        %2344 = vmatpush.bf16.msra.mxu0 %v1133
        %2345 = vmatpush.bf16.msra.mxu0 %v1129
        %2346 = vmatmul.bf16.gmra.mxu0 %v1160
        %v2347 = vpop.f32.mrf.mxu0
        %v2348 = vadd.f32 0.0, %v2347
        %v2349 = vpop.f32.mrf.mxu0
        %v2350 = vadd.f32 0.0, %v2349
        %2351 = vmatmul.bf16.gmra.mxu0 %v1163
        %v2352 = vpop.f32.mrf.mxu0
        %v2353 = vadd.f32 0.0, %v2352
        %v2354 = vpop.f32.mrf.mxu0
        %v2355 = vadd.f32 0.0, %v2354
        %2356 = vmatmul.bf16.gmra.mxu0 %v1166
        %v2357 = vpop.f32.mrf.mxu0
        %v2358 = vadd.f32 0.0, %v2357
        %v2359 = vpop.f32.mrf.mxu0
        %v2360 = vadd.f32 0.0, %v2359
        %2361 = vmatmul.bf16.gmra.mxu0 %v1169
        %v2362 = vpop.f32.mrf.mxu0
        %v2363 = vadd.f32 0.0, %v2362
        %v2364 = vpop.f32.mrf.mxu0
        %v2365 = vadd.f32 0.0, %v2364
        %2366 = vmatmul.bf16.gmra.mxu0 %v1172
        %v2367 = vpop.f32.mrf.mxu0
        %v2368 = vadd.f32 0.0, %v2367
        %v2369 = vpop.f32.mrf.mxu0
        %v2370 = vadd.f32 0.0, %v2369
        %2371 = vmatmul.bf16.gmra.mxu0 %v1175
        %v2372 = vpop.f32.mrf.mxu0
        %v2373 = vadd.f32 0.0, %v2372
        %v2374 = vpop.f32.mrf.mxu0
        %v2375 = vadd.f32 0.0, %v2374
        %2376 = vmatmul.bf16.gmra.mxu0 %v1178
        %v2377 = vpop.f32.mrf.mxu0
        %v2378 = vadd.f32 0.0, %v2377
        %v2379 = vpop.f32.mrf.mxu0
        %v2380 = vadd.f32 0.0, %v2379
        %2381 = vmatmul.bf16.gmra.mxu0 %v1181
        %v2382 = vpop.f32.mrf.mxu0
        %v2383 = vadd.f32 0.0, %v2382
        %v2384 = vpop.f32.mrf.mxu0
        %v2385 = vadd.f32 0.0, %v2384
        %2386 = vmatmul.bf16.gmra.mxu0 %v1184
        %v2387 = vpop.f32.mrf.mxu0
        %v2388 = vadd.f32 0.0, %v2387
        %v2389 = vpop.f32.mrf.mxu0
        %v2390 = vadd.f32 0.0, %v2389
        %2391 = vmatmul.bf16.gmra.mxu0 %v1187
        %v2392 = vpop.f32.mrf.mxu0
        %v2393 = vadd.f32 0.0, %v2392
        %v2394 = vpop.f32.mrf.mxu0
        %v2395 = vadd.f32 0.0, %v2394
        %2396 = vmatmul.bf16.gmra.mxu0 %v1190
        %v2397 = vpop.f32.mrf.mxu0
        %v2398 = vadd.f32 0.0, %v2397
        %v2399 = vpop.f32.mrf.mxu0
        %v2400 = vadd.f32 0.0, %v2399
        %2401 = vmatmul.bf16.gmra.mxu0 %v1193
        %v2402 = vpop.f32.mrf.mxu0
        %v2403 = vadd.f32 0.0, %v2402
        %v2404 = vpop.f32.mrf.mxu0
        %v2405 = vadd.f32 0.0, %v2404
        %2406 = vmatmul.bf16.gmra.mxu0 %v1196
        %v2407 = vpop.f32.mrf.mxu0
        %v2408 = vadd.f32 0.0, %v2407
        %v2409 = vpop.f32.mrf.mxu0
        %v2410 = vadd.f32 0.0, %v2409
        %2411 = vmatmul.bf16.gmra.mxu0 %v1199
        %v2412 = vpop.f32.mrf.mxu0
        %v2413 = vadd.f32 0.0, %v2412
        %v2414 = vpop.f32.mrf.mxu0
        %v2415 = vadd.f32 0.0, %v2414
        %2416 = vmatmul.bf16.gmra.mxu0 %v1202
        %v2417 = vpop.f32.mrf.mxu0
        %v2418 = vadd.f32 0.0, %v2417
        %v2419 = vpop.f32.mrf.mxu0
        %v2420 = vadd.f32 0.0, %v2419
        %2421 = vmatmul.bf16.gmra.mxu0 %v1205
        %v2422 = vpop.f32.mrf.mxu0
        %v2423 = vadd.f32 0.0, %v2422
        %v2424 = vpop.f32.mrf.mxu0
        %v2425 = vadd.f32 0.0, %v2424
        %2426 = vmatmul.bf16.gmra.mxu0 %v1208
        %v2427 = vpop.f32.mrf.mxu0
        %v2428 = vadd.f32 0.0, %v2427
        %v2429 = vpop.f32.mrf.mxu0
        %v2430 = vadd.f32 0.0, %v2429
        %2431 = vmatmul.bf16.gmra.mxu0 %v1211
        %v2432 = vpop.f32.mrf.mxu0
        %v2433 = vadd.f32 0.0, %v2432
        %v2434 = vpop.f32.mrf.mxu0
        %v2435 = vadd.f32 0.0, %v2434
        %2436 = vmatmul.bf16.gmra.mxu0 %v1214
        %v2437 = vpop.f32.mrf.mxu0
        %v2438 = vadd.f32 0.0, %v2437
        %v2439 = vpop.f32.mrf.mxu0
        %v2440 = vadd.f32 0.0, %v2439
        %2441 = vmatmul.bf16.gmra.mxu0 %v1217
        %v2442 = vpop.f32.mrf.mxu0
        %v2443 = vadd.f32 0.0, %v2442
        %v2444 = vpop.f32.mrf.mxu0
        %v2445 = vadd.f32 0.0, %v2444
        %2446 = vmatmul.bf16.gmra.mxu0 %v1220
        %v2447 = vpop.f32.mrf.mxu0
        %v2448 = vadd.f32 0.0, %v2447
        %v2449 = vpop.f32.mrf.mxu0
        %v2450 = vadd.f32 0.0, %v2449
        %2451 = vmatmul.bf16.gmra.mxu0 %v1223
        %v2452 = vpop.f32.mrf.mxu0
        %v2453 = vadd.f32 0.0, %v2452
        %v2454 = vpop.f32.mrf.mxu0
        %v2455 = vadd.f32 0.0, %v2454
        %2456 = vmatmul.bf16.gmra.mxu0 %v1226
        %v2457 = vpop.f32.mrf.mxu0
        %v2458 = vadd.f32 0.0, %v2457
        %v2459 = vpop.f32.mrf.mxu0
        %v2460 = vadd.f32 0.0, %v2459
        %2461 = vmatmul.bf16.gmra.mxu0 %v1229
        %v2462 = vpop.f32.mrf.mxu0
        %v2463 = vadd.f32 0.0, %v2462
        %v2464 = vpop.f32.mrf.mxu0
        %v2465 = vadd.f32 0.0, %v2464
        %2466 = vmatmul.bf16.gmra.mxu0 %v1232
        %v2467 = vpop.f32.mrf.mxu0
        %v2468 = vadd.f32 0.0, %v2467
        %v2469 = vpop.f32.mrf.mxu0
        %v2470 = vadd.f32 0.0, %v2469
        %2471 = vmatmul.bf16.gmra.mxu0 %v1235
        %v2472 = vpop.f32.mrf.mxu0
        %v2473 = vadd.f32 0.0, %v2472
        %v2474 = vpop.f32.mrf.mxu0
        %v2475 = vadd.f32 0.0, %v2474
        %2476 = vmatmul.bf16.gmra.mxu0 %v1238
        %v2477 = vpop.f32.mrf.mxu0
        %v2478 = vadd.f32 0.0, %v2477
        %v2479 = vpop.f32.mrf.mxu0
        %v2480 = vadd.f32 0.0, %v2479
        %2481 = vmatmul.bf16.gmra.mxu0 %v1241
        %v2482 = vpop.f32.mrf.mxu0
        %v2483 = vadd.f32 0.0, %v2482
        %v2484 = vpop.f32.mrf.mxu0
        %v2485 = vadd.f32 0.0, %v2484
        %2486 = vmatmul.bf16.gmra.mxu0 %v1244
        %v2487 = vpop.f32.mrf.mxu0
        %v2488 = vadd.f32 0.0, %v2487
        %v2489 = vpop.f32.mrf.mxu0
        %v2490 = vadd.f32 0.0, %v2489
        %2491 = vmatmul.bf16.gmra.mxu0 %v1247
        %v2492 = vpop.f32.mrf.mxu0
        %v2493 = vadd.f32 0.0, %v2492
        %v2494 = vpop.f32.mrf.mxu0
        %v2495 = vadd.f32 0.0, %v2494
        %2496 = vmatmul.bf16.gmra.mxu0 %v1250
        %v2497 = vpop.f32.mrf.mxu0
        %v2498 = vadd.f32 0.0, %v2497
        %v2499 = vpop.f32.mrf.mxu0
        %v2500 = vadd.f32 0.0, %v2499
        %2501 = vmatmul.bf16.gmra.mxu0 %v1253
        %v2502 = vpop.f32.mrf.mxu0
        %v2503 = vadd.f32 0.0, %v2502
        %v2504 = vpop.f32.mrf.mxu0
        %v2505 = vadd.f32 0.0, %v2504
        %2506 = vmatmul.bf16.gmra.mxu0 %v1256
        %v2507 = vpop.f32.mrf.mxu0
        %v2508 = vadd.f32 0.0, %v2507
        %v2509 = vpop.f32.mrf.mxu0
        %v2510 = vadd.f32 0.0, %v2509
        %2511 = vmatmul.bf16.gmra.mxu0 %v1259
        %v2512 = vpop.f32.mrf.mxu0
        %v2513 = vadd.f32 0.0, %v2512
        %v2514 = vpop.f32.mrf.mxu0
        %v2515 = vadd.f32 0.0, %v2514
        %2516 = vmatmul.bf16.gmra.mxu0 %v1262
        %v2517 = vpop.f32.mrf.mxu0
        %v2518 = vadd.f32 0.0, %v2517
        %v2519 = vpop.f32.mrf.mxu0
        %v2520 = vadd.f32 0.0, %v2519
        %2521 = vmatmul.bf16.gmra.mxu0 %v1265
        %v2522 = vpop.f32.mrf.mxu0
        %v2523 = vadd.f32 0.0, %v2522
        %v2524 = vpop.f32.mrf.mxu0
        %v2525 = vadd.f32 0.0, %v2524
        %2526 = vmatmul.bf16.gmra.mxu0 %v1268
        %v2527 = vpop.f32.mrf.mxu0
        %v2528 = vadd.f32 0.0, %v2527
        %v2529 = vpop.f32.mrf.mxu0
        %v2530 = vadd.f32 0.0, %v2529
        %2531 = vmatmul.bf16.gmra.mxu0 %v1271
        %v2532 = vpop.f32.mrf.mxu0
        %v2533 = vadd.f32 0.0, %v2532
        %v2534 = vpop.f32.mrf.mxu0
        %v2535 = vadd.f32 0.0, %v2534
        %2536 = vmatmul.bf16.gmra.mxu0 %v1274
        %v2537 = vpop.f32.mrf.mxu0
        %v2538 = vadd.f32 0.0, %v2537
        %v2539 = vpop.f32.mrf.mxu0
        %v2540 = vadd.f32 0.0, %v2539
        %2541 = vmatmul.bf16.gmra.mxu0 %v1277
        %v2542 = vpop.f32.mrf.mxu0
        %v2543 = vadd.f32 0.0, %v2542
        %v2544 = vpop.f32.mrf.mxu0
        %v2545 = vadd.f32 0.0, %v2544
        %2546 = vmatmul.bf16.gmra.mxu0 %v1280
        %v2547 = vpop.f32.mrf.mxu0
        %v2548 = vadd.f32 0.0, %v2547
        %v2549 = vpop.f32.mrf.mxu0
        %v2550 = vadd.f32 0.0, %v2549
        %2551 = vmatmul.bf16.gmra.mxu0 %v1283
        %v2552 = vpop.f32.mrf.mxu0
        %v2553 = vadd.f32 0.0, %v2552
        %v2554 = vpop.f32.mrf.mxu0
        %v2555 = vadd.f32 0.0, %v2554
        %2556 = vmatmul.bf16.gmra.mxu0 %v1286
        %v2557 = vpop.f32.mrf.mxu0
        %v2558 = vadd.f32 0.0, %v2557
        %v2559 = vpop.f32.mrf.mxu0
        %v2560 = vadd.f32 0.0, %v2559
        %2561 = vmatmul.bf16.gmra.mxu0 %v1289
        %v2562 = vpop.f32.mrf.mxu0
        %v2563 = vadd.f32 0.0, %v2562
        %v2564 = vpop.f32.mrf.mxu0
        %v2565 = vadd.f32 0.0, %v2564
        %2566 = vmatmul.bf16.gmra.mxu0 %v1292
        %v2567 = vpop.f32.mrf.mxu0
        %v2568 = vadd.f32 0.0, %v2567
        %v2569 = vpop.f32.mrf.mxu0
        %v2570 = vadd.f32 0.0, %v2569
        %2571 = vmatmul.bf16.gmra.mxu0 %v1295
        %v2572 = vpop.f32.mrf.mxu0
        %v2573 = vadd.f32 0.0, %v2572
        %v2574 = vpop.f32.mrf.mxu0
        %v2575 = vadd.f32 0.0, %v2574
        %2576 = vmatmul.bf16.gmra.mxu0 %v1298
        %v2577 = vpop.f32.mrf.mxu0
        %v2578 = vadd.f32 0.0, %v2577
        %v2579 = vpop.f32.mrf.mxu0
        %v2580 = vadd.f32 0.0, %v2579
        %2581 = vmatmul.bf16.gmra.mxu0 %v1301
        %v2582 = vpop.f32.mrf.mxu0
        %v2583 = vadd.f32 0.0, %v2582
        %v2584 = vpop.f32.mrf.mxu0
        %v2585 = vadd.f32 0.0, %v2584
        %2586 = vmatmul.bf16.gmra.mxu0 %v1304
        %v2587 = vpop.f32.mrf.mxu0
        %v2588 = vadd.f32 0.0, %v2587
        %v2589 = vpop.f32.mrf.mxu0
        %v2590 = vadd.f32 0.0, %v2589
        %2591 = vmatmul.bf16.gmra.mxu0 %v1307
        %v2592 = vpop.f32.mrf.mxu0
        %v2593 = vadd.f32 0.0, %v2592
        %v2594 = vpop.f32.mrf.mxu0
        %v2595 = vadd.f32 0.0, %v2594
        %2596 = vmatmul.bf16.gmra.mxu0 %v1310
        %v2597 = vpop.f32.mrf.mxu0
        %v2598 = vadd.f32 0.0, %v2597
        %v2599 = vpop.f32.mrf.mxu0
        %v2600 = vadd.f32 0.0, %v2599
        %2601 = vmatmul.bf16.gmra.mxu0 %v1313
        %v2602 = vpop.f32.mrf.mxu0
        %v2603 = vadd.f32 0.0, %v2602
        %v2604 = vpop.f32.mrf.mxu0
        %v2605 = vadd.f32 0.0, %v2604
        %2606 = vmatmul.bf16.gmra.mxu0 %v1316
        %v2607 = vpop.f32.mrf.mxu0
        %v2608 = vadd.f32 0.0, %v2607
        %v2609 = vpop.f32.mrf.mxu0
        %v2610 = vadd.f32 0.0, %v2609
        %2611 = vmatmul.bf16.gmra.mxu0 %v1319
        %v2612 = vpop.f32.mrf.mxu0
        %v2613 = vadd.f32 0.0, %v2612
        %v2614 = vpop.f32.mrf.mxu0
        %v2615 = vadd.f32 0.0, %v2614
        %2616 = vmatmul.bf16.gmra.mxu0 %v1322
        %v2617 = vpop.f32.mrf.mxu0
        %v2618 = vadd.f32 0.0, %v2617
        %v2619 = vpop.f32.mrf.mxu0
        %v2620 = vadd.f32 0.0, %v2619
        %2621 = vmatmul.bf16.gmra.mxu0 %v1325
        %v2622 = vpop.f32.mrf.mxu0
        %v2623 = vadd.f32 0.0, %v2622
        %v2624 = vpop.f32.mrf.mxu0
        %v2625 = vadd.f32 0.0, %v2624
        %2626 = vmatmul.bf16.gmra.mxu0 %v1328
        %v2627 = vpop.f32.mrf.mxu0
        %v2628 = vadd.f32 0.0, %v2627
        %v2629 = vpop.f32.mrf.mxu0
        %v2630 = vadd.f32 0.0, %v2629
        %2631 = vmatmul.bf16.gmra.mxu0 %v1331
        %v2632 = vpop.f32.mrf.mxu0
        %v2633 = vadd.f32 0.0, %v2632
        %v2634 = vpop.f32.mrf.mxu0
        %v2635 = vadd.f32 0.0, %v2634
        %2636 = vmatmul.bf16.gmra.mxu0 %v1334
        %v2637 = vpop.f32.mrf.mxu0
        %v2638 = vadd.f32 0.0, %v2637
        %v2639 = vpop.f32.mrf.mxu0
        %v2640 = vadd.f32 0.0, %v2639
        %2641 = vmatmul.bf16.gmra.mxu0 %v1337
        %v2642 = vpop.f32.mrf.mxu0
        %v2643 = vadd.f32 0.0, %v2642
        %v2644 = vpop.f32.mrf.mxu0
        %v2645 = vadd.f32 0.0, %v2644
        %2646 = vmatmul.bf16.gmra.mxu0 %v1340
        %v2647 = vpop.f32.mrf.mxu0
        %v2648 = vadd.f32 0.0, %v2647
        %v2649 = vpop.f32.mrf.mxu0
        %v2650 = vadd.f32 0.0, %v2649
        %2651 = vmatmul.bf16.gmra.mxu0 %v1343
        %v2652 = vpop.f32.mrf.mxu0
        %v2653 = vadd.f32 0.0, %v2652
        %v2654 = vpop.f32.mrf.mxu0
        %v2655 = vadd.f32 0.0, %v2654
        %2656 = vmatmul.bf16.gmra.mxu0 %v1346
        %v2657 = vpop.f32.mrf.mxu0
        %v2658 = vadd.f32 0.0, %v2657
        %v2659 = vpop.f32.mrf.mxu0
        %v2660 = vadd.f32 0.0, %v2659
        %2661 = vmatmul.bf16.gmra.mxu0 %v1349
        %v2662 = vpop.f32.mrf.mxu0
        %v2663 = vadd.f32 0.0, %v2662
        %v2664 = vpop.f32.mrf.mxu0
        %v2665 = vadd.f32 0.0, %v2664
        %2666 = vdwg.mxu0
        %v2667 = vmax.f32 %v1361, %v1363
        %v2668 = vmax.f32 %v2667, %v1366
        %v2669 = vmax.f32 %v2668, %v1368
        %v2670 = vmax.f32 %v2669, %v1371
        %v2671 = vmax.f32 %v2670, %v1373
        %v2672 = vmax.f32 %v2671, %v1376
        %v2673 = vmax.f32 %v2672, %v1378
        %v2674 = vmax.f32 %v2673, %v1381
        %v2675 = vmax.f32 %v2674, %v1383
        %v2676 = vmax.f32 %v2675, %v1386
        %v2677 = vmax.f32 %v2676, %v1388
        %v2678 = vmax.f32 %v2677, %v1391
        %v2679 = vmax.f32 %v2678, %v1393
        %v2680 = vmax.f32 %v2679, %v1396
        %v2681 = vmax.f32 %v2680, %v1398
        %v2682 = vmax.f32 %v2681, %v1401
        %v2683 = vmax.f32 %v2682, %v1403
        %v2684 = vmax.f32 %v2683, %v1406
        %v2685 = vmax.f32 %v2684, %v1408
        %v2686 = vmax.f32 %v2685, %v1411
        %v2687 = vmax.f32 %v2686, %v1413
        %v2688 = vmax.f32 %v2687, %v1416
        %v2689 = vmax.f32 %v2688, %v1418
        %v2690 = vmax.f32 %v2689, %v1421
        %v2691 = vmax.f32 %v2690, %v1423
        %v2692 = vmax.f32 %v2691, %v1426
        %v2693 = vmax.f32 %v2692, %v1428
        %v2694 = vmax.f32 %v2693, %v1431
        %v2695 = vmax.f32 %v2694, %v1433
        %v2696 = vmax.f32 %v2695, %v1436
        %v2697 = vmax.f32 %v2696, %v1438
        %v2698 = vmax.f32 %v2697, %v1441
        %v2699 = vmax.f32 %v2698, %v1443
        %v2700 = vmax.f32 %v2699, %v1446
        %v2701 = vmax.f32 %v2700, %v1448
        %v2702 = vmax.f32 %v2701, %v1451
        %v2703 = vmax.f32 %v2702, %v1453
        %v2704 = vmax.f32 %v2703, %v1456
        %v2705 = vmax.f32 %v2704, %v1458
        %v2706 = vmax.f32 %v2705, %v1461
        %v2707 = vmax.f32 %v2706, %v1463
        %v2708 = vmax.f32 %v2707, %v1466
        %v2709 = vmax.f32 %v2708, %v1468
        %v2710 = vmax.f32 %v2709, %v1471
        %v2711 = vmax.f32 %v2710, %v1473
        %v2712 = vmax.f32 %v2711, %v1476
        %v2713 = vmax.f32 %v2712, %v1478
        %v2714 = vmax.f32 %v2713, %v1481
        %v2715 = vmax.f32 %v2714, %v1483
        %v2716 = vmax.f32 %v2715, %v1486
        %v2717 = vmax.f32 %v2716, %v1488
        %v2718 = vmax.f32 %v2717, %v1491
        %v2719 = vmax.f32 %v2718, %v1493
        %v2720 = vmax.f32 %v2719, %v1496
        %v2721 = vmax.f32 %v2720, %v1498
        %v2722 = vmax.f32 %v2721, %v1501
        %v2723 = vmax.f32 %v2722, %v1503
        %v2724 = vmax.f32 %v2723, %v1506
        %v2725 = vmax.f32 %v2724, %v1508
        %v2726 = vmax.f32 %v2725, %v1511
        %v2727 = vmax.f32 %v2726, %v1513
        %v2728 = vmax.f32 %v2727, %v1516
        %v2729 = vmax.f32 %v2728, %v1518
        %v2730 = vmax.f32 %v2729, %v1521
        %v2731 = vmax.f32 %v2730, %v1523
        %v2732 = vmax.f32 %v2731, %v1526
        %v2733 = vmax.f32 %v2732, %v1528
        %v2734 = vmax.f32 %v2733, %v1531
        %v2735 = vmax.f32 %v2734, %v1533
        %v2736 = vmax.f32 %v2735, %v1536
        %v2737 = vmax.f32 %v2736, %v1538
        %v2738 = vmax.f32 %v2737, %v1541
        %v2739 = vmax.f32 %v2738, %v1543
        %v2740 = vmax.f32 %v2739, %v1546
        %v2741 = vmax.f32 %v2740, %v1548
        %v2742 = vmax.f32 %v2741, %v1551
        %v2743 = vmax.f32 %v2742, %v1553
        %v2744 = vmax.f32 %v2743, %v1556
        %v2745 = vmax.f32 %v2744, %v1558
        %v2746 = vmax.f32 %v2745, %v1561
        %v2747 = vmax.f32 %v2746, %v1563
        %v2748 = vmax.f32 %v2747, %v1566
        %v2749 = vmax.f32 %v2748, %v1568
        %v2750 = vmax.f32 %v2749, %v1571
        %v2751 = vmax.f32 %v2750, %v1573
        %v2752 = vmax.f32 %v2751, %v1576
        %v2753 = vmax.f32 %v2752, %v1578
        %v2754 = vmax.f32 %v2753, %v1581
        %v2755 = vmax.f32 %v2754, %v1583
        %v2756 = vmax.f32 %v2755, %v1586
        %v2757 = vmax.f32 %v2756, %v1588
        %v2758 = vmax.f32 %v2757, %v1591
        %v2759 = vmax.f32 %v2758, %v1593
        %v2760 = vmax.f32 %v2759, %v1596
        %v2761 = vmax.f32 %v2760, %v1598
        %v2762 = vmax.f32 %v2761, %v1601
        %v2763 = vmax.f32 %v2762, %v1603
        %v2764 = vmax.f32 %v2763, %v1606
        %v2765 = vmax.f32 %v2764, %v1608
        %v2766 = vmax.f32 %v2765, %v1611
        %v2767 = vmax.f32 %v2766, %v1613
        %v2768 = vmax.f32 %v2767, %v1616
        %v2769 = vmax.f32 %v2768, %v1618
        %v2770 = vmax.f32 %v2769, %v1621
        %v2771 = vmax.f32 %v2770, %v1623
        %v2772 = vmax.f32 %v2771, %v1626
        %v2773 = vmax.f32 %v2772, %v1628
        %v2774 = vmax.f32 %v2773, %v1631
        %v2775 = vmax.f32 %v2774, %v1633
        %v2776 = vmax.f32 %v2775, %v1636
        %v2777 = vmax.f32 %v2776, %v1638
        %v2778 = vmax.f32 %v2777, %v1641
        %v2779 = vmax.f32 %v2778, %v1643
        %v2780 = vmax.f32 %v2779, %v1646
        %v2781 = vmax.f32 %v2780, %v1648
        %v2782 = vmax.f32 %v2781, %v1651
        %v2783 = vmax.f32 %v2782, %v1653
        %v2784 = vmax.f32 %v2783, %v1656
        %v2785 = vmax.f32 %v2784, %v1658
        %v2786 = vmax.f32 %v2785, %v1661
        %v2787 = vmax.f32 %v2786, %v1663
        %v2788 = vmax.f32 %v2787, %v1666
        %v2789 = vmax.f32 %v2788, %v1668
        %v2790 = vmax.f32 %v2789, %v1671
        %v2791 = vmax.f32 %v2790, %v1673
        %v2792 = vmax.f32 %v2791, %v1676
        %v2793 = vmax.f32 %v2792, %v1678
        %v2794 = vrot.slane %v2793, 4
        %v2795 = vmax.f32 %v2793, %v2794
        %v2796 = vrot.slane %v2795, 2
        %v2797 = vmax.f32 %v2795, %v2796
        %v2798 = vrot.slane %v2797, 1
        %v2799 = vmax.f32 %v2797, %v2798
        %v2800 = vmax.f32 %v1690, %v1692
        %v2801 = vmax.f32 %v2800, %v1695
        %v2802 = vmax.f32 %v2801, %v1697
        %v2803 = vmax.f32 %v2802, %v1700
        %v2804 = vmax.f32 %v2803, %v1702
        %v2805 = vmax.f32 %v2804, %v1705
        %v2806 = vmax.f32 %v2805, %v1707
        %v2807 = vmax.f32 %v2806, %v1710
        %v2808 = vmax.f32 %v2807, %v1712
        %v2809 = vmax.f32 %v2808, %v1715
        %v2810 = vmax.f32 %v2809, %v1717
        %v2811 = vmax.f32 %v2810, %v1720
        %v2812 = vmax.f32 %v2811, %v1722
        %v2813 = vmax.f32 %v2812, %v1725
        %v2814 = vmax.f32 %v2813, %v1727
        %v2815 = vmax.f32 %v2814, %v1730
        %v2816 = vmax.f32 %v2815, %v1732
        %v2817 = vmax.f32 %v2816, %v1735
        %v2818 = vmax.f32 %v2817, %v1737
        %v2819 = vmax.f32 %v2818, %v1740
        %v2820 = vmax.f32 %v2819, %v1742
        %v2821 = vmax.f32 %v2820, %v1745
        %v2822 = vmax.f32 %v2821, %v1747
        %v2823 = vmax.f32 %v2822, %v1750
        %v2824 = vmax.f32 %v2823, %v1752
        %v2825 = vmax.f32 %v2824, %v1755
        %v2826 = vmax.f32 %v2825, %v1757
        %v2827 = vmax.f32 %v2826, %v1760
        %v2828 = vmax.f32 %v2827, %v1762
        %v2829 = vmax.f32 %v2828, %v1765
        %v2830 = vmax.f32 %v2829, %v1767
        %v2831 = vmax.f32 %v2830, %v1770
        %v2832 = vmax.f32 %v2831, %v1772
        %v2833 = vmax.f32 %v2832, %v1775
        %v2834 = vmax.f32 %v2833, %v1777
        %v2835 = vmax.f32 %v2834, %v1780
        %v2836 = vmax.f32 %v2835, %v1782
        %v2837 = vmax.f32 %v2836, %v1785
        %v2838 = vmax.f32 %v2837, %v1787
        %v2839 = vmax.f32 %v2838, %v1790
        %v2840 = vmax.f32 %v2839, %v1792
        %v2841 = vmax.f32 %v2840, %v1795
        %v2842 = vmax.f32 %v2841, %v1797
        %v2843 = vmax.f32 %v2842, %v1800
        %v2844 = vmax.f32 %v2843, %v1802
        %v2845 = vmax.f32 %v2844, %v1805
        %v2846 = vmax.f32 %v2845, %v1807
        %v2847 = vmax.f32 %v2846, %v1810
        %v2848 = vmax.f32 %v2847, %v1812
        %v2849 = vmax.f32 %v2848, %v1815
        %v2850 = vmax.f32 %v2849, %v1817
        %v2851 = vmax.f32 %v2850, %v1820
        %v2852 = vmax.f32 %v2851, %v1822
        %v2853 = vmax.f32 %v2852, %v1825
        %v2854 = vmax.f32 %v2853, %v1827
        %v2855 = vmax.f32 %v2854, %v1830
        %v2856 = vmax.f32 %v2855, %v1832
        %v2857 = vmax.f32 %v2856, %v1835
        %v2858 = vmax.f32 %v2857, %v1837
        %v2859 = vmax.f32 %v2858, %v1840
        %v2860 = vmax.f32 %v2859, %v1842
        %v2861 = vmax.f32 %v2860, %v1845
        %v2862 = vmax.f32 %v2861, %v1847
        %v2863 = vmax.f32 %v2862, %v1850
        %v2864 = vmax.f32 %v2863, %v1852
        %v2865 = vmax.f32 %v2864, %v1855
        %v2866 = vmax.f32 %v2865, %v1857
        %v2867 = vmax.f32 %v2866, %v1860
        %v2868 = vmax.f32 %v2867, %v1862
        %v2869 = vmax.f32 %v2868, %v1865
        %v2870 = vmax.f32 %v2869, %v1867
        %v2871 = vmax.f32 %v2870, %v1870
        %v2872 = vmax.f32 %v2871, %v1872
        %v2873 = vmax.f32 %v2872, %v1875
        %v2874 = vmax.f32 %v2873, %v1877
        %v2875 = vmax.f32 %v2874, %v1880
        %v2876 = vmax.f32 %v2875, %v1882
        %v2877 = vmax.f32 %v2876, %v1885
        %v2878 = vmax.f32 %v2877, %v1887
        %v2879 = vmax.f32 %v2878, %v1890
        %v2880 = vmax.f32 %v2879, %v1892
        %v2881 = vmax.f32 %v2880, %v1895
        %v2882 = vmax.f32 %v2881, %v1897
        %v2883 = vmax.f32 %v2882, %v1900
        %v2884 = vmax.f32 %v2883, %v1902
        %v2885 = vmax.f32 %v2884, %v1905
        %v2886 = vmax.f32 %v2885, %v1907
        %v2887 = vmax.f32 %v2886, %v1910
        %v2888 = vmax.f32 %v2887, %v1912
        %v2889 = vmax.f32 %v2888, %v1915
        %v2890 = vmax.f32 %v2889, %v1917
        %v2891 = vmax.f32 %v2890, %v1920
        %v2892 = vmax.f32 %v2891, %v1922
        %v2893 = vmax.f32 %v2892, %v1925
        %v2894 = vmax.f32 %v2893, %v1927
        %v2895 = vmax.f32 %v2894, %v1930
        %v2896 = vmax.f32 %v2895, %v1932
        %v2897 = vmax.f32 %v2896, %v1935
        %v2898 = vmax.f32 %v2897, %v1937
        %v2899 = vmax.f32 %v2898, %v1940
        %v2900 = vmax.f32 %v2899, %v1942
        %v2901 = vmax.f32 %v2900, %v1945
        %v2902 = vmax.f32 %v2901, %v1947
        %v2903 = vmax.f32 %v2902, %v1950
        %v2904 = vmax.f32 %v2903, %v1952
        %v2905 = vmax.f32 %v2904, %v1955
        %v2906 = vmax.f32 %v2905, %v1957
        %v2907 = vmax.f32 %v2906, %v1960
        %v2908 = vmax.f32 %v2907, %v1962
        %v2909 = vmax.f32 %v2908, %v1965
        %v2910 = vmax.f32 %v2909, %v1967
        %v2911 = vmax.f32 %v2910, %v1970
        %v2912 = vmax.f32 %v2911, %v1972
        %v2913 = vmax.f32 %v2912, %v1975
        %v2914 = vmax.f32 %v2913, %v1977
        %v2915 = vmax.f32 %v2914, %v1980
        %v2916 = vmax.f32 %v2915, %v1982
        %v2917 = vmax.f32 %v2916, %v1985
        %v2918 = vmax.f32 %v2917, %v1987
        %v2919 = vmax.f32 %v2918, %v1990
        %v2920 = vmax.f32 %v2919, %v1992
        %v2921 = vmax.f32 %v2920, %v1995
        %v2922 = vmax.f32 %v2921, %v1997
        %v2923 = vmax.f32 %v2922, %v2000
        %v2924 = vmax.f32 %v2923, %v2002
        %v2925 = vmax.f32 %v2924, %v2005
        %v2926 = vmax.f32 %v2925, %v2007
        %v2927 = vrot.slane %v2926, 4
        %v2928 = vmax.f32 %v2926, %v2927
        %v2929 = vrot.slane %v2928, 2
        %v2930 = vmax.f32 %v2928, %v2929
        %v2931 = vrot.slane %v2930, 1
        %v2932 = vmax.f32 %v2930, %v2931
        %v2933 = vmax.f32 %v2019, %v2021
        %v2934 = vmax.f32 %v2933, %v2024
        %v2935 = vmax.f32 %v2934, %v2026
        %v2936 = vmax.f32 %v2935, %v2029
        %v2937 = vmax.f32 %v2936, %v2031
        %v2938 = vmax.f32 %v2937, %v2034
        %v2939 = vmax.f32 %v2938, %v2036
        %v2940 = vmax.f32 %v2939, %v2039
        %v2941 = vmax.f32 %v2940, %v2041
        %v2942 = vmax.f32 %v2941, %v2044
        %v2943 = vmax.f32 %v2942, %v2046
        %v2944 = vmax.f32 %v2943, %v2049
        %v2945 = vmax.f32 %v2944, %v2051
        %v2946 = vmax.f32 %v2945, %v2054
        %v2947 = vmax.f32 %v2946, %v2056
        %v2948 = vmax.f32 %v2947, %v2059
        %v2949 = vmax.f32 %v2948, %v2061
        %v2950 = vmax.f32 %v2949, %v2064
        %v2951 = vmax.f32 %v2950, %v2066
        %v2952 = vmax.f32 %v2951, %v2069
        %v2953 = vmax.f32 %v2952, %v2071
        %v2954 = vmax.f32 %v2953, %v2074
        %v2955 = vmax.f32 %v2954, %v2076
        %v2956 = vmax.f32 %v2955, %v2079
        %v2957 = vmax.f32 %v2956, %v2081
        %v2958 = vmax.f32 %v2957, %v2084
        %v2959 = vmax.f32 %v2958, %v2086
        %v2960 = vmax.f32 %v2959, %v2089
        %v2961 = vmax.f32 %v2960, %v2091
        %v2962 = vmax.f32 %v2961, %v2094
        %v2963 = vmax.f32 %v2962, %v2096
        %v2964 = vmax.f32 %v2963, %v2099
        %v2965 = vmax.f32 %v2964, %v2101
        %v2966 = vmax.f32 %v2965, %v2104
        %v2967 = vmax.f32 %v2966, %v2106
        %v2968 = vmax.f32 %v2967, %v2109
        %v2969 = vmax.f32 %v2968, %v2111
        %v2970 = vmax.f32 %v2969, %v2114
        %v2971 = vmax.f32 %v2970, %v2116
        %v2972 = vmax.f32 %v2971, %v2119
        %v2973 = vmax.f32 %v2972, %v2121
        %v2974 = vmax.f32 %v2973, %v2124
        %v2975 = vmax.f32 %v2974, %v2126
        %v2976 = vmax.f32 %v2975, %v2129
        %v2977 = vmax.f32 %v2976, %v2131
        %v2978 = vmax.f32 %v2977, %v2134
        %v2979 = vmax.f32 %v2978, %v2136
        %v2980 = vmax.f32 %v2979, %v2139
        %v2981 = vmax.f32 %v2980, %v2141
        %v2982 = vmax.f32 %v2981, %v2144
        %v2983 = vmax.f32 %v2982, %v2146
        %v2984 = vmax.f32 %v2983, %v2149
        %v2985 = vmax.f32 %v2984, %v2151
        %v2986 = vmax.f32 %v2985, %v2154
        %v2987 = vmax.f32 %v2986, %v2156
        %v2988 = vmax.f32 %v2987, %v2159
        %v2989 = vmax.f32 %v2988, %v2161
        %v2990 = vmax.f32 %v2989, %v2164
        %v2991 = vmax.f32 %v2990, %v2166
        %v2992 = vmax.f32 %v2991, %v2169
        %v2993 = vmax.f32 %v2992, %v2171
        %v2994 = vmax.f32 %v2993, %v2174
        %v2995 = vmax.f32 %v2994, %v2176
        %v2996 = vmax.f32 %v2995, %v2179
        %v2997 = vmax.f32 %v2996, %v2181
        %v2998 = vmax.f32 %v2997, %v2184
        %v2999 = vmax.f32 %v2998, %v2186
        %v3000 = vmax.f32 %v2999, %v2189
        %v3001 = vmax.f32 %v3000, %v2191
        %v3002 = vmax.f32 %v3001, %v2194
        %v3003 = vmax.f32 %v3002, %v2196
        %v3004 = vmax.f32 %v3003, %v2199
        %v3005 = vmax.f32 %v3004, %v2201
        %v3006 = vmax.f32 %v3005, %v2204
        %v3007 = vmax.f32 %v3006, %v2206
        %v3008 = vmax.f32 %v3007, %v2209
        %v3009 = vmax.f32 %v3008, %v2211
        %v3010 = vmax.f32 %v3009, %v2214
        %v3011 = vmax.f32 %v3010, %v2216
        %v3012 = vmax.f32 %v3011, %v2219
        %v3013 = vmax.f32 %v3012, %v2221
        %v3014 = vmax.f32 %v3013, %v2224
        %v3015 = vmax.f32 %v3014, %v2226
        %v3016 = vmax.f32 %v3015, %v2229
        %v3017 = vmax.f32 %v3016, %v2231
        %v3018 = vmax.f32 %v3017, %v2234
        %v3019 = vmax.f32 %v3018, %v2236
        %v3020 = vmax.f32 %v3019, %v2239
        %v3021 = vmax.f32 %v3020, %v2241
        %v3022 = vmax.f32 %v3021, %v2244
        %v3023 = vmax.f32 %v3022, %v2246
        %v3024 = vmax.f32 %v3023, %v2249
        %v3025 = vmax.f32 %v3024, %v2251
        %v3026 = vmax.f32 %v3025, %v2254
        %v3027 = vmax.f32 %v3026, %v2256
        %v3028 = vmax.f32 %v3027, %v2259
        %v3029 = vmax.f32 %v3028, %v2261
        %v3030 = vmax.f32 %v3029, %v2264
        %v3031 = vmax.f32 %v3030, %v2266
        %v3032 = vmax.f32 %v3031, %v2269
        %v3033 = vmax.f32 %v3032, %v2271
        %v3034 = vmax.f32 %v3033, %v2274
        %v3035 = vmax.f32 %v3034, %v2276
        %v3036 = vmax.f32 %v3035, %v2279
        %v3037 = vmax.f32 %v3036, %v2281
        %v3038 = vmax.f32 %v3037, %v2284
        %v3039 = vmax.f32 %v3038, %v2286
        %v3040 = vmax.f32 %v3039, %v2289
        %v3041 = vmax.f32 %v3040, %v2291
        %v3042 = vmax.f32 %v3041, %v2294
        %v3043 = vmax.f32 %v3042, %v2296
        %v3044 = vmax.f32 %v3043, %v2299
        %v3045 = vmax.f32 %v3044, %v2301
        %v3046 = vmax.f32 %v3045, %v2304
        %v3047 = vmax.f32 %v3046, %v2306
        %v3048 = vmax.f32 %v3047, %v2309
        %v3049 = vmax.f32 %v3048, %v2311
        %v3050 = vmax.f32 %v3049, %v2314
        %v3051 = vmax.f32 %v3050, %v2316
        %v3052 = vmax.f32 %v3051, %v2319
        %v3053 = vmax.f32 %v3052, %v2321
        %v3054 = vmax.f32 %v3053, %v2324
        %v3055 = vmax.f32 %v3054, %v2326
        %v3056 = vmax.f32 %v3055, %v2329
        %v3057 = vmax.f32 %v3056, %v2331
        %v3058 = vmax.f32 %v3057, %v2334
        %v3059 = vmax.f32 %v3058, %v2336
        %v3060 = vrot.slane %v3059, 4
        %v3061 = vmax.f32 %v3059, %v3060
        %v3062 = vrot.slane %v3061, 2
        %v3063 = vmax.f32 %v3061, %v3062
        %v3064 = vrot.slane %v3063, 1
        %v3065 = vmax.f32 %v3063, %v3064
        %v3066 = vmax.f32 %v2348, %v2350
        %v3067 = vmax.f32 %v3066, %v2353
        %v3068 = vmax.f32 %v3067, %v2355
        %v3069 = vmax.f32 %v3068, %v2358
        %v3070 = vmax.f32 %v3069, %v2360
        %v3071 = vmax.f32 %v3070, %v2363
        %v3072 = vmax.f32 %v3071, %v2365
        %v3073 = vmax.f32 %v3072, %v2368
        %v3074 = vmax.f32 %v3073, %v2370
        %v3075 = vmax.f32 %v3074, %v2373
        %v3076 = vmax.f32 %v3075, %v2375
        %v3077 = vmax.f32 %v3076, %v2378
        %v3078 = vmax.f32 %v3077, %v2380
        %v3079 = vmax.f32 %v3078, %v2383
        %v3080 = vmax.f32 %v3079, %v2385
        %v3081 = vmax.f32 %v3080, %v2388
        %v3082 = vmax.f32 %v3081, %v2390
        %v3083 = vmax.f32 %v3082, %v2393
        %v3084 = vmax.f32 %v3083, %v2395
        %v3085 = vmax.f32 %v3084, %v2398
        %v3086 = vmax.f32 %v3085, %v2400
        %v3087 = vmax.f32 %v3086, %v2403
        %v3088 = vmax.f32 %v3087, %v2405
        %v3089 = vmax.f32 %v3088, %v2408
        %v3090 = vmax.f32 %v3089, %v2410
        %v3091 = vmax.f32 %v3090, %v2413
        %v3092 = vmax.f32 %v3091, %v2415
        %v3093 = vmax.f32 %v3092, %v2418
        %v3094 = vmax.f32 %v3093, %v2420
        %v3095 = vmax.f32 %v3094, %v2423
        %v3096 = vmax.f32 %v3095, %v2425
        %v3097 = vmax.f32 %v3096, %v2428
        %v3098 = vmax.f32 %v3097, %v2430
        %v3099 = vmax.f32 %v3098, %v2433
        %v3100 = vmax.f32 %v3099, %v2435
        %v3101 = vmax.f32 %v3100, %v2438
        %v3102 = vmax.f32 %v3101, %v2440
        %v3103 = vmax.f32 %v3102, %v2443
        %v3104 = vmax.f32 %v3103, %v2445
        %v3105 = vmax.f32 %v3104, %v2448
        %v3106 = vmax.f32 %v3105, %v2450
        %v3107 = vmax.f32 %v3106, %v2453
        %v3108 = vmax.f32 %v3107, %v2455
        %v3109 = vmax.f32 %v3108, %v2458
        %v3110 = vmax.f32 %v3109, %v2460
        %v3111 = vmax.f32 %v3110, %v2463
        %v3112 = vmax.f32 %v3111, %v2465
        %v3113 = vmax.f32 %v3112, %v2468
        %v3114 = vmax.f32 %v3113, %v2470
        %v3115 = vmax.f32 %v3114, %v2473
        %v3116 = vmax.f32 %v3115, %v2475
        %v3117 = vmax.f32 %v3116, %v2478
        %v3118 = vmax.f32 %v3117, %v2480
        %v3119 = vmax.f32 %v3118, %v2483
        %v3120 = vmax.f32 %v3119, %v2485
        %v3121 = vmax.f32 %v3120, %v2488
        %v3122 = vmax.f32 %v3121, %v2490
        %v3123 = vmax.f32 %v3122, %v2493
        %v3124 = vmax.f32 %v3123, %v2495
        %v3125 = vmax.f32 %v3124, %v2498
        %v3126 = vmax.f32 %v3125, %v2500
        %v3127 = vmax.f32 %v3126, %v2503
        %v3128 = vmax.f32 %v3127, %v2505
        %v3129 = vmax.f32 %v3128, %v2508
        %v3130 = vmax.f32 %v3129, %v2510
        %v3131 = vmax.f32 %v3130, %v2513
        %v3132 = vmax.f32 %v3131, %v2515
        %v3133 = vmax.f32 %v3132, %v2518
        %v3134 = vmax.f32 %v3133, %v2520
        %v3135 = vmax.f32 %v3134, %v2523
        %v3136 = vmax.f32 %v3135, %v2525
        %v3137 = vmax.f32 %v3136, %v2528
        %v3138 = vmax.f32 %v3137, %v2530
        %v3139 = vmax.f32 %v3138, %v2533
        %v3140 = vmax.f32 %v3139, %v2535
        %v3141 = vmax.f32 %v3140, %v2538
        %v3142 = vmax.f32 %v3141, %v2540
        %v3143 = vmax.f32 %v3142, %v2543
        %v3144 = vmax.f32 %v3143, %v2545
        %v3145 = vmax.f32 %v3144, %v2548
        %v3146 = vmax.f32 %v3145, %v2550
        %v3147 = vmax.f32 %v3146, %v2553
        %v3148 = vmax.f32 %v3147, %v2555
        %v3149 = vmax.f32 %v3148, %v2558
        %v3150 = vmax.f32 %v3149, %v2560
        %v3151 = vmax.f32 %v3150, %v2563
        %v3152 = vmax.f32 %v3151, %v2565
        %v3153 = vmax.f32 %v3152, %v2568
        %v3154 = vmax.f32 %v3153, %v2570
        %v3155 = vmax.f32 %v3154, %v2573
        %v3156 = vmax.f32 %v3155, %v2575
        %v3157 = vmax.f32 %v3156, %v2578
        %v3158 = vmax.f32 %v3157, %v2580
        %v3159 = vmax.f32 %v3158, %v2583
        %v3160 = vmax.f32 %v3159, %v2585
        %v3161 = vmax.f32 %v3160, %v2588
        %v3162 = vmax.f32 %v3161, %v2590
        %v3163 = vmax.f32 %v3162, %v2593
        %v3164 = vmax.f32 %v3163, %v2595
        %v3165 = vmax.f32 %v3164, %v2598
        %v3166 = vmax.f32 %v3165, %v2600
        %v3167 = vmax.f32 %v3166, %v2603
        %v3168 = vmax.f32 %v3167, %v2605
        %v3169 = vmax.f32 %v3168, %v2608
        %v3170 = vmax.f32 %v3169, %v2610
        %v3171 = vmax.f32 %v3170, %v2613
        %v3172 = vmax.f32 %v3171, %v2615
        %v3173 = vmax.f32 %v3172, %v2618
        %v3174 = vmax.f32 %v3173, %v2620
        %v3175 = vmax.f32 %v3174, %v2623
        %v3176 = vmax.f32 %v3175, %v2625
        %v3177 = vmax.f32 %v3176, %v2628
        %v3178 = vmax.f32 %v3177, %v2630
        %v3179 = vmax.f32 %v3178, %v2633
        %v3180 = vmax.f32 %v3179, %v2635
        %v3181 = vmax.f32 %v3180, %v2638
        %v3182 = vmax.f32 %v3181, %v2640
        %v3183 = vmax.f32 %v3182, %v2643
        %v3184 = vmax.f32 %v3183, %v2645
        %v3185 = vmax.f32 %v3184, %v2648
        %v3186 = vmax.f32 %v3185, %v2650
        %v3187 = vmax.f32 %v3186, %v2653
        %v3188 = vmax.f32 %v3187, %v2655
        %v3189 = vmax.f32 %v3188, %v2658
        %v3190 = vmax.f32 %v3189, %v2660
        %v3191 = vmax.f32 %v3190, %v2663
        %v3192 = vmax.f32 %v3191, %v2665
        %v3193 = vrot.slane %v3192, 4
        %v3194 = vmax.f32 %v3192, %v3193
        %v3195 = vrot.slane %v3194, 2
        %v3196 = vmax.f32 %v3194, %v3195
        %v3197 = vrot.slane %v3196, 1
        %v3198 = vmax.f32 %v3196, %v3197
        %v3199 = vsub.f32 %v1361, %v2799
        %v3200 = vsub.f32 %v1690, %v2932
        %v3201 = vsub.f32 %v2019, %v3065
        %v3202 = vsub.f32 %v2348, %v3198
        %v3203 = vsub.f32 %v1363, %v2799
        %v3204 = vsub.f32 %v1692, %v2932
        %v3205 = vsub.f32 %v2021, %v3065
        %v3206 = vsub.f32 %v2350, %v3198
        %v3207 = vsub.f32 %v1366, %v2799
        %v3208 = vsub.f32 %v1695, %v2932
        %v3209 = vsub.f32 %v2024, %v3065
        %v3210 = vsub.f32 %v2353, %v3198
        %v3211 = vsub.f32 %v1368, %v2799
        %v3212 = vsub.f32 %v1697, %v2932
        %v3213 = vsub.f32 %v2026, %v3065
        %v3214 = vsub.f32 %v2355, %v3198
        %v3215 = vsub.f32 %v1371, %v2799
        %v3216 = vsub.f32 %v1700, %v2932
        %v3217 = vsub.f32 %v2029, %v3065
        %v3218 = vsub.f32 %v2358, %v3198
        %v3219 = vsub.f32 %v1373, %v2799
        %v3220 = vsub.f32 %v1702, %v2932
        %v3221 = vsub.f32 %v2031, %v3065
        %v3222 = vsub.f32 %v2360, %v3198
        %v3223 = vsub.f32 %v1376, %v2799
        %v3224 = vsub.f32 %v1705, %v2932
        %v3225 = vsub.f32 %v2034, %v3065
        %v3226 = vsub.f32 %v2363, %v3198
        %v3227 = vsub.f32 %v1378, %v2799
        %v3228 = vsub.f32 %v1707, %v2932
        %v3229 = vsub.f32 %v2036, %v3065
        %v3230 = vsub.f32 %v2365, %v3198
        %v3231 = vsub.f32 %v1381, %v2799
        %v3232 = vsub.f32 %v1710, %v2932
        %v3233 = vsub.f32 %v2039, %v3065
        %v3234 = vsub.f32 %v2368, %v3198
        %v3235 = vsub.f32 %v1383, %v2799
        %v3236 = vsub.f32 %v1712, %v2932
        %v3237 = vsub.f32 %v2041, %v3065
        %v3238 = vsub.f32 %v2370, %v3198
        %v3239 = vsub.f32 %v1386, %v2799
        %v3240 = vsub.f32 %v1715, %v2932
        %v3241 = vsub.f32 %v2044, %v3065
        %v3242 = vsub.f32 %v2373, %v3198
        %v3243 = vsub.f32 %v1388, %v2799
        %v3244 = vsub.f32 %v1717, %v2932
        %v3245 = vsub.f32 %v2046, %v3065
        %v3246 = vsub.f32 %v2375, %v3198
        %v3247 = vsub.f32 %v1391, %v2799
        %v3248 = vsub.f32 %v1720, %v2932
        %v3249 = vsub.f32 %v2049, %v3065
        %v3250 = vsub.f32 %v2378, %v3198
        %v3251 = vsub.f32 %v1393, %v2799
        %v3252 = vsub.f32 %v1722, %v2932
        %v3253 = vsub.f32 %v2051, %v3065
        %v3254 = vsub.f32 %v2380, %v3198
        %v3255 = vsub.f32 %v1396, %v2799
        %v3256 = vsub.f32 %v1725, %v2932
        %v3257 = vsub.f32 %v2054, %v3065
        %v3258 = vsub.f32 %v2383, %v3198
        %v3259 = vsub.f32 %v1398, %v2799
        %v3260 = vsub.f32 %v1727, %v2932
        %v3261 = vsub.f32 %v2056, %v3065
        %v3262 = vsub.f32 %v2385, %v3198
        %v3263 = vsub.f32 %v1401, %v2799
        %v3264 = vsub.f32 %v1730, %v2932
        %v3265 = vsub.f32 %v2059, %v3065
        %v3266 = vsub.f32 %v2388, %v3198
        %v3267 = vsub.f32 %v1403, %v2799
        %v3268 = vsub.f32 %v1732, %v2932
        %v3269 = vsub.f32 %v2061, %v3065
        %v3270 = vsub.f32 %v2390, %v3198
        %v3271 = vsub.f32 %v1406, %v2799
        %v3272 = vsub.f32 %v1735, %v2932
        %v3273 = vsub.f32 %v2064, %v3065
        %v3274 = vsub.f32 %v2393, %v3198
        %v3275 = vsub.f32 %v1408, %v2799
        %v3276 = vsub.f32 %v1737, %v2932
        %v3277 = vsub.f32 %v2066, %v3065
        %v3278 = vsub.f32 %v2395, %v3198
        %v3279 = vsub.f32 %v1411, %v2799
        %v3280 = vsub.f32 %v1740, %v2932
        %v3281 = vsub.f32 %v2069, %v3065
        %v3282 = vsub.f32 %v2398, %v3198
        %v3283 = vsub.f32 %v1413, %v2799
        %v3284 = vsub.f32 %v1742, %v2932
        %v3285 = vsub.f32 %v2071, %v3065
        %v3286 = vsub.f32 %v2400, %v3198
        %v3287 = vsub.f32 %v1416, %v2799
        %v3288 = vsub.f32 %v1745, %v2932
        %v3289 = vsub.f32 %v2074, %v3065
        %v3290 = vsub.f32 %v2403, %v3198
        %v3291 = vsub.f32 %v1418, %v2799
        %v3292 = vsub.f32 %v1747, %v2932
        %v3293 = vsub.f32 %v2076, %v3065
        %v3294 = vsub.f32 %v2405, %v3198
        %v3295 = vsub.f32 %v1421, %v2799
        %v3296 = vsub.f32 %v1750, %v2932
        %v3297 = vsub.f32 %v2079, %v3065
        %v3298 = vsub.f32 %v2408, %v3198
        %v3299 = vsub.f32 %v1423, %v2799
        %v3300 = vsub.f32 %v1752, %v2932
        %v3301 = vsub.f32 %v2081, %v3065
        %v3302 = vsub.f32 %v2410, %v3198
        %v3303 = vsub.f32 %v1426, %v2799
        %v3304 = vsub.f32 %v1755, %v2932
        %v3305 = vsub.f32 %v2084, %v3065
        %v3306 = vsub.f32 %v2413, %v3198
        %v3307 = vsub.f32 %v1428, %v2799
        %v3308 = vsub.f32 %v1757, %v2932
        %v3309 = vsub.f32 %v2086, %v3065
        %v3310 = vsub.f32 %v2415, %v3198
        %v3311 = vsub.f32 %v1431, %v2799
        %v3312 = vsub.f32 %v1760, %v2932
        %v3313 = vsub.f32 %v2089, %v3065
        %v3314 = vsub.f32 %v2418, %v3198
        %v3315 = vsub.f32 %v1433, %v2799
        %v3316 = vsub.f32 %v1762, %v2932
        %v3317 = vsub.f32 %v2091, %v3065
        %v3318 = vsub.f32 %v2420, %v3198
        %v3319 = vsub.f32 %v1436, %v2799
        %v3320 = vsub.f32 %v1765, %v2932
        %v3321 = vsub.f32 %v2094, %v3065
        %v3322 = vsub.f32 %v2423, %v3198
        %v3323 = vsub.f32 %v1438, %v2799
        %v3324 = vsub.f32 %v1767, %v2932
        %v3325 = vsub.f32 %v2096, %v3065
        %v3326 = vsub.f32 %v2425, %v3198
        %v3327 = vsub.f32 %v1441, %v2799
        %v3328 = vsub.f32 %v1770, %v2932
        %v3329 = vsub.f32 %v2099, %v3065
        %v3330 = vsub.f32 %v2428, %v3198
        %v3331 = vsub.f32 %v1443, %v2799
        %v3332 = vsub.f32 %v1772, %v2932
        %v3333 = vsub.f32 %v2101, %v3065
        %v3334 = vsub.f32 %v2430, %v3198
        %v3335 = vsub.f32 %v1446, %v2799
        %v3336 = vsub.f32 %v1775, %v2932
        %v3337 = vsub.f32 %v2104, %v3065
        %v3338 = vsub.f32 %v2433, %v3198
        %v3339 = vsub.f32 %v1448, %v2799
        %v3340 = vsub.f32 %v1777, %v2932
        %v3341 = vsub.f32 %v2106, %v3065
        %v3342 = vsub.f32 %v2435, %v3198
        %v3343 = vsub.f32 %v1451, %v2799
        %v3344 = vsub.f32 %v1780, %v2932
        %v3345 = vsub.f32 %v2109, %v3065
        %v3346 = vsub.f32 %v2438, %v3198
        %v3347 = vsub.f32 %v1453, %v2799
        %v3348 = vsub.f32 %v1782, %v2932
        %v3349 = vsub.f32 %v2111, %v3065
        %v3350 = vsub.f32 %v2440, %v3198
        %v3351 = vsub.f32 %v1456, %v2799
        %v3352 = vsub.f32 %v1785, %v2932
        %v3353 = vsub.f32 %v2114, %v3065
        %v3354 = vsub.f32 %v2443, %v3198
        %v3355 = vsub.f32 %v1458, %v2799
        %v3356 = vsub.f32 %v1787, %v2932
        %v3357 = vsub.f32 %v2116, %v3065
        %v3358 = vsub.f32 %v2445, %v3198
        %v3359 = vsub.f32 %v1461, %v2799
        %v3360 = vsub.f32 %v1790, %v2932
        %v3361 = vsub.f32 %v2119, %v3065
        %v3362 = vsub.f32 %v2448, %v3198
        %v3363 = vsub.f32 %v1463, %v2799
        %v3364 = vsub.f32 %v1792, %v2932
        %v3365 = vsub.f32 %v2121, %v3065
        %v3366 = vsub.f32 %v2450, %v3198
        %v3367 = vsub.f32 %v1466, %v2799
        %v3368 = vsub.f32 %v1795, %v2932
        %v3369 = vsub.f32 %v2124, %v3065
        %v3370 = vsub.f32 %v2453, %v3198
        %v3371 = vsub.f32 %v1468, %v2799
        %v3372 = vsub.f32 %v1797, %v2932
        %v3373 = vsub.f32 %v2126, %v3065
        %v3374 = vsub.f32 %v2455, %v3198
        %v3375 = vsub.f32 %v1471, %v2799
        %v3376 = vsub.f32 %v1800, %v2932
        %v3377 = vsub.f32 %v2129, %v3065
        %v3378 = vsub.f32 %v2458, %v3198
        %v3379 = vsub.f32 %v1473, %v2799
        %v3380 = vsub.f32 %v1802, %v2932
        %v3381 = vsub.f32 %v2131, %v3065
        %v3382 = vsub.f32 %v2460, %v3198
        %v3383 = vsub.f32 %v1476, %v2799
        %v3384 = vsub.f32 %v1805, %v2932
        %v3385 = vsub.f32 %v2134, %v3065
        %v3386 = vsub.f32 %v2463, %v3198
        %v3387 = vsub.f32 %v1478, %v2799
        %v3388 = vsub.f32 %v1807, %v2932
        %v3389 = vsub.f32 %v2136, %v3065
        %v3390 = vsub.f32 %v2465, %v3198
        %v3391 = vsub.f32 %v1481, %v2799
        %v3392 = vsub.f32 %v1810, %v2932
        %v3393 = vsub.f32 %v2139, %v3065
        %v3394 = vsub.f32 %v2468, %v3198
        %v3395 = vsub.f32 %v1483, %v2799
        %v3396 = vsub.f32 %v1812, %v2932
        %v3397 = vsub.f32 %v2141, %v3065
        %v3398 = vsub.f32 %v2470, %v3198
        %v3399 = vsub.f32 %v1486, %v2799
        %v3400 = vsub.f32 %v1815, %v2932
        %v3401 = vsub.f32 %v2144, %v3065
        %v3402 = vsub.f32 %v2473, %v3198
        %v3403 = vsub.f32 %v1488, %v2799
        %v3404 = vsub.f32 %v1817, %v2932
        %v3405 = vsub.f32 %v2146, %v3065
        %v3406 = vsub.f32 %v2475, %v3198
        %v3407 = vsub.f32 %v1491, %v2799
        %v3408 = vsub.f32 %v1820, %v2932
        %v3409 = vsub.f32 %v2149, %v3065
        %v3410 = vsub.f32 %v2478, %v3198
        %v3411 = vsub.f32 %v1493, %v2799
        %v3412 = vsub.f32 %v1822, %v2932
        %v3413 = vsub.f32 %v2151, %v3065
        %v3414 = vsub.f32 %v2480, %v3198
        %v3415 = vsub.f32 %v1496, %v2799
        %v3416 = vsub.f32 %v1825, %v2932
        %v3417 = vsub.f32 %v2154, %v3065
        %v3418 = vsub.f32 %v2483, %v3198
        %v3419 = vsub.f32 %v1498, %v2799
        %v3420 = vsub.f32 %v1827, %v2932
        %v3421 = vsub.f32 %v2156, %v3065
        %v3422 = vsub.f32 %v2485, %v3198
        %v3423 = vsub.f32 %v1501, %v2799
        %v3424 = vsub.f32 %v1830, %v2932
        %v3425 = vsub.f32 %v2159, %v3065
        %v3426 = vsub.f32 %v2488, %v3198
        %v3427 = vsub.f32 %v1503, %v2799
        %v3428 = vsub.f32 %v1832, %v2932
        %v3429 = vsub.f32 %v2161, %v3065
        %v3430 = vsub.f32 %v2490, %v3198
        %v3431 = vsub.f32 %v1506, %v2799
        %v3432 = vsub.f32 %v1835, %v2932
        %v3433 = vsub.f32 %v2164, %v3065
        %v3434 = vsub.f32 %v2493, %v3198
        %v3435 = vsub.f32 %v1508, %v2799
        %v3436 = vsub.f32 %v1837, %v2932
        %v3437 = vsub.f32 %v2166, %v3065
        %v3438 = vsub.f32 %v2495, %v3198
        %v3439 = vsub.f32 %v1511, %v2799
        %v3440 = vsub.f32 %v1840, %v2932
        %v3441 = vsub.f32 %v2169, %v3065
        %v3442 = vsub.f32 %v2498, %v3198
        %v3443 = vsub.f32 %v1513, %v2799
        %v3444 = vsub.f32 %v1842, %v2932
        %v3445 = vsub.f32 %v2171, %v3065
        %v3446 = vsub.f32 %v2500, %v3198
        %v3447 = vsub.f32 %v1516, %v2799
        %v3448 = vsub.f32 %v1845, %v2932
        %v3449 = vsub.f32 %v2174, %v3065
        %v3450 = vsub.f32 %v2503, %v3198
        %v3451 = vsub.f32 %v1518, %v2799
        %v3452 = vsub.f32 %v1847, %v2932
        %v3453 = vsub.f32 %v2176, %v3065
        %v3454 = vsub.f32 %v2505, %v3198
        %v3455 = vsub.f32 %v1521, %v2799
        %v3456 = vsub.f32 %v1850, %v2932
        %v3457 = vsub.f32 %v2179, %v3065
        %v3458 = vsub.f32 %v2508, %v3198
        %v3459 = vsub.f32 %v1523, %v2799
        %v3460 = vsub.f32 %v1852, %v2932
        %v3461 = vsub.f32 %v2181, %v3065
        %v3462 = vsub.f32 %v2510, %v3198
        %v3463 = vsub.f32 %v1526, %v2799
        %v3464 = vsub.f32 %v1855, %v2932
        %v3465 = vsub.f32 %v2184, %v3065
        %v3466 = vsub.f32 %v2513, %v3198
        %v3467 = vsub.f32 %v1528, %v2799
        %v3468 = vsub.f32 %v1857, %v2932
        %v3469 = vsub.f32 %v2186, %v3065
        %v3470 = vsub.f32 %v2515, %v3198
        %v3471 = vsub.f32 %v1531, %v2799
        %v3472 = vsub.f32 %v1860, %v2932
        %v3473 = vsub.f32 %v2189, %v3065
        %v3474 = vsub.f32 %v2518, %v3198
        %v3475 = vsub.f32 %v1533, %v2799
        %v3476 = vsub.f32 %v1862, %v2932
        %v3477 = vsub.f32 %v2191, %v3065
        %v3478 = vsub.f32 %v2520, %v3198
        %v3479 = vsub.f32 %v1536, %v2799
        %v3480 = vsub.f32 %v1865, %v2932
        %v3481 = vsub.f32 %v2194, %v3065
        %v3482 = vsub.f32 %v2523, %v3198
        %v3483 = vsub.f32 %v1538, %v2799
        %v3484 = vsub.f32 %v1867, %v2932
        %v3485 = vsub.f32 %v2196, %v3065
        %v3486 = vsub.f32 %v2525, %v3198
        %v3487 = vsub.f32 %v1541, %v2799
        %v3488 = vsub.f32 %v1870, %v2932
        %v3489 = vsub.f32 %v2199, %v3065
        %v3490 = vsub.f32 %v2528, %v3198
        %v3491 = vsub.f32 %v1543, %v2799
        %v3492 = vsub.f32 %v1872, %v2932
        %v3493 = vsub.f32 %v2201, %v3065
        %v3494 = vsub.f32 %v2530, %v3198
        %v3495 = vsub.f32 %v1546, %v2799
        %v3496 = vsub.f32 %v1875, %v2932
        %v3497 = vsub.f32 %v2204, %v3065
        %v3498 = vsub.f32 %v2533, %v3198
        %v3499 = vsub.f32 %v1548, %v2799
        %v3500 = vsub.f32 %v1877, %v2932
        %v3501 = vsub.f32 %v2206, %v3065
        %v3502 = vsub.f32 %v2535, %v3198
        %v3503 = vsub.f32 %v1551, %v2799
        %v3504 = vsub.f32 %v1880, %v2932
        %v3505 = vsub.f32 %v2209, %v3065
        %v3506 = vsub.f32 %v2538, %v3198
        %v3507 = vsub.f32 %v1553, %v2799
        %v3508 = vsub.f32 %v1882, %v2932
        %v3509 = vsub.f32 %v2211, %v3065
        %v3510 = vsub.f32 %v2540, %v3198
        %v3511 = vsub.f32 %v1556, %v2799
        %v3512 = vsub.f32 %v1885, %v2932
        %v3513 = vsub.f32 %v2214, %v3065
        %v3514 = vsub.f32 %v2543, %v3198
        %v3515 = vsub.f32 %v1558, %v2799
        %v3516 = vsub.f32 %v1887, %v2932
        %v3517 = vsub.f32 %v2216, %v3065
        %v3518 = vsub.f32 %v2545, %v3198
        %v3519 = vsub.f32 %v1561, %v2799
        %v3520 = vsub.f32 %v1890, %v2932
        %v3521 = vsub.f32 %v2219, %v3065
        %v3522 = vsub.f32 %v2548, %v3198
        %v3523 = vsub.f32 %v1563, %v2799
        %v3524 = vsub.f32 %v1892, %v2932
        %v3525 = vsub.f32 %v2221, %v3065
        %v3526 = vsub.f32 %v2550, %v3198
        %v3527 = vsub.f32 %v1566, %v2799
        %v3528 = vsub.f32 %v1895, %v2932
        %v3529 = vsub.f32 %v2224, %v3065
        %v3530 = vsub.f32 %v2553, %v3198
        %v3531 = vsub.f32 %v1568, %v2799
        %v3532 = vsub.f32 %v1897, %v2932
        %v3533 = vsub.f32 %v2226, %v3065
        %v3534 = vsub.f32 %v2555, %v3198
        %v3535 = vsub.f32 %v1571, %v2799
        %v3536 = vsub.f32 %v1900, %v2932
        %v3537 = vsub.f32 %v2229, %v3065
        %v3538 = vsub.f32 %v2558, %v3198
        %v3539 = vsub.f32 %v1573, %v2799
        %v3540 = vsub.f32 %v1902, %v2932
        %v3541 = vsub.f32 %v2231, %v3065
        %v3542 = vsub.f32 %v2560, %v3198
        %v3543 = vsub.f32 %v1576, %v2799
        %v3544 = vsub.f32 %v1905, %v2932
        %v3545 = vsub.f32 %v2234, %v3065
        %v3546 = vsub.f32 %v2563, %v3198
        %v3547 = vsub.f32 %v1578, %v2799
        %v3548 = vsub.f32 %v1907, %v2932
        %v3549 = vsub.f32 %v2236, %v3065
        %v3550 = vsub.f32 %v2565, %v3198
        %v3551 = vsub.f32 %v1581, %v2799
        %v3552 = vsub.f32 %v1910, %v2932
        %v3553 = vsub.f32 %v2239, %v3065
        %v3554 = vsub.f32 %v2568, %v3198
        %v3555 = vsub.f32 %v1583, %v2799
        %v3556 = vsub.f32 %v1912, %v2932
        %v3557 = vsub.f32 %v2241, %v3065
        %v3558 = vsub.f32 %v2570, %v3198
        %v3559 = vsub.f32 %v1586, %v2799
        %v3560 = vsub.f32 %v1915, %v2932
        %v3561 = vsub.f32 %v2244, %v3065
        %v3562 = vsub.f32 %v2573, %v3198
        %v3563 = vsub.f32 %v1588, %v2799
        %v3564 = vsub.f32 %v1917, %v2932
        %v3565 = vsub.f32 %v2246, %v3065
        %v3566 = vsub.f32 %v2575, %v3198
        %v3567 = vsub.f32 %v1591, %v2799
        %v3568 = vsub.f32 %v1920, %v2932
        %v3569 = vsub.f32 %v2249, %v3065
        %v3570 = vsub.f32 %v2578, %v3198
        %v3571 = vsub.f32 %v1593, %v2799
        %v3572 = vsub.f32 %v1922, %v2932
        %v3573 = vsub.f32 %v2251, %v3065
        %v3574 = vsub.f32 %v2580, %v3198
        %v3575 = vsub.f32 %v1596, %v2799
        %v3576 = vsub.f32 %v1925, %v2932
        %v3577 = vsub.f32 %v2254, %v3065
        %v3578 = vsub.f32 %v2583, %v3198
        %v3579 = vsub.f32 %v1598, %v2799
        %v3580 = vsub.f32 %v1927, %v2932
        %v3581 = vsub.f32 %v2256, %v3065
        %v3582 = vsub.f32 %v2585, %v3198
        %v3583 = vsub.f32 %v1601, %v2799
        %v3584 = vsub.f32 %v1930, %v2932
        %v3585 = vsub.f32 %v2259, %v3065
        %v3586 = vsub.f32 %v2588, %v3198
        %v3587 = vsub.f32 %v1603, %v2799
        %v3588 = vsub.f32 %v1932, %v2932
        %v3589 = vsub.f32 %v2261, %v3065
        %v3590 = vsub.f32 %v2590, %v3198
        %v3591 = vsub.f32 %v1606, %v2799
        %v3592 = vsub.f32 %v1935, %v2932
        %v3593 = vsub.f32 %v2264, %v3065
        %v3594 = vsub.f32 %v2593, %v3198
        %v3595 = vsub.f32 %v1608, %v2799
        %v3596 = vsub.f32 %v1937, %v2932
        %v3597 = vsub.f32 %v2266, %v3065
        %v3598 = vsub.f32 %v2595, %v3198
        %v3599 = vsub.f32 %v1611, %v2799
        %v3600 = vsub.f32 %v1940, %v2932
        %v3601 = vsub.f32 %v2269, %v3065
        %v3602 = vsub.f32 %v2598, %v3198
        %v3603 = vsub.f32 %v1613, %v2799
        %v3604 = vsub.f32 %v1942, %v2932
        %v3605 = vsub.f32 %v2271, %v3065
        %v3606 = vsub.f32 %v2600, %v3198
        %v3607 = vsub.f32 %v1616, %v2799
        %v3608 = vsub.f32 %v1945, %v2932
        %v3609 = vsub.f32 %v2274, %v3065
        %v3610 = vsub.f32 %v2603, %v3198
        %v3611 = vsub.f32 %v1618, %v2799
        %v3612 = vsub.f32 %v1947, %v2932
        %v3613 = vsub.f32 %v2276, %v3065
        %v3614 = vsub.f32 %v2605, %v3198
        %v3615 = vsub.f32 %v1621, %v2799
        %v3616 = vsub.f32 %v1950, %v2932
        %v3617 = vsub.f32 %v2279, %v3065
        %v3618 = vsub.f32 %v2608, %v3198
        %v3619 = vsub.f32 %v1623, %v2799
        %v3620 = vsub.f32 %v1952, %v2932
        %v3621 = vsub.f32 %v2281, %v3065
        %v3622 = vsub.f32 %v2610, %v3198
        %v3623 = vsub.f32 %v1626, %v2799
        %v3624 = vsub.f32 %v1955, %v2932
        %v3625 = vsub.f32 %v2284, %v3065
        %v3626 = vsub.f32 %v2613, %v3198
        %v3627 = vsub.f32 %v1628, %v2799
        %v3628 = vsub.f32 %v1957, %v2932
        %v3629 = vsub.f32 %v2286, %v3065
        %v3630 = vsub.f32 %v2615, %v3198
        %v3631 = vsub.f32 %v1631, %v2799
        %v3632 = vsub.f32 %v1960, %v2932
        %v3633 = vsub.f32 %v2289, %v3065
        %v3634 = vsub.f32 %v2618, %v3198
        %v3635 = vsub.f32 %v1633, %v2799
        %v3636 = vsub.f32 %v1962, %v2932
        %v3637 = vsub.f32 %v2291, %v3065
        %v3638 = vsub.f32 %v2620, %v3198
        %v3639 = vsub.f32 %v1636, %v2799
        %v3640 = vsub.f32 %v1965, %v2932
        %v3641 = vsub.f32 %v2294, %v3065
        %v3642 = vsub.f32 %v2623, %v3198
        %v3643 = vsub.f32 %v1638, %v2799
        %v3644 = vsub.f32 %v1967, %v2932
        %v3645 = vsub.f32 %v2296, %v3065
        %v3646 = vsub.f32 %v2625, %v3198
        %v3647 = vsub.f32 %v1641, %v2799
        %v3648 = vsub.f32 %v1970, %v2932
        %v3649 = vsub.f32 %v2299, %v3065
        %v3650 = vsub.f32 %v2628, %v3198
        %v3651 = vsub.f32 %v1643, %v2799
        %v3652 = vsub.f32 %v1972, %v2932
        %v3653 = vsub.f32 %v2301, %v3065
        %v3654 = vsub.f32 %v2630, %v3198
        %v3655 = vsub.f32 %v1646, %v2799
        %v3656 = vsub.f32 %v1975, %v2932
        %v3657 = vsub.f32 %v2304, %v3065
        %v3658 = vsub.f32 %v2633, %v3198
        %v3659 = vsub.f32 %v1648, %v2799
        %v3660 = vsub.f32 %v1977, %v2932
        %v3661 = vsub.f32 %v2306, %v3065
        %v3662 = vsub.f32 %v2635, %v3198
        %v3663 = vsub.f32 %v1651, %v2799
        %v3664 = vsub.f32 %v1980, %v2932
        %v3665 = vsub.f32 %v2309, %v3065
        %v3666 = vsub.f32 %v2638, %v3198
        %v3667 = vsub.f32 %v1653, %v2799
        %v3668 = vsub.f32 %v1982, %v2932
        %v3669 = vsub.f32 %v2311, %v3065
        %v3670 = vsub.f32 %v2640, %v3198
        %v3671 = vsub.f32 %v1656, %v2799
        %v3672 = vsub.f32 %v1985, %v2932
        %v3673 = vsub.f32 %v2314, %v3065
        %v3674 = vsub.f32 %v2643, %v3198
        %v3675 = vsub.f32 %v1658, %v2799
        %v3676 = vsub.f32 %v1987, %v2932
        %v3677 = vsub.f32 %v2316, %v3065
        %v3678 = vsub.f32 %v2645, %v3198
        %v3679 = vsub.f32 %v1661, %v2799
        %v3680 = vsub.f32 %v1990, %v2932
        %v3681 = vsub.f32 %v2319, %v3065
        %v3682 = vsub.f32 %v2648, %v3198
        %v3683 = vsub.f32 %v1663, %v2799
        %v3684 = vsub.f32 %v1992, %v2932
        %v3685 = vsub.f32 %v2321, %v3065
        %v3686 = vsub.f32 %v2650, %v3198
        %v3687 = vsub.f32 %v1666, %v2799
        %v3688 = vsub.f32 %v1995, %v2932
        %v3689 = vsub.f32 %v2324, %v3065
        %v3690 = vsub.f32 %v2653, %v3198
        %v3691 = vsub.f32 %v1668, %v2799
        %v3692 = vsub.f32 %v1997, %v2932
        %v3693 = vsub.f32 %v2326, %v3065
        %v3694 = vsub.f32 %v2655, %v3198
        %v3695 = vsub.f32 %v1671, %v2799
        %v3696 = vsub.f32 %v2000, %v2932
        %v3697 = vsub.f32 %v2329, %v3065
        %v3698 = vsub.f32 %v2658, %v3198
        %v3699 = vsub.f32 %v1673, %v2799
        %v3700 = vsub.f32 %v2002, %v2932
        %v3701 = vsub.f32 %v2331, %v3065
        %v3702 = vsub.f32 %v2660, %v3198
        %v3703 = vsub.f32 %v1676, %v2799
        %v3704 = vsub.f32 %v2005, %v2932
        %v3705 = vsub.f32 %v2334, %v3065
        %v3706 = vsub.f32 %v2663, %v3198
        %v3707 = vsub.f32 %v1678, %v2799
        %v3708 = vsub.f32 %v2007, %v2932
        %v3709 = vsub.f32 %v2336, %v3065
        %v3710 = vsub.f32 %v2665, %v3198
        %v3711 = vmul.f32 %v3199, 1.442695
        %v3712 = vpow.pop %v3711
        %v3713 = vmul.f32 %v3200, 1.442695
        %v3714 = vpow.pop %v3713
        %v3715 = vmul.f32 %v3201, 1.442695
        %v3716 = vpow.pop %v3715
        %v3717 = vmul.f32 %v3202, 1.442695
        %v3718 = vpow.pop %v3717
        %v3719 = vmul.f32 %v3203, 1.442695
        %v3720 = vpow.pop %v3719
        %v3721 = vmul.f32 %v3204, 1.442695
        %v3722 = vpow.pop %v3721
        %v3723 = vmul.f32 %v3205, 1.442695
        %v3724 = vpow.pop %v3723
        %v3725 = vmul.f32 %v3206, 1.442695
        %v3726 = vpow.pop %v3725
        %v3727 = vmul.f32 %v3207, 1.442695
        %v3728 = vpow.pop %v3727
        %v3729 = vmul.f32 %v3208, 1.442695
        %v3730 = vpow.pop %v3729
        %v3731 = vmul.f32 %v3209, 1.442695
        %v3732 = vpow.pop %v3731
        %v3733 = vmul.f32 %v3210, 1.442695
        %v3734 = vpow.pop %v3733
        %v3735 = vmul.f32 %v3211, 1.442695
        %v3736 = vpow.pop %v3735
        %v3737 = vmul.f32 %v3212, 1.442695
        %v3738 = vpow.pop %v3737
        %v3739 = vmul.f32 %v3213, 1.442695
        %v3740 = vpow.pop %v3739
        %v3741 = vmul.f32 %v3214, 1.442695
        %v3742 = vpow.pop %v3741
        %v3743 = vmul.f32 %v3215, 1.442695
        %v3744 = vpow.pop %v3743
        %v3745 = vmul.f32 %v3216, 1.442695
        %v3746 = vpow.pop %v3745
        %v3747 = vmul.f32 %v3217, 1.442695
        %v3748 = vpow.pop %v3747
        %v3749 = vmul.f32 %v3218, 1.442695
        %v3750 = vpow.pop %v3749
        %v3751 = vmul.f32 %v3219, 1.442695
        %v3752 = vpow.pop %v3751
        %v3753 = vmul.f32 %v3220, 1.442695
        %v3754 = vpow.pop %v3753
        %v3755 = vmul.f32 %v3221, 1.442695
        %v3756 = vpow.pop %v3755
        %v3757 = vmul.f32 %v3222, 1.442695
        %v3758 = vpow.pop %v3757
        %v3759 = vmul.f32 %v3223, 1.442695
        %v3760 = vpow.pop %v3759
        %v3761 = vmul.f32 %v3224, 1.442695
        %v3762 = vpow.pop %v3761
        %v3763 = vmul.f32 %v3225, 1.442695
        %v3764 = vpow.pop %v3763
        %v3765 = vmul.f32 %v3226, 1.442695
        %v3766 = vpow.pop %v3765
        %v3767 = vmul.f32 %v3227, 1.442695
        %v3768 = vpow.pop %v3767
        %v3769 = vmul.f32 %v3228, 1.442695
        %v3770 = vpow.pop %v3769
        %v3771 = vmul.f32 %v3229, 1.442695
        %v3772 = vpow.pop %v3771
        %v3773 = vmul.f32 %v3230, 1.442695
        %v3774 = vpow.pop %v3773
        %v3775 = vmul.f32 %v3231, 1.442695
        %v3776 = vpow.pop %v3775
        %v3777 = vmul.f32 %v3232, 1.442695
        %v3778 = vpow.pop %v3777
        %v3779 = vmul.f32 %v3233, 1.442695
        %v3780 = vpow.pop %v3779
        %v3781 = vmul.f32 %v3234, 1.442695
        %v3782 = vpow.pop %v3781
        %v3783 = vmul.f32 %v3235, 1.442695
        %v3784 = vpow.pop %v3783
        %v3785 = vmul.f32 %v3236, 1.442695
        %v3786 = vpow.pop %v3785
        %v3787 = vmul.f32 %v3237, 1.442695
        %v3788 = vpow.pop %v3787
        %v3789 = vmul.f32 %v3238, 1.442695
        %v3790 = vpow.pop %v3789
        %v3791 = vmul.f32 %v3239, 1.442695
        %v3792 = vpow.pop %v3791
        %v3793 = vmul.f32 %v3240, 1.442695
        %v3794 = vpow.pop %v3793
        %v3795 = vmul.f32 %v3241, 1.442695
        %v3796 = vpow.pop %v3795
        %v3797 = vmul.f32 %v3242, 1.442695
        %v3798 = vpow.pop %v3797
        %v3799 = vmul.f32 %v3243, 1.442695
        %v3800 = vpow.pop %v3799
        %v3801 = vmul.f32 %v3244, 1.442695
        %v3802 = vpow.pop %v3801
        %v3803 = vmul.f32 %v3245, 1.442695
        %v3804 = vpow.pop %v3803
        %v3805 = vmul.f32 %v3246, 1.442695
        %v3806 = vpow.pop %v3805
        %v3807 = vmul.f32 %v3247, 1.442695
        %v3808 = vpow.pop %v3807
        %v3809 = vmul.f32 %v3248, 1.442695
        %v3810 = vpow.pop %v3809
        %v3811 = vmul.f32 %v3249, 1.442695
        %v3812 = vpow.pop %v3811
        %v3813 = vmul.f32 %v3250, 1.442695
        %v3814 = vpow.pop %v3813
        %v3815 = vmul.f32 %v3251, 1.442695
        %v3816 = vpow.pop %v3815
        %v3817 = vmul.f32 %v3252, 1.442695
        %v3818 = vpow.pop %v3817
        %v3819 = vmul.f32 %v3253, 1.442695
        %v3820 = vpow.pop %v3819
        %v3821 = vmul.f32 %v3254, 1.442695
        %v3822 = vpow.pop %v3821
        %v3823 = vmul.f32 %v3255, 1.442695
        %v3824 = vpow.pop %v3823
        %v3825 = vmul.f32 %v3256, 1.442695
        %v3826 = vpow.pop %v3825
        %v3827 = vmul.f32 %v3257, 1.442695
        %v3828 = vpow.pop %v3827
        %v3829 = vmul.f32 %v3258, 1.442695
        %v3830 = vpow.pop %v3829
        %v3831 = vmul.f32 %v3259, 1.442695
        %v3832 = vpow.pop %v3831
        %v3833 = vmul.f32 %v3260, 1.442695
        %v3834 = vpow.pop %v3833
        %v3835 = vmul.f32 %v3261, 1.442695
        %v3836 = vpow.pop %v3835
        %v3837 = vmul.f32 %v3262, 1.442695
        %v3838 = vpow.pop %v3837
        %v3839 = vmul.f32 %v3263, 1.442695
        %v3840 = vpow.pop %v3839
        %v3841 = vmul.f32 %v3264, 1.442695
        %v3842 = vpow.pop %v3841
        %v3843 = vmul.f32 %v3265, 1.442695
        %v3844 = vpow.pop %v3843
        %v3845 = vmul.f32 %v3266, 1.442695
        %v3846 = vpow.pop %v3845
        %v3847 = vmul.f32 %v3267, 1.442695
        %v3848 = vpow.pop %v3847
        %v3849 = vmul.f32 %v3268, 1.442695
        %v3850 = vpow.pop %v3849
        %v3851 = vmul.f32 %v3269, 1.442695
        %v3852 = vpow.pop %v3851
        %v3853 = vmul.f32 %v3270, 1.442695
        %v3854 = vpow.pop %v3853
        %v3855 = vmul.f32 %v3271, 1.442695
        %v3856 = vpow.pop %v3855
        %v3857 = vmul.f32 %v3272, 1.442695
        %v3858 = vpow.pop %v3857
        %v3859 = vmul.f32 %v3273, 1.442695
        %v3860 = vpow.pop %v3859
        %v3861 = vmul.f32 %v3274, 1.442695
        %v3862 = vpow.pop %v3861
        %v3863 = vmul.f32 %v3275, 1.442695
        %v3864 = vpow.pop %v3863
        %v3865 = vmul.f32 %v3276, 1.442695
        %v3866 = vpow.pop %v3865
        %v3867 = vmul.f32 %v3277, 1.442695
        %v3868 = vpow.pop %v3867
        %v3869 = vmul.f32 %v3278, 1.442695
        %v3870 = vpow.pop %v3869
        %v3871 = vmul.f32 %v3279, 1.442695
        %v3872 = vpow.pop %v3871
        %v3873 = vmul.f32 %v3280, 1.442695
        %v3874 = vpow.pop %v3873
        %v3875 = vmul.f32 %v3281, 1.442695
        %v3876 = vpow.pop %v3875
        %v3877 = vmul.f32 %v3282, 1.442695
        %v3878 = vpow.pop %v3877
        %v3879 = vmul.f32 %v3283, 1.442695
        %v3880 = vpow.pop %v3879
        %v3881 = vmul.f32 %v3284, 1.442695
        %v3882 = vpow.pop %v3881
        %v3883 = vmul.f32 %v3285, 1.442695
        %v3884 = vpow.pop %v3883
        %v3885 = vmul.f32 %v3286, 1.442695
        %v3886 = vpow.pop %v3885
        %v3887 = vmul.f32 %v3287, 1.442695
        %v3888 = vpow.pop %v3887
        %v3889 = vmul.f32 %v3288, 1.442695
        %v3890 = vpow.pop %v3889
        %v3891 = vmul.f32 %v3289, 1.442695
        %v3892 = vpow.pop %v3891
        %v3893 = vmul.f32 %v3290, 1.442695
        %v3894 = vpow.pop %v3893
        %v3895 = vmul.f32 %v3291, 1.442695
        %v3896 = vpow.pop %v3895
        %v3897 = vmul.f32 %v3292, 1.442695
        %v3898 = vpow.pop %v3897
        %v3899 = vmul.f32 %v3293, 1.442695
        %v3900 = vpow.pop %v3899
        %v3901 = vmul.f32 %v3294, 1.442695
        %v3902 = vpow.pop %v3901
        %v3903 = vmul.f32 %v3295, 1.442695
        %v3904 = vpow.pop %v3903
        %v3905 = vmul.f32 %v3296, 1.442695
        %v3906 = vpow.pop %v3905
        %v3907 = vmul.f32 %v3297, 1.442695
        %v3908 = vpow.pop %v3907
        %v3909 = vmul.f32 %v3298, 1.442695
        %v3910 = vpow.pop %v3909
        %v3911 = vmul.f32 %v3299, 1.442695
        %v3912 = vpow.pop %v3911
        %v3913 = vmul.f32 %v3300, 1.442695
        %v3914 = vpow.pop %v3913
        %v3915 = vmul.f32 %v3301, 1.442695
        %v3916 = vpow.pop %v3915
        %v3917 = vmul.f32 %v3302, 1.442695
        %v3918 = vpow.pop %v3917
        %v3919 = vmul.f32 %v3303, 1.442695
        %v3920 = vpow.pop %v3919
        %v3921 = vmul.f32 %v3304, 1.442695
        %v3922 = vpow.pop %v3921
        %v3923 = vmul.f32 %v3305, 1.442695
        %v3924 = vpow.pop %v3923
        %v3925 = vmul.f32 %v3306, 1.442695
        %v3926 = vpow.pop %v3925
        %v3927 = vmul.f32 %v3307, 1.442695
        %v3928 = vpow.pop %v3927
        %v3929 = vmul.f32 %v3308, 1.442695
        %v3930 = vpow.pop %v3929
        %v3931 = vmul.f32 %v3309, 1.442695
        %v3932 = vpow.pop %v3931
        %v3933 = vmul.f32 %v3310, 1.442695
        %v3934 = vpow.pop %v3933
        %v3935 = vmul.f32 %v3311, 1.442695
        %v3936 = vpow.pop %v3935
        %v3937 = vmul.f32 %v3312, 1.442695
        %v3938 = vpow.pop %v3937
        %v3939 = vmul.f32 %v3313, 1.442695
        %v3940 = vpow.pop %v3939
        %v3941 = vmul.f32 %v3314, 1.442695
        %v3942 = vpow.pop %v3941
        %v3943 = vmul.f32 %v3315, 1.442695
        %v3944 = vpow.pop %v3943
        %v3945 = vmul.f32 %v3316, 1.442695
        %v3946 = vpow.pop %v3945
        %v3947 = vmul.f32 %v3317, 1.442695
        %v3948 = vpow.pop %v3947
        %v3949 = vmul.f32 %v3318, 1.442695
        %v3950 = vpow.pop %v3949
        %v3951 = vmul.f32 %v3319, 1.442695
        %v3952 = vpow.pop %v3951
        %v3953 = vmul.f32 %v3320, 1.442695
        %v3954 = vpow.pop %v3953
        %v3955 = vmul.f32 %v3321, 1.442695
        %v3956 = vpow.pop %v3955
        %v3957 = vmul.f32 %v3322, 1.442695
        %v3958 = vpow.pop %v3957
        %v3959 = vmul.f32 %v3323, 1.442695
        %v3960 = vpow.pop %v3959
        %v3961 = vmul.f32 %v3324, 1.442695
        %v3962 = vpow.pop %v3961
        %v3963 = vmul.f32 %v3325, 1.442695
        %v3964 = vpow.pop %v3963
        %v3965 = vmul.f32 %v3326, 1.442695
        %v3966 = vpow.pop %v3965
        %v3967 = vmul.f32 %v3327, 1.442695
        %v3968 = vpow.pop %v3967
        %v3969 = vmul.f32 %v3328, 1.442695
        %v3970 = vpow.pop %v3969
        %v3971 = vmul.f32 %v3329, 1.442695
        %v3972 = vpow.pop %v3971
        %v3973 = vmul.f32 %v3330, 1.442695
        %v3974 = vpow.pop %v3973
        %v3975 = vmul.f32 %v3331, 1.442695
        %v3976 = vpow.pop %v3975
        %v3977 = vmul.f32 %v3332, 1.442695
        %v3978 = vpow.pop %v3977
        %v3979 = vmul.f32 %v3333, 1.442695
        %v3980 = vpow.pop %v3979
        %v3981 = vmul.f32 %v3334, 1.442695
        %v3982 = vpow.pop %v3981
        %v3983 = vmul.f32 %v3335, 1.442695
        %v3984 = vpow.pop %v3983
        %v3985 = vmul.f32 %v3336, 1.442695
        %v3986 = vpow.pop %v3985
        %v3987 = vmul.f32 %v3337, 1.442695
        %v3988 = vpow.pop %v3987
        %v3989 = vmul.f32 %v3338, 1.442695
        %v3990 = vpow.pop %v3989
        %v3991 = vmul.f32 %v3339, 1.442695
        %v3992 = vpow.pop %v3991
        %v3993 = vmul.f32 %v3340, 1.442695
        %v3994 = vpow.pop %v3993
        %v3995 = vmul.f32 %v3341, 1.442695
        %v3996 = vpow.pop %v3995
        %v3997 = vmul.f32 %v3342, 1.442695
        %v3998 = vpow.pop %v3997
        %v3999 = vmul.f32 %v3343, 1.442695
        %v4000 = vpow.pop %v3999
        %v4001 = vmul.f32 %v3344, 1.442695
        %v4002 = vpow.pop %v4001
        %v4003 = vmul.f32 %v3345, 1.442695
        %v4004 = vpow.pop %v4003
        %v4005 = vmul.f32 %v3346, 1.442695
        %v4006 = vpow.pop %v4005
        %v4007 = vmul.f32 %v3347, 1.442695
        %v4008 = vpow.pop %v4007
        %v4009 = vmul.f32 %v3348, 1.442695
        %v4010 = vpow.pop %v4009
        %v4011 = vmul.f32 %v3349, 1.442695
        %v4012 = vpow.pop %v4011
        %v4013 = vmul.f32 %v3350, 1.442695
        %v4014 = vpow.pop %v4013
        %v4015 = vmul.f32 %v3351, 1.442695
        %v4016 = vpow.pop %v4015
        %v4017 = vmul.f32 %v3352, 1.442695
        %v4018 = vpow.pop %v4017
        %v4019 = vmul.f32 %v3353, 1.442695
        %v4020 = vpow.pop %v4019
        %v4021 = vmul.f32 %v3354, 1.442695
        %v4022 = vpow.pop %v4021
        %v4023 = vmul.f32 %v3355, 1.442695
        %v4024 = vpow.pop %v4023
        %v4025 = vmul.f32 %v3356, 1.442695
        %v4026 = vpow.pop %v4025
        %v4027 = vmul.f32 %v3357, 1.442695
        %v4028 = vpow.pop %v4027
        %v4029 = vmul.f32 %v3358, 1.442695
        %v4030 = vpow.pop %v4029
        %v4031 = vmul.f32 %v3359, 1.442695
        %v4032 = vpow.pop %v4031
        %v4033 = vmul.f32 %v3360, 1.442695
        %v4034 = vpow.pop %v4033
        %v4035 = vmul.f32 %v3361, 1.442695
        %v4036 = vpow.pop %v4035
        %v4037 = vmul.f32 %v3362, 1.442695
        %v4038 = vpow.pop %v4037
        %v4039 = vmul.f32 %v3363, 1.442695
        %v4040 = vpow.pop %v4039
        %v4041 = vmul.f32 %v3364, 1.442695
        %v4042 = vpow.pop %v4041
        %v4043 = vmul.f32 %v3365, 1.442695
        %v4044 = vpow.pop %v4043
        %v4045 = vmul.f32 %v3366, 1.442695
        %v4046 = vpow.pop %v4045
        %v4047 = vmul.f32 %v3367, 1.442695
        %v4048 = vpow.pop %v4047
        %v4049 = vmul.f32 %v3368, 1.442695
        %v4050 = vpow.pop %v4049
        %v4051 = vmul.f32 %v3369, 1.442695
        %v4052 = vpow.pop %v4051
        %v4053 = vmul.f32 %v3370, 1.442695
        %v4054 = vpow.pop %v4053
        %v4055 = vmul.f32 %v3371, 1.442695
        %v4056 = vpow.pop %v4055
        %v4057 = vmul.f32 %v3372, 1.442695
        %v4058 = vpow.pop %v4057
        %v4059 = vmul.f32 %v3373, 1.442695
        %v4060 = vpow.pop %v4059
        %v4061 = vmul.f32 %v3374, 1.442695
        %v4062 = vpow.pop %v4061
        %v4063 = vmul.f32 %v3375, 1.442695
        %v4064 = vpow.pop %v4063
        %v4065 = vmul.f32 %v3376, 1.442695
        %v4066 = vpow.pop %v4065
        %v4067 = vmul.f32 %v3377, 1.442695
        %v4068 = vpow.pop %v4067
        %v4069 = vmul.f32 %v3378, 1.442695
        %v4070 = vpow.pop %v4069
        %v4071 = vmul.f32 %v3379, 1.442695
        %v4072 = vpow.pop %v4071
        %v4073 = vmul.f32 %v3380, 1.442695
        %v4074 = vpow.pop %v4073
        %v4075 = vmul.f32 %v3381, 1.442695
        %v4076 = vpow.pop %v4075
        %v4077 = vmul.f32 %v3382, 1.442695
        %v4078 = vpow.pop %v4077
        %v4079 = vmul.f32 %v3383, 1.442695
        %v4080 = vpow.pop %v4079
        %v4081 = vmul.f32 %v3384, 1.442695
        %v4082 = vpow.pop %v4081
        %v4083 = vmul.f32 %v3385, 1.442695
        %v4084 = vpow.pop %v4083
        %v4085 = vmul.f32 %v3386, 1.442695
        %v4086 = vpow.pop %v4085
        %v4087 = vmul.f32 %v3387, 1.442695
        %v4088 = vpow.pop %v4087
        %v4089 = vmul.f32 %v3388, 1.442695
        %v4090 = vpow.pop %v4089
        %v4091 = vmul.f32 %v3389, 1.442695
        %v4092 = vpow.pop %v4091
        %v4093 = vmul.f32 %v3390, 1.442695
        %v4094 = vpow.pop %v4093
        %v4095 = vmul.f32 %v3391, 1.442695
        %v4096 = vpow.pop %v4095
        %v4097 = vmul.f32 %v3392, 1.442695
        %v4098 = vpow.pop %v4097
        %v4099 = vmul.f32 %v3393, 1.442695
        %v4100 = vpow.pop %v4099
        %v4101 = vmul.f32 %v3394, 1.442695
        %v4102 = vpow.pop %v4101
        %v4103 = vmul.f32 %v3395, 1.442695
        %v4104 = vpow.pop %v4103
        %v4105 = vmul.f32 %v3396, 1.442695
        %v4106 = vpow.pop %v4105
        %v4107 = vmul.f32 %v3397, 1.442695
        %v4108 = vpow.pop %v4107
        %v4109 = vmul.f32 %v3398, 1.442695
        %v4110 = vpow.pop %v4109
        %v4111 = vmul.f32 %v3399, 1.442695
        %v4112 = vpow.pop %v4111
        %v4113 = vmul.f32 %v3400, 1.442695
        %v4114 = vpow.pop %v4113
        %v4115 = vmul.f32 %v3401, 1.442695
        %v4116 = vpow.pop %v4115
        %v4117 = vmul.f32 %v3402, 1.442695
        %v4118 = vpow.pop %v4117
        %v4119 = vmul.f32 %v3403, 1.442695
        %v4120 = vpow.pop %v4119
        %v4121 = vmul.f32 %v3404, 1.442695
        %v4122 = vpow.pop %v4121
        %v4123 = vmul.f32 %v3405, 1.442695
        %v4124 = vpow.pop %v4123
        %v4125 = vmul.f32 %v3406, 1.442695
        %v4126 = vpow.pop %v4125
        %v4127 = vmul.f32 %v3407, 1.442695
        %v4128 = vpow.pop %v4127
        %v4129 = vmul.f32 %v3408, 1.442695
        %v4130 = vpow.pop %v4129
        %v4131 = vmul.f32 %v3409, 1.442695
        %v4132 = vpow.pop %v4131
        %v4133 = vmul.f32 %v3410, 1.442695
        %v4134 = vpow.pop %v4133
        %v4135 = vmul.f32 %v3411, 1.442695
        %v4136 = vpow.pop %v4135
        %v4137 = vmul.f32 %v3412, 1.442695
        %v4138 = vpow.pop %v4137
        %v4139 = vmul.f32 %v3413, 1.442695
        %v4140 = vpow.pop %v4139
        %v4141 = vmul.f32 %v3414, 1.442695
        %v4142 = vpow.pop %v4141
        %v4143 = vmul.f32 %v3415, 1.442695
        %v4144 = vpow.pop %v4143
        %v4145 = vmul.f32 %v3416, 1.442695
        %v4146 = vpow.pop %v4145
        %v4147 = vmul.f32 %v3417, 1.442695
        %v4148 = vpow.pop %v4147
        %v4149 = vmul.f32 %v3418, 1.442695
        %v4150 = vpow.pop %v4149
        %v4151 = vmul.f32 %v3419, 1.442695
        %v4152 = vpow.pop %v4151
        %v4153 = vmul.f32 %v3420, 1.442695
        %v4154 = vpow.pop %v4153
        %v4155 = vmul.f32 %v3421, 1.442695
        %v4156 = vpow.pop %v4155
        %v4157 = vmul.f32 %v3422, 1.442695
        %v4158 = vpow.pop %v4157
        %v4159 = vmul.f32 %v3423, 1.442695
        %v4160 = vpow.pop %v4159
        %v4161 = vmul.f32 %v3424, 1.442695
        %v4162 = vpow.pop %v4161
        %v4163 = vmul.f32 %v3425, 1.442695
        %v4164 = vpow.pop %v4163
        %v4165 = vmul.f32 %v3426, 1.442695
        %v4166 = vpow.pop %v4165
        %v4167 = vmul.f32 %v3427, 1.442695
        %v4168 = vpow.pop %v4167
        %v4169 = vmul.f32 %v3428, 1.442695
        %v4170 = vpow.pop %v4169
        %v4171 = vmul.f32 %v3429, 1.442695
        %v4172 = vpow.pop %v4171
        %v4173 = vmul.f32 %v3430, 1.442695
        %v4174 = vpow.pop %v4173
        %v4175 = vmul.f32 %v3431, 1.442695
        %v4176 = vpow.pop %v4175
        %v4177 = vmul.f32 %v3432, 1.442695
        %v4178 = vpow.pop %v4177
        %v4179 = vmul.f32 %v3433, 1.442695
        %v4180 = vpow.pop %v4179
        %v4181 = vmul.f32 %v3434, 1.442695
        %v4182 = vpow.pop %v4181
        %v4183 = vmul.f32 %v3435, 1.442695
        %v4184 = vpow.pop %v4183
        %v4185 = vmul.f32 %v3436, 1.442695
        %v4186 = vpow.pop %v4185
        %v4187 = vmul.f32 %v3437, 1.442695
        %v4188 = vpow.pop %v4187
        %v4189 = vmul.f32 %v3438, 1.442695
        %v4190 = vpow.pop %v4189
        %v4191 = vmul.f32 %v3439, 1.442695
        %v4192 = vpow.pop %v4191
        %v4193 = vmul.f32 %v3440, 1.442695
        %v4194 = vpow.pop %v4193
        %v4195 = vmul.f32 %v3441, 1.442695
        %v4196 = vpow.pop %v4195
        %v4197 = vmul.f32 %v3442, 1.442695
        %v4198 = vpow.pop %v4197
        %v4199 = vmul.f32 %v3443, 1.442695
        %v4200 = vpow.pop %v4199
        %v4201 = vmul.f32 %v3444, 1.442695
        %v4202 = vpow.pop %v4201
        %v4203 = vmul.f32 %v3445, 1.442695
        %v4204 = vpow.pop %v4203
        %v4205 = vmul.f32 %v3446, 1.442695
        %v4206 = vpow.pop %v4205
        %v4207 = vmul.f32 %v3447, 1.442695
        %v4208 = vpow.pop %v4207
        %v4209 = vmul.f32 %v3448, 1.442695
        %v4210 = vpow.pop %v4209
        %v4211 = vmul.f32 %v3449, 1.442695
        %v4212 = vpow.pop %v4211
        %v4213 = vmul.f32 %v3450, 1.442695
        %v4214 = vpow.pop %v4213
        %v4215 = vmul.f32 %v3451, 1.442695
        %v4216 = vpow.pop %v4215
        %v4217 = vmul.f32 %v3452, 1.442695
        %v4218 = vpow.pop %v4217
        %v4219 = vmul.f32 %v3453, 1.442695
        %v4220 = vpow.pop %v4219
        %v4221 = vmul.f32 %v3454, 1.442695
        %v4222 = vpow.pop %v4221
        %v4223 = vmul.f32 %v3455, 1.442695
        %v4224 = vpow.pop %v4223
        %v4225 = vmul.f32 %v3456, 1.442695
        %v4226 = vpow.pop %v4225
        %v4227 = vmul.f32 %v3457, 1.442695
        %v4228 = vpow.pop %v4227
        %v4229 = vmul.f32 %v3458, 1.442695
        %v4230 = vpow.pop %v4229
        %v4231 = vmul.f32 %v3459, 1.442695
        %v4232 = vpow.pop %v4231
        %v4233 = vmul.f32 %v3460, 1.442695
        %v4234 = vpow.pop %v4233
        %v4235 = vmul.f32 %v3461, 1.442695
        %v4236 = vpow.pop %v4235
        %v4237 = vmul.f32 %v3462, 1.442695
        %v4238 = vpow.pop %v4237
        %v4239 = vmul.f32 %v3463, 1.442695
        %v4240 = vpow.pop %v4239
        %v4241 = vmul.f32 %v3464, 1.442695
        %v4242 = vpow.pop %v4241
        %v4243 = vmul.f32 %v3465, 1.442695
        %v4244 = vpow.pop %v4243
        %v4245 = vmul.f32 %v3466, 1.442695
        %v4246 = vpow.pop %v4245
        %v4247 = vmul.f32 %v3467, 1.442695
        %v4248 = vpow.pop %v4247
        %v4249 = vmul.f32 %v3468, 1.442695
        %v4250 = vpow.pop %v4249
        %v4251 = vmul.f32 %v3469, 1.442695
        %v4252 = vpow.pop %v4251
        %v4253 = vmul.f32 %v3470, 1.442695
        %v4254 = vpow.pop %v4253
        %v4255 = vmul.f32 %v3471, 1.442695
        %v4256 = vpow.pop %v4255
        %v4257 = vmul.f32 %v3472, 1.442695
        %v4258 = vpow.pop %v4257
        %v4259 = vmul.f32 %v3473, 1.442695
        %v4260 = vpow.pop %v4259
        %v4261 = vmul.f32 %v3474, 1.442695
        %v4262 = vpow.pop %v4261
        %v4263 = vmul.f32 %v3475, 1.442695
        %v4264 = vpow.pop %v4263
        %v4265 = vmul.f32 %v3476, 1.442695
        %v4266 = vpow.pop %v4265
        %v4267 = vmul.f32 %v3477, 1.442695
        %v4268 = vpow.pop %v4267
        %v4269 = vmul.f32 %v3478, 1.442695
        %v4270 = vpow.pop %v4269
        %v4271 = vmul.f32 %v3479, 1.442695
        %v4272 = vpow.pop %v4271
        %v4273 = vmul.f32 %v3480, 1.442695
        %v4274 = vpow.pop %v4273
        %v4275 = vmul.f32 %v3481, 1.442695
        %v4276 = vpow.pop %v4275
        %v4277 = vmul.f32 %v3482, 1.442695
        %v4278 = vpow.pop %v4277
        %v4279 = vmul.f32 %v3483, 1.442695
        %v4280 = vpow.pop %v4279
        %v4281 = vmul.f32 %v3484, 1.442695
        %v4282 = vpow.pop %v4281
        %v4283 = vmul.f32 %v3485, 1.442695
        %v4284 = vpow.pop %v4283
        %v4285 = vmul.f32 %v3486, 1.442695
        %v4286 = vpow.pop %v4285
        %v4287 = vmul.f32 %v3487, 1.442695
        %v4288 = vpow.pop %v4287
        %v4289 = vmul.f32 %v3488, 1.442695
        %v4290 = vpow.pop %v4289
        %v4291 = vmul.f32 %v3489, 1.442695
        %v4292 = vpow.pop %v4291
        %v4293 = vmul.f32 %v3490, 1.442695
        %v4294 = vpow.pop %v4293
        %v4295 = vmul.f32 %v3491, 1.442695
        %v4296 = vpow.pop %v4295
        %v4297 = vmul.f32 %v3492, 1.442695
        %v4298 = vpow.pop %v4297
        %v4299 = vmul.f32 %v3493, 1.442695
        %v4300 = vpow.pop %v4299
        %v4301 = vmul.f32 %v3494, 1.442695
        %v4302 = vpow.pop %v4301
        %v4303 = vmul.f32 %v3495, 1.442695
        %v4304 = vpow.pop %v4303
        %v4305 = vmul.f32 %v3496, 1.442695
        %v4306 = vpow.pop %v4305
        %v4307 = vmul.f32 %v3497, 1.442695
        %v4308 = vpow.pop %v4307
        %v4309 = vmul.f32 %v3498, 1.442695
        %v4310 = vpow.pop %v4309
        %v4311 = vmul.f32 %v3499, 1.442695
        %v4312 = vpow.pop %v4311
        %v4313 = vmul.f32 %v3500, 1.442695
        %v4314 = vpow.pop %v4313
        %v4315 = vmul.f32 %v3501, 1.442695
        %v4316 = vpow.pop %v4315
        %v4317 = vmul.f32 %v3502, 1.442695
        %v4318 = vpow.pop %v4317
        %v4319 = vmul.f32 %v3503, 1.442695
        %v4320 = vpow.pop %v4319
        %v4321 = vmul.f32 %v3504, 1.442695
        %v4322 = vpow.pop %v4321
        %v4323 = vmul.f32 %v3505, 1.442695
        %v4324 = vpow.pop %v4323
        %v4325 = vmul.f32 %v3506, 1.442695
        %v4326 = vpow.pop %v4325
        %v4327 = vmul.f32 %v3507, 1.442695
        %v4328 = vpow.pop %v4327
        %v4329 = vmul.f32 %v3508, 1.442695
        %v4330 = vpow.pop %v4329
        %v4331 = vmul.f32 %v3509, 1.442695
        %v4332 = vpow.pop %v4331
        %v4333 = vmul.f32 %v3510, 1.442695
        %v4334 = vpow.pop %v4333
        %v4335 = vmul.f32 %v3511, 1.442695
        %v4336 = vpow.pop %v4335
        %v4337 = vmul.f32 %v3512, 1.442695
        %v4338 = vpow.pop %v4337
        %v4339 = vmul.f32 %v3513, 1.442695
        %v4340 = vpow.pop %v4339
        %v4341 = vmul.f32 %v3514, 1.442695
        %v4342 = vpow.pop %v4341
        %v4343 = vmul.f32 %v3515, 1.442695
        %v4344 = vpow.pop %v4343
        %v4345 = vmul.f32 %v3516, 1.442695
        %v4346 = vpow.pop %v4345
        %v4347 = vmul.f32 %v3517, 1.442695
        %v4348 = vpow.pop %v4347
        %v4349 = vmul.f32 %v3518, 1.442695
        %v4350 = vpow.pop %v4349
        %v4351 = vmul.f32 %v3519, 1.442695
        %v4352 = vpow.pop %v4351
        %v4353 = vmul.f32 %v3520, 1.442695
        %v4354 = vpow.pop %v4353
        %v4355 = vmul.f32 %v3521, 1.442695
        %v4356 = vpow.pop %v4355
        %v4357 = vmul.f32 %v3522, 1.442695
        %v4358 = vpow.pop %v4357
        %v4359 = vmul.f32 %v3523, 1.442695
        %v4360 = vpow.pop %v4359
        %v4361 = vmul.f32 %v3524, 1.442695
        %v4362 = vpow.pop %v4361
        %v4363 = vmul.f32 %v3525, 1.442695
        %v4364 = vpow.pop %v4363
        %v4365 = vmul.f32 %v3526, 1.442695
        %v4366 = vpow.pop %v4365
        %v4367 = vmul.f32 %v3527, 1.442695
        %v4368 = vpow.pop %v4367
        %v4369 = vmul.f32 %v3528, 1.442695
        %v4370 = vpow.pop %v4369
        %v4371 = vmul.f32 %v3529, 1.442695
        %v4372 = vpow.pop %v4371
        %v4373 = vmul.f32 %v3530, 1.442695
        %v4374 = vpow.pop %v4373
        %v4375 = vmul.f32 %v3531, 1.442695
        %v4376 = vpow.pop %v4375
        %v4377 = vmul.f32 %v3532, 1.442695
        %v4378 = vpow.pop %v4377
        %v4379 = vmul.f32 %v3533, 1.442695
        %v4380 = vpow.pop %v4379
        %v4381 = vmul.f32 %v3534, 1.442695
        %v4382 = vpow.pop %v4381
        %v4383 = vmul.f32 %v3535, 1.442695
        %v4384 = vpow.pop %v4383
        %v4385 = vmul.f32 %v3536, 1.442695
        %v4386 = vpow.pop %v4385
        %v4387 = vmul.f32 %v3537, 1.442695
        %v4388 = vpow.pop %v4387
        %v4389 = vmul.f32 %v3538, 1.442695
        %v4390 = vpow.pop %v4389
        %v4391 = vmul.f32 %v3539, 1.442695
        %v4392 = vpow.pop %v4391
        %v4393 = vmul.f32 %v3540, 1.442695
        %v4394 = vpow.pop %v4393
        %v4395 = vmul.f32 %v3541, 1.442695
        %v4396 = vpow.pop %v4395
        %v4397 = vmul.f32 %v3542, 1.442695
        %v4398 = vpow.pop %v4397
        %v4399 = vmul.f32 %v3543, 1.442695
        %v4400 = vpow.pop %v4399
        %v4401 = vmul.f32 %v3544, 1.442695
        %v4402 = vpow.pop %v4401
        %v4403 = vmul.f32 %v3545, 1.442695
        %v4404 = vpow.pop %v4403
        %v4405 = vmul.f32 %v3546, 1.442695
        %v4406 = vpow.pop %v4405
        %v4407 = vmul.f32 %v3547, 1.442695
        %v4408 = vpow.pop %v4407
        %v4409 = vmul.f32 %v3548, 1.442695
        %v4410 = vpow.pop %v4409
        %v4411 = vmul.f32 %v3549, 1.442695
        %v4412 = vpow.pop %v4411
        %v4413 = vmul.f32 %v3550, 1.442695
        %v4414 = vpow.pop %v4413
        %v4415 = vmul.f32 %v3551, 1.442695
        %v4416 = vpow.pop %v4415
        %v4417 = vmul.f32 %v3552, 1.442695
        %v4418 = vpow.pop %v4417
        %v4419 = vmul.f32 %v3553, 1.442695
        %v4420 = vpow.pop %v4419
        %v4421 = vmul.f32 %v3554, 1.442695
        %v4422 = vpow.pop %v4421
        %v4423 = vmul.f32 %v3555, 1.442695
        %v4424 = vpow.pop %v4423
        %v4425 = vmul.f32 %v3556, 1.442695
        %v4426 = vpow.pop %v4425
        %v4427 = vmul.f32 %v3557, 1.442695
        %v4428 = vpow.pop %v4427
        %v4429 = vmul.f32 %v3558, 1.442695
        %v4430 = vpow.pop %v4429
        %v4431 = vmul.f32 %v3559, 1.442695
        %v4432 = vpow.pop %v4431
        %v4433 = vmul.f32 %v3560, 1.442695
        %v4434 = vpow.pop %v4433
        %v4435 = vmul.f32 %v3561, 1.442695
        %v4436 = vpow.pop %v4435
        %v4437 = vmul.f32 %v3562, 1.442695
        %v4438 = vpow.pop %v4437
        %v4439 = vmul.f32 %v3563, 1.442695
        %v4440 = vpow.pop %v4439
        %v4441 = vmul.f32 %v3564, 1.442695
        %v4442 = vpow.pop %v4441
        %v4443 = vmul.f32 %v3565, 1.442695
        %v4444 = vpow.pop %v4443
        %v4445 = vmul.f32 %v3566, 1.442695
        %v4446 = vpow.pop %v4445
        %v4447 = vmul.f32 %v3567, 1.442695
        %v4448 = vpow.pop %v4447
        %v4449 = vmul.f32 %v3568, 1.442695
        %v4450 = vpow.pop %v4449
        %v4451 = vmul.f32 %v3569, 1.442695
        %v4452 = vpow.pop %v4451
        %v4453 = vmul.f32 %v3570, 1.442695
        %v4454 = vpow.pop %v4453
        %v4455 = vmul.f32 %v3571, 1.442695
        %v4456 = vpow.pop %v4455
        %v4457 = vmul.f32 %v3572, 1.442695
        %v4458 = vpow.pop %v4457
        %v4459 = vmul.f32 %v3573, 1.442695
        %v4460 = vpow.pop %v4459
        %v4461 = vmul.f32 %v3574, 1.442695
        %v4462 = vpow.pop %v4461
        %v4463 = vmul.f32 %v3575, 1.442695
        %v4464 = vpow.pop %v4463
        %v4465 = vmul.f32 %v3576, 1.442695
        %v4466 = vpow.pop %v4465
        %v4467 = vmul.f32 %v3577, 1.442695
        %v4468 = vpow.pop %v4467
        %v4469 = vmul.f32 %v3578, 1.442695
        %v4470 = vpow.pop %v4469
        %v4471 = vmul.f32 %v3579, 1.442695
        %v4472 = vpow.pop %v4471
        %v4473 = vmul.f32 %v3580, 1.442695
        %v4474 = vpow.pop %v4473
        %v4475 = vmul.f32 %v3581, 1.442695
        %v4476 = vpow.pop %v4475
        %v4477 = vmul.f32 %v3582, 1.442695
        %v4478 = vpow.pop %v4477
        %v4479 = vmul.f32 %v3583, 1.442695
        %v4480 = vpow.pop %v4479
        %v4481 = vmul.f32 %v3584, 1.442695
        %v4482 = vpow.pop %v4481
        %v4483 = vmul.f32 %v3585, 1.442695
        %v4484 = vpow.pop %v4483
        %v4485 = vmul.f32 %v3586, 1.442695
        %v4486 = vpow.pop %v4485
        %v4487 = vmul.f32 %v3587, 1.442695
        %v4488 = vpow.pop %v4487
        %v4489 = vmul.f32 %v3588, 1.442695
        %v4490 = vpow.pop %v4489
        %v4491 = vmul.f32 %v3589, 1.442695
        %v4492 = vpow.pop %v4491
        %v4493 = vmul.f32 %v3590, 1.442695
        %v4494 = vpow.pop %v4493
        %v4495 = vmul.f32 %v3591, 1.442695
        %v4496 = vpow.pop %v4495
        %v4497 = vmul.f32 %v3592, 1.442695
        %v4498 = vpow.pop %v4497
        %v4499 = vmul.f32 %v3593, 1.442695
        %v4500 = vpow.pop %v4499
        %v4501 = vmul.f32 %v3594, 1.442695
        %v4502 = vpow.pop %v4501
        %v4503 = vmul.f32 %v3595, 1.442695
        %v4504 = vpow.pop %v4503
        %v4505 = vmul.f32 %v3596, 1.442695
        %v4506 = vpow.pop %v4505
        %v4507 = vmul.f32 %v3597, 1.442695
        %v4508 = vpow.pop %v4507
        %v4509 = vmul.f32 %v3598, 1.442695
        %v4510 = vpow.pop %v4509
        %v4511 = vmul.f32 %v3599, 1.442695
        %v4512 = vpow.pop %v4511
        %v4513 = vmul.f32 %v3600, 1.442695
        %v4514 = vpow.pop %v4513
        %v4515 = vmul.f32 %v3601, 1.442695
        %v4516 = vpow.pop %v4515
        %v4517 = vmul.f32 %v3602, 1.442695
        %v4518 = vpow.pop %v4517
        %v4519 = vmul.f32 %v3603, 1.442695
        %v4520 = vpow.pop %v4519
        %v4521 = vmul.f32 %v3604, 1.442695
        %v4522 = vpow.pop %v4521
        %v4523 = vmul.f32 %v3605, 1.442695
        %v4524 = vpow.pop %v4523
        %v4525 = vmul.f32 %v3606, 1.442695
        %v4526 = vpow.pop %v4525
        %v4527 = vmul.f32 %v3607, 1.442695
        %v4528 = vpow.pop %v4527
        %v4529 = vmul.f32 %v3608, 1.442695
        %v4530 = vpow.pop %v4529
        %v4531 = vmul.f32 %v3609, 1.442695
        %v4532 = vpow.pop %v4531
        %v4533 = vmul.f32 %v3610, 1.442695
        %v4534 = vpow.pop %v4533
        %v4535 = vmul.f32 %v3611, 1.442695
        %v4536 = vpow.pop %v4535
        %v4537 = vmul.f32 %v3612, 1.442695
        %v4538 = vpow.pop %v4537
        %v4539 = vmul.f32 %v3613, 1.442695
        %v4540 = vpow.pop %v4539
        %v4541 = vmul.f32 %v3614, 1.442695
        %v4542 = vpow.pop %v4541
        %v4543 = vmul.f32 %v3615, 1.442695
        %v4544 = vpow.pop %v4543
        %v4545 = vmul.f32 %v3616, 1.442695
        %v4546 = vpow.pop %v4545
        %v4547 = vmul.f32 %v3617, 1.442695
        %v4548 = vpow.pop %v4547
        %v4549 = vmul.f32 %v3618, 1.442695
        %v4550 = vpow.pop %v4549
        %v4551 = vmul.f32 %v3619, 1.442695
        %v4552 = vpow.pop %v4551
        %v4553 = vmul.f32 %v3620, 1.442695
        %v4554 = vpow.pop %v4553
        %v4555 = vmul.f32 %v3621, 1.442695
        %v4556 = vpow.pop %v4555
        %v4557 = vmul.f32 %v3622, 1.442695
        %v4558 = vpow.pop %v4557
        %v4559 = vmul.f32 %v3623, 1.442695
        %v4560 = vpow.pop %v4559
        %v4561 = vmul.f32 %v3624, 1.442695
        %v4562 = vpow.pop %v4561
        %v4563 = vmul.f32 %v3625, 1.442695
        %v4564 = vpow.pop %v4563
        %v4565 = vmul.f32 %v3626, 1.442695
        %v4566 = vpow.pop %v4565
        %v4567 = vmul.f32 %v3627, 1.442695
        %v4568 = vpow.pop %v4567
        %v4569 = vmul.f32 %v3628, 1.442695
        %v4570 = vpow.pop %v4569
        %v4571 = vmul.f32 %v3629, 1.442695
        %v4572 = vpow.pop %v4571
        %v4573 = vmul.f32 %v3630, 1.442695
        %v4574 = vpow.pop %v4573
        %v4575 = vmul.f32 %v3631, 1.442695
        %v4576 = vpow.pop %v4575
        %v4577 = vmul.f32 %v3632, 1.442695
        %v4578 = vpow.pop %v4577
        %v4579 = vmul.f32 %v3633, 1.442695
        %v4580 = vpow.pop %v4579
        %v4581 = vmul.f32 %v3634, 1.442695
        %v4582 = vpow.pop %v4581
        %v4583 = vmul.f32 %v3635, 1.442695
        %v4584 = vpow.pop %v4583
        %v4585 = vmul.f32 %v3636, 1.442695
        %v4586 = vpow.pop %v4585
        %v4587 = vmul.f32 %v3637, 1.442695
        %v4588 = vpow.pop %v4587
        %v4589 = vmul.f32 %v3638, 1.442695
        %v4590 = vpow.pop %v4589
        %v4591 = vmul.f32 %v3639, 1.442695
        %v4592 = vpow.pop %v4591
        %v4593 = vmul.f32 %v3640, 1.442695
        %v4594 = vpow.pop %v4593
        %v4595 = vmul.f32 %v3641, 1.442695
        %v4596 = vpow.pop %v4595
        %v4597 = vmul.f32 %v3642, 1.442695
        %v4598 = vpow.pop %v4597
        %v4599 = vmul.f32 %v3643, 1.442695
        %v4600 = vpow.pop %v4599
        %v4601 = vmul.f32 %v3644, 1.442695
        %v4602 = vpow.pop %v4601
        %v4603 = vmul.f32 %v3645, 1.442695
        %v4604 = vpow.pop %v4603
        %v4605 = vmul.f32 %v3646, 1.442695
        %v4606 = vpow.pop %v4605
        %v4607 = vmul.f32 %v3647, 1.442695
        %v4608 = vpow.pop %v4607
        %v4609 = vmul.f32 %v3648, 1.442695
        %v4610 = vpow.pop %v4609
        %v4611 = vmul.f32 %v3649, 1.442695
        %v4612 = vpow.pop %v4611
        %v4613 = vmul.f32 %v3650, 1.442695
        %v4614 = vpow.pop %v4613
        %v4615 = vmul.f32 %v3651, 1.442695
        %v4616 = vpow.pop %v4615
        %v4617 = vmul.f32 %v3652, 1.442695
        %v4618 = vpow.pop %v4617
        %v4619 = vmul.f32 %v3653, 1.442695
        %v4620 = vpow.pop %v4619
        %v4621 = vmul.f32 %v3654, 1.442695
        %v4622 = vpow.pop %v4621
        %v4623 = vmul.f32 %v3655, 1.442695
        %v4624 = vpow.pop %v4623
        %v4625 = vmul.f32 %v3656, 1.442695
        %v4626 = vpow.pop %v4625
        %v4627 = vmul.f32 %v3657, 1.442695
        %v4628 = vpow.pop %v4627
        %v4629 = vmul.f32 %v3658, 1.442695
        %v4630 = vpow.pop %v4629
        %v4631 = vmul.f32 %v3659, 1.442695
        %v4632 = vpow.pop %v4631
        %v4633 = vmul.f32 %v3660, 1.442695
        %v4634 = vpow.pop %v4633
        %v4635 = vmul.f32 %v3661, 1.442695
        %v4636 = vpow.pop %v4635
        %v4637 = vmul.f32 %v3662, 1.442695
        %v4638 = vpow.pop %v4637
        %v4639 = vmul.f32 %v3663, 1.442695
        %v4640 = vpow.pop %v4639
        %v4641 = vmul.f32 %v3664, 1.442695
        %v4642 = vpow.pop %v4641
        %v4643 = vmul.f32 %v3665, 1.442695
        %v4644 = vpow.pop %v4643
        %v4645 = vmul.f32 %v3666, 1.442695
        %v4646 = vpow.pop %v4645
        %v4647 = vmul.f32 %v3667, 1.442695
        %v4648 = vpow.pop %v4647
        %v4649 = vmul.f32 %v3668, 1.442695
        %v4650 = vpow.pop %v4649
        %v4651 = vmul.f32 %v3669, 1.442695
        %v4652 = vpow.pop %v4651
        %v4653 = vmul.f32 %v3670, 1.442695
        %v4654 = vpow.pop %v4653
        %v4655 = vmul.f32 %v3671, 1.442695
        %v4656 = vpow.pop %v4655
        %v4657 = vmul.f32 %v3672, 1.442695
        %v4658 = vpow.pop %v4657
        %v4659 = vmul.f32 %v3673, 1.442695
        %v4660 = vpow.pop %v4659
        %v4661 = vmul.f32 %v3674, 1.442695
        %v4662 = vpow.pop %v4661
        %v4663 = vmul.f32 %v3675, 1.442695
        %v4664 = vpow.pop %v4663
        %v4665 = vmul.f32 %v3676, 1.442695
        %v4666 = vpow.pop %v4665
        %v4667 = vmul.f32 %v3677, 1.442695
        %v4668 = vpow.pop %v4667
        %v4669 = vmul.f32 %v3678, 1.442695
        %v4670 = vpow.pop %v4669
        %v4671 = vmul.f32 %v3679, 1.442695
        %v4672 = vpow.pop %v4671
        %v4673 = vmul.f32 %v3680, 1.442695
        %v4674 = vpow.pop %v4673
        %v4675 = vmul.f32 %v3681, 1.442695
        %v4676 = vpow.pop %v4675
        %v4677 = vmul.f32 %v3682, 1.442695
        %v4678 = vpow.pop %v4677
        %v4679 = vmul.f32 %v3683, 1.442695
        %v4680 = vpow.pop %v4679
        %v4681 = vmul.f32 %v3684, 1.442695
        %v4682 = vpow.pop %v4681
        %v4683 = vmul.f32 %v3685, 1.442695
        %v4684 = vpow.pop %v4683
        %v4685 = vmul.f32 %v3686, 1.442695
        %v4686 = vpow.pop %v4685
        %v4687 = vmul.f32 %v3687, 1.442695
        %v4688 = vpow.pop %v4687
        %v4689 = vmul.f32 %v3688, 1.442695
        %v4690 = vpow.pop %v4689
        %v4691 = vmul.f32 %v3689, 1.442695
        %v4692 = vpow.pop %v4691
        %v4693 = vmul.f32 %v3690, 1.442695
        %v4694 = vpow.pop %v4693
        %v4695 = vmul.f32 %v3691, 1.442695
        %v4696 = vpow.pop %v4695
        %v4697 = vmul.f32 %v3692, 1.442695
        %v4698 = vpow.pop %v4697
        %v4699 = vmul.f32 %v3693, 1.442695
        %v4700 = vpow.pop %v4699
        %v4701 = vmul.f32 %v3694, 1.442695
        %v4702 = vpow.pop %v4701
        %v4703 = vmul.f32 %v3695, 1.442695
        %v4704 = vpow.pop %v4703
        %v4705 = vmul.f32 %v3696, 1.442695
        %v4706 = vpow.pop %v4705
        %v4707 = vmul.f32 %v3697, 1.442695
        %v4708 = vpow.pop %v4707
        %v4709 = vmul.f32 %v3698, 1.442695
        %v4710 = vpow.pop %v4709
        %v4711 = vmul.f32 %v3699, 1.442695
        %v4712 = vpow.pop %v4711
        %v4713 = vmul.f32 %v3700, 1.442695
        %v4714 = vpow.pop %v4713
        %v4715 = vmul.f32 %v3701, 1.442695
        %v4716 = vpow.pop %v4715
        %v4717 = vmul.f32 %v3702, 1.442695
        %v4718 = vpow.pop %v4717
        %v4719 = vmul.f32 %v3703, 1.442695
        %v4720 = vpow.pop %v4719
        %v4721 = vmul.f32 %v3704, 1.442695
        %v4722 = vpow.pop %v4721
        %v4723 = vmul.f32 %v3705, 1.442695
        %v4724 = vpow.pop %v4723
        %v4725 = vmul.f32 %v3706, 1.442695
        %v4726 = vpow.pop %v4725
        %v4727 = vmul.f32 %v3707, 1.442695
        %v4728 = vpow.pop %v4727
        %v4729 = vmul.f32 %v3708, 1.442695
        %v4730 = vpow.pop %v4729
        %v4731 = vmul.f32 %v3709, 1.442695
        %v4732 = vpow.pop %v4731
        %v4733 = vmul.f32 %v3710, 1.442695
        %v4734 = vpow.pop %v4733
        %v4735 = vpack.c.bf16 %v3720, %v3712
        %v4736 = vpack.c.bf16 %v3722, %v3714
        %v4737 = vpack.c.bf16 %v3724, %v3716
        %v4738 = vpack.c.bf16 %v3726, %v3718
        %v4739 = vpack.c.bf16 %v3736, %v3728
        %v4740 = vpack.c.bf16 %v3738, %v3730
        %v4741 = vpack.c.bf16 %v3740, %v3732
        %v4742 = vpack.c.bf16 %v3742, %v3734
        %v4743 = vpack.c.bf16 %v3752, %v3744
        %v4744 = vpack.c.bf16 %v3754, %v3746
        %v4745 = vpack.c.bf16 %v3756, %v3748
        %v4746 = vpack.c.bf16 %v3758, %v3750
        %v4747 = vpack.c.bf16 %v3768, %v3760
        %v4748 = vpack.c.bf16 %v3770, %v3762
        %v4749 = vpack.c.bf16 %v3772, %v3764
        %v4750 = vpack.c.bf16 %v3774, %v3766
        %v4751 = vpack.c.bf16 %v3784, %v3776
        %v4752 = vpack.c.bf16 %v3786, %v3778
        %v4753 = vpack.c.bf16 %v3788, %v3780
        %v4754 = vpack.c.bf16 %v3790, %v3782
        %v4755 = vpack.c.bf16 %v3800, %v3792
        %v4756 = vpack.c.bf16 %v3802, %v3794
        %v4757 = vpack.c.bf16 %v3804, %v3796
        %v4758 = vpack.c.bf16 %v3806, %v3798
        %v4759 = vpack.c.bf16 %v3816, %v3808
        %v4760 = vpack.c.bf16 %v3818, %v3810
        %v4761 = vpack.c.bf16 %v3820, %v3812
        %v4762 = vpack.c.bf16 %v3822, %v3814
        %v4763 = vpack.c.bf16 %v3832, %v3824
        %v4764 = vpack.c.bf16 %v3834, %v3826
        %v4765 = vpack.c.bf16 %v3836, %v3828
        %v4766 = vpack.c.bf16 %v3838, %v3830
        %v4767 = vpack.c.bf16 %v3848, %v3840
        %v4768 = vpack.c.bf16 %v3850, %v3842
        %v4769 = vpack.c.bf16 %v3852, %v3844
        %v4770 = vpack.c.bf16 %v3854, %v3846
        %v4771 = vpack.c.bf16 %v3864, %v3856
        %v4772 = vpack.c.bf16 %v3866, %v3858
        %v4773 = vpack.c.bf16 %v3868, %v3860
        %v4774 = vpack.c.bf16 %v3870, %v3862
        %v4775 = vpack.c.bf16 %v3880, %v3872
        %v4776 = vpack.c.bf16 %v3882, %v3874
        %v4777 = vpack.c.bf16 %v3884, %v3876
        %v4778 = vpack.c.bf16 %v3886, %v3878
        %v4779 = vpack.c.bf16 %v3896, %v3888
        %v4780 = vpack.c.bf16 %v3898, %v3890
        %v4781 = vpack.c.bf16 %v3900, %v3892
        %v4782 = vpack.c.bf16 %v3902, %v3894
        %v4783 = vpack.c.bf16 %v3912, %v3904
        %v4784 = vpack.c.bf16 %v3914, %v3906
        %v4785 = vpack.c.bf16 %v3916, %v3908
        %v4786 = vpack.c.bf16 %v3918, %v3910
        %v4787 = vpack.c.bf16 %v3928, %v3920
        %v4788 = vpack.c.bf16 %v3930, %v3922
        %v4789 = vpack.c.bf16 %v3932, %v3924
        %v4790 = vpack.c.bf16 %v3934, %v3926
        %v4791 = vpack.c.bf16 %v3944, %v3936
        %v4792 = vpack.c.bf16 %v3946, %v3938
        %v4793 = vpack.c.bf16 %v3948, %v3940
        %v4794 = vpack.c.bf16 %v3950, %v3942
        %v4795 = vpack.c.bf16 %v3960, %v3952
        %v4796 = vpack.c.bf16 %v3962, %v3954
        %v4797 = vpack.c.bf16 %v3964, %v3956
        %v4798 = vpack.c.bf16 %v3966, %v3958
        %v4799 = vpack.c.bf16 %v3976, %v3968
        %v4800 = vpack.c.bf16 %v3978, %v3970
        %v4801 = vpack.c.bf16 %v3980, %v3972
        %v4802 = vpack.c.bf16 %v3982, %v3974
        %v4803 = vpack.c.bf16 %v3992, %v3984
        %v4804 = vpack.c.bf16 %v3994, %v3986
        %v4805 = vpack.c.bf16 %v3996, %v3988
        %v4806 = vpack.c.bf16 %v3998, %v3990
        %v4807 = vpack.c.bf16 %v4008, %v4000
        %v4808 = vpack.c.bf16 %v4010, %v4002
        %v4809 = vpack.c.bf16 %v4012, %v4004
        %v4810 = vpack.c.bf16 %v4014, %v4006
        %v4811 = vpack.c.bf16 %v4024, %v4016
        %v4812 = vpack.c.bf16 %v4026, %v4018
        %v4813 = vpack.c.bf16 %v4028, %v4020
        %v4814 = vpack.c.bf16 %v4030, %v4022
        %v4815 = vpack.c.bf16 %v4040, %v4032
        %v4816 = vpack.c.bf16 %v4042, %v4034
        %v4817 = vpack.c.bf16 %v4044, %v4036
        %v4818 = vpack.c.bf16 %v4046, %v4038
        %v4819 = vpack.c.bf16 %v4056, %v4048
        %v4820 = vpack.c.bf16 %v4058, %v4050
        %v4821 = vpack.c.bf16 %v4060, %v4052
        %v4822 = vpack.c.bf16 %v4062, %v4054
        %v4823 = vpack.c.bf16 %v4072, %v4064
        %v4824 = vpack.c.bf16 %v4074, %v4066
        %v4825 = vpack.c.bf16 %v4076, %v4068
        %v4826 = vpack.c.bf16 %v4078, %v4070
        %v4827 = vpack.c.bf16 %v4088, %v4080
        %v4828 = vpack.c.bf16 %v4090, %v4082
        %v4829 = vpack.c.bf16 %v4092, %v4084
        %v4830 = vpack.c.bf16 %v4094, %v4086
        %v4831 = vpack.c.bf16 %v4104, %v4096
        %v4832 = vpack.c.bf16 %v4106, %v4098
        %v4833 = vpack.c.bf16 %v4108, %v4100
        %v4834 = vpack.c.bf16 %v4110, %v4102
        %v4835 = vpack.c.bf16 %v4120, %v4112
        %v4836 = vpack.c.bf16 %v4122, %v4114
        %v4837 = vpack.c.bf16 %v4124, %v4116
        %v4838 = vpack.c.bf16 %v4126, %v4118
        %v4839 = vpack.c.bf16 %v4136, %v4128
        %v4840 = vpack.c.bf16 %v4138, %v4130
        %v4841 = vpack.c.bf16 %v4140, %v4132
        %v4842 = vpack.c.bf16 %v4142, %v4134
        %v4843 = vpack.c.bf16 %v4152, %v4144
        %v4844 = vpack.c.bf16 %v4154, %v4146
        %v4845 = vpack.c.bf16 %v4156, %v4148
        %v4846 = vpack.c.bf16 %v4158, %v4150
        %v4847 = vpack.c.bf16 %v4168, %v4160
        %v4848 = vpack.c.bf16 %v4170, %v4162
        %v4849 = vpack.c.bf16 %v4172, %v4164
        %v4850 = vpack.c.bf16 %v4174, %v4166
        %v4851 = vpack.c.bf16 %v4184, %v4176
        %v4852 = vpack.c.bf16 %v4186, %v4178
        %v4853 = vpack.c.bf16 %v4188, %v4180
        %v4854 = vpack.c.bf16 %v4190, %v4182
        %v4855 = vpack.c.bf16 %v4200, %v4192
        %v4856 = vpack.c.bf16 %v4202, %v4194
        %v4857 = vpack.c.bf16 %v4204, %v4196
        %v4858 = vpack.c.bf16 %v4206, %v4198
        %v4859 = vpack.c.bf16 %v4216, %v4208
        %v4860 = vpack.c.bf16 %v4218, %v4210
        %v4861 = vpack.c.bf16 %v4220, %v4212
        %v4862 = vpack.c.bf16 %v4222, %v4214
        %v4863 = vpack.c.bf16 %v4232, %v4224
        %v4864 = vpack.c.bf16 %v4234, %v4226
        %v4865 = vpack.c.bf16 %v4236, %v4228
        %v4866 = vpack.c.bf16 %v4238, %v4230
        %v4867 = vpack.c.bf16 %v4248, %v4240
        %v4868 = vpack.c.bf16 %v4250, %v4242
        %v4869 = vpack.c.bf16 %v4252, %v4244
        %v4870 = vpack.c.bf16 %v4254, %v4246
        %v4871 = vpack.c.bf16 %v4264, %v4256
        %v4872 = vpack.c.bf16 %v4266, %v4258
        %v4873 = vpack.c.bf16 %v4268, %v4260
        %v4874 = vpack.c.bf16 %v4270, %v4262
        %v4875 = vpack.c.bf16 %v4280, %v4272
        %v4876 = vpack.c.bf16 %v4282, %v4274
        %v4877 = vpack.c.bf16 %v4284, %v4276
        %v4878 = vpack.c.bf16 %v4286, %v4278
        %v4879 = vpack.c.bf16 %v4296, %v4288
        %v4880 = vpack.c.bf16 %v4298, %v4290
        %v4881 = vpack.c.bf16 %v4300, %v4292
        %v4882 = vpack.c.bf16 %v4302, %v4294
        %v4883 = vpack.c.bf16 %v4312, %v4304
        %v4884 = vpack.c.bf16 %v4314, %v4306
        %v4885 = vpack.c.bf16 %v4316, %v4308
        %v4886 = vpack.c.bf16 %v4318, %v4310
        %v4887 = vpack.c.bf16 %v4328, %v4320
        %v4888 = vpack.c.bf16 %v4330, %v4322
        %v4889 = vpack.c.bf16 %v4332, %v4324
        %v4890 = vpack.c.bf16 %v4334, %v4326
        %v4891 = vpack.c.bf16 %v4344, %v4336
        %v4892 = vpack.c.bf16 %v4346, %v4338
        %v4893 = vpack.c.bf16 %v4348, %v4340
        %v4894 = vpack.c.bf16 %v4350, %v4342
        %v4895 = vpack.c.bf16 %v4360, %v4352
        %v4896 = vpack.c.bf16 %v4362, %v4354
        %v4897 = vpack.c.bf16 %v4364, %v4356
        %v4898 = vpack.c.bf16 %v4366, %v4358
        %v4899 = vpack.c.bf16 %v4376, %v4368
        %v4900 = vpack.c.bf16 %v4378, %v4370
        %v4901 = vpack.c.bf16 %v4380, %v4372
        %v4902 = vpack.c.bf16 %v4382, %v4374
        %v4903 = vpack.c.bf16 %v4392, %v4384
        %v4904 = vpack.c.bf16 %v4394, %v4386
        %v4905 = vpack.c.bf16 %v4396, %v4388
        %v4906 = vpack.c.bf16 %v4398, %v4390
        %v4907 = vpack.c.bf16 %v4408, %v4400
        %v4908 = vpack.c.bf16 %v4410, %v4402
        %v4909 = vpack.c.bf16 %v4412, %v4404
        %v4910 = vpack.c.bf16 %v4414, %v4406
        %v4911 = vpack.c.bf16 %v4424, %v4416
        %v4912 = vpack.c.bf16 %v4426, %v4418
        %v4913 = vpack.c.bf16 %v4428, %v4420
        %v4914 = vpack.c.bf16 %v4430, %v4422
        %v4915 = vpack.c.bf16 %v4440, %v4432
        %v4916 = vpack.c.bf16 %v4442, %v4434
        %v4917 = vpack.c.bf16 %v4444, %v4436
        %v4918 = vpack.c.bf16 %v4446, %v4438
        %v4919 = vpack.c.bf16 %v4456, %v4448
        %v4920 = vpack.c.bf16 %v4458, %v4450
        %v4921 = vpack.c.bf16 %v4460, %v4452
        %v4922 = vpack.c.bf16 %v4462, %v4454
        %v4923 = vpack.c.bf16 %v4472, %v4464
        %v4924 = vpack.c.bf16 %v4474, %v4466
        %v4925 = vpack.c.bf16 %v4476, %v4468
        %v4926 = vpack.c.bf16 %v4478, %v4470
        %v4927 = vpack.c.bf16 %v4488, %v4480
        %v4928 = vpack.c.bf16 %v4490, %v4482
        %v4929 = vpack.c.bf16 %v4492, %v4484
        %v4930 = vpack.c.bf16 %v4494, %v4486
        %v4931 = vpack.c.bf16 %v4504, %v4496
        %v4932 = vpack.c.bf16 %v4506, %v4498
        %v4933 = vpack.c.bf16 %v4508, %v4500
        %v4934 = vpack.c.bf16 %v4510, %v4502
        %v4935 = vpack.c.bf16 %v4520, %v4512
        %v4936 = vpack.c.bf16 %v4522, %v4514
        %v4937 = vpack.c.bf16 %v4524, %v4516
        %v4938 = vpack.c.bf16 %v4526, %v4518
        %v4939 = vpack.c.bf16 %v4536, %v4528
        %v4940 = vpack.c.bf16 %v4538, %v4530
        %v4941 = vpack.c.bf16 %v4540, %v4532
        %v4942 = vpack.c.bf16 %v4542, %v4534
        %v4943 = vpack.c.bf16 %v4552, %v4544
        %v4944 = vpack.c.bf16 %v4554, %v4546
        %v4945 = vpack.c.bf16 %v4556, %v4548
        %v4946 = vpack.c.bf16 %v4558, %v4550
        %v4947 = vpack.c.bf16 %v4568, %v4560
        %v4948 = vpack.c.bf16 %v4570, %v4562
        %v4949 = vpack.c.bf16 %v4572, %v4564
        %v4950 = vpack.c.bf16 %v4574, %v4566
        %v4951 = vpack.c.bf16 %v4584, %v4576
        %v4952 = vpack.c.bf16 %v4586, %v4578
        %v4953 = vpack.c.bf16 %v4588, %v4580
        %v4954 = vpack.c.bf16 %v4590, %v4582
        %v4955 = vpack.c.bf16 %v4600, %v4592
        %v4956 = vpack.c.bf16 %v4602, %v4594
        %v4957 = vpack.c.bf16 %v4604, %v4596
        %v4958 = vpack.c.bf16 %v4606, %v4598
        %v4959 = vpack.c.bf16 %v4616, %v4608
        %v4960 = vpack.c.bf16 %v4618, %v4610
        %v4961 = vpack.c.bf16 %v4620, %v4612
        %v4962 = vpack.c.bf16 %v4622, %v4614
        %v4963 = vpack.c.bf16 %v4632, %v4624
        %v4964 = vpack.c.bf16 %v4634, %v4626
        %v4965 = vpack.c.bf16 %v4636, %v4628
        %v4966 = vpack.c.bf16 %v4638, %v4630
        %v4967 = vpack.c.bf16 %v4648, %v4640
        %v4968 = vpack.c.bf16 %v4650, %v4642
        %v4969 = vpack.c.bf16 %v4652, %v4644
        %v4970 = vpack.c.bf16 %v4654, %v4646
        %v4971 = vpack.c.bf16 %v4664, %v4656
        %v4972 = vpack.c.bf16 %v4666, %v4658
        %v4973 = vpack.c.bf16 %v4668, %v4660
        %v4974 = vpack.c.bf16 %v4670, %v4662
        %v4975 = vpack.c.bf16 %v4680, %v4672
        %v4976 = vpack.c.bf16 %v4682, %v4674
        %v4977 = vpack.c.bf16 %v4684, %v4676
        %v4978 = vpack.c.bf16 %v4686, %v4678
        %v4979 = vpack.c.bf16 %v4696, %v4688
        %v4980 = vpack.c.bf16 %v4698, %v4690
        %v4981 = vpack.c.bf16 %v4700, %v4692
        %v4982 = vpack.c.bf16 %v4702, %v4694
        %v4983 = vpack.c.bf16 %v4712, %v4704
        %v4984 = vpack.c.bf16 %v4714, %v4706
        %v4985 = vpack.c.bf16 %v4716, %v4708
        %v4986 = vpack.c.bf16 %v4718, %v4710
        %v4987 = vpack.c.bf16 %v4728, %v4720
        %v4988 = vpack.c.bf16 %v4730, %v4722
        %v4989 = vpack.c.bf16 %v4732, %v4724
        %v4990 = vpack.c.bf16 %v4734, %v4726
        %v5027 = vunpack.c.l.b16 %v722
        %v5028 = vunpack.c.h.b16 %v722
        %v5029 = vunpack.c.l.b16 %v723
        %v5030 = vunpack.c.h.b16 %v723
        %v5031 = vunpack.c.l.b16 %v724
        %v5032 = vunpack.c.h.b16 %v724
        %v5033 = vunpack.c.l.b16 %v725
        %v5034 = vunpack.c.h.b16 %v725
        %v5035 = vunpack.c.l.b16 %v726
        %v5036 = vunpack.c.h.b16 %v726
        %v5037 = vunpack.c.l.b16 %v727
        %v5038 = vunpack.c.h.b16 %v727
        %v5039 = vunpack.c.l.b16 %v728
        %v5040 = vunpack.c.h.b16 %v728
        %v5041 = vunpack.c.l.b16 %v729
        %v5042 = vunpack.c.h.b16 %v729
        %v5043 = vunpack.c.l.b16 %v730
        %v5044 = vunpack.c.h.b16 %v730
        %v5045 = vunpack.c.l.b16 %v731
        %v5046 = vunpack.c.h.b16 %v731
        %v5047 = vunpack.c.l.b16 %v732
        %v5048 = vunpack.c.h.b16 %v732
        %v5049 = vunpack.c.l.b16 %v733
        %v5050 = vunpack.c.h.b16 %v733
        %v5051 = vunpack.c.l.b16 %v734
        %v5052 = vunpack.c.h.b16 %v734
        %v5053 = vunpack.c.l.b16 %v735
        %v5054 = vunpack.c.h.b16 %v735
        %v5055 = vunpack.c.l.b16 %v736
        %v5056 = vunpack.c.h.b16 %v736
        %v5057 = vunpack.c.l.b16 %v737
        %v5058 = vunpack.c.h.b16 %v737
        %v5059 = vunpack.c.l.b16 %v738
        %v5060 = vunpack.c.h.b16 %v738
        %v5061 = vunpack.c.l.b16 %v739
        %v5062 = vunpack.c.h.b16 %v739
        %v5063 = vunpack.c.l.b16 %v740
        %v5064 = vunpack.c.h.b16 %v740
        %v5065 = vunpack.c.l.b16 %v741
        %v5066 = vunpack.c.h.b16 %v741
        %v5067 = vunpack.c.l.b16 %v742
        %v5068 = vunpack.c.h.b16 %v742
        %v5069 = vunpack.c.l.b16 %v743
        %v5070 = vunpack.c.h.b16 %v743
        %v5071 = vunpack.c.l.b16 %v744
        %v5072 = vunpack.c.h.b16 %v744
        %v5073 = vunpack.c.l.b16 %v745
        %v5074 = vunpack.c.h.b16 %v745
        %v5075 = vunpack.c.l.b16 %v746
        %v5076 = vunpack.c.h.b16 %v746
        %v5077 = vunpack.c.l.b16 %v747
        %v5078 = vunpack.c.h.b16 %v747
        %v5079 = vunpack.c.l.b16 %v748
        %v5080 = vunpack.c.h.b16 %v748
        %v5081 = vunpack.c.l.b16 %v749
        %v5082 = vunpack.c.h.b16 %v749
        %v5083 = vunpack.c.l.b16 %v750
        %v5084 = vunpack.c.h.b16 %v750
        %v5085 = vunpack.c.l.b16 %v751
        %v5086 = vunpack.c.h.b16 %v751
        %v5087 = vunpack.c.l.b16 %v752
        %v5088 = vunpack.c.h.b16 %v752
        %v5089 = vunpack.c.l.b16 %v753
        %v5090 = vunpack.c.h.b16 %v753
        %v5091 = vunpack.c.l.b16 %v754
        %v5092 = vunpack.c.h.b16 %v754
        %v5093 = vunpack.c.l.b16 %v755
        %v5094 = vunpack.c.h.b16 %v755
        %v5095 = vunpack.c.l.b16 %v756
        %v5096 = vunpack.c.h.b16 %v756
        %v5097 = vunpack.c.l.b16 %v757
        %v5098 = vunpack.c.h.b16 %v757
        %v5099 = vpack.c.b16 %v5035, %v5027
        %v5100 = vpack.c.b16 %v5036, %v5028
        %v5101 = vpack.c.b16 %v5037, %v5029
        %v5102 = vpack.c.b16 %v5038, %v5030
        %v5103 = vpack.c.b16 %v5039, %v5031
        %v5104 = vpack.c.b16 %v5040, %v5032
        %v5105 = vpack.c.b16 %v5041, %v5033
        %v5106 = vpack.c.b16 %v5042, %v5034
        %v5107 = vpack.c.b16 %v5051, %v5043
        %v5108 = vpack.c.b16 %v5052, %v5044
        %v5109 = vpack.c.b16 %v5053, %v5045
        %v5110 = vpack.c.b16 %v5054, %v5046
        %v5111 = vpack.c.b16 %v5055, %v5047
        %v5112 = vpack.c.b16 %v5056, %v5048
        %v5113 = vpack.c.b16 %v5057, %v5049
        %v5114 = vpack.c.b16 %v5058, %v5050
        %v5115 = vpack.c.b16 %v5067, %v5059
        %v5116 = vpack.c.b16 %v5068, %v5060
        %v5117 = vpack.c.b16 %v5069, %v5061
        %v5118 = vpack.c.b16 %v5070, %v5062
        %v5119 = vpack.c.b16 %v5071, %v5063
        %v5120 = vpack.c.b16 %v5072, %v5064
        %v5121 = vpack.c.b16 %v5073, %v5065
        %v5122 = vpack.c.b16 %v5074, %v5066
        %v5123 = vpack.c.b16 %v5083, %v5075
        %v5124 = vpack.c.b16 %v5084, %v5076
        %v5125 = vpack.c.b16 %v5085, %v5077
        %v5126 = vpack.c.b16 %v5086, %v5078
        %v5127 = vpack.c.b16 %v5087, %v5079
        %v5128 = vpack.c.b16 %v5088, %v5080
        %v5129 = vpack.c.b16 %v5089, %v5081
        %v5130 = vpack.c.b16 %v5090, %v5082
        %v5131 = vpack.c.b16 %v5091, %v5091
        %v5132 = vpack.c.b16 %v5092, %v5092
        %v5133 = vpack.c.b16 %v5093, %v5093
        %v5134 = vpack.c.b16 %v5094, %v5094
        %v5135 = vpack.c.b16 %v5095, %v5095
        %v5136 = vpack.c.b16 %v5096, %v5096
        %v5137 = vpack.c.b16 %v5097, %v5097
        %v5138 = vpack.c.b16 %v5098, %v5098
        %5179 = vmatpush.bf16.msra.mxu0 %v4763
        %5180 = vmatpush.bf16.msra.mxu0 %v4759
        %5181 = vmatpush.bf16.msra.mxu0 %v4755
        %5182 = vmatpush.bf16.msra.mxu0 %v4751
        %5183 = vmatpush.bf16.msra.mxu0 %v4747
        %5184 = vmatpush.bf16.msra.mxu0 %v4743
        %5185 = vmatpush.bf16.msra.mxu0 %v4739
        %5186 = vmatpush.bf16.msra.mxu0 %v4735
        %5187 = vmatmul.bf16.gmra.mxu0 %v5099
        %v5188 = vpop.f32.mrf.mxu0
        %v5189 = vadd.f32 0.0, %v5188
        %v5190 = vpop.f32.mrf.mxu0
        %v5191 = vadd.f32 0.0, %v5190
        %5192 = vmatmul.bf16.gmra.mxu0 %v5107
        %v5193 = vpop.f32.mrf.mxu0
        %v5194 = vadd.f32 0.0, %v5193
        %v5195 = vpop.f32.mrf.mxu0
        %v5196 = vadd.f32 0.0, %v5195
        %5197 = vmatmul.bf16.gmra.mxu0 %v5115
        %v5198 = vpop.f32.mrf.mxu0
        %v5199 = vadd.f32 0.0, %v5198
        %v5200 = vpop.f32.mrf.mxu0
        %v5201 = vadd.f32 0.0, %v5200
        %5202 = vmatmul.bf16.gmra.mxu0 %v5123
        %v5203 = vpop.f32.mrf.mxu0
        %v5204 = vadd.f32 0.0, %v5203
        %v5205 = vpop.f32.mrf.mxu0
        %v5206 = vadd.f32 0.0, %v5205
        %5207 = vmatmul.bf16.gmra.mxu0 %v5131
        %v5208 = vpop.f32.mrf.mxu0
        %v5209 = vadd.f32 0.0, %v5208
        %v5210 = vpop.f32.mrf.mxu0
        %5211 = vdwg.mxu0
        %5212 = vmatpush.bf16.msra.mxu0 %v4795
        %5213 = vmatpush.bf16.msra.mxu0 %v4791
        %5214 = vmatpush.bf16.msra.mxu0 %v4787
        %5215 = vmatpush.bf16.msra.mxu0 %v4783
        %5216 = vmatpush.bf16.msra.mxu0 %v4779
        %5217 = vmatpush.bf16.msra.mxu0 %v4775
        %5218 = vmatpush.bf16.msra.mxu0 %v4771
        %5219 = vmatpush.bf16.msra.mxu0 %v4767
        %5220 = vmatmul.bf16.gmra.mxu0 %v5100
        %v5221 = vpop.f32.mrf.mxu0
        %v5222 = vadd.f32 %v5189, %v5221
        %v5223 = vpop.f32.mrf.mxu0
        %v5224 = vadd.f32 %v5191, %v5223
        %5225 = vmatmul.bf16.gmra.mxu0 %v5108
        %v5226 = vpop.f32.mrf.mxu0
        %v5227 = vadd.f32 %v5194, %v5226
        %v5228 = vpop.f32.mrf.mxu0
        %v5229 = vadd.f32 %v5196, %v5228
        %5230 = vmatmul.bf16.gmra.mxu0 %v5116
        %v5231 = vpop.f32.mrf.mxu0
        %v5232 = vadd.f32 %v5199, %v5231
        %v5233 = vpop.f32.mrf.mxu0
        %v5234 = vadd.f32 %v5201, %v5233
        %5235 = vmatmul.bf16.gmra.mxu0 %v5124
        %v5236 = vpop.f32.mrf.mxu0
        %v5237 = vadd.f32 %v5204, %v5236
        %v5238 = vpop.f32.mrf.mxu0
        %v5239 = vadd.f32 %v5206, %v5238
        %5240 = vmatmul.bf16.gmra.mxu0 %v5132
        %v5241 = vpop.f32.mrf.mxu0
        %v5242 = vadd.f32 %v5209, %v5241
        %v5243 = vpop.f32.mrf.mxu0
        %5244 = vdwg.mxu0
        %5245 = vmatpush.bf16.msra.mxu0 %v4827
        %5246 = vmatpush.bf16.msra.mxu0 %v4823
        %5247 = vmatpush.bf16.msra.mxu0 %v4819
        %5248 = vmatpush.bf16.msra.mxu0 %v4815
        %5249 = vmatpush.bf16.msra.mxu0 %v4811
        %5250 = vmatpush.bf16.msra.mxu0 %v4807
        %5251 = vmatpush.bf16.msra.mxu0 %v4803
        %5252 = vmatpush.bf16.msra.mxu0 %v4799
        %5253 = vmatmul.bf16.gmra.mxu0 %v5101
        %v5254 = vpop.f32.mrf.mxu0
        %v5255 = vadd.f32 %v5222, %v5254
        %v5256 = vpop.f32.mrf.mxu0
        %v5257 = vadd.f32 %v5224, %v5256
        %5258 = vmatmul.bf16.gmra.mxu0 %v5109
        %v5259 = vpop.f32.mrf.mxu0
        %v5260 = vadd.f32 %v5227, %v5259
        %v5261 = vpop.f32.mrf.mxu0
        %v5262 = vadd.f32 %v5229, %v5261
        %5263 = vmatmul.bf16.gmra.mxu0 %v5117
        %v5264 = vpop.f32.mrf.mxu0
        %v5265 = vadd.f32 %v5232, %v5264
        %v5266 = vpop.f32.mrf.mxu0
        %v5267 = vadd.f32 %v5234, %v5266
        %5268 = vmatmul.bf16.gmra.mxu0 %v5125
        %v5269 = vpop.f32.mrf.mxu0
        %v5270 = vadd.f32 %v5237, %v5269
        %v5271 = vpop.f32.mrf.mxu0
        %v5272 = vadd.f32 %v5239, %v5271
        %5273 = vmatmul.bf16.gmra.mxu0 %v5133
        %v5274 = vpop.f32.mrf.mxu0
        %v5275 = vadd.f32 %v5242, %v5274
        %v5276 = vpop.f32.mrf.mxu0
        %5277 = vdwg.mxu0
        %5278 = vmatpush.bf16.msra.mxu0 %v4859
        %5279 = vmatpush.bf16.msra.mxu0 %v4855
        %5280 = vmatpush.bf16.msra.mxu0 %v4851
        %5281 = vmatpush.bf16.msra.mxu0 %v4847
        %5282 = vmatpush.bf16.msra.mxu0 %v4843
        %5283 = vmatpush.bf16.msra.mxu0 %v4839
        %5284 = vmatpush.bf16.msra.mxu0 %v4835
        %5285 = vmatpush.bf16.msra.mxu0 %v4831
        %5286 = vmatmul.bf16.gmra.mxu0 %v5102
        %v5287 = vpop.f32.mrf.mxu0
        %v5288 = vadd.f32 %v5255, %v5287
        %v5289 = vpop.f32.mrf.mxu0
        %v5290 = vadd.f32 %v5257, %v5289
        %5291 = vmatmul.bf16.gmra.mxu0 %v5110
        %v5292 = vpop.f32.mrf.mxu0
        %v5293 = vadd.f32 %v5260, %v5292
        %v5294 = vpop.f32.mrf.mxu0
        %v5295 = vadd.f32 %v5262, %v5294
        %5296 = vmatmul.bf16.gmra.mxu0 %v5118
        %v5297 = vpop.f32.mrf.mxu0
        %v5298 = vadd.f32 %v5265, %v5297
        %v5299 = vpop.f32.mrf.mxu0
        %v5300 = vadd.f32 %v5267, %v5299
        %5301 = vmatmul.bf16.gmra.mxu0 %v5126
        %v5302 = vpop.f32.mrf.mxu0
        %v5303 = vadd.f32 %v5270, %v5302
        %v5304 = vpop.f32.mrf.mxu0
        %v5305 = vadd.f32 %v5272, %v5304
        %5306 = vmatmul.bf16.gmra.mxu0 %v5134
        %v5307 = vpop.f32.mrf.mxu0
        %v5308 = vadd.f32 %v5275, %v5307
        %v5309 = vpop.f32.mrf.mxu0
        %5310 = vdwg.mxu0
        %5311 = vmatpush.bf16.msra.mxu0 %v4891
        %5312 = vmatpush.bf16.msra.mxu0 %v4887
        %5313 = vmatpush.bf16.msra.mxu0 %v4883
        %5314 = vmatpush.bf16.msra.mxu0 %v4879
        %5315 = vmatpush.bf16.msra.mxu0 %v4875
        %5316 = vmatpush.bf16.msra.mxu0 %v4871
        %5317 = vmatpush.bf16.msra.mxu0 %v4867
        %5318 = vmatpush.bf16.msra.mxu0 %v4863
        %5319 = vmatmul.bf16.gmra.mxu0 %v5103
        %v5320 = vpop.f32.mrf.mxu0
        %v5321 = vadd.f32 %v5288, %v5320
        %v5322 = vpop.f32.mrf.mxu0
        %v5323 = vadd.f32 %v5290, %v5322
        %5324 = vmatmul.bf16.gmra.mxu0 %v5111
        %v5325 = vpop.f32.mrf.mxu0
        %v5326 = vadd.f32 %v5293, %v5325
        %v5327 = vpop.f32.mrf.mxu0
        %v5328 = vadd.f32 %v5295, %v5327
        %5329 = vmatmul.bf16.gmra.mxu0 %v5119
        %v5330 = vpop.f32.mrf.mxu0
        %v5331 = vadd.f32 %v5298, %v5330
        %v5332 = vpop.f32.mrf.mxu0
        %v5333 = vadd.f32 %v5300, %v5332
        %5334 = vmatmul.bf16.gmra.mxu0 %v5127
        %v5335 = vpop.f32.mrf.mxu0
        %v5336 = vadd.f32 %v5303, %v5335
        %v5337 = vpop.f32.mrf.mxu0
        %v5338 = vadd.f32 %v5305, %v5337
        %5339 = vmatmul.bf16.gmra.mxu0 %v5135
        %v5340 = vpop.f32.mrf.mxu0
        %v5341 = vadd.f32 %v5308, %v5340
        %v5342 = vpop.f32.mrf.mxu0
        %5343 = vdwg.mxu0
        %5344 = vmatpush.bf16.msra.mxu0 %v4923
        %5345 = vmatpush.bf16.msra.mxu0 %v4919
        %5346 = vmatpush.bf16.msra.mxu0 %v4915
        %5347 = vmatpush.bf16.msra.mxu0 %v4911
        %5348 = vmatpush.bf16.msra.mxu0 %v4907
        %5349 = vmatpush.bf16.msra.mxu0 %v4903
        %5350 = vmatpush.bf16.msra.mxu0 %v4899
        %5351 = vmatpush.bf16.msra.mxu0 %v4895
        %5352 = vmatmul.bf16.gmra.mxu0 %v5104
        %v5353 = vpop.f32.mrf.mxu0
        %v5354 = vadd.f32 %v5321, %v5353
        %v5355 = vpop.f32.mrf.mxu0
        %v5356 = vadd.f32 %v5323, %v5355
        %5357 = vmatmul.bf16.gmra.mxu0 %v5112
        %v5358 = vpop.f32.mrf.mxu0
        %v5359 = vadd.f32 %v5326, %v5358
        %v5360 = vpop.f32.mrf.mxu0
        %v5361 = vadd.f32 %v5328, %v5360
        %5362 = vmatmul.bf16.gmra.mxu0 %v5120
        %v5363 = vpop.f32.mrf.mxu0
        %v5364 = vadd.f32 %v5331, %v5363
        %v5365 = vpop.f32.mrf.mxu0
        %v5366 = vadd.f32 %v5333, %v5365
        %5367 = vmatmul.bf16.gmra.mxu0 %v5128
        %v5368 = vpop.f32.mrf.mxu0
        %v5369 = vadd.f32 %v5336, %v5368
        %v5370 = vpop.f32.mrf.mxu0
        %v5371 = vadd.f32 %v5338, %v5370
        %5372 = vmatmul.bf16.gmra.mxu0 %v5136
        %v5373 = vpop.f32.mrf.mxu0
        %v5374 = vadd.f32 %v5341, %v5373
        %v5375 = vpop.f32.mrf.mxu0
        %5376 = vdwg.mxu0
        %5377 = vmatpush.bf16.msra.mxu0 %v4955
        %5378 = vmatpush.bf16.msra.mxu0 %v4951
        %5379 = vmatpush.bf16.msra.mxu0 %v4947
        %5380 = vmatpush.bf16.msra.mxu0 %v4943
        %5381 = vmatpush.bf16.msra.mxu0 %v4939
        %5382 = vmatpush.bf16.msra.mxu0 %v4935
        %5383 = vmatpush.bf16.msra.mxu0 %v4931
        %5384 = vmatpush.bf16.msra.mxu0 %v4927
        %5385 = vmatmul.bf16.gmra.mxu0 %v5105
        %v5386 = vpop.f32.mrf.mxu0
        %v5387 = vadd.f32 %v5354, %v5386
        %v5388 = vpop.f32.mrf.mxu0
        %v5389 = vadd.f32 %v5356, %v5388
        %5390 = vmatmul.bf16.gmra.mxu0 %v5113
        %v5391 = vpop.f32.mrf.mxu0
        %v5392 = vadd.f32 %v5359, %v5391
        %v5393 = vpop.f32.mrf.mxu0
        %v5394 = vadd.f32 %v5361, %v5393
        %5395 = vmatmul.bf16.gmra.mxu0 %v5121
        %v5396 = vpop.f32.mrf.mxu0
        %v5397 = vadd.f32 %v5364, %v5396
        %v5398 = vpop.f32.mrf.mxu0
        %v5399 = vadd.f32 %v5366, %v5398
        %5400 = vmatmul.bf16.gmra.mxu0 %v5129
        %v5401 = vpop.f32.mrf.mxu0
        %v5402 = vadd.f32 %v5369, %v5401
        %v5403 = vpop.f32.mrf.mxu0
        %v5404 = vadd.f32 %v5371, %v5403
        %5405 = vmatmul.bf16.gmra.mxu0 %v5137
        %v5406 = vpop.f32.mrf.mxu0
        %v5407 = vadd.f32 %v5374, %v5406
        %v5408 = vpop.f32.mrf.mxu0
        %5409 = vdwg.mxu0
        %5410 = vmatpush.bf16.msra.mxu0 %v4987
        %5411 = vmatpush.bf16.msra.mxu0 %v4983
        %5412 = vmatpush.bf16.msra.mxu0 %v4979
        %5413 = vmatpush.bf16.msra.mxu0 %v4975
        %5414 = vmatpush.bf16.msra.mxu0 %v4971
        %5415 = vmatpush.bf16.msra.mxu0 %v4967
        %5416 = vmatpush.bf16.msra.mxu0 %v4963
        %5417 = vmatpush.bf16.msra.mxu0 %v4959
        %5418 = vmatmul.bf16.gmra.mxu0 %v5106
        %v5419 = vpop.f32.mrf.mxu0
        %v5420 = vadd.f32 %v5387, %v5419
        %v5421 = vpop.f32.mrf.mxu0
        %v5422 = vadd.f32 %v5389, %v5421
        %5423 = vmatmul.bf16.gmra.mxu0 %v5114
        %v5424 = vpop.f32.mrf.mxu0
        %v5425 = vadd.f32 %v5392, %v5424
        %v5426 = vpop.f32.mrf.mxu0
        %v5427 = vadd.f32 %v5394, %v5426
        %5428 = vmatmul.bf16.gmra.mxu0 %v5122
        %v5429 = vpop.f32.mrf.mxu0
        %v5430 = vadd.f32 %v5397, %v5429
        %v5431 = vpop.f32.mrf.mxu0
        %v5432 = vadd.f32 %v5399, %v5431
        %5433 = vmatmul.bf16.gmra.mxu0 %v5130
        %v5434 = vpop.f32.mrf.mxu0
        %v5435 = vadd.f32 %v5402, %v5434
        %v5436 = vpop.f32.mrf.mxu0
        %v5437 = vadd.f32 %v5404, %v5436
        %5438 = vmatmul.bf16.gmra.mxu0 %v5138
        %v5439 = vpop.f32.mrf.mxu0
        %v5440 = vadd.f32 %v5407, %v5439
        %v5441 = vpop.f32.mrf.mxu0
        %5442 = vdwg.mxu0
        %5443 = vmatpush.bf16.msra.mxu0 %v4764
        %5444 = vmatpush.bf16.msra.mxu0 %v4760
        %5445 = vmatpush.bf16.msra.mxu0 %v4756
        %5446 = vmatpush.bf16.msra.mxu0 %v4752
        %5447 = vmatpush.bf16.msra.mxu0 %v4748
        %5448 = vmatpush.bf16.msra.mxu0 %v4744
        %5449 = vmatpush.bf16.msra.mxu0 %v4740
        %5450 = vmatpush.bf16.msra.mxu0 %v4736
        %5451 = vmatmul.bf16.gmra.mxu0 %v5099
        %v5452 = vpop.f32.mrf.mxu0
        %v5453 = vadd.f32 0.0, %v5452
        %v5454 = vpop.f32.mrf.mxu0
        %v5455 = vadd.f32 0.0, %v5454
        %5456 = vmatmul.bf16.gmra.mxu0 %v5107
        %v5457 = vpop.f32.mrf.mxu0
        %v5458 = vadd.f32 0.0, %v5457
        %v5459 = vpop.f32.mrf.mxu0
        %v5460 = vadd.f32 0.0, %v5459
        %5461 = vmatmul.bf16.gmra.mxu0 %v5115
        %v5462 = vpop.f32.mrf.mxu0
        %v5463 = vadd.f32 0.0, %v5462
        %v5464 = vpop.f32.mrf.mxu0
        %v5465 = vadd.f32 0.0, %v5464
        %5466 = vmatmul.bf16.gmra.mxu0 %v5123
        %v5467 = vpop.f32.mrf.mxu0
        %v5468 = vadd.f32 0.0, %v5467
        %v5469 = vpop.f32.mrf.mxu0
        %v5470 = vadd.f32 0.0, %v5469
        %5471 = vmatmul.bf16.gmra.mxu0 %v5131
        %v5472 = vpop.f32.mrf.mxu0
        %v5473 = vadd.f32 0.0, %v5472
        %v5474 = vpop.f32.mrf.mxu0
        %5475 = vdwg.mxu0
        %5476 = vmatpush.bf16.msra.mxu0 %v4796
        %5477 = vmatpush.bf16.msra.mxu0 %v4792
        %5478 = vmatpush.bf16.msra.mxu0 %v4788
        %5479 = vmatpush.bf16.msra.mxu0 %v4784
        %5480 = vmatpush.bf16.msra.mxu0 %v4780
        %5481 = vmatpush.bf16.msra.mxu0 %v4776
        %5482 = vmatpush.bf16.msra.mxu0 %v4772
        %5483 = vmatpush.bf16.msra.mxu0 %v4768
        %5484 = vmatmul.bf16.gmra.mxu0 %v5100
        %v5485 = vpop.f32.mrf.mxu0
        %v5486 = vadd.f32 %v5453, %v5485
        %v5487 = vpop.f32.mrf.mxu0
        %v5488 = vadd.f32 %v5455, %v5487
        %5489 = vmatmul.bf16.gmra.mxu0 %v5108
        %v5490 = vpop.f32.mrf.mxu0
        %v5491 = vadd.f32 %v5458, %v5490
        %v5492 = vpop.f32.mrf.mxu0
        %v5493 = vadd.f32 %v5460, %v5492
        %5494 = vmatmul.bf16.gmra.mxu0 %v5116
        %v5495 = vpop.f32.mrf.mxu0
        %v5496 = vadd.f32 %v5463, %v5495
        %v5497 = vpop.f32.mrf.mxu0
        %v5498 = vadd.f32 %v5465, %v5497
        %5499 = vmatmul.bf16.gmra.mxu0 %v5124
        %v5500 = vpop.f32.mrf.mxu0
        %v5501 = vadd.f32 %v5468, %v5500
        %v5502 = vpop.f32.mrf.mxu0
        %v5503 = vadd.f32 %v5470, %v5502
        %5504 = vmatmul.bf16.gmra.mxu0 %v5132
        %v5505 = vpop.f32.mrf.mxu0
        %v5506 = vadd.f32 %v5473, %v5505
        %v5507 = vpop.f32.mrf.mxu0
        %5508 = vdwg.mxu0
        %5509 = vmatpush.bf16.msra.mxu0 %v4828
        %5510 = vmatpush.bf16.msra.mxu0 %v4824
        %5511 = vmatpush.bf16.msra.mxu0 %v4820
        %5512 = vmatpush.bf16.msra.mxu0 %v4816
        %5513 = vmatpush.bf16.msra.mxu0 %v4812
        %5514 = vmatpush.bf16.msra.mxu0 %v4808
        %5515 = vmatpush.bf16.msra.mxu0 %v4804
        %5516 = vmatpush.bf16.msra.mxu0 %v4800
        %5517 = vmatmul.bf16.gmra.mxu0 %v5101
        %v5518 = vpop.f32.mrf.mxu0
        %v5519 = vadd.f32 %v5486, %v5518
        %v5520 = vpop.f32.mrf.mxu0
        %v5521 = vadd.f32 %v5488, %v5520
        %5522 = vmatmul.bf16.gmra.mxu0 %v5109
        %v5523 = vpop.f32.mrf.mxu0
        %v5524 = vadd.f32 %v5491, %v5523
        %v5525 = vpop.f32.mrf.mxu0
        %v5526 = vadd.f32 %v5493, %v5525
        %5527 = vmatmul.bf16.gmra.mxu0 %v5117
        %v5528 = vpop.f32.mrf.mxu0
        %v5529 = vadd.f32 %v5496, %v5528
        %v5530 = vpop.f32.mrf.mxu0
        %v5531 = vadd.f32 %v5498, %v5530
        %5532 = vmatmul.bf16.gmra.mxu0 %v5125
        %v5533 = vpop.f32.mrf.mxu0
        %v5534 = vadd.f32 %v5501, %v5533
        %v5535 = vpop.f32.mrf.mxu0
        %v5536 = vadd.f32 %v5503, %v5535
        %5537 = vmatmul.bf16.gmra.mxu0 %v5133
        %v5538 = vpop.f32.mrf.mxu0
        %v5539 = vadd.f32 %v5506, %v5538
        %v5540 = vpop.f32.mrf.mxu0
        %5541 = vdwg.mxu0
        %5542 = vmatpush.bf16.msra.mxu0 %v4860
        %5543 = vmatpush.bf16.msra.mxu0 %v4856
        %5544 = vmatpush.bf16.msra.mxu0 %v4852
        %5545 = vmatpush.bf16.msra.mxu0 %v4848
        %5546 = vmatpush.bf16.msra.mxu0 %v4844
        %5547 = vmatpush.bf16.msra.mxu0 %v4840
        %5548 = vmatpush.bf16.msra.mxu0 %v4836
        %5549 = vmatpush.bf16.msra.mxu0 %v4832
        %5550 = vmatmul.bf16.gmra.mxu0 %v5102
        %v5551 = vpop.f32.mrf.mxu0
        %v5552 = vadd.f32 %v5519, %v5551
        %v5553 = vpop.f32.mrf.mxu0
        %v5554 = vadd.f32 %v5521, %v5553
        %5555 = vmatmul.bf16.gmra.mxu0 %v5110
        %v5556 = vpop.f32.mrf.mxu0
        %v5557 = vadd.f32 %v5524, %v5556
        %v5558 = vpop.f32.mrf.mxu0
        %v5559 = vadd.f32 %v5526, %v5558
        %5560 = vmatmul.bf16.gmra.mxu0 %v5118
        %v5561 = vpop.f32.mrf.mxu0
        %v5562 = vadd.f32 %v5529, %v5561
        %v5563 = vpop.f32.mrf.mxu0
        %v5564 = vadd.f32 %v5531, %v5563
        %5565 = vmatmul.bf16.gmra.mxu0 %v5126
        %v5566 = vpop.f32.mrf.mxu0
        %v5567 = vadd.f32 %v5534, %v5566
        %v5568 = vpop.f32.mrf.mxu0
        %v5569 = vadd.f32 %v5536, %v5568
        %5570 = vmatmul.bf16.gmra.mxu0 %v5134
        %v5571 = vpop.f32.mrf.mxu0
        %v5572 = vadd.f32 %v5539, %v5571
        %v5573 = vpop.f32.mrf.mxu0
        %5574 = vdwg.mxu0
        %5575 = vmatpush.bf16.msra.mxu0 %v4892
        %5576 = vmatpush.bf16.msra.mxu0 %v4888
        %5577 = vmatpush.bf16.msra.mxu0 %v4884
        %5578 = vmatpush.bf16.msra.mxu0 %v4880
        %5579 = vmatpush.bf16.msra.mxu0 %v4876
        %5580 = vmatpush.bf16.msra.mxu0 %v4872
        %5581 = vmatpush.bf16.msra.mxu0 %v4868
        %5582 = vmatpush.bf16.msra.mxu0 %v4864
        %5583 = vmatmul.bf16.gmra.mxu0 %v5103
        %v5584 = vpop.f32.mrf.mxu0
        %v5585 = vadd.f32 %v5552, %v5584
        %v5586 = vpop.f32.mrf.mxu0
        %v5587 = vadd.f32 %v5554, %v5586
        %5588 = vmatmul.bf16.gmra.mxu0 %v5111
        %v5589 = vpop.f32.mrf.mxu0
        %v5590 = vadd.f32 %v5557, %v5589
        %v5591 = vpop.f32.mrf.mxu0
        %v5592 = vadd.f32 %v5559, %v5591
        %5593 = vmatmul.bf16.gmra.mxu0 %v5119
        %v5594 = vpop.f32.mrf.mxu0
        %v5595 = vadd.f32 %v5562, %v5594
        %v5596 = vpop.f32.mrf.mxu0
        %v5597 = vadd.f32 %v5564, %v5596
        %5598 = vmatmul.bf16.gmra.mxu0 %v5127
        %v5599 = vpop.f32.mrf.mxu0
        %v5600 = vadd.f32 %v5567, %v5599
        %v5601 = vpop.f32.mrf.mxu0
        %v5602 = vadd.f32 %v5569, %v5601
        %5603 = vmatmul.bf16.gmra.mxu0 %v5135
        %v5604 = vpop.f32.mrf.mxu0
        %v5605 = vadd.f32 %v5572, %v5604
        %v5606 = vpop.f32.mrf.mxu0
        %5607 = vdwg.mxu0
        %5608 = vmatpush.bf16.msra.mxu0 %v4924
        %5609 = vmatpush.bf16.msra.mxu0 %v4920
        %5610 = vmatpush.bf16.msra.mxu0 %v4916
        %5611 = vmatpush.bf16.msra.mxu0 %v4912
        %5612 = vmatpush.bf16.msra.mxu0 %v4908
        %5613 = vmatpush.bf16.msra.mxu0 %v4904
        %5614 = vmatpush.bf16.msra.mxu0 %v4900
        %5615 = vmatpush.bf16.msra.mxu0 %v4896
        %5616 = vmatmul.bf16.gmra.mxu0 %v5104
        %v5617 = vpop.f32.mrf.mxu0
        %v5618 = vadd.f32 %v5585, %v5617
        %v5619 = vpop.f32.mrf.mxu0
        %v5620 = vadd.f32 %v5587, %v5619
        %5621 = vmatmul.bf16.gmra.mxu0 %v5112
        %v5622 = vpop.f32.mrf.mxu0
        %v5623 = vadd.f32 %v5590, %v5622
        %v5624 = vpop.f32.mrf.mxu0
        %v5625 = vadd.f32 %v5592, %v5624
        %5626 = vmatmul.bf16.gmra.mxu0 %v5120
        %v5627 = vpop.f32.mrf.mxu0
        %v5628 = vadd.f32 %v5595, %v5627
        %v5629 = vpop.f32.mrf.mxu0
        %v5630 = vadd.f32 %v5597, %v5629
        %5631 = vmatmul.bf16.gmra.mxu0 %v5128
        %v5632 = vpop.f32.mrf.mxu0
        %v5633 = vadd.f32 %v5600, %v5632
        %v5634 = vpop.f32.mrf.mxu0
        %v5635 = vadd.f32 %v5602, %v5634
        %5636 = vmatmul.bf16.gmra.mxu0 %v5136
        %v5637 = vpop.f32.mrf.mxu0
        %v5638 = vadd.f32 %v5605, %v5637
        %v5639 = vpop.f32.mrf.mxu0
        %5640 = vdwg.mxu0
        %5641 = vmatpush.bf16.msra.mxu0 %v4956
        %5642 = vmatpush.bf16.msra.mxu0 %v4952
        %5643 = vmatpush.bf16.msra.mxu0 %v4948
        %5644 = vmatpush.bf16.msra.mxu0 %v4944
        %5645 = vmatpush.bf16.msra.mxu0 %v4940
        %5646 = vmatpush.bf16.msra.mxu0 %v4936
        %5647 = vmatpush.bf16.msra.mxu0 %v4932
        %5648 = vmatpush.bf16.msra.mxu0 %v4928
        %5649 = vmatmul.bf16.gmra.mxu0 %v5105
        %v5650 = vpop.f32.mrf.mxu0
        %v5651 = vadd.f32 %v5618, %v5650
        %v5652 = vpop.f32.mrf.mxu0
        %v5653 = vadd.f32 %v5620, %v5652
        %5654 = vmatmul.bf16.gmra.mxu0 %v5113
        %v5655 = vpop.f32.mrf.mxu0
        %v5656 = vadd.f32 %v5623, %v5655
        %v5657 = vpop.f32.mrf.mxu0
        %v5658 = vadd.f32 %v5625, %v5657
        %5659 = vmatmul.bf16.gmra.mxu0 %v5121
        %v5660 = vpop.f32.mrf.mxu0
        %v5661 = vadd.f32 %v5628, %v5660
        %v5662 = vpop.f32.mrf.mxu0
        %v5663 = vadd.f32 %v5630, %v5662
        %5664 = vmatmul.bf16.gmra.mxu0 %v5129
        %v5665 = vpop.f32.mrf.mxu0
        %v5666 = vadd.f32 %v5633, %v5665
        %v5667 = vpop.f32.mrf.mxu0
        %v5668 = vadd.f32 %v5635, %v5667
        %5669 = vmatmul.bf16.gmra.mxu0 %v5137
        %v5670 = vpop.f32.mrf.mxu0
        %v5671 = vadd.f32 %v5638, %v5670
        %v5672 = vpop.f32.mrf.mxu0
        %5673 = vdwg.mxu0
        %5674 = vmatpush.bf16.msra.mxu0 %v4988
        %5675 = vmatpush.bf16.msra.mxu0 %v4984
        %5676 = vmatpush.bf16.msra.mxu0 %v4980
        %5677 = vmatpush.bf16.msra.mxu0 %v4976
        %5678 = vmatpush.bf16.msra.mxu0 %v4972
        %5679 = vmatpush.bf16.msra.mxu0 %v4968
        %5680 = vmatpush.bf16.msra.mxu0 %v4964
        %5681 = vmatpush.bf16.msra.mxu0 %v4960
        %5682 = vmatmul.bf16.gmra.mxu0 %v5106
        %v5683 = vpop.f32.mrf.mxu0
        %v5684 = vadd.f32 %v5651, %v5683
        %v5685 = vpop.f32.mrf.mxu0
        %v5686 = vadd.f32 %v5653, %v5685
        %5687 = vmatmul.bf16.gmra.mxu0 %v5114
        %v5688 = vpop.f32.mrf.mxu0
        %v5689 = vadd.f32 %v5656, %v5688
        %v5690 = vpop.f32.mrf.mxu0
        %v5691 = vadd.f32 %v5658, %v5690
        %5692 = vmatmul.bf16.gmra.mxu0 %v5122
        %v5693 = vpop.f32.mrf.mxu0
        %v5694 = vadd.f32 %v5661, %v5693
        %v5695 = vpop.f32.mrf.mxu0
        %v5696 = vadd.f32 %v5663, %v5695
        %5697 = vmatmul.bf16.gmra.mxu0 %v5130
        %v5698 = vpop.f32.mrf.mxu0
        %v5699 = vadd.f32 %v5666, %v5698
        %v5700 = vpop.f32.mrf.mxu0
        %v5701 = vadd.f32 %v5668, %v5700
        %5702 = vmatmul.bf16.gmra.mxu0 %v5138
        %v5703 = vpop.f32.mrf.mxu0
        %v5704 = vadd.f32 %v5671, %v5703
        %v5705 = vpop.f32.mrf.mxu0
        %5706 = vdwg.mxu0
        %5707 = vmatpush.bf16.msra.mxu0 %v4765
        %5708 = vmatpush.bf16.msra.mxu0 %v4761
        %5709 = vmatpush.bf16.msra.mxu0 %v4757
        %5710 = vmatpush.bf16.msra.mxu0 %v4753
        %5711 = vmatpush.bf16.msra.mxu0 %v4749
        %5712 = vmatpush.bf16.msra.mxu0 %v4745
        %5713 = vmatpush.bf16.msra.mxu0 %v4741
        %5714 = vmatpush.bf16.msra.mxu0 %v4737
        %5715 = vmatmul.bf16.gmra.mxu0 %v5099
        %v5716 = vpop.f32.mrf.mxu0
        %v5717 = vadd.f32 0.0, %v5716
        %v5718 = vpop.f32.mrf.mxu0
        %v5719 = vadd.f32 0.0, %v5718
        %5720 = vmatmul.bf16.gmra.mxu0 %v5107
        %v5721 = vpop.f32.mrf.mxu0
        %v5722 = vadd.f32 0.0, %v5721
        %v5723 = vpop.f32.mrf.mxu0
        %v5724 = vadd.f32 0.0, %v5723
        %5725 = vmatmul.bf16.gmra.mxu0 %v5115
        %v5726 = vpop.f32.mrf.mxu0
        %v5727 = vadd.f32 0.0, %v5726
        %v5728 = vpop.f32.mrf.mxu0
        %v5729 = vadd.f32 0.0, %v5728
        %5730 = vmatmul.bf16.gmra.mxu0 %v5123
        %v5731 = vpop.f32.mrf.mxu0
        %v5732 = vadd.f32 0.0, %v5731
        %v5733 = vpop.f32.mrf.mxu0
        %v5734 = vadd.f32 0.0, %v5733
        %5735 = vmatmul.bf16.gmra.mxu0 %v5131
        %v5736 = vpop.f32.mrf.mxu0
        %v5737 = vadd.f32 0.0, %v5736
        %v5738 = vpop.f32.mrf.mxu0
        %5739 = vdwg.mxu0
        %5740 = vmatpush.bf16.msra.mxu0 %v4797
        %5741 = vmatpush.bf16.msra.mxu0 %v4793
        %5742 = vmatpush.bf16.msra.mxu0 %v4789
        %5743 = vmatpush.bf16.msra.mxu0 %v4785
        %5744 = vmatpush.bf16.msra.mxu0 %v4781
        %5745 = vmatpush.bf16.msra.mxu0 %v4777
        %5746 = vmatpush.bf16.msra.mxu0 %v4773
        %5747 = vmatpush.bf16.msra.mxu0 %v4769
        %5748 = vmatmul.bf16.gmra.mxu0 %v5100
        %v5749 = vpop.f32.mrf.mxu0
        %v5750 = vadd.f32 %v5717, %v5749
        %v5751 = vpop.f32.mrf.mxu0
        %v5752 = vadd.f32 %v5719, %v5751
        %5753 = vmatmul.bf16.gmra.mxu0 %v5108
        %v5754 = vpop.f32.mrf.mxu0
        %v5755 = vadd.f32 %v5722, %v5754
        %v5756 = vpop.f32.mrf.mxu0
        %v5757 = vadd.f32 %v5724, %v5756
        %5758 = vmatmul.bf16.gmra.mxu0 %v5116
        %v5759 = vpop.f32.mrf.mxu0
        %v5760 = vadd.f32 %v5727, %v5759
        %v5761 = vpop.f32.mrf.mxu0
        %v5762 = vadd.f32 %v5729, %v5761
        %5763 = vmatmul.bf16.gmra.mxu0 %v5124
        %v5764 = vpop.f32.mrf.mxu0
        %v5765 = vadd.f32 %v5732, %v5764
        %v5766 = vpop.f32.mrf.mxu0
        %v5767 = vadd.f32 %v5734, %v5766
        %5768 = vmatmul.bf16.gmra.mxu0 %v5132
        %v5769 = vpop.f32.mrf.mxu0
        %v5770 = vadd.f32 %v5737, %v5769
        %v5771 = vpop.f32.mrf.mxu0
        %5772 = vdwg.mxu0
        %5773 = vmatpush.bf16.msra.mxu0 %v4829
        %5774 = vmatpush.bf16.msra.mxu0 %v4825
        %5775 = vmatpush.bf16.msra.mxu0 %v4821
        %5776 = vmatpush.bf16.msra.mxu0 %v4817
        %5777 = vmatpush.bf16.msra.mxu0 %v4813
        %5778 = vmatpush.bf16.msra.mxu0 %v4809
        %5779 = vmatpush.bf16.msra.mxu0 %v4805
        %5780 = vmatpush.bf16.msra.mxu0 %v4801
        %5781 = vmatmul.bf16.gmra.mxu0 %v5101
        %v5782 = vpop.f32.mrf.mxu0
        %v5783 = vadd.f32 %v5750, %v5782
        %v5784 = vpop.f32.mrf.mxu0
        %v5785 = vadd.f32 %v5752, %v5784
        %5786 = vmatmul.bf16.gmra.mxu0 %v5109
        %v5787 = vpop.f32.mrf.mxu0
        %v5788 = vadd.f32 %v5755, %v5787
        %v5789 = vpop.f32.mrf.mxu0
        %v5790 = vadd.f32 %v5757, %v5789
        %5791 = vmatmul.bf16.gmra.mxu0 %v5117
        %v5792 = vpop.f32.mrf.mxu0
        %v5793 = vadd.f32 %v5760, %v5792
        %v5794 = vpop.f32.mrf.mxu0
        %v5795 = vadd.f32 %v5762, %v5794
        %5796 = vmatmul.bf16.gmra.mxu0 %v5125
        %v5797 = vpop.f32.mrf.mxu0
        %v5798 = vadd.f32 %v5765, %v5797
        %v5799 = vpop.f32.mrf.mxu0
        %v5800 = vadd.f32 %v5767, %v5799
        %5801 = vmatmul.bf16.gmra.mxu0 %v5133
        %v5802 = vpop.f32.mrf.mxu0
        %v5803 = vadd.f32 %v5770, %v5802
        %v5804 = vpop.f32.mrf.mxu0
        %5805 = vdwg.mxu0
        %5806 = vmatpush.bf16.msra.mxu0 %v4861
        %5807 = vmatpush.bf16.msra.mxu0 %v4857
        %5808 = vmatpush.bf16.msra.mxu0 %v4853
        %5809 = vmatpush.bf16.msra.mxu0 %v4849
        %5810 = vmatpush.bf16.msra.mxu0 %v4845
        %5811 = vmatpush.bf16.msra.mxu0 %v4841
        %5812 = vmatpush.bf16.msra.mxu0 %v4837
        %5813 = vmatpush.bf16.msra.mxu0 %v4833
        %5814 = vmatmul.bf16.gmra.mxu0 %v5102
        %v5815 = vpop.f32.mrf.mxu0
        %v5816 = vadd.f32 %v5783, %v5815
        %v5817 = vpop.f32.mrf.mxu0
        %v5818 = vadd.f32 %v5785, %v5817
        %5819 = vmatmul.bf16.gmra.mxu0 %v5110
        %v5820 = vpop.f32.mrf.mxu0
        %v5821 = vadd.f32 %v5788, %v5820
        %v5822 = vpop.f32.mrf.mxu0
        %v5823 = vadd.f32 %v5790, %v5822
        %5824 = vmatmul.bf16.gmra.mxu0 %v5118
        %v5825 = vpop.f32.mrf.mxu0
        %v5826 = vadd.f32 %v5793, %v5825
        %v5827 = vpop.f32.mrf.mxu0
        %v5828 = vadd.f32 %v5795, %v5827
        %5829 = vmatmul.bf16.gmra.mxu0 %v5126
        %v5830 = vpop.f32.mrf.mxu0
        %v5831 = vadd.f32 %v5798, %v5830
        %v5832 = vpop.f32.mrf.mxu0
        %v5833 = vadd.f32 %v5800, %v5832
        %5834 = vmatmul.bf16.gmra.mxu0 %v5134
        %v5835 = vpop.f32.mrf.mxu0
        %v5836 = vadd.f32 %v5803, %v5835
        %v5837 = vpop.f32.mrf.mxu0
        %5838 = vdwg.mxu0
        %5839 = vmatpush.bf16.msra.mxu0 %v4893
        %5840 = vmatpush.bf16.msra.mxu0 %v4889
        %5841 = vmatpush.bf16.msra.mxu0 %v4885
        %5842 = vmatpush.bf16.msra.mxu0 %v4881
        %5843 = vmatpush.bf16.msra.mxu0 %v4877
        %5844 = vmatpush.bf16.msra.mxu0 %v4873
        %5845 = vmatpush.bf16.msra.mxu0 %v4869
        %5846 = vmatpush.bf16.msra.mxu0 %v4865
        %5847 = vmatmul.bf16.gmra.mxu0 %v5103
        %v5848 = vpop.f32.mrf.mxu0
        %v5849 = vadd.f32 %v5816, %v5848
        %v5850 = vpop.f32.mrf.mxu0
        %v5851 = vadd.f32 %v5818, %v5850
        %5852 = vmatmul.bf16.gmra.mxu0 %v5111
        %v5853 = vpop.f32.mrf.mxu0
        %v5854 = vadd.f32 %v5821, %v5853
        %v5855 = vpop.f32.mrf.mxu0
        %v5856 = vadd.f32 %v5823, %v5855
        %5857 = vmatmul.bf16.gmra.mxu0 %v5119
        %v5858 = vpop.f32.mrf.mxu0
        %v5859 = vadd.f32 %v5826, %v5858
        %v5860 = vpop.f32.mrf.mxu0
        %v5861 = vadd.f32 %v5828, %v5860
        %5862 = vmatmul.bf16.gmra.mxu0 %v5127
        %v5863 = vpop.f32.mrf.mxu0
        %v5864 = vadd.f32 %v5831, %v5863
        %v5865 = vpop.f32.mrf.mxu0
        %v5866 = vadd.f32 %v5833, %v5865
        %5867 = vmatmul.bf16.gmra.mxu0 %v5135
        %v5868 = vpop.f32.mrf.mxu0
        %v5869 = vadd.f32 %v5836, %v5868
        %v5870 = vpop.f32.mrf.mxu0
        %5871 = vdwg.mxu0
        %5872 = vmatpush.bf16.msra.mxu0 %v4925
        %5873 = vmatpush.bf16.msra.mxu0 %v4921
        %5874 = vmatpush.bf16.msra.mxu0 %v4917
        %5875 = vmatpush.bf16.msra.mxu0 %v4913
        %5876 = vmatpush.bf16.msra.mxu0 %v4909
        %5877 = vmatpush.bf16.msra.mxu0 %v4905
        %5878 = vmatpush.bf16.msra.mxu0 %v4901
        %5879 = vmatpush.bf16.msra.mxu0 %v4897
        %5880 = vmatmul.bf16.gmra.mxu0 %v5104
        %v5881 = vpop.f32.mrf.mxu0
        %v5882 = vadd.f32 %v5849, %v5881
        %v5883 = vpop.f32.mrf.mxu0
        %v5884 = vadd.f32 %v5851, %v5883
        %5885 = vmatmul.bf16.gmra.mxu0 %v5112
        %v5886 = vpop.f32.mrf.mxu0
        %v5887 = vadd.f32 %v5854, %v5886
        %v5888 = vpop.f32.mrf.mxu0
        %v5889 = vadd.f32 %v5856, %v5888
        %5890 = vmatmul.bf16.gmra.mxu0 %v5120
        %v5891 = vpop.f32.mrf.mxu0
        %v5892 = vadd.f32 %v5859, %v5891
        %v5893 = vpop.f32.mrf.mxu0
        %v5894 = vadd.f32 %v5861, %v5893
        %5895 = vmatmul.bf16.gmra.mxu0 %v5128
        %v5896 = vpop.f32.mrf.mxu0
        %v5897 = vadd.f32 %v5864, %v5896
        %v5898 = vpop.f32.mrf.mxu0
        %v5899 = vadd.f32 %v5866, %v5898
        %5900 = vmatmul.bf16.gmra.mxu0 %v5136
        %v5901 = vpop.f32.mrf.mxu0
        %v5902 = vadd.f32 %v5869, %v5901
        %v5903 = vpop.f32.mrf.mxu0
        %5904 = vdwg.mxu0
        %5905 = vmatpush.bf16.msra.mxu0 %v4957
        %5906 = vmatpush.bf16.msra.mxu0 %v4953
        %5907 = vmatpush.bf16.msra.mxu0 %v4949
        %5908 = vmatpush.bf16.msra.mxu0 %v4945
        %5909 = vmatpush.bf16.msra.mxu0 %v4941
        %5910 = vmatpush.bf16.msra.mxu0 %v4937
        %5911 = vmatpush.bf16.msra.mxu0 %v4933
        %5912 = vmatpush.bf16.msra.mxu0 %v4929
        %5913 = vmatmul.bf16.gmra.mxu0 %v5105
        %v5914 = vpop.f32.mrf.mxu0
        %v5915 = vadd.f32 %v5882, %v5914
        %v5916 = vpop.f32.mrf.mxu0
        %v5917 = vadd.f32 %v5884, %v5916
        %5918 = vmatmul.bf16.gmra.mxu0 %v5113
        %v5919 = vpop.f32.mrf.mxu0
        %v5920 = vadd.f32 %v5887, %v5919
        %v5921 = vpop.f32.mrf.mxu0
        %v5922 = vadd.f32 %v5889, %v5921
        %5923 = vmatmul.bf16.gmra.mxu0 %v5121
        %v5924 = vpop.f32.mrf.mxu0
        %v5925 = vadd.f32 %v5892, %v5924
        %v5926 = vpop.f32.mrf.mxu0
        %v5927 = vadd.f32 %v5894, %v5926
        %5928 = vmatmul.bf16.gmra.mxu0 %v5129
        %v5929 = vpop.f32.mrf.mxu0
        %v5930 = vadd.f32 %v5897, %v5929
        %v5931 = vpop.f32.mrf.mxu0
        %v5932 = vadd.f32 %v5899, %v5931
        %5933 = vmatmul.bf16.gmra.mxu0 %v5137
        %v5934 = vpop.f32.mrf.mxu0
        %v5935 = vadd.f32 %v5902, %v5934
        %v5936 = vpop.f32.mrf.mxu0
        %5937 = vdwg.mxu0
        %5938 = vmatpush.bf16.msra.mxu0 %v4989
        %5939 = vmatpush.bf16.msra.mxu0 %v4985
        %5940 = vmatpush.bf16.msra.mxu0 %v4981
        %5941 = vmatpush.bf16.msra.mxu0 %v4977
        %5942 = vmatpush.bf16.msra.mxu0 %v4973
        %5943 = vmatpush.bf16.msra.mxu0 %v4969
        %5944 = vmatpush.bf16.msra.mxu0 %v4965
        %5945 = vmatpush.bf16.msra.mxu0 %v4961
        %5946 = vmatmul.bf16.gmra.mxu0 %v5106
        %v5947 = vpop.f32.mrf.mxu0
        %v5948 = vadd.f32 %v5915, %v5947
        %v5949 = vpop.f32.mrf.mxu0
        %v5950 = vadd.f32 %v5917, %v5949
        %5951 = vmatmul.bf16.gmra.mxu0 %v5114
        %v5952 = vpop.f32.mrf.mxu0
        %v5953 = vadd.f32 %v5920, %v5952
        %v5954 = vpop.f32.mrf.mxu0
        %v5955 = vadd.f32 %v5922, %v5954
        %5956 = vmatmul.bf16.gmra.mxu0 %v5122
        %v5957 = vpop.f32.mrf.mxu0
        %v5958 = vadd.f32 %v5925, %v5957
        %v5959 = vpop.f32.mrf.mxu0
        %v5960 = vadd.f32 %v5927, %v5959
        %5961 = vmatmul.bf16.gmra.mxu0 %v5130
        %v5962 = vpop.f32.mrf.mxu0
        %v5963 = vadd.f32 %v5930, %v5962
        %v5964 = vpop.f32.mrf.mxu0
        %v5965 = vadd.f32 %v5932, %v5964
        %5966 = vmatmul.bf16.gmra.mxu0 %v5138
        %v5967 = vpop.f32.mrf.mxu0
        %v5968 = vadd.f32 %v5935, %v5967
        %v5969 = vpop.f32.mrf.mxu0
        %5970 = vdwg.mxu0
        %5971 = vmatpush.bf16.msra.mxu0 %v4766
        %5972 = vmatpush.bf16.msra.mxu0 %v4762
        %5973 = vmatpush.bf16.msra.mxu0 %v4758
        %5974 = vmatpush.bf16.msra.mxu0 %v4754
        %5975 = vmatpush.bf16.msra.mxu0 %v4750
        %5976 = vmatpush.bf16.msra.mxu0 %v4746
        %5977 = vmatpush.bf16.msra.mxu0 %v4742
        %5978 = vmatpush.bf16.msra.mxu0 %v4738
        %5979 = vmatmul.bf16.gmra.mxu0 %v5099
        %v5980 = vpop.f32.mrf.mxu0
        %v5981 = vadd.f32 0.0, %v5980
        %v5982 = vpop.f32.mrf.mxu0
        %v5983 = vadd.f32 0.0, %v5982
        %5984 = vmatmul.bf16.gmra.mxu0 %v5107
        %v5985 = vpop.f32.mrf.mxu0
        %v5986 = vadd.f32 0.0, %v5985
        %v5987 = vpop.f32.mrf.mxu0
        %v5988 = vadd.f32 0.0, %v5987
        %5989 = vmatmul.bf16.gmra.mxu0 %v5115
        %v5990 = vpop.f32.mrf.mxu0
        %v5991 = vadd.f32 0.0, %v5990
        %v5992 = vpop.f32.mrf.mxu0
        %v5993 = vadd.f32 0.0, %v5992
        %5994 = vmatmul.bf16.gmra.mxu0 %v5123
        %v5995 = vpop.f32.mrf.mxu0
        %v5996 = vadd.f32 0.0, %v5995
        %v5997 = vpop.f32.mrf.mxu0
        %v5998 = vadd.f32 0.0, %v5997
        %5999 = vmatmul.bf16.gmra.mxu0 %v5131
        %v6000 = vpop.f32.mrf.mxu0
        %v6001 = vadd.f32 0.0, %v6000
        %v6002 = vpop.f32.mrf.mxu0
        %6003 = vdwg.mxu0
        %6004 = vmatpush.bf16.msra.mxu0 %v4798
        %6005 = vmatpush.bf16.msra.mxu0 %v4794
        %6006 = vmatpush.bf16.msra.mxu0 %v4790
        %6007 = vmatpush.bf16.msra.mxu0 %v4786
        %6008 = vmatpush.bf16.msra.mxu0 %v4782
        %6009 = vmatpush.bf16.msra.mxu0 %v4778
        %6010 = vmatpush.bf16.msra.mxu0 %v4774
        %6011 = vmatpush.bf16.msra.mxu0 %v4770
        %6012 = vmatmul.bf16.gmra.mxu0 %v5100
        %v6013 = vpop.f32.mrf.mxu0
        %v6014 = vadd.f32 %v5981, %v6013
        %v6015 = vpop.f32.mrf.mxu0
        %v6016 = vadd.f32 %v5983, %v6015
        %6017 = vmatmul.bf16.gmra.mxu0 %v5108
        %v6018 = vpop.f32.mrf.mxu0
        %v6019 = vadd.f32 %v5986, %v6018
        %v6020 = vpop.f32.mrf.mxu0
        %v6021 = vadd.f32 %v5988, %v6020
        %6022 = vmatmul.bf16.gmra.mxu0 %v5116
        %v6023 = vpop.f32.mrf.mxu0
        %v6024 = vadd.f32 %v5991, %v6023
        %v6025 = vpop.f32.mrf.mxu0
        %v6026 = vadd.f32 %v5993, %v6025
        %6027 = vmatmul.bf16.gmra.mxu0 %v5124
        %v6028 = vpop.f32.mrf.mxu0
        %v6029 = vadd.f32 %v5996, %v6028
        %v6030 = vpop.f32.mrf.mxu0
        %v6031 = vadd.f32 %v5998, %v6030
        %6032 = vmatmul.bf16.gmra.mxu0 %v5132
        %v6033 = vpop.f32.mrf.mxu0
        %v6034 = vadd.f32 %v6001, %v6033
        %v6035 = vpop.f32.mrf.mxu0
        %6036 = vdwg.mxu0
        %6037 = vmatpush.bf16.msra.mxu0 %v4830
        %6038 = vmatpush.bf16.msra.mxu0 %v4826
        %6039 = vmatpush.bf16.msra.mxu0 %v4822
        %6040 = vmatpush.bf16.msra.mxu0 %v4818
        %6041 = vmatpush.bf16.msra.mxu0 %v4814
        %6042 = vmatpush.bf16.msra.mxu0 %v4810
        %6043 = vmatpush.bf16.msra.mxu0 %v4806
        %6044 = vmatpush.bf16.msra.mxu0 %v4802
        %6045 = vmatmul.bf16.gmra.mxu0 %v5101
        %v6046 = vpop.f32.mrf.mxu0
        %v6047 = vadd.f32 %v6014, %v6046
        %v6048 = vpop.f32.mrf.mxu0
        %v6049 = vadd.f32 %v6016, %v6048
        %6050 = vmatmul.bf16.gmra.mxu0 %v5109
        %v6051 = vpop.f32.mrf.mxu0
        %v6052 = vadd.f32 %v6019, %v6051
        %v6053 = vpop.f32.mrf.mxu0
        %v6054 = vadd.f32 %v6021, %v6053
        %6055 = vmatmul.bf16.gmra.mxu0 %v5117
        %v6056 = vpop.f32.mrf.mxu0
        %v6057 = vadd.f32 %v6024, %v6056
        %v6058 = vpop.f32.mrf.mxu0
        %v6059 = vadd.f32 %v6026, %v6058
        %6060 = vmatmul.bf16.gmra.mxu0 %v5125
        %v6061 = vpop.f32.mrf.mxu0
        %v6062 = vadd.f32 %v6029, %v6061
        %v6063 = vpop.f32.mrf.mxu0
        %v6064 = vadd.f32 %v6031, %v6063
        %6065 = vmatmul.bf16.gmra.mxu0 %v5133
        %v6066 = vpop.f32.mrf.mxu0
        %v6067 = vadd.f32 %v6034, %v6066
        %v6068 = vpop.f32.mrf.mxu0
        %6069 = vdwg.mxu0
        %6070 = vmatpush.bf16.msra.mxu0 %v4862
        %6071 = vmatpush.bf16.msra.mxu0 %v4858
        %6072 = vmatpush.bf16.msra.mxu0 %v4854
        %6073 = vmatpush.bf16.msra.mxu0 %v4850
        %6074 = vmatpush.bf16.msra.mxu0 %v4846
        %6075 = vmatpush.bf16.msra.mxu0 %v4842
        %6076 = vmatpush.bf16.msra.mxu0 %v4838
        %6077 = vmatpush.bf16.msra.mxu0 %v4834
        %6078 = vmatmul.bf16.gmra.mxu0 %v5102
        %v6079 = vpop.f32.mrf.mxu0
        %v6080 = vadd.f32 %v6047, %v6079
        %v6081 = vpop.f32.mrf.mxu0
        %v6082 = vadd.f32 %v6049, %v6081
        %6083 = vmatmul.bf16.gmra.mxu0 %v5110
        %v6084 = vpop.f32.mrf.mxu0
        %v6085 = vadd.f32 %v6052, %v6084
        %v6086 = vpop.f32.mrf.mxu0
        %v6087 = vadd.f32 %v6054, %v6086
        %6088 = vmatmul.bf16.gmra.mxu0 %v5118
        %v6089 = vpop.f32.mrf.mxu0
        %v6090 = vadd.f32 %v6057, %v6089
        %v6091 = vpop.f32.mrf.mxu0
        %v6092 = vadd.f32 %v6059, %v6091
        %6093 = vmatmul.bf16.gmra.mxu0 %v5126
        %v6094 = vpop.f32.mrf.mxu0
        %v6095 = vadd.f32 %v6062, %v6094
        %v6096 = vpop.f32.mrf.mxu0
        %v6097 = vadd.f32 %v6064, %v6096
        %6098 = vmatmul.bf16.gmra.mxu0 %v5134
        %v6099 = vpop.f32.mrf.mxu0
        %v6100 = vadd.f32 %v6067, %v6099
        %v6101 = vpop.f32.mrf.mxu0
        %6102 = vdwg.mxu0
        %6103 = vmatpush.bf16.msra.mxu0 %v4894
        %6104 = vmatpush.bf16.msra.mxu0 %v4890
        %6105 = vmatpush.bf16.msra.mxu0 %v4886
        %6106 = vmatpush.bf16.msra.mxu0 %v4882
        %6107 = vmatpush.bf16.msra.mxu0 %v4878
        %6108 = vmatpush.bf16.msra.mxu0 %v4874
        %6109 = vmatpush.bf16.msra.mxu0 %v4870
        %6110 = vmatpush.bf16.msra.mxu0 %v4866
        %6111 = vmatmul.bf16.gmra.mxu0 %v5103
        %v6112 = vpop.f32.mrf.mxu0
        %v6113 = vadd.f32 %v6080, %v6112
        %v6114 = vpop.f32.mrf.mxu0
        %v6115 = vadd.f32 %v6082, %v6114
        %6116 = vmatmul.bf16.gmra.mxu0 %v5111
        %v6117 = vpop.f32.mrf.mxu0
        %v6118 = vadd.f32 %v6085, %v6117
        %v6119 = vpop.f32.mrf.mxu0
        %v6120 = vadd.f32 %v6087, %v6119
        %6121 = vmatmul.bf16.gmra.mxu0 %v5119
        %v6122 = vpop.f32.mrf.mxu0
        %v6123 = vadd.f32 %v6090, %v6122
        %v6124 = vpop.f32.mrf.mxu0
        %v6125 = vadd.f32 %v6092, %v6124
        %6126 = vmatmul.bf16.gmra.mxu0 %v5127
        %v6127 = vpop.f32.mrf.mxu0
        %v6128 = vadd.f32 %v6095, %v6127
        %v6129 = vpop.f32.mrf.mxu0
        %v6130 = vadd.f32 %v6097, %v6129
        %6131 = vmatmul.bf16.gmra.mxu0 %v5135
        %v6132 = vpop.f32.mrf.mxu0
        %v6133 = vadd.f32 %v6100, %v6132
        %v6134 = vpop.f32.mrf.mxu0
        %6135 = vdwg.mxu0
        %6136 = vmatpush.bf16.msra.mxu0 %v4926
        %6137 = vmatpush.bf16.msra.mxu0 %v4922
        %6138 = vmatpush.bf16.msra.mxu0 %v4918
        %6139 = vmatpush.bf16.msra.mxu0 %v4914
        %6140 = vmatpush.bf16.msra.mxu0 %v4910
        %6141 = vmatpush.bf16.msra.mxu0 %v4906
        %6142 = vmatpush.bf16.msra.mxu0 %v4902
        %6143 = vmatpush.bf16.msra.mxu0 %v4898
        %6144 = vmatmul.bf16.gmra.mxu0 %v5104
        %v6145 = vpop.f32.mrf.mxu0
        %v6146 = vadd.f32 %v6113, %v6145
        %v6147 = vpop.f32.mrf.mxu0
        %v6148 = vadd.f32 %v6115, %v6147
        %6149 = vmatmul.bf16.gmra.mxu0 %v5112
        %v6150 = vpop.f32.mrf.mxu0
        %v6151 = vadd.f32 %v6118, %v6150
        %v6152 = vpop.f32.mrf.mxu0
        %v6153 = vadd.f32 %v6120, %v6152
        %6154 = vmatmul.bf16.gmra.mxu0 %v5120
        %v6155 = vpop.f32.mrf.mxu0
        %v6156 = vadd.f32 %v6123, %v6155
        %v6157 = vpop.f32.mrf.mxu0
        %v6158 = vadd.f32 %v6125, %v6157
        %6159 = vmatmul.bf16.gmra.mxu0 %v5128
        %v6160 = vpop.f32.mrf.mxu0
        %v6161 = vadd.f32 %v6128, %v6160
        %v6162 = vpop.f32.mrf.mxu0
        %v6163 = vadd.f32 %v6130, %v6162
        %6164 = vmatmul.bf16.gmra.mxu0 %v5136
        %v6165 = vpop.f32.mrf.mxu0
        %v6166 = vadd.f32 %v6133, %v6165
        %v6167 = vpop.f32.mrf.mxu0
        %6168 = vdwg.mxu0
        %6169 = vmatpush.bf16.msra.mxu0 %v4958
        %6170 = vmatpush.bf16.msra.mxu0 %v4954
        %6171 = vmatpush.bf16.msra.mxu0 %v4950
        %6172 = vmatpush.bf16.msra.mxu0 %v4946
        %6173 = vmatpush.bf16.msra.mxu0 %v4942
        %6174 = vmatpush.bf16.msra.mxu0 %v4938
        %6175 = vmatpush.bf16.msra.mxu0 %v4934
        %6176 = vmatpush.bf16.msra.mxu0 %v4930
        %6177 = vmatmul.bf16.gmra.mxu0 %v5105
        %v6178 = vpop.f32.mrf.mxu0
        %v6179 = vadd.f32 %v6146, %v6178
        %v6180 = vpop.f32.mrf.mxu0
        %v6181 = vadd.f32 %v6148, %v6180
        %6182 = vmatmul.bf16.gmra.mxu0 %v5113
        %v6183 = vpop.f32.mrf.mxu0
        %v6184 = vadd.f32 %v6151, %v6183
        %v6185 = vpop.f32.mrf.mxu0
        %v6186 = vadd.f32 %v6153, %v6185
        %6187 = vmatmul.bf16.gmra.mxu0 %v5121
        %v6188 = vpop.f32.mrf.mxu0
        %v6189 = vadd.f32 %v6156, %v6188
        %v6190 = vpop.f32.mrf.mxu0
        %v6191 = vadd.f32 %v6158, %v6190
        %6192 = vmatmul.bf16.gmra.mxu0 %v5129
        %v6193 = vpop.f32.mrf.mxu0
        %v6194 = vadd.f32 %v6161, %v6193
        %v6195 = vpop.f32.mrf.mxu0
        %v6196 = vadd.f32 %v6163, %v6195
        %6197 = vmatmul.bf16.gmra.mxu0 %v5137
        %v6198 = vpop.f32.mrf.mxu0
        %v6199 = vadd.f32 %v6166, %v6198
        %v6200 = vpop.f32.mrf.mxu0
        %6201 = vdwg.mxu0
        %6202 = vmatpush.bf16.msra.mxu0 %v4990
        %6203 = vmatpush.bf16.msra.mxu0 %v4986
        %6204 = vmatpush.bf16.msra.mxu0 %v4982
        %6205 = vmatpush.bf16.msra.mxu0 %v4978
        %6206 = vmatpush.bf16.msra.mxu0 %v4974
        %6207 = vmatpush.bf16.msra.mxu0 %v4970
        %6208 = vmatpush.bf16.msra.mxu0 %v4966
        %6209 = vmatpush.bf16.msra.mxu0 %v4962
        %6210 = vmatmul.bf16.gmra.mxu0 %v5106
        %v6211 = vpop.f32.mrf.mxu0
        %v6212 = vadd.f32 %v6179, %v6211
        %v6213 = vpop.f32.mrf.mxu0
        %v6214 = vadd.f32 %v6181, %v6213
        %6215 = vmatmul.bf16.gmra.mxu0 %v5114
        %v6216 = vpop.f32.mrf.mxu0
        %v6217 = vadd.f32 %v6184, %v6216
        %v6218 = vpop.f32.mrf.mxu0
        %v6219 = vadd.f32 %v6186, %v6218
        %6220 = vmatmul.bf16.gmra.mxu0 %v5122
        %v6221 = vpop.f32.mrf.mxu0
        %v6222 = vadd.f32 %v6189, %v6221
        %v6223 = vpop.f32.mrf.mxu0
        %v6224 = vadd.f32 %v6191, %v6223
        %6225 = vmatmul.bf16.gmra.mxu0 %v5130
        %v6226 = vpop.f32.mrf.mxu0
        %v6227 = vadd.f32 %v6194, %v6226
        %v6228 = vpop.f32.mrf.mxu0
        %v6229 = vadd.f32 %v6196, %v6228
        %6230 = vmatmul.bf16.gmra.mxu0 %v5138
        %v6231 = vpop.f32.mrf.mxu0
        %v6232 = vadd.f32 %v6199, %v6231
        %v6233 = vpop.f32.mrf.mxu0
        %6234 = vdwg.mxu0
        %v6235 = vrcp.pop %v5440
        %v6236 = vrcp.pop %v5704
        %v6237 = vrcp.pop %v5968
        %v6238 = vrcp.pop %v6232
        %v6239 = vperm.slane %v6235, 0
        %v6240 = vperm.slane %v6236, 0
        %v6241 = vperm.slane %v6237, 0
        %v6242 = vperm.slane %v6238, 0
        %v6243 = vmul.f32 %v5420, %v6239
        %v6244 = vmul.f32 %v5684, %v6240
        %v6245 = vmul.f32 %v5948, %v6241
        %v6246 = vmul.f32 %v6212, %v6242
        %v6247 = vmul.f32 %v5422, %v6239
        %v6248 = vmul.f32 %v5686, %v6240
        %v6249 = vmul.f32 %v5950, %v6241
        %v6250 = vmul.f32 %v6214, %v6242
        %v6251 = vmul.f32 %v5425, %v6239
        %v6252 = vmul.f32 %v5689, %v6240
        %v6253 = vmul.f32 %v5953, %v6241
        %v6254 = vmul.f32 %v6217, %v6242
        %v6255 = vmul.f32 %v5427, %v6239
        %v6256 = vmul.f32 %v5691, %v6240
        %v6257 = vmul.f32 %v5955, %v6241
        %v6258 = vmul.f32 %v6219, %v6242
        %v6259 = vmul.f32 %v5430, %v6239
        %v6260 = vmul.f32 %v5694, %v6240
        %v6261 = vmul.f32 %v5958, %v6241
        %v6262 = vmul.f32 %v6222, %v6242
        %v6263 = vmul.f32 %v5432, %v6239
        %v6264 = vmul.f32 %v5696, %v6240
        %v6265 = vmul.f32 %v5960, %v6241
        %v6266 = vmul.f32 %v6224, %v6242
        %v6267 = vmul.f32 %v5435, %v6239
        %v6268 = vmul.f32 %v5699, %v6240
        %v6269 = vmul.f32 %v5963, %v6241
        %v6270 = vmul.f32 %v6227, %v6242
        %v6271 = vmul.f32 %v5437, %v6239
        %v6272 = vmul.f32 %v5701, %v6240
        %v6273 = vmul.f32 %v5965, %v6241
        %v6274 = vmul.f32 %v6229, %v6242
        %v6275 = vld [vmem:[%s5] sm:$0xf]
        %v6276 = vld [vmem:[%s5 + $0x4] sm:$0xf]
        %v6277 = vld [vmem:[%s5 + $0x8] sm:$0xf]
        %v6278 = vld [vmem:[%s5 + $0xc] sm:$0xf]
        %v6279 = vld [vmem:[%s5 + $0x10] sm:$0xf]
        %v6280 = vld [vmem:[%s5 + $0x14] sm:$0xf]
        %v6281 = vld [vmem:[%s5 + $0x18] sm:$0xf]
        %v6282 = vld [vmem:[%s5 + $0x1c] sm:$0xf]
        %v6283 = vpack.c.bf16 %v6247, %v6243
        %v6284 = vpack.c.bf16 %v6248, %v6244
        %v6285 = vpack.c.bf16 %v6249, %v6245
        %v6286 = vpack.c.bf16 %v6250, %v6246
        %v6287 = vpack.c.bf16 %v6255, %v6251
        %v6288 = vpack.c.bf16 %v6256, %v6252
        %v6289 = vpack.c.bf16 %v6257, %v6253
        %v6290 = vpack.c.bf16 %v6258, %v6254
        %v6291 = vpack.c.bf16 %v6263, %v6259
        %v6292 = vpack.c.bf16 %v6264, %v6260
        %v6293 = vpack.c.bf16 %v6265, %v6261
        %v6294 = vpack.c.bf16 %v6266, %v6262
        %v6295 = vpack.c.bf16 %v6271, %v6267
        %v6296 = vpack.c.bf16 %v6272, %v6268
        %v6297 = vpack.c.bf16 %v6273, %v6269
        %v6298 = vpack.c.bf16 %v6274, %v6270
        %v6307 = vunpack.c.l.b16 %v6275
        %v6308 = vunpack.c.l.b16 %v6276
        %v6309 = vunpack.c.l.b16 %v6277
        %v6310 = vunpack.c.l.b16 %v6278
        %v6311 = vunpack.c.l.b16 %v6279
        %v6312 = vunpack.c.l.b16 %v6280
        %v6313 = vunpack.c.l.b16 %v6281
        %v6314 = vunpack.c.l.b16 %v6282
        %v6315 = vpack.c.b16 %v6308, %v6307
        %v6316 = vpack.c.b16 %v6310, %v6309
        %v6317 = vpack.c.b16 %v6312, %v6311
        %v6318 = vpack.c.b16 %v6314, %v6313
        %v6320 = vsel %vm1158, %v6315, 0
        %v6323 = vsel %vm1158, %v6316, 0
        %v6326 = vsel %vm1158, %v6317, 0
        %v6329 = vsel %vm1158, %v6318, 0
        %6331 = vmatpush.bf16.msra.mxu0 0
        %6332 = vmatpush.bf16.msra.mxu0 0
        %6333 = vmatpush.bf16.msra.mxu0 0
        %6334 = vmatpush.bf16.msra.mxu0 0
        %6335 = vmatpush.bf16.msra.mxu0 %v6295
        %6336 = vmatpush.bf16.msra.mxu0 %v6291
        %6337 = vmatpush.bf16.msra.mxu0 %v6287
        %6338 = vmatpush.bf16.msra.mxu0 %v6283
        %6339 = vmatmul.bf16.gmra.mxu0 %v6320
        %v6340 = vpop.f32.mrf.mxu0
        %v6341 = vadd.f32 0.0, %v6340
        %v6342 = vpop.f32.mrf.mxu0
        %v6343 = vadd.f32 0.0, %v6342
        %6344 = vmatmul.bf16.gmra.mxu0 %v6323
        %v6345 = vpop.f32.mrf.mxu0
        %v6346 = vadd.f32 0.0, %v6345
        %v6347 = vpop.f32.mrf.mxu0
        %v6348 = vadd.f32 0.0, %v6347
        %6349 = vmatmul.bf16.gmra.mxu0 %v6326
        %v6350 = vpop.f32.mrf.mxu0
        %v6351 = vadd.f32 0.0, %v6350
        %v6352 = vpop.f32.mrf.mxu0
        %v6353 = vadd.f32 0.0, %v6352
        %6354 = vmatmul.bf16.gmra.mxu0 %v6329
        %v6355 = vpop.f32.mrf.mxu0
        %v6356 = vadd.f32 0.0, %v6355
        %v6357 = vpop.f32.mrf.mxu0
        %v6358 = vadd.f32 0.0, %v6357
        %6359 = vdwg.mxu0
        %6360 = vmatpush.bf16.msra.mxu0 0
        %6361 = vmatpush.bf16.msra.mxu0 0
        %6362 = vmatpush.bf16.msra.mxu0 0
        %6363 = vmatpush.bf16.msra.mxu0 0
        %6364 = vmatpush.bf16.msra.mxu0 %v6296
        %6365 = vmatpush.bf16.msra.mxu0 %v6292
        %6366 = vmatpush.bf16.msra.mxu0 %v6288
        %6367 = vmatpush.bf16.msra.mxu0 %v6284
        %6368 = vmatmul.bf16.gmra.mxu0 %v6320
        %v6369 = vpop.f32.mrf.mxu0
        %v6370 = vadd.f32 0.0, %v6369
        %v6371 = vpop.f32.mrf.mxu0
        %v6372 = vadd.f32 0.0, %v6371
        %6373 = vmatmul.bf16.gmra.mxu0 %v6323
        %v6374 = vpop.f32.mrf.mxu0
        %v6375 = vadd.f32 0.0, %v6374
        %v6376 = vpop.f32.mrf.mxu0
        %v6377 = vadd.f32 0.0, %v6376
        %6378 = vmatmul.bf16.gmra.mxu0 %v6326
        %v6379 = vpop.f32.mrf.mxu0
        %v6380 = vadd.f32 0.0, %v6379
        %v6381 = vpop.f32.mrf.mxu0
        %v6382 = vadd.f32 0.0, %v6381
        %6383 = vmatmul.bf16.gmra.mxu0 %v6329
        %v6384 = vpop.f32.mrf.mxu0
        %v6385 = vadd.f32 0.0, %v6384
        %v6386 = vpop.f32.mrf.mxu0
        %v6387 = vadd.f32 0.0, %v6386
        %6388 = vdwg.mxu0
        %6389 = vmatpush.bf16.msra.mxu0 0
        %6390 = vmatpush.bf16.msra.mxu0 0
        %6391 = vmatpush.bf16.msra.mxu0 0
        %6392 = vmatpush.bf16.msra.mxu0 0
        %6393 = vmatpush.bf16.msra.mxu0 %v6297
        %6394 = vmatpush.bf16.msra.mxu0 %v6293
        %6395 = vmatpush.bf16.msra.mxu0 %v6289
        %6396 = vmatpush.bf16.msra.mxu0 %v6285
        %6397 = vmatmul.bf16.gmra.mxu0 %v6320
        %v6398 = vpop.f32.mrf.mxu0
        %v6399 = vadd.f32 0.0, %v6398
        %v6400 = vpop.f32.mrf.mxu0
        %v6401 = vadd.f32 0.0, %v6400
        %6402 = vmatmul.bf16.gmra.mxu0 %v6323
        %v6403 = vpop.f32.mrf.mxu0
        %v6404 = vadd.f32 0.0, %v6403
        %v6405 = vpop.f32.mrf.mxu0
        %v6406 = vadd.f32 0.0, %v6405
        %6407 = vmatmul.bf16.gmra.mxu0 %v6326
        %v6408 = vpop.f32.mrf.mxu0
        %v6409 = vadd.f32 0.0, %v6408
        %v6410 = vpop.f32.mrf.mxu0
        %v6411 = vadd.f32 0.0, %v6410
        %6412 = vmatmul.bf16.gmra.mxu0 %v6329
        %v6413 = vpop.f32.mrf.mxu0
        %v6414 = vadd.f32 0.0, %v6413
        %v6415 = vpop.f32.mrf.mxu0
        %v6416 = vadd.f32 0.0, %v6415
        %6417 = vdwg.mxu0
        %6418 = vmatpush.bf16.msra.mxu0 0
        %6419 = vmatpush.bf16.msra.mxu0 0
        %6420 = vmatpush.bf16.msra.mxu0 0
        %6421 = vmatpush.bf16.msra.mxu0 0
        %6422 = vmatpush.bf16.msra.mxu0 %v6298
        %6423 = vmatpush.bf16.msra.mxu0 %v6294
        %6424 = vmatpush.bf16.msra.mxu0 %v6290
        %6425 = vmatpush.bf16.msra.mxu0 %v6286
        %6426 = vmatmul.bf16.gmra.mxu0 %v6320
        %v6427 = vpop.f32.mrf.mxu0
        %v6428 = vadd.f32 0.0, %v6427
        %v6429 = vpop.f32.mrf.mxu0
        %v6430 = vadd.f32 0.0, %v6429
        %6431 = vmatmul.bf16.gmra.mxu0 %v6323
        %v6432 = vpop.f32.mrf.mxu0
        %v6433 = vadd.f32 0.0, %v6432
        %v6434 = vpop.f32.mrf.mxu0
        %v6435 = vadd.f32 0.0, %v6434
        %6436 = vmatmul.bf16.gmra.mxu0 %v6326
        %v6437 = vpop.f32.mrf.mxu0
        %v6438 = vadd.f32 0.0, %v6437
        %v6439 = vpop.f32.mrf.mxu0
        %v6440 = vadd.f32 0.0, %v6439
        %6441 = vmatmul.bf16.gmra.mxu0 %v6329
        %v6442 = vpop.f32.mrf.mxu0
        %v6443 = vadd.f32 0.0, %v6442
        %v6444 = vpop.f32.mrf.mxu0
        %v6445 = vadd.f32 0.0, %v6444
        %6446 = vdwg.mxu0
        %v6447 = vadd.f32 %v546, %v6341
        %v6448 = vadd.f32 %v547, %v6370
        %v6449 = vadd.f32 %v548, %v6399
        %v6450 = vadd.f32 %v549, %v6428
        %v6451 = vadd.f32 %v550, %v6343
        %v6452 = vadd.f32 %v551, %v6372
        %v6453 = vadd.f32 %v552, %v6401
        %v6454 = vadd.f32 %v553, %v6430
        %v6455 = vadd.f32 %v554, %v6346
        %v6456 = vadd.f32 %v555, %v6375
        %v6457 = vadd.f32 %v556, %v6404
        %v6458 = vadd.f32 %v557, %v6433
        %v6459 = vadd.f32 %v558, %v6348
        %v6460 = vadd.f32 %v559, %v6377
        %v6461 = vadd.f32 %v560, %v6406
        %v6462 = vadd.f32 %v561, %v6435
        %v6463 = vadd.f32 %v562, %v6351
        %v6464 = vadd.f32 %v563, %v6380
        %v6465 = vadd.f32 %v564, %v6409
        %v6466 = vadd.f32 %v565, %v6438
        %v6467 = vadd.f32 %v566, %v6353
        %v6468 = vadd.f32 %v567, %v6382
        %v6469 = vadd.f32 %v568, %v6411
        %v6470 = vadd.f32 %v569, %v6440
        %v6471 = vadd.f32 %v570, %v6356
        %v6472 = vadd.f32 %v571, %v6385
        %v6473 = vadd.f32 %v572, %v6414
        %v6474 = vadd.f32 %v573, %v6443
        %v6475 = vadd.f32 %v574, %v6358
        %v6476 = vadd.f32 %v575, %v6387
        %v6477 = vadd.f32 %v576, %v6416
        %v6478 = vadd.f32 %v577, %v6445
        %v6479 = vadd.f32 %v6447, %v6451
        %v6480 = vadd.f32 %v6479, %v6455
        %v6481 = vadd.f32 %v6480, %v6459
        %v6482 = vadd.f32 %v6481, %v6463
        %v6483 = vadd.f32 %v6482, %v6467
        %v6484 = vadd.f32 %v6483, %v6471
        %v6485 = vadd.f32 %v6484, %v6475
        %v6486 = vrot.slane %v6485, 4
        %v6487 = vadd.f32 %v6485, %v6486
        %v6488 = vrot.slane %v6487, 2
        %v6489 = vadd.f32 %v6487, %v6488
        %v6490 = vrot.slane %v6489, 1
        %v6491 = vadd.f32 %v6489, %v6490
        %v6492 = vadd.f32 %v6448, %v6452
        %v6493 = vadd.f32 %v6492, %v6456
        %v6494 = vadd.f32 %v6493, %v6460
        %v6495 = vadd.f32 %v6494, %v6464
        %v6496 = vadd.f32 %v6495, %v6468
        %v6497 = vadd.f32 %v6496, %v6472
        %v6498 = vadd.f32 %v6497, %v6476
        %v6499 = vrot.slane %v6498, 4
        %v6500 = vadd.f32 %v6498, %v6499
        %v6501 = vrot.slane %v6500, 2
        %v6502 = vadd.f32 %v6500, %v6501
        %v6503 = vrot.slane %v6502, 1
        %v6504 = vadd.f32 %v6502, %v6503
        %v6505 = vadd.f32 %v6449, %v6453
        %v6506 = vadd.f32 %v6505, %v6457
        %v6507 = vadd.f32 %v6506, %v6461
        %v6508 = vadd.f32 %v6507, %v6465
        %v6509 = vadd.f32 %v6508, %v6469
        %v6510 = vadd.f32 %v6509, %v6473
        %v6511 = vadd.f32 %v6510, %v6477
        %v6512 = vrot.slane %v6511, 4
        %v6513 = vadd.f32 %v6511, %v6512
        %v6514 = vrot.slane %v6513, 2
        %v6515 = vadd.f32 %v6513, %v6514
        %v6516 = vrot.slane %v6515, 1
        %v6517 = vadd.f32 %v6515, %v6516
        %v6518 = vadd.f32 %v6450, %v6454
        %v6519 = vadd.f32 %v6518, %v6458
        %v6520 = vadd.f32 %v6519, %v6462
        %v6521 = vadd.f32 %v6520, %v6466
        %v6522 = vadd.f32 %v6521, %v6470
        %v6523 = vadd.f32 %v6522, %v6474
        %v6524 = vadd.f32 %v6523, %v6478
        %v6525 = vrot.slane %v6524, 4
        %v6526 = vadd.f32 %v6524, %v6525
        %v6527 = vrot.slane %v6526, 2
        %v6528 = vadd.f32 %v6526, %v6527
        %v6529 = vrot.slane %v6528, 1
        %v6530 = vadd.f32 %v6528, %v6529
        %v6531 = vrcp.pop 64.0
        %v6532 = vmul.f32 64.0, %v6531
        %v6533 = vsub.f32 1.0, %v6532
        %v6534 = vmul.f32 %v6531, %v6533
        %v6535 = vadd.f32 %v6531, %v6534
        %vm6536 = vweird.f32 %v6531
        %v6537 = vsel %vm6536, %v6531, %v6535
        %v6538 = vmul.f32 %v6491, %v6537
        %v6539 = vmul.f32 %v6504, %v6537
        %v6540 = vmul.f32 %v6517, %v6537
        %v6541 = vmul.f32 %v6530, %v6537
        %v6542 = vsub.f32 %v6447, %v6538
        %v6543 = vsub.f32 %v6448, %v6539
        %v6544 = vsub.f32 %v6449, %v6540
        %v6545 = vsub.f32 %v6450, %v6541
        %v6546 = vsub.f32 %v6451, %v6538
        %v6547 = vsub.f32 %v6452, %v6539
        %v6548 = vsub.f32 %v6453, %v6540
        %v6549 = vsub.f32 %v6454, %v6541
        %v6550 = vsub.f32 %v6455, %v6538
        %v6551 = vsub.f32 %v6456, %v6539
        %v6552 = vsub.f32 %v6457, %v6540
        %v6553 = vsub.f32 %v6458, %v6541
        %v6554 = vsub.f32 %v6459, %v6538
        %v6555 = vsub.f32 %v6460, %v6539
        %v6556 = vsub.f32 %v6461, %v6540
        %v6557 = vsub.f32 %v6462, %v6541
        %v6558 = vsub.f32 %v6463, %v6538
        %v6559 = vsub.f32 %v6464, %v6539
        %v6560 = vsub.f32 %v6465, %v6540
        %v6561 = vsub.f32 %v6466, %v6541
        %v6562 = vsub.f32 %v6467, %v6538
        %v6563 = vsub.f32 %v6468, %v6539
        %v6564 = vsub.f32 %v6469, %v6540
        %v6565 = vsub.f32 %v6470, %v6541
        %v6566 = vsub.f32 %v6471, %v6538
        %v6567 = vsub.f32 %v6472, %v6539
        %v6568 = vsub.f32 %v6473, %v6540
        %v6569 = vsub.f32 %v6474, %v6541
        %v6570 = vsub.f32 %v6475, %v6538
        %v6571 = vsub.f32 %v6476, %v6539
        %v6572 = vsub.f32 %v6477, %v6540
        %v6573 = vsub.f32 %v6478, %v6541
        %v6574 = vmul.f32 %v6542, %v6542
        %v6575 = vmul.f32 %v6543, %v6543
        %v6576 = vmul.f32 %v6544, %v6544
        %v6577 = vmul.f32 %v6545, %v6545
        %v6578 = vmul.f32 %v6546, %v6546
        %v6579 = vmul.f32 %v6547, %v6547
        %v6580 = vmul.f32 %v6548, %v6548
        %v6581 = vmul.f32 %v6549, %v6549
        %v6582 = vmul.f32 %v6550, %v6550
        %v6583 = vmul.f32 %v6551, %v6551
        %v6584 = vmul.f32 %v6552, %v6552
        %v6585 = vmul.f32 %v6553, %v6553
        %v6586 = vmul.f32 %v6554, %v6554
        %v6587 = vmul.f32 %v6555, %v6555
        %v6588 = vmul.f32 %v6556, %v6556
        %v6589 = vmul.f32 %v6557, %v6557
        %v6590 = vmul.f32 %v6558, %v6558
        %v6591 = vmul.f32 %v6559, %v6559
        %v6592 = vmul.f32 %v6560, %v6560
        %v6593 = vmul.f32 %v6561, %v6561
        %v6594 = vmul.f32 %v6562, %v6562
        %v6595 = vmul.f32 %v6563, %v6563
        %v6596 = vmul.f32 %v6564, %v6564
        %v6597 = vmul.f32 %v6565, %v6565
        %v6598 = vmul.f32 %v6566, %v6566
        %v6599 = vmul.f32 %v6567, %v6567
        %v6600 = vmul.f32 %v6568, %v6568
        %v6601 = vmul.f32 %v6569, %v6569
        %v6602 = vmul.f32 %v6570, %v6570
        %v6603 = vmul.f32 %v6571, %v6571
        %v6604 = vmul.f32 %v6572, %v6572
        %v6605 = vmul.f32 %v6573, %v6573
        %v6606 = vadd.f32 %v6574, %v6578
        %v6607 = vadd.f32 %v6606, %v6582
        %v6608 = vadd.f32 %v6607, %v6586
        %v6609 = vadd.f32 %v6608, %v6590
        %v6610 = vadd.f32 %v6609, %v6594
        %v6611 = vadd.f32 %v6610, %v6598
        %v6612 = vadd.f32 %v6611, %v6602
        %v6613 = vrot.slane %v6612, 4
        %v6614 = vadd.f32 %v6612, %v6613
        %v6615 = vrot.slane %v6614, 2
        %v6616 = vadd.f32 %v6614, %v6615
        %v6617 = vrot.slane %v6616, 1
        %v6618 = vadd.f32 %v6616, %v6617
        %v6619 = vadd.f32 %v6575, %v6579
        %v6620 = vadd.f32 %v6619, %v6583
        %v6621 = vadd.f32 %v6620, %v6587
        %v6622 = vadd.f32 %v6621, %v6591
        %v6623 = vadd.f32 %v6622, %v6595
        %v6624 = vadd.f32 %v6623, %v6599
        %v6625 = vadd.f32 %v6624, %v6603
        %v6626 = vrot.slane %v6625, 4
        %v6627 = vadd.f32 %v6625, %v6626
        %v6628 = vrot.slane %v6627, 2
        %v6629 = vadd.f32 %v6627, %v6628
        %v6630 = vrot.slane %v6629, 1
        %v6631 = vadd.f32 %v6629, %v6630
        %v6632 = vadd.f32 %v6576, %v6580
        %v6633 = vadd.f32 %v6632, %v6584
        %v6634 = vadd.f32 %v6633, %v6588
        %v6635 = vadd.f32 %v6634, %v6592
        %v6636 = vadd.f32 %v6635, %v6596
        %v6637 = vadd.f32 %v6636, %v6600
        %v6638 = vadd.f32 %v6637, %v6604
        %v6639 = vrot.slane %v6638, 4
        %v6640 = vadd.f32 %v6638, %v6639
        %v6641 = vrot.slane %v6640, 2
        %v6642 = vadd.f32 %v6640, %v6641
        %v6643 = vrot.slane %v6642, 1
        %v6644 = vadd.f32 %v6642, %v6643
        %v6645 = vadd.f32 %v6577, %v6581
        %v6646 = vadd.f32 %v6645, %v6585
        %v6647 = vadd.f32 %v6646, %v6589
        %v6648 = vadd.f32 %v6647, %v6593
        %v6649 = vadd.f32 %v6648, %v6597
        %v6650 = vadd.f32 %v6649, %v6601
        %v6651 = vadd.f32 %v6650, %v6605
        %v6652 = vrot.slane %v6651, 4
        %v6653 = vadd.f32 %v6651, %v6652
        %v6654 = vrot.slane %v6653, 2
        %v6655 = vadd.f32 %v6653, %v6654
        %v6656 = vrot.slane %v6655, 1
        %v6657 = vadd.f32 %v6655, %v6656
        %v6658 = vmul.f32 %v6618, %v6537
        %v6659 = vmul.f32 %v6631, %v6537
        %v6660 = vmul.f32 %v6644, %v6537
        %v6661 = vmul.f32 %v6657, %v6537
        %v6662 = vadd.f32 %v6658, 1e-05
        %v6663 = vadd.f32 %v6659, 1e-05
        %v6664 = vadd.f32 %v6660, 1e-05
        %v6665 = vadd.f32 %v6661, 1e-05
        %v6666 = vrsqrt.pop %v6662
        %v6667 = vmul.f32 %v6666, %v6662
        %v6668 = vmul.f32 %v6667, %v6666
        %v6669 = vmul.f32 0.5, %v6668
        %v6670 = vsub.f32 1.5, %v6669
        %v6671 = vmul.f32 %v6666, %v6670
        %vm6672 = vweird.f32 %v6662
        %vm6673 = vweird.f32 %v6666
        %vm6674 = vmor %vm6672, %vm6673
        %v6675 = vsel %vm6674, %v6666, %v6671
        %v6676 = vrsqrt.pop %v6663
        %v6677 = vmul.f32 %v6676, %v6663
        %v6678 = vmul.f32 %v6677, %v6676
        %v6679 = vmul.f32 0.5, %v6678
        %v6680 = vsub.f32 1.5, %v6679
        %v6681 = vmul.f32 %v6676, %v6680
        %vm6682 = vweird.f32 %v6663
        %vm6683 = vweird.f32 %v6676
        %vm6684 = vmor %vm6682, %vm6683
        %v6685 = vsel %vm6684, %v6676, %v6681
        %v6686 = vrsqrt.pop %v6664
        %v6687 = vmul.f32 %v6686, %v6664
        %v6688 = vmul.f32 %v6687, %v6686
        %v6689 = vmul.f32 0.5, %v6688
        %v6690 = vsub.f32 1.5, %v6689
        %v6691 = vmul.f32 %v6686, %v6690
        %vm6692 = vweird.f32 %v6664
        %vm6693 = vweird.f32 %v6686
        %vm6694 = vmor %vm6692, %vm6693
        %v6695 = vsel %vm6694, %v6686, %v6691
        %v6696 = vrsqrt.pop %v6665
        %v6697 = vmul.f32 %v6696, %v6665
        %v6698 = vmul.f32 %v6697, %v6696
        %v6699 = vmul.f32 0.5, %v6698
        %v6700 = vsub.f32 1.5, %v6699
        %v6701 = vmul.f32 %v6696, %v6700
        %vm6702 = vweird.f32 %v6665
        %vm6703 = vweird.f32 %v6696
        %vm6704 = vmor %vm6702, %vm6703
        %v6705 = vsel %vm6704, %v6696, %v6701
        %v6706 = vmul.f32 %v6542, %v6675
        %v6707 = vmul.f32 %v6543, %v6685
        %v6708 = vmul.f32 %v6544, %v6695
        %v6709 = vmul.f32 %v6545, %v6705
        %v6710 = vmul.f32 %v6546, %v6675
        %v6711 = vmul.f32 %v6547, %v6685
        %v6712 = vmul.f32 %v6548, %v6695
        %v6713 = vmul.f32 %v6549, %v6705
        %v6714 = vmul.f32 %v6550, %v6675
        %v6715 = vmul.f32 %v6551, %v6685
        %v6716 = vmul.f32 %v6552, %v6695
        %v6717 = vmul.f32 %v6553, %v6705
        %v6718 = vmul.f32 %v6554, %v6675
        %v6719 = vmul.f32 %v6555, %v6685
        %v6720 = vmul.f32 %v6556, %v6695
        %v6721 = vmul.f32 %v6557, %v6705
        %v6722 = vmul.f32 %v6558, %v6675
        %v6723 = vmul.f32 %v6559, %v6685
        %v6724 = vmul.f32 %v6560, %v6695
        %v6725 = vmul.f32 %v6561, %v6705
        %v6726 = vmul.f32 %v6562, %v6675
        %v6727 = vmul.f32 %v6563, %v6685
        %v6728 = vmul.f32 %v6564, %v6695
        %v6729 = vmul.f32 %v6565, %v6705
        %v6730 = vmul.f32 %v6566, %v6675
        %v6731 = vmul.f32 %v6567, %v6685
        %v6732 = vmul.f32 %v6568, %v6695
        %v6733 = vmul.f32 %v6569, %v6705
        %v6734 = vmul.f32 %v6570, %v6675
        %v6735 = vmul.f32 %v6571, %v6685
        %v6736 = vmul.f32 %v6572, %v6695
        %v6737 = vmul.f32 %v6573, %v6705
        %6739 = vset.pattern.permute.xlu0 3
        %6740 = vperm.xlu0 %6739, %v530
        %v6741 = vpop.permute.xlu0 %6740
        %6744 = vset.pattern.permute.xlu0 3
        %6745 = vperm.xlu0 %6744, %v531
        %v6746 = vpop.permute.xlu0 %6745
        %6749 = vset.pattern.permute.xlu0 3
        %6750 = vperm.xlu0 %6749, %v532
        %v6751 = vpop.permute.xlu0 %6750
        %6754 = vset.pattern.permute.xlu0 3
        %6755 = vperm.xlu0 %6754, %v533
        %v6756 = vpop.permute.xlu0 %6755
        %6759 = vset.pattern.permute.xlu0 3
        %6760 = vperm.xlu0 %6759, %v534
        %v6761 = vpop.permute.xlu0 %6760
        %6764 = vset.pattern.permute.xlu0 3
        %6765 = vperm.xlu0 %6764, %v535
        %v6766 = vpop.permute.xlu0 %6765
        %6769 = vset.pattern.permute.xlu0 3
        %6770 = vperm.xlu0 %6769, %v536
        %v6771 = vpop.permute.xlu0 %6770
        %6774 = vset.pattern.permute.xlu0 3
        %6775 = vperm.xlu0 %6774, %v537
        %v6776 = vpop.permute.xlu0 %6775
        %v6778 = vmul.f32 %v6706, %v6741
        %v6779 = vmul.f32 %v6707, %v6741
        %v6780 = vmul.f32 %v6708, %v6741
        %v6781 = vmul.f32 %v6709, %v6741
        %v6782 = vmul.f32 %v6710, %v6746
        %v6783 = vmul.f32 %v6711, %v6746
        %v6784 = vmul.f32 %v6712, %v6746
        %v6785 = vmul.f32 %v6713, %v6746
        %v6786 = vmul.f32 %v6714, %v6751
        %v6787 = vmul.f32 %v6715, %v6751
        %v6788 = vmul.f32 %v6716, %v6751
        %v6789 = vmul.f32 %v6717, %v6751
        %v6790 = vmul.f32 %v6718, %v6756
        %v6791 = vmul.f32 %v6719, %v6756
        %v6792 = vmul.f32 %v6720, %v6756
        %v6793 = vmul.f32 %v6721, %v6756
        %v6794 = vmul.f32 %v6722, %v6761
        %v6795 = vmul.f32 %v6723, %v6761
        %v6796 = vmul.f32 %v6724, %v6761
        %v6797 = vmul.f32 %v6725, %v6761
        %v6798 = vmul.f32 %v6726, %v6766
        %v6799 = vmul.f32 %v6727, %v6766
        %v6800 = vmul.f32 %v6728, %v6766
        %v6801 = vmul.f32 %v6729, %v6766
        %v6802 = vmul.f32 %v6730, %v6771
        %v6803 = vmul.f32 %v6731, %v6771
        %v6804 = vmul.f32 %v6732, %v6771
        %v6805 = vmul.f32 %v6733, %v6771
        %v6806 = vmul.f32 %v6734, %v6776
        %v6807 = vmul.f32 %v6735, %v6776
        %v6808 = vmul.f32 %v6736, %v6776
        %v6809 = vmul.f32 %v6737, %v6776
        %6810 = vset.pattern.permute.xlu0 4
        %6811 = vperm.xlu0 %6810, %v530
        %v6812 = vpop.permute.xlu0 %6811
        %6814 = vset.pattern.permute.xlu0 4
        %6815 = vperm.xlu0 %6814, %v531
        %v6816 = vpop.permute.xlu0 %6815
        %6818 = vset.pattern.permute.xlu0 4
        %6819 = vperm.xlu0 %6818, %v532
        %v6820 = vpop.permute.xlu0 %6819
        %6822 = vset.pattern.permute.xlu0 4
        %6823 = vperm.xlu0 %6822, %v533
        %v6824 = vpop.permute.xlu0 %6823
        %6826 = vset.pattern.permute.xlu0 4
        %6827 = vperm.xlu0 %6826, %v534
        %v6828 = vpop.permute.xlu0 %6827
        %6830 = vset.pattern.permute.xlu0 4
        %6831 = vperm.xlu0 %6830, %v535
        %v6832 = vpop.permute.xlu0 %6831
        %6834 = vset.pattern.permute.xlu0 4
        %6835 = vperm.xlu0 %6834, %v536
        %v6836 = vpop.permute.xlu0 %6835
        %6838 = vset.pattern.permute.xlu0 4
        %6839 = vperm.xlu0 %6838, %v537
        %v6840 = vpop.permute.xlu0 %6839
        %v6842 = vadd.f32 %v6778, %v6812
        %v6843 = vadd.f32 %v6779, %v6812
        %v6844 = vadd.f32 %v6780, %v6812
        %v6845 = vadd.f32 %v6781, %v6812
        %v6846 = vadd.f32 %v6782, %v6816
        %v6847 = vadd.f32 %v6783, %v6816
        %v6848 = vadd.f32 %v6784, %v6816
        %v6849 = vadd.f32 %v6785, %v6816
        %v6850 = vadd.f32 %v6786, %v6820
        %v6851 = vadd.f32 %v6787, %v6820
        %v6852 = vadd.f32 %v6788, %v6820
        %v6853 = vadd.f32 %v6789, %v6820
        %v6854 = vadd.f32 %v6790, %v6824
        %v6855 = vadd.f32 %v6791, %v6824
        %v6856 = vadd.f32 %v6792, %v6824
        %v6857 = vadd.f32 %v6793, %v6824
        %v6858 = vadd.f32 %v6794, %v6828
        %v6859 = vadd.f32 %v6795, %v6828
        %v6860 = vadd.f32 %v6796, %v6828
        %v6861 = vadd.f32 %v6797, %v6828
        %v6862 = vadd.f32 %v6798, %v6832
        %v6863 = vadd.f32 %v6799, %v6832
        %v6864 = vadd.f32 %v6800, %v6832
        %v6865 = vadd.f32 %v6801, %v6832
        %v6866 = vadd.f32 %v6802, %v6836
        %v6867 = vadd.f32 %v6803, %v6836
        %v6868 = vadd.f32 %v6804, %v6836
        %v6869 = vadd.f32 %v6805, %v6836
        %v6870 = vadd.f32 %v6806, %v6840
        %v6871 = vadd.f32 %v6807, %v6840
        %v6872 = vadd.f32 %v6808, %v6840
        %v6873 = vadd.f32 %v6809, %v6840
        %v6874 = vld [vmem:[%s6] sm:$0xf]
        %v6875 = vld [vmem:[%s6 + $0x4] sm:$0xf]
        %v6876 = vld [vmem:[%s6 + $0x8] sm:$0xf]
        %v6877 = vld [vmem:[%s6 + $0xc] sm:$0xf]
        %v6878 = vld [vmem:[%s6 + $0x10] sm:$0xf]
        %v6879 = vld [vmem:[%s6 + $0x14] sm:$0xf]
        %v6880 = vld [vmem:[%s6 + $0x18] sm:$0xf]
        %v6881 = vld [vmem:[%s6 + $0x1c] sm:$0xf]
        %v6882 = vld [vmem:[%s6 + $0x20] sm:$0xf]
        %v6883 = vld [vmem:[%s6 + $0x24] sm:$0xf]
        %v6884 = vld [vmem:[%s6 + $0x28] sm:$0xf]
        %v6885 = vld [vmem:[%s6 + $0x2c] sm:$0xf]
        %v6886 = vld [vmem:[%s6 + $0x30] sm:$0xf]
        %v6887 = vld [vmem:[%s6 + $0x34] sm:$0xf]
        %v6888 = vld [vmem:[%s6 + $0x38] sm:$0xf]
        %v6889 = vld [vmem:[%s6 + $0x3c] sm:$0xf]
        %v6890 = vpack.c.bf16 %v6846, %v6842
        %v6891 = vpack.c.bf16 %v6847, %v6843
        %v6892 = vpack.c.bf16 %v6848, %v6844
        %v6893 = vpack.c.bf16 %v6849, %v6845
        %v6894 = vpack.c.bf16 %v6854, %v6850
        %v6895 = vpack.c.bf16 %v6855, %v6851
        %v6896 = vpack.c.bf16 %v6856, %v6852
        %v6897 = vpack.c.bf16 %v6857, %v6853
        %v6898 = vpack.c.bf16 %v6862, %v6858
        %v6899 = vpack.c.bf16 %v6863, %v6859
        %v6900 = vpack.c.bf16 %v6864, %v6860
        %v6901 = vpack.c.bf16 %v6865, %v6861
        %v6902 = vpack.c.bf16 %v6870, %v6866
        %v6903 = vpack.c.bf16 %v6871, %v6867
        %v6904 = vpack.c.bf16 %v6872, %v6868
        %v6905 = vpack.c.bf16 %v6873, %v6869
        %6906 = vset.pattern.permute.xlu0 6
        %6907 = vperm.xlu0 %6906, %v530
        %v6908 = vpop.permute.xlu0 %6907
        %6910 = vset.pattern.permute.xlu0 6
        %6911 = vperm.xlu0 %6910, %v531
        %v6912 = vpop.permute.xlu0 %6911
        %6914 = vset.pattern.permute.xlu0 6
        %6915 = vperm.xlu0 %6914, %v532
        %v6916 = vpop.permute.xlu0 %6915
        %6918 = vset.pattern.permute.xlu0 6
        %6919 = vperm.xlu0 %6918, %v533
        %v6920 = vpop.permute.xlu0 %6919
        %6922 = vset.pattern.permute.xlu0 6
        %6923 = vperm.xlu0 %6922, %v534
        %v6924 = vpop.permute.xlu0 %6923
        %6926 = vset.pattern.permute.xlu0 6
        %6927 = vperm.xlu0 %6926, %v535
        %v6928 = vpop.permute.xlu0 %6927
        %6930 = vset.pattern.permute.xlu0 6
        %6931 = vperm.xlu0 %6930, %v536
        %v6932 = vpop.permute.xlu0 %6931
        %6934 = vset.pattern.permute.xlu0 6
        %6935 = vperm.xlu0 %6934, %v537
        %v6936 = vpop.permute.xlu0 %6935
        %6939 = vset.pattern.permute.xlu0 6
        %6940 = vperm.xlu0 %6939, %v538
        %v6941 = vpop.permute.xlu0 %6940
        %6944 = vset.pattern.permute.xlu0 6
        %6945 = vperm.xlu0 %6944, %v539
        %v6946 = vpop.permute.xlu0 %6945
        %6949 = vset.pattern.permute.xlu0 6
        %6950 = vperm.xlu0 %6949, %v540
        %v6951 = vpop.permute.xlu0 %6950
        %6954 = vset.pattern.permute.xlu0 6
        %6955 = vperm.xlu0 %6954, %v541
        %v6956 = vpop.permute.xlu0 %6955
        %6959 = vset.pattern.permute.xlu0 6
        %6960 = vperm.xlu0 %6959, %v542
        %v6961 = vpop.permute.xlu0 %6960
        %6964 = vset.pattern.permute.xlu0 6
        %6965 = vperm.xlu0 %6964, %v543
        %v6966 = vpop.permute.xlu0 %6965
        %6969 = vset.pattern.permute.xlu0 6
        %6970 = vperm.xlu0 %6969, %v544
        %v6971 = vpop.permute.xlu0 %6970
        %6974 = vset.pattern.permute.xlu0 6
        %6975 = vperm.xlu0 %6974, %v545
        %v6976 = vpop.permute.xlu0 %6975
        %v6994 = vunpack.c.l.b16 %v6874
        %v6995 = vunpack.c.l.b16 %v6875
        %v6996 = vunpack.c.l.b16 %v6876
        %v6997 = vunpack.c.l.b16 %v6877
        %v6998 = vunpack.c.l.b16 %v6878
        %v6999 = vunpack.c.l.b16 %v6879
        %v7000 = vunpack.c.l.b16 %v6880
        %v7001 = vunpack.c.l.b16 %v6881
        %v7002 = vunpack.c.l.b16 %v6882
        %v7003 = vunpack.c.l.b16 %v6883
        %v7004 = vunpack.c.l.b16 %v6884
        %v7005 = vunpack.c.l.b16 %v6885
        %v7006 = vunpack.c.l.b16 %v6886
        %v7007 = vunpack.c.l.b16 %v6887
        %v7008 = vunpack.c.l.b16 %v6888
        %v7009 = vunpack.c.l.b16 %v6889
        %v7010 = vpack.c.b16 %v6995, %v6994
        %v7011 = vpack.c.b16 %v6997, %v6996
        %v7012 = vpack.c.b16 %v6999, %v6998
        %v7013 = vpack.c.b16 %v7001, %v7000
        %v7014 = vpack.c.b16 %v7003, %v7002
        %v7015 = vpack.c.b16 %v7005, %v7004
        %v7016 = vpack.c.b16 %v7007, %v7006
        %v7017 = vpack.c.b16 %v7009, %v7008
        %v7019 = vsel %vm1158, %v7010, 0
        %v7022 = vsel %vm1158, %v7011, 0
        %v7025 = vsel %vm1158, %v7012, 0
        %v7028 = vsel %vm1158, %v7013, 0
        %v7031 = vsel %vm1158, %v7014, 0
        %v7034 = vsel %vm1158, %v7015, 0
        %v7037 = vsel %vm1158, %v7016, 0
        %v7040 = vsel %vm1158, %v7017, 0
        %7042 = vmatpush.bf16.msra.mxu0 0
        %7043 = vmatpush.bf16.msra.mxu0 0
        %7044 = vmatpush.bf16.msra.mxu0 0
        %7045 = vmatpush.bf16.msra.mxu0 0
        %7046 = vmatpush.bf16.msra.mxu0 %v6902
        %7047 = vmatpush.bf16.msra.mxu0 %v6898
        %7048 = vmatpush.bf16.msra.mxu0 %v6894
        %7049 = vmatpush.bf16.msra.mxu0 %v6890
        %7050 = vmatmul.bf16.gmra.mxu0 %v7019
        %v7051 = vpop.f32.mrf.mxu0
        %v7052 = vadd.f32 %v6908, %v7051
        %v7053 = vpop.f32.mrf.mxu0
        %v7054 = vadd.f32 %v6912, %v7053
        %7055 = vmatmul.bf16.gmra.mxu0 %v7022
        %v7056 = vpop.f32.mrf.mxu0
        %v7057 = vadd.f32 %v6916, %v7056
        %v7058 = vpop.f32.mrf.mxu0
        %v7059 = vadd.f32 %v6920, %v7058
        %7060 = vmatmul.bf16.gmra.mxu0 %v7025
        %v7061 = vpop.f32.mrf.mxu0
        %v7062 = vadd.f32 %v6924, %v7061
        %v7063 = vpop.f32.mrf.mxu0
        %v7064 = vadd.f32 %v6928, %v7063
        %7065 = vmatmul.bf16.gmra.mxu0 %v7028
        %v7066 = vpop.f32.mrf.mxu0
        %v7067 = vadd.f32 %v6932, %v7066
        %v7068 = vpop.f32.mrf.mxu0
        %v7069 = vadd.f32 %v6936, %v7068
        %7070 = vmatmul.bf16.gmra.mxu0 %v7031
        %v7071 = vpop.f32.mrf.mxu0
        %v7072 = vadd.f32 %v6941, %v7071
        %v7073 = vpop.f32.mrf.mxu0
        %v7074 = vadd.f32 %v6946, %v7073
        %7075 = vmatmul.bf16.gmra.mxu0 %v7034
        %v7076 = vpop.f32.mrf.mxu0
        %v7077 = vadd.f32 %v6951, %v7076
        %v7078 = vpop.f32.mrf.mxu0
        %v7079 = vadd.f32 %v6956, %v7078
        %7080 = vmatmul.bf16.gmra.mxu0 %v7037
        %v7081 = vpop.f32.mrf.mxu0
        %v7082 = vadd.f32 %v6961, %v7081
        %v7083 = vpop.f32.mrf.mxu0
        %v7084 = vadd.f32 %v6966, %v7083
        %7085 = vmatmul.bf16.gmra.mxu0 %v7040
        %v7086 = vpop.f32.mrf.mxu0
        %v7087 = vadd.f32 %v6971, %v7086
        %v7088 = vpop.f32.mrf.mxu0
        %v7089 = vadd.f32 %v6976, %v7088
        %7090 = vdwg.mxu0
        %7091 = vmatpush.bf16.msra.mxu0 0
        %7092 = vmatpush.bf16.msra.mxu0 0
        %7093 = vmatpush.bf16.msra.mxu0 0
        %7094 = vmatpush.bf16.msra.mxu0 0
        %7095 = vmatpush.bf16.msra.mxu0 %v6903
        %7096 = vmatpush.bf16.msra.mxu0 %v6899
        %7097 = vmatpush.bf16.msra.mxu0 %v6895
        %7098 = vmatpush.bf16.msra.mxu0 %v6891
        %7099 = vmatmul.bf16.gmra.mxu0 %v7019
        %v7100 = vpop.f32.mrf.mxu0
        %v7101 = vadd.f32 %v6908, %v7100
        %v7102 = vpop.f32.mrf.mxu0
        %v7103 = vadd.f32 %v6912, %v7102
        %7104 = vmatmul.bf16.gmra.mxu0 %v7022
        %v7105 = vpop.f32.mrf.mxu0
        %v7106 = vadd.f32 %v6916, %v7105
        %v7107 = vpop.f32.mrf.mxu0
        %v7108 = vadd.f32 %v6920, %v7107
        %7109 = vmatmul.bf16.gmra.mxu0 %v7025
        %v7110 = vpop.f32.mrf.mxu0
        %v7111 = vadd.f32 %v6924, %v7110
        %v7112 = vpop.f32.mrf.mxu0
        %v7113 = vadd.f32 %v6928, %v7112
        %7114 = vmatmul.bf16.gmra.mxu0 %v7028
        %v7115 = vpop.f32.mrf.mxu0
        %v7116 = vadd.f32 %v6932, %v7115
        %v7117 = vpop.f32.mrf.mxu0
        %v7118 = vadd.f32 %v6936, %v7117
        %7119 = vmatmul.bf16.gmra.mxu0 %v7031
        %v7120 = vpop.f32.mrf.mxu0
        %v7121 = vadd.f32 %v6941, %v7120
        %v7122 = vpop.f32.mrf.mxu0
        %v7123 = vadd.f32 %v6946, %v7122
        %7124 = vmatmul.bf16.gmra.mxu0 %v7034
        %v7125 = vpop.f32.mrf.mxu0
        %v7126 = vadd.f32 %v6951, %v7125
        %v7127 = vpop.f32.mrf.mxu0
        %v7128 = vadd.f32 %v6956, %v7127
        %7129 = vmatmul.bf16.gmra.mxu0 %v7037
        %v7130 = vpop.f32.mrf.mxu0
        %v7131 = vadd.f32 %v6961, %v7130
        %v7132 = vpop.f32.mrf.mxu0
        %v7133 = vadd.f32 %v6966, %v7132
        %7134 = vmatmul.bf16.gmra.mxu0 %v7040
        %v7135 = vpop.f32.mrf.mxu0
        %v7136 = vadd.f32 %v6971, %v7135
        %v7137 = vpop.f32.mrf.mxu0
        %v7138 = vadd.f32 %v6976, %v7137
        %7139 = vdwg.mxu0
        %7140 = vmatpush.bf16.msra.mxu0 0
        %7141 = vmatpush.bf16.msra.mxu0 0
        %7142 = vmatpush.bf16.msra.mxu0 0
        %7143 = vmatpush.bf16.msra.mxu0 0
        %7144 = vmatpush.bf16.msra.mxu0 %v6904
        %7145 = vmatpush.bf16.msra.mxu0 %v6900
        %7146 = vmatpush.bf16.msra.mxu0 %v6896
        %7147 = vmatpush.bf16.msra.mxu0 %v6892
        %7148 = vmatmul.bf16.gmra.mxu0 %v7019
        %v7149 = vpop.f32.mrf.mxu0
        %v7150 = vadd.f32 %v6908, %v7149
        %v7151 = vpop.f32.mrf.mxu0
        %v7152 = vadd.f32 %v6912, %v7151
        %7153 = vmatmul.bf16.gmra.mxu0 %v7022
        %v7154 = vpop.f32.mrf.mxu0
        %v7155 = vadd.f32 %v6916, %v7154
        %v7156 = vpop.f32.mrf.mxu0
        %v7157 = vadd.f32 %v6920, %v7156
        %7158 = vmatmul.bf16.gmra.mxu0 %v7025
        %v7159 = vpop.f32.mrf.mxu0
        %v7160 = vadd.f32 %v6924, %v7159
        %v7161 = vpop.f32.mrf.mxu0
        %v7162 = vadd.f32 %v6928, %v7161
        %7163 = vmatmul.bf16.gmra.mxu0 %v7028
        %v7164 = vpop.f32.mrf.mxu0
        %v7165 = vadd.f32 %v6932, %v7164
        %v7166 = vpop.f32.mrf.mxu0
        %v7167 = vadd.f32 %v6936, %v7166
        %7168 = vmatmul.bf16.gmra.mxu0 %v7031
        %v7169 = vpop.f32.mrf.mxu0
        %v7170 = vadd.f32 %v6941, %v7169
        %v7171 = vpop.f32.mrf.mxu0
        %v7172 = vadd.f32 %v6946, %v7171
        %7173 = vmatmul.bf16.gmra.mxu0 %v7034
        %v7174 = vpop.f32.mrf.mxu0
        %v7175 = vadd.f32 %v6951, %v7174
        %v7176 = vpop.f32.mrf.mxu0
        %v7177 = vadd.f32 %v6956, %v7176
        %7178 = vmatmul.bf16.gmra.mxu0 %v7037
        %v7179 = vpop.f32.mrf.mxu0
        %v7180 = vadd.f32 %v6961, %v7179
        %v7181 = vpop.f32.mrf.mxu0
        %v7182 = vadd.f32 %v6966, %v7181
        %7183 = vmatmul.bf16.gmra.mxu0 %v7040
        %v7184 = vpop.f32.mrf.mxu0
        %v7185 = vadd.f32 %v6971, %v7184
        %v7186 = vpop.f32.mrf.mxu0
        %v7187 = vadd.f32 %v6976, %v7186
        %7188 = vdwg.mxu0
        %7189 = vmatpush.bf16.msra.mxu0 0
        %7190 = vmatpush.bf16.msra.mxu0 0
        %7191 = vmatpush.bf16.msra.mxu0 0
        %7192 = vmatpush.bf16.msra.mxu0 0
        %7193 = vmatpush.bf16.msra.mxu0 %v6905
        %7194 = vmatpush.bf16.msra.mxu0 %v6901
        %7195 = vmatpush.bf16.msra.mxu0 %v6897
        %7196 = vmatpush.bf16.msra.mxu0 %v6893
        %7197 = vmatmul.bf16.gmra.mxu0 %v7019
        %v7198 = vpop.f32.mrf.mxu0
        %v7199 = vadd.f32 %v6908, %v7198
        %v7200 = vpop.f32.mrf.mxu0
        %v7201 = vadd.f32 %v6912, %v7200
        %7202 = vmatmul.bf16.gmra.mxu0 %v7022
        %v7203 = vpop.f32.mrf.mxu0
        %v7204 = vadd.f32 %v6916, %v7203
        %v7205 = vpop.f32.mrf.mxu0
        %v7206 = vadd.f32 %v6920, %v7205
        %7207 = vmatmul.bf16.gmra.mxu0 %v7025
        %v7208 = vpop.f32.mrf.mxu0
        %v7209 = vadd.f32 %v6924, %v7208
        %v7210 = vpop.f32.mrf.mxu0
        %v7211 = vadd.f32 %v6928, %v7210
        %7212 = vmatmul.bf16.gmra.mxu0 %v7028
        %v7213 = vpop.f32.mrf.mxu0
        %v7214 = vadd.f32 %v6932, %v7213
        %v7215 = vpop.f32.mrf.mxu0
        %v7216 = vadd.f32 %v6936, %v7215
        %7217 = vmatmul.bf16.gmra.mxu0 %v7031
        %v7218 = vpop.f32.mrf.mxu0
        %v7219 = vadd.f32 %v6941, %v7218
        %v7220 = vpop.f32.mrf.mxu0
        %v7221 = vadd.f32 %v6946, %v7220
        %7222 = vmatmul.bf16.gmra.mxu0 %v7034
        %v7223 = vpop.f32.mrf.mxu0
        %v7224 = vadd.f32 %v6951, %v7223
        %v7225 = vpop.f32.mrf.mxu0
        %v7226 = vadd.f32 %v6956, %v7225
        %7227 = vmatmul.bf16.gmra.mxu0 %v7037
        %v7228 = vpop.f32.mrf.mxu0
        %v7229 = vadd.f32 %v6961, %v7228
        %v7230 = vpop.f32.mrf.mxu0
        %v7231 = vadd.f32 %v6966, %v7230
        %7232 = vmatmul.bf16.gmra.mxu0 %v7040
        %v7233 = vpop.f32.mrf.mxu0
        %v7234 = vadd.f32 %v6971, %v7233
        %v7235 = vpop.f32.mrf.mxu0
        %v7236 = vadd.f32 %v6976, %v7235
        %7237 = vdwg.mxu0
        %v7238 = vmul.f32 %v7052, %v7052
        %v7239 = vmul.f32 %v7101, %v7101
        %v7240 = vmul.f32 %v7150, %v7150
        %v7241 = vmul.f32 %v7199, %v7199
        %v7242 = vmul.f32 %v7054, %v7054
        %v7243 = vmul.f32 %v7103, %v7103
        %v7244 = vmul.f32 %v7152, %v7152
        %v7245 = vmul.f32 %v7201, %v7201
        %v7246 = vmul.f32 %v7057, %v7057
        %v7247 = vmul.f32 %v7106, %v7106
        %v7248 = vmul.f32 %v7155, %v7155
        %v7249 = vmul.f32 %v7204, %v7204
        %v7250 = vmul.f32 %v7059, %v7059
        %v7251 = vmul.f32 %v7108, %v7108
        %v7252 = vmul.f32 %v7157, %v7157
        %v7253 = vmul.f32 %v7206, %v7206
        %v7254 = vmul.f32 %v7062, %v7062
        %v7255 = vmul.f32 %v7111, %v7111
        %v7256 = vmul.f32 %v7160, %v7160
        %v7257 = vmul.f32 %v7209, %v7209
        %v7258 = vmul.f32 %v7064, %v7064
        %v7259 = vmul.f32 %v7113, %v7113
        %v7260 = vmul.f32 %v7162, %v7162
        %v7261 = vmul.f32 %v7211, %v7211
        %v7262 = vmul.f32 %v7067, %v7067
        %v7263 = vmul.f32 %v7116, %v7116
        %v7264 = vmul.f32 %v7165, %v7165
        %v7265 = vmul.f32 %v7214, %v7214
        %v7266 = vmul.f32 %v7069, %v7069
        %v7267 = vmul.f32 %v7118, %v7118
        %v7268 = vmul.f32 %v7167, %v7167
        %v7269 = vmul.f32 %v7216, %v7216
        %v7270 = vmul.f32 %v7072, %v7072
        %v7271 = vmul.f32 %v7121, %v7121
        %v7272 = vmul.f32 %v7170, %v7170
        %v7273 = vmul.f32 %v7219, %v7219
        %v7274 = vmul.f32 %v7074, %v7074
        %v7275 = vmul.f32 %v7123, %v7123
        %v7276 = vmul.f32 %v7172, %v7172
        %v7277 = vmul.f32 %v7221, %v7221
        %v7278 = vmul.f32 %v7077, %v7077
        %v7279 = vmul.f32 %v7126, %v7126
        %v7280 = vmul.f32 %v7175, %v7175
        %v7281 = vmul.f32 %v7224, %v7224
        %v7282 = vmul.f32 %v7079, %v7079
        %v7283 = vmul.f32 %v7128, %v7128
        %v7284 = vmul.f32 %v7177, %v7177
        %v7285 = vmul.f32 %v7226, %v7226
        %v7286 = vmul.f32 %v7082, %v7082
        %v7287 = vmul.f32 %v7131, %v7131
        %v7288 = vmul.f32 %v7180, %v7180
        %v7289 = vmul.f32 %v7229, %v7229
        %v7290 = vmul.f32 %v7084, %v7084
        %v7291 = vmul.f32 %v7133, %v7133
        %v7292 = vmul.f32 %v7182, %v7182
        %v7293 = vmul.f32 %v7231, %v7231
        %v7294 = vmul.f32 %v7087, %v7087
        %v7295 = vmul.f32 %v7136, %v7136
        %v7296 = vmul.f32 %v7185, %v7185
        %v7297 = vmul.f32 %v7234, %v7234
        %v7298 = vmul.f32 %v7089, %v7089
        %v7299 = vmul.f32 %v7138, %v7138
        %v7300 = vmul.f32 %v7187, %v7187
        %v7301 = vmul.f32 %v7236, %v7236
        %v7302 = vmul.f32 %v7052, %v7238
        %v7303 = vmul.f32 %v7101, %v7239
        %v7304 = vmul.f32 %v7150, %v7240
        %v7305 = vmul.f32 %v7199, %v7241
        %v7306 = vmul.f32 %v7054, %v7242
        %v7307 = vmul.f32 %v7103, %v7243
        %v7308 = vmul.f32 %v7152, %v7244
        %v7309 = vmul.f32 %v7201, %v7245
        %v7310 = vmul.f32 %v7057, %v7246
        %v7311 = vmul.f32 %v7106, %v7247
        %v7312 = vmul.f32 %v7155, %v7248
        %v7313 = vmul.f32 %v7204, %v7249
        %v7314 = vmul.f32 %v7059, %v7250
        %v7315 = vmul.f32 %v7108, %v7251
        %v7316 = vmul.f32 %v7157, %v7252
        %v7317 = vmul.f32 %v7206, %v7253
        %v7318 = vmul.f32 %v7062, %v7254
        %v7319 = vmul.f32 %v7111, %v7255
        %v7320 = vmul.f32 %v7160, %v7256
        %v7321 = vmul.f32 %v7209, %v7257
        %v7322 = vmul.f32 %v7064, %v7258
        %v7323 = vmul.f32 %v7113, %v7259
        %v7324 = vmul.f32 %v7162, %v7260
        %v7325 = vmul.f32 %v7211, %v7261
        %v7326 = vmul.f32 %v7067, %v7262
        %v7327 = vmul.f32 %v7116, %v7263
        %v7328 = vmul.f32 %v7165, %v7264
        %v7329 = vmul.f32 %v7214, %v7265
        %v7330 = vmul.f32 %v7069, %v7266
        %v7331 = vmul.f32 %v7118, %v7267
        %v7332 = vmul.f32 %v7167, %v7268
        %v7333 = vmul.f32 %v7216, %v7269
        %v7334 = vmul.f32 %v7072, %v7270
        %v7335 = vmul.f32 %v7121, %v7271
        %v7336 = vmul.f32 %v7170, %v7272
        %v7337 = vmul.f32 %v7219, %v7273
        %v7338 = vmul.f32 %v7074, %v7274
        %v7339 = vmul.f32 %v7123, %v7275
        %v7340 = vmul.f32 %v7172, %v7276
        %v7341 = vmul.f32 %v7221, %v7277
        %v7342 = vmul.f32 %v7077, %v7278
        %v7343 = vmul.f32 %v7126, %v7279
        %v7344 = vmul.f32 %v7175, %v7280
        %v7345 = vmul.f32 %v7224, %v7281
        %v7346 = vmul.f32 %v7079, %v7282
        %v7347 = vmul.f32 %v7128, %v7283
        %v7348 = vmul.f32 %v7177, %v7284
        %v7349 = vmul.f32 %v7226, %v7285
        %v7350 = vmul.f32 %v7082, %v7286
        %v7351 = vmul.f32 %v7131, %v7287
        %v7352 = vmul.f32 %v7180, %v7288
        %v7353 = vmul.f32 %v7229, %v7289
        %v7354 = vmul.f32 %v7084, %v7290
        %v7355 = vmul.f32 %v7133, %v7291
        %v7356 = vmul.f32 %v7182, %v7292
        %v7357 = vmul.f32 %v7231, %v7293
        %v7358 = vmul.f32 %v7087, %v7294
        %v7359 = vmul.f32 %v7136, %v7295
        %v7360 = vmul.f32 %v7185, %v7296
        %v7361 = vmul.f32 %v7234, %v7297
        %v7362 = vmul.f32 %v7089, %v7298
        %v7363 = vmul.f32 %v7138, %v7299
        %v7364 = vmul.f32 %v7187, %v7300
        %v7365 = vmul.f32 %v7236, %v7301
        %v7366 = vmul.f32 %v7302, 0.044715
        %v7367 = vmul.f32 %v7303, 0.044715
        %v7368 = vmul.f32 %v7304, 0.044715
        %v7369 = vmul.f32 %v7305, 0.044715
        %v7370 = vmul.f32 %v7306, 0.044715
        %v7371 = vmul.f32 %v7307, 0.044715
        %v7372 = vmul.f32 %v7308, 0.044715
        %v7373 = vmul.f32 %v7309, 0.044715
        %v7374 = vmul.f32 %v7310, 0.044715
        %v7375 = vmul.f32 %v7311, 0.044715
        %v7376 = vmul.f32 %v7312, 0.044715
        %v7377 = vmul.f32 %v7313, 0.044715
        %v7378 = vmul.f32 %v7314, 0.044715
        %v7379 = vmul.f32 %v7315, 0.044715
        %v7380 = vmul.f32 %v7316, 0.044715
        %v7381 = vmul.f32 %v7317, 0.044715
        %v7382 = vmul.f32 %v7318, 0.044715
        %v7383 = vmul.f32 %v7319, 0.044715
        %v7384 = vmul.f32 %v7320, 0.044715
        %v7385 = vmul.f32 %v7321, 0.044715
        %v7386 = vmul.f32 %v7322, 0.044715
        %v7387 = vmul.f32 %v7323, 0.044715
        %v7388 = vmul.f32 %v7324, 0.044715
        %v7389 = vmul.f32 %v7325, 0.044715
        %v7390 = vmul.f32 %v7326, 0.044715
        %v7391 = vmul.f32 %v7327, 0.044715
        %v7392 = vmul.f32 %v7328, 0.044715
        %v7393 = vmul.f32 %v7329, 0.044715
        %v7394 = vmul.f32 %v7330, 0.044715
        %v7395 = vmul.f32 %v7331, 0.044715
        %v7396 = vmul.f32 %v7332, 0.044715
        %v7397 = vmul.f32 %v7333, 0.044715
        %v7398 = vmul.f32 %v7334, 0.044715
        %v7399 = vmul.f32 %v7335, 0.044715
        %v7400 = vmul.f32 %v7336, 0.044715
        %v7401 = vmul.f32 %v7337, 0.044715
        %v7402 = vmul.f32 %v7338, 0.044715
        %v7403 = vmul.f32 %v7339, 0.044715
        %v7404 = vmul.f32 %v7340, 0.044715
        %v7405 = vmul.f32 %v7341, 0.044715
        %v7406 = vmul.f32 %v7342, 0.044715
        %v7407 = vmul.f32 %v7343, 0.044715
        %v7408 = vmul.f32 %v7344, 0.044715
        %v7409 = vmul.f32 %v7345, 0.044715
        %v7410 = vmul.f32 %v7346, 0.044715
        %v7411 = vmul.f32 %v7347, 0.044715
        %v7412 = vmul.f32 %v7348, 0.044715
        %v7413 = vmul.f32 %v7349, 0.044715
        %v7414 = vmul.f32 %v7350, 0.044715
        %v7415 = vmul.f32 %v7351, 0.044715
        %v7416 = vmul.f32 %v7352, 0.044715
        %v7417 = vmul.f32 %v7353, 0.044715
        %v7418 = vmul.f32 %v7354, 0.044715
        %v7419 = vmul.f32 %v7355, 0.044715
        %v7420 = vmul.f32 %v7356, 0.044715
        %v7421 = vmul.f32 %v7357, 0.044715
        %v7422 = vmul.f32 %v7358, 0.044715
        %v7423 = vmul.f32 %v7359, 0.044715
        %v7424 = vmul.f32 %v7360, 0.044715
        %v7425 = vmul.f32 %v7361, 0.044715
        %v7426 = vmul.f32 %v7362, 0.044715
        %v7427 = vmul.f32 %v7363, 0.044715
        %v7428 = vmul.f32 %v7364, 0.044715
        %v7429 = vmul.f32 %v7365, 0.044715
        %v7430 = vadd.f32 %v7052, %v7366
        %v7431 = vadd.f32 %v7101, %v7367
        %v7432 = vadd.f32 %v7150, %v7368
        %v7433 = vadd.f32 %v7199, %v7369
        %v7434 = vadd.f32 %v7054, %v7370
        %v7435 = vadd.f32 %v7103, %v7371
        %v7436 = vadd.f32 %v7152, %v7372
        %v7437 = vadd.f32 %v7201, %v7373
        %v7438 = vadd.f32 %v7057, %v7374
        %v7439 = vadd.f32 %v7106, %v7375
        %v7440 = vadd.f32 %v7155, %v7376
        %v7441 = vadd.f32 %v7204, %v7377
        %v7442 = vadd.f32 %v7059, %v7378
        %v7443 = vadd.f32 %v7108, %v7379
        %v7444 = vadd.f32 %v7157, %v7380
        %v7445 = vadd.f32 %v7206, %v7381
        %v7446 = vadd.f32 %v7062, %v7382
        %v7447 = vadd.f32 %v7111, %v7383
        %v7448 = vadd.f32 %v7160, %v7384
        %v7449 = vadd.f32 %v7209, %v7385
        %v7450 = vadd.f32 %v7064, %v7386
        %v7451 = vadd.f32 %v7113, %v7387
        %v7452 = vadd.f32 %v7162, %v7388
        %v7453 = vadd.f32 %v7211, %v7389
        %v7454 = vadd.f32 %v7067, %v7390
        %v7455 = vadd.f32 %v7116, %v7391
        %v7456 = vadd.f32 %v7165, %v7392
        %v7457 = vadd.f32 %v7214, %v7393
        %v7458 = vadd.f32 %v7069, %v7394
        %v7459 = vadd.f32 %v7118, %v7395
        %v7460 = vadd.f32 %v7167, %v7396
        %v7461 = vadd.f32 %v7216, %v7397
        %v7462 = vadd.f32 %v7072, %v7398
        %v7463 = vadd.f32 %v7121, %v7399
        %v7464 = vadd.f32 %v7170, %v7400
        %v7465 = vadd.f32 %v7219, %v7401
        %v7466 = vadd.f32 %v7074, %v7402
        %v7467 = vadd.f32 %v7123, %v7403
        %v7468 = vadd.f32 %v7172, %v7404
        %v7469 = vadd.f32 %v7221, %v7405
        %v7470 = vadd.f32 %v7077, %v7406
        %v7471 = vadd.f32 %v7126, %v7407
        %v7472 = vadd.f32 %v7175, %v7408
        %v7473 = vadd.f32 %v7224, %v7409
        %v7474 = vadd.f32 %v7079, %v7410
        %v7475 = vadd.f32 %v7128, %v7411
        %v7476 = vadd.f32 %v7177, %v7412
        %v7477 = vadd.f32 %v7226, %v7413
        %v7478 = vadd.f32 %v7082, %v7414
        %v7479 = vadd.f32 %v7131, %v7415
        %v7480 = vadd.f32 %v7180, %v7416
        %v7481 = vadd.f32 %v7229, %v7417
        %v7482 = vadd.f32 %v7084, %v7418
        %v7483 = vadd.f32 %v7133, %v7419
        %v7484 = vadd.f32 %v7182, %v7420
        %v7485 = vadd.f32 %v7231, %v7421
        %v7486 = vadd.f32 %v7087, %v7422
        %v7487 = vadd.f32 %v7136, %v7423
        %v7488 = vadd.f32 %v7185, %v7424
        %v7489 = vadd.f32 %v7234, %v7425
        %v7490 = vadd.f32 %v7089, %v7426
        %v7491 = vadd.f32 %v7138, %v7427
        %v7492 = vadd.f32 %v7187, %v7428
        %v7493 = vadd.f32 %v7236, %v7429
        %v7494 = vmul.f32 %v7430, 0.7978846
        %v7495 = vmul.f32 %v7431, 0.7978846
        %v7496 = vmul.f32 %v7432, 0.7978846
        %v7497 = vmul.f32 %v7433, 0.7978846
        %v7498 = vmul.f32 %v7434, 0.7978846
        %v7499 = vmul.f32 %v7435, 0.7978846
        %v7500 = vmul.f32 %v7436, 0.7978846
        %v7501 = vmul.f32 %v7437, 0.7978846
        %v7502 = vmul.f32 %v7438, 0.7978846
        %v7503 = vmul.f32 %v7439, 0.7978846
        %v7504 = vmul.f32 %v7440, 0.7978846
        %v7505 = vmul.f32 %v7441, 0.7978846
        %v7506 = vmul.f32 %v7442, 0.7978846
        %v7507 = vmul.f32 %v7443, 0.7978846
        %v7508 = vmul.f32 %v7444, 0.7978846
        %v7509 = vmul.f32 %v7445, 0.7978846
        %v7510 = vmul.f32 %v7446, 0.7978846
        %v7511 = vmul.f32 %v7447, 0.7978846
        %v7512 = vmul.f32 %v7448, 0.7978846
        %v7513 = vmul.f32 %v7449, 0.7978846
        %v7514 = vmul.f32 %v7450, 0.7978846
        %v7515 = vmul.f32 %v7451, 0.7978846
        %v7516 = vmul.f32 %v7452, 0.7978846
        %v7517 = vmul.f32 %v7453, 0.7978846
        %v7518 = vmul.f32 %v7454, 0.7978846
        %v7519 = vmul.f32 %v7455, 0.7978846
        %v7520 = vmul.f32 %v7456, 0.7978846
        %v7521 = vmul.f32 %v7457, 0.7978846
        %v7522 = vmul.f32 %v7458, 0.7978846
        %v7523 = vmul.f32 %v7459, 0.7978846
        %v7524 = vmul.f32 %v7460, 0.7978846
        %v7525 = vmul.f32 %v7461, 0.7978846
        %v7526 = vmul.f32 %v7462, 0.7978846
        %v7527 = vmul.f32 %v7463, 0.7978846
        %v7528 = vmul.f32 %v7464, 0.7978846
        %v7529 = vmul.f32 %v7465, 0.7978846
        %v7530 = vmul.f32 %v7466, 0.7978846
        %v7531 = vmul.f32 %v7467, 0.7978846
        %v7532 = vmul.f32 %v7468, 0.7978846
        %v7533 = vmul.f32 %v7469, 0.7978846
        %v7534 = vmul.f32 %v7470, 0.7978846
        %v7535 = vmul.f32 %v7471, 0.7978846
        %v7536 = vmul.f32 %v7472, 0.7978846
        %v7537 = vmul.f32 %v7473, 0.7978846
        %v7538 = vmul.f32 %v7474, 0.7978846
        %v7539 = vmul.f32 %v7475, 0.7978846
        %v7540 = vmul.f32 %v7476, 0.7978846
        %v7541 = vmul.f32 %v7477, 0.7978846
        %v7542 = vmul.f32 %v7478, 0.7978846
        %v7543 = vmul.f32 %v7479, 0.7978846
        %v7544 = vmul.f32 %v7480, 0.7978846
        %v7545 = vmul.f32 %v7481, 0.7978846
        %v7546 = vmul.f32 %v7482, 0.7978846
        %v7547 = vmul.f32 %v7483, 0.7978846
        %v7548 = vmul.f32 %v7484, 0.7978846
        %v7549 = vmul.f32 %v7485, 0.7978846
        %v7550 = vmul.f32 %v7486, 0.7978846
        %v7551 = vmul.f32 %v7487, 0.7978846
        %v7552 = vmul.f32 %v7488, 0.7978846
        %v7553 = vmul.f32 %v7489, 0.7978846
        %v7554 = vmul.f32 %v7490, 0.7978846
        %v7555 = vmul.f32 %v7491, 0.7978846
        %v7556 = vmul.f32 %v7492, 0.7978846
        %v7557 = vmul.f32 %v7493, 0.7978846
        %v7558 = vtanh.pop %v7494
        %v7559 = vtanh.pop %v7495
        %v7560 = vtanh.pop %v7496
        %v7561 = vtanh.pop %v7497
        %v7562 = vtanh.pop %v7498
        %v7563 = vtanh.pop %v7499
        %v7564 = vtanh.pop %v7500
        %v7565 = vtanh.pop %v7501
        %v7566 = vtanh.pop %v7502
        %v7567 = vtanh.pop %v7503
        %v7568 = vtanh.pop %v7504
        %v7569 = vtanh.pop %v7505
        %v7570 = vtanh.pop %v7506
        %v7571 = vtanh.pop %v7507
        %v7572 = vtanh.pop %v7508
        %v7573 = vtanh.pop %v7509
        %v7574 = vtanh.pop %v7510
        %v7575 = vtanh.pop %v7511
        %v7576 = vtanh.pop %v7512
        %v7577 = vtanh.pop %v7513
        %v7578 = vtanh.pop %v7514
        %v7579 = vtanh.pop %v7515
        %v7580 = vtanh.pop %v7516
        %v7581 = vtanh.pop %v7517
        %v7582 = vtanh.pop %v7518
        %v7583 = vtanh.pop %v7519
        %v7584 = vtanh.pop %v7520
        %v7585 = vtanh.pop %v7521
        %v7586 = vtanh.pop %v7522
        %v7587 = vtanh.pop %v7523
        %v7588 = vtanh.pop %v7524
        %v7589 = vtanh.pop %v7525
        %v7590 = vtanh.pop %v7526
        %v7591 = vtanh.pop %v7527
        %v7592 = vtanh.pop %v7528
        %v7593 = vtanh.pop %v7529
        %v7594 = vtanh.pop %v7530
        %v7595 = vtanh.pop %v7531
        %v7596 = vtanh.pop %v7532
        %v7597 = vtanh.pop %v7533
        %v7598 = vtanh.pop %v7534
        %v7599 = vtanh.pop %v7535
        %v7600 = vtanh.pop %v7536
        %v7601 = vtanh.pop %v7537
        %v7602 = vtanh.pop %v7538
        %v7603 = vtanh.pop %v7539
        %v7604 = vtanh.pop %v7540
        %v7605 = vtanh.pop %v7541
        %v7606 = vtanh.pop %v7542
        %v7607 = vtanh.pop %v7543
        %v7608 = vtanh.pop %v7544
        %v7609 = vtanh.pop %v7545
        %v7610 = vtanh.pop %v7546
        %v7611 = vtanh.pop %v7547
        %v7612 = vtanh.pop %v7548
        %v7613 = vtanh.pop %v7549
        %v7614 = vtanh.pop %v7550
        %v7615 = vtanh.pop %v7551
        %v7616 = vtanh.pop %v7552
        %v7617 = vtanh.pop %v7553
        %v7618 = vtanh.pop %v7554
        %v7619 = vtanh.pop %v7555
        %v7620 = vtanh.pop %v7556
        %v7621 = vtanh.pop %v7557
        %v7622 = vadd.f32 %v7558, 1.0
        %v7623 = vadd.f32 %v7559, 1.0
        %v7624 = vadd.f32 %v7560, 1.0
        %v7625 = vadd.f32 %v7561, 1.0
        %v7626 = vadd.f32 %v7562, 1.0
        %v7627 = vadd.f32 %v7563, 1.0
        %v7628 = vadd.f32 %v7564, 1.0
        %v7629 = vadd.f32 %v7565, 1.0
        %v7630 = vadd.f32 %v7566, 1.0
        %v7631 = vadd.f32 %v7567, 1.0
        %v7632 = vadd.f32 %v7568, 1.0
        %v7633 = vadd.f32 %v7569, 1.0
        %v7634 = vadd.f32 %v7570, 1.0
        %v7635 = vadd.f32 %v7571, 1.0
        %v7636 = vadd.f32 %v7572, 1.0
        %v7637 = vadd.f32 %v7573, 1.0
        %v7638 = vadd.f32 %v7574, 1.0
        %v7639 = vadd.f32 %v7575, 1.0
        %v7640 = vadd.f32 %v7576, 1.0
        %v7641 = vadd.f32 %v7577, 1.0
        %v7642 = vadd.f32 %v7578, 1.0
        %v7643 = vadd.f32 %v7579, 1.0
        %v7644 = vadd.f32 %v7580, 1.0
        %v7645 = vadd.f32 %v7581, 1.0
        %v7646 = vadd.f32 %v7582, 1.0
        %v7647 = vadd.f32 %v7583, 1.0
        %v7648 = vadd.f32 %v7584, 1.0
        %v7649 = vadd.f32 %v7585, 1.0
        %v7650 = vadd.f32 %v7586, 1.0
        %v7651 = vadd.f32 %v7587, 1.0
        %v7652 = vadd.f32 %v7588, 1.0
        %v7653 = vadd.f32 %v7589, 1.0
        %v7654 = vadd.f32 %v7590, 1.0
        %v7655 = vadd.f32 %v7591, 1.0
        %v7656 = vadd.f32 %v7592, 1.0
        %v7657 = vadd.f32 %v7593, 1.0
        %v7658 = vadd.f32 %v7594, 1.0
        %v7659 = vadd.f32 %v7595, 1.0
        %v7660 = vadd.f32 %v7596, 1.0
        %v7661 = vadd.f32 %v7597, 1.0
        %v7662 = vadd.f32 %v7598, 1.0
        %v7663 = vadd.f32 %v7599, 1.0
        %v7664 = vadd.f32 %v7600, 1.0
        %v7665 = vadd.f32 %v7601, 1.0
        %v7666 = vadd.f32 %v7602, 1.0
        %v7667 = vadd.f32 %v7603, 1.0
        %v7668 = vadd.f32 %v7604, 1.0
        %v7669 = vadd.f32 %v7605, 1.0
        %v7670 = vadd.f32 %v7606, 1.0
        %v7671 = vadd.f32 %v7607, 1.0
        %v7672 = vadd.f32 %v7608, 1.0
        %v7673 = vadd.f32 %v7609, 1.0
        %v7674 = vadd.f32 %v7610, 1.0
        %v7675 = vadd.f32 %v7611, 1.0
        %v7676 = vadd.f32 %v7612, 1.0
        %v7677 = vadd.f32 %v7613, 1.0
        %v7678 = vadd.f32 %v7614, 1.0
        %v7679 = vadd.f32 %v7615, 1.0
        %v7680 = vadd.f32 %v7616, 1.0
        %v7681 = vadd.f32 %v7617, 1.0
        %v7682 = vadd.f32 %v7618, 1.0
        %v7683 = vadd.f32 %v7619, 1.0
        %v7684 = vadd.f32 %v7620, 1.0
        %v7685 = vadd.f32 %v7621, 1.0
        %v7686 = vmul.f32 %v7622, 0.5
        %v7687 = vmul.f32 %v7623, 0.5
        %v7688 = vmul.f32 %v7624, 0.5
        %v7689 = vmul.f32 %v7625, 0.5
        %v7690 = vmul.f32 %v7626, 0.5
        %v7691 = vmul.f32 %v7627, 0.5
        %v7692 = vmul.f32 %v7628, 0.5
        %v7693 = vmul.f32 %v7629, 0.5
        %v7694 = vmul.f32 %v7630, 0.5
        %v7695 = vmul.f32 %v7631, 0.5
        %v7696 = vmul.f32 %v7632, 0.5
        %v7697 = vmul.f32 %v7633, 0.5
        %v7698 = vmul.f32 %v7634, 0.5
        %v7699 = vmul.f32 %v7635, 0.5
        %v7700 = vmul.f32 %v7636, 0.5
        %v7701 = vmul.f32 %v7637, 0.5
        %v7702 = vmul.f32 %v7638, 0.5
        %v7703 = vmul.f32 %v7639, 0.5
        %v7704 = vmul.f32 %v7640, 0.5
        %v7705 = vmul.f32 %v7641, 0.5
        %v7706 = vmul.f32 %v7642, 0.5
        %v7707 = vmul.f32 %v7643, 0.5
        %v7708 = vmul.f32 %v7644, 0.5
        %v7709 = vmul.f32 %v7645, 0.5
        %v7710 = vmul.f32 %v7646, 0.5
        %v7711 = vmul.f32 %v7647, 0.5
        %v7712 = vmul.f32 %v7648, 0.5
        %v7713 = vmul.f32 %v7649, 0.5
        %v7714 = vmul.f32 %v7650, 0.5
        %v7715 = vmul.f32 %v7651, 0.5
        %v7716 = vmul.f32 %v7652, 0.5
        %v7717 = vmul.f32 %v7653, 0.5
        %v7718 = vmul.f32 %v7654, 0.5
        %v7719 = vmul.f32 %v7655, 0.5
        %v7720 = vmul.f32 %v7656, 0.5
        %v7721 = vmul.f32 %v7657, 0.5
        %v7722 = vmul.f32 %v7658, 0.5
        %v7723 = vmul.f32 %v7659, 0.5
        %v7724 = vmul.f32 %v7660, 0.5
        %v7725 = vmul.f32 %v7661, 0.5
        %v7726 = vmul.f32 %v7662, 0.5
        %v7727 = vmul.f32 %v7663, 0.5
        %v7728 = vmul.f32 %v7664, 0.5
        %v7729 = vmul.f32 %v7665, 0.5
        %v7730 = vmul.f32 %v7666, 0.5
        %v7731 = vmul.f32 %v7667, 0.5
        %v7732 = vmul.f32 %v7668, 0.5
        %v7733 = vmul.f32 %v7669, 0.5
        %v7734 = vmul.f32 %v7670, 0.5
        %v7735 = vmul.f32 %v7671, 0.5
        %v7736 = vmul.f32 %v7672, 0.5
        %v7737 = vmul.f32 %v7673, 0.5
        %v7738 = vmul.f32 %v7674, 0.5
        %v7739 = vmul.f32 %v7675, 0.5
        %v7740 = vmul.f32 %v7676, 0.5
        %v7741 = vmul.f32 %v7677, 0.5
        %v7742 = vmul.f32 %v7678, 0.5
        %v7743 = vmul.f32 %v7679, 0.5
        %v7744 = vmul.f32 %v7680, 0.5
        %v7745 = vmul.f32 %v7681, 0.5
        %v7746 = vmul.f32 %v7682, 0.5
        %v7747 = vmul.f32 %v7683, 0.5
        %v7748 = vmul.f32 %v7684, 0.5
        %v7749 = vmul.f32 %v7685, 0.5
        %v7750 = vmul.f32 %v7052, %v7686
        %v7751 = vmul.f32 %v7101, %v7687
        %v7752 = vmul.f32 %v7150, %v7688
        %v7753 = vmul.f32 %v7199, %v7689
        %v7754 = vmul.f32 %v7054, %v7690
        %v7755 = vmul.f32 %v7103, %v7691
        %v7756 = vmul.f32 %v7152, %v7692
        %v7757 = vmul.f32 %v7201, %v7693
        %v7758 = vmul.f32 %v7057, %v7694
        %v7759 = vmul.f32 %v7106, %v7695
        %v7760 = vmul.f32 %v7155, %v7696
        %v7761 = vmul.f32 %v7204, %v7697
        %v7762 = vmul.f32 %v7059, %v7698
        %v7763 = vmul.f32 %v7108, %v7699
        %v7764 = vmul.f32 %v7157, %v7700
        %v7765 = vmul.f32 %v7206, %v7701
        %v7766 = vmul.f32 %v7062, %v7702
        %v7767 = vmul.f32 %v7111, %v7703
        %v7768 = vmul.f32 %v7160, %v7704
        %v7769 = vmul.f32 %v7209, %v7705
        %v7770 = vmul.f32 %v7064, %v7706
        %v7771 = vmul.f32 %v7113, %v7707
        %v7772 = vmul.f32 %v7162, %v7708
        %v7773 = vmul.f32 %v7211, %v7709
        %v7774 = vmul.f32 %v7067, %v7710
        %v7775 = vmul.f32 %v7116, %v7711
        %v7776 = vmul.f32 %v7165, %v7712
        %v7777 = vmul.f32 %v7214, %v7713
        %v7778 = vmul.f32 %v7069, %v7714
        %v7779 = vmul.f32 %v7118, %v7715
        %v7780 = vmul.f32 %v7167, %v7716
        %v7781 = vmul.f32 %v7216, %v7717
        %v7782 = vmul.f32 %v7072, %v7718
        %v7783 = vmul.f32 %v7121, %v7719
        %v7784 = vmul.f32 %v7170, %v7720
        %v7785 = vmul.f32 %v7219, %v7721
        %v7786 = vmul.f32 %v7074, %v7722
        %v7787 = vmul.f32 %v7123, %v7723
        %v7788 = vmul.f32 %v7172, %v7724
        %v7789 = vmul.f32 %v7221, %v7725
        %v7790 = vmul.f32 %v7077, %v7726
        %v7791 = vmul.f32 %v7126, %v7727
        %v7792 = vmul.f32 %v7175, %v7728
        %v7793 = vmul.f32 %v7224, %v7729
        %v7794 = vmul.f32 %v7079, %v7730
        %v7795 = vmul.f32 %v7128, %v7731
        %v7796 = vmul.f32 %v7177, %v7732
        %v7797 = vmul.f32 %v7226, %v7733
        %v7798 = vmul.f32 %v7082, %v7734
        %v7799 = vmul.f32 %v7131, %v7735
        %v7800 = vmul.f32 %v7180, %v7736
        %v7801 = vmul.f32 %v7229, %v7737
        %v7802 = vmul.f32 %v7084, %v7738
        %v7803 = vmul.f32 %v7133, %v7739
        %v7804 = vmul.f32 %v7182, %v7740
        %v7805 = vmul.f32 %v7231, %v7741
        %v7806 = vmul.f32 %v7087, %v7742
        %v7807 = vmul.f32 %v7136, %v7743
        %v7808 = vmul.f32 %v7185, %v7744
        %v7809 = vmul.f32 %v7234, %v7745
        %v7810 = vmul.f32 %v7089, %v7746
        %v7811 = vmul.f32 %v7138, %v7747
        %v7812 = vmul.f32 %v7187, %v7748
        %v7813 = vmul.f32 %v7236, %v7749
        %v7814 = vld [vmem:[%s7] sm:$0xf]
        %v7815 = vld [vmem:[%s7 + $0x4] sm:$0xf]
        %v7816 = vld [vmem:[%s7 + $0x8] sm:$0xf]
        %v7817 = vld [vmem:[%s7 + $0xc] sm:$0xf]
        %v7818 = vld [vmem:[%s7 + $0x10] sm:$0xf]
        %v7819 = vld [vmem:[%s7 + $0x14] sm:$0xf]
        %v7820 = vld [vmem:[%s7 + $0x18] sm:$0xf]
        %v7821 = vld [vmem:[%s7 + $0x1c] sm:$0xf]
        %v7822 = vpack.c.bf16 %v7754, %v7750
        %v7823 = vpack.c.bf16 %v7755, %v7751
        %v7824 = vpack.c.bf16 %v7756, %v7752
        %v7825 = vpack.c.bf16 %v7757, %v7753
        %v7826 = vpack.c.bf16 %v7762, %v7758
        %v7827 = vpack.c.bf16 %v7763, %v7759
        %v7828 = vpack.c.bf16 %v7764, %v7760
        %v7829 = vpack.c.bf16 %v7765, %v7761
        %v7830 = vpack.c.bf16 %v7770, %v7766
        %v7831 = vpack.c.bf16 %v7771, %v7767
        %v7832 = vpack.c.bf16 %v7772, %v7768
        %v7833 = vpack.c.bf16 %v7773, %v7769
        %v7834 = vpack.c.bf16 %v7778, %v7774
        %v7835 = vpack.c.bf16 %v7779, %v7775
        %v7836 = vpack.c.bf16 %v7780, %v7776
        %v7837 = vpack.c.bf16 %v7781, %v7777
        %v7838 = vpack.c.bf16 %v7786, %v7782
        %v7839 = vpack.c.bf16 %v7787, %v7783
        %v7840 = vpack.c.bf16 %v7788, %v7784
        %v7841 = vpack.c.bf16 %v7789, %v7785
        %v7842 = vpack.c.bf16 %v7794, %v7790
        %v7843 = vpack.c.bf16 %v7795, %v7791
        %v7844 = vpack.c.bf16 %v7796, %v7792
        %v7845 = vpack.c.bf16 %v7797, %v7793
        %v7846 = vpack.c.bf16 %v7802, %v7798
        %v7847 = vpack.c.bf16 %v7803, %v7799
        %v7848 = vpack.c.bf16 %v7804, %v7800
        %v7849 = vpack.c.bf16 %v7805, %v7801
        %v7850 = vpack.c.bf16 %v7810, %v7806
        %v7851 = vpack.c.bf16 %v7811, %v7807
        %v7852 = vpack.c.bf16 %v7812, %v7808
        %v7853 = vpack.c.bf16 %v7813, %v7809
        %v7862 = vunpack.c.l.b16 %v7814
        %v7863 = vunpack.c.l.b16 %v7815
        %v7864 = vunpack.c.l.b16 %v7816
        %v7865 = vunpack.c.l.b16 %v7817
        %v7866 = vunpack.c.l.b16 %v7818
        %v7867 = vunpack.c.l.b16 %v7819
        %v7868 = vunpack.c.l.b16 %v7820
        %v7869 = vunpack.c.l.b16 %v7821
        %v7870 = vpack.c.b16 %v7863, %v7862
        %v7871 = vpack.c.b16 %v7865, %v7864
        %v7872 = vpack.c.b16 %v7867, %v7866
        %v7873 = vpack.c.b16 %v7869, %v7868
        %7878 = vmatpush.bf16.msra.mxu0 %v7850
        %7879 = vmatpush.bf16.msra.mxu0 %v7846
        %7880 = vmatpush.bf16.msra.mxu0 %v7842
        %7881 = vmatpush.bf16.msra.mxu0 %v7838
        %7882 = vmatpush.bf16.msra.mxu0 %v7834
        %7883 = vmatpush.bf16.msra.mxu0 %v7830
        %7884 = vmatpush.bf16.msra.mxu0 %v7826
        %7885 = vmatpush.bf16.msra.mxu0 %v7822
        %7886 = vmatmul.bf16.gmra.mxu0 %v7870
        %v7887 = vpop.f32.mrf.mxu0
        %v7888 = vadd.f32 0.0, %v7887
        %v7889 = vpop.f32.mrf.mxu0
        %v7890 = vadd.f32 0.0, %v7889
        %7891 = vmatmul.bf16.gmra.mxu0 %v7871
        %v7892 = vpop.f32.mrf.mxu0
        %v7893 = vadd.f32 0.0, %v7892
        %v7894 = vpop.f32.mrf.mxu0
        %v7895 = vadd.f32 0.0, %v7894
        %7896 = vmatmul.bf16.gmra.mxu0 %v7872
        %v7897 = vpop.f32.mrf.mxu0
        %v7898 = vadd.f32 0.0, %v7897
        %v7899 = vpop.f32.mrf.mxu0
        %v7900 = vadd.f32 0.0, %v7899
        %7901 = vmatmul.bf16.gmra.mxu0 %v7873
        %v7902 = vpop.f32.mrf.mxu0
        %v7903 = vadd.f32 0.0, %v7902
        %v7904 = vpop.f32.mrf.mxu0
        %v7905 = vadd.f32 0.0, %v7904
        %7906 = vdwg.mxu0
        %7907 = vmatpush.bf16.msra.mxu0 %v7851
        %7908 = vmatpush.bf16.msra.mxu0 %v7847
        %7909 = vmatpush.bf16.msra.mxu0 %v7843
        %7910 = vmatpush.bf16.msra.mxu0 %v7839
        %7911 = vmatpush.bf16.msra.mxu0 %v7835
        %7912 = vmatpush.bf16.msra.mxu0 %v7831
        %7913 = vmatpush.bf16.msra.mxu0 %v7827
        %7914 = vmatpush.bf16.msra.mxu0 %v7823
        %7915 = vmatmul.bf16.gmra.mxu0 %v7870
        %v7916 = vpop.f32.mrf.mxu0
        %v7917 = vadd.f32 0.0, %v7916
        %v7918 = vpop.f32.mrf.mxu0
        %v7919 = vadd.f32 0.0, %v7918
        %7920 = vmatmul.bf16.gmra.mxu0 %v7871
        %v7921 = vpop.f32.mrf.mxu0
        %v7922 = vadd.f32 0.0, %v7921
        %v7923 = vpop.f32.mrf.mxu0
        %v7924 = vadd.f32 0.0, %v7923
        %7925 = vmatmul.bf16.gmra.mxu0 %v7872
        %v7926 = vpop.f32.mrf.mxu0
        %v7927 = vadd.f32 0.0, %v7926
        %v7928 = vpop.f32.mrf.mxu0
        %v7929 = vadd.f32 0.0, %v7928
        %7930 = vmatmul.bf16.gmra.mxu0 %v7873
        %v7931 = vpop.f32.mrf.mxu0
        %v7932 = vadd.f32 0.0, %v7931
        %v7933 = vpop.f32.mrf.mxu0
        %v7934 = vadd.f32 0.0, %v7933
        %7935 = vdwg.mxu0
        %7936 = vmatpush.bf16.msra.mxu0 %v7852
        %7937 = vmatpush.bf16.msra.mxu0 %v7848
        %7938 = vmatpush.bf16.msra.mxu0 %v7844
        %7939 = vmatpush.bf16.msra.mxu0 %v7840
        %7940 = vmatpush.bf16.msra.mxu0 %v7836
        %7941 = vmatpush.bf16.msra.mxu0 %v7832
        %7942 = vmatpush.bf16.msra.mxu0 %v7828
        %7943 = vmatpush.bf16.msra.mxu0 %v7824
        %7944 = vmatmul.bf16.gmra.mxu0 %v7870
        %v7945 = vpop.f32.mrf.mxu0
        %v7946 = vadd.f32 0.0, %v7945
        %v7947 = vpop.f32.mrf.mxu0
        %v7948 = vadd.f32 0.0, %v7947
        %7949 = vmatmul.bf16.gmra.mxu0 %v7871
        %v7950 = vpop.f32.mrf.mxu0
        %v7951 = vadd.f32 0.0, %v7950
        %v7952 = vpop.f32.mrf.mxu0
        %v7953 = vadd.f32 0.0, %v7952
        %7954 = vmatmul.bf16.gmra.mxu0 %v7872
        %v7955 = vpop.f32.mrf.mxu0
        %v7956 = vadd.f32 0.0, %v7955
        %v7957 = vpop.f32.mrf.mxu0
        %v7958 = vadd.f32 0.0, %v7957
        %7959 = vmatmul.bf16.gmra.mxu0 %v7873
        %v7960 = vpop.f32.mrf.mxu0
        %v7961 = vadd.f32 0.0, %v7960
        %v7962 = vpop.f32.mrf.mxu0
        %v7963 = vadd.f32 0.0, %v7962
        %7964 = vdwg.mxu0
        %7965 = vmatpush.bf16.msra.mxu0 %v7853
        %7966 = vmatpush.bf16.msra.mxu0 %v7849
        %7967 = vmatpush.bf16.msra.mxu0 %v7845
        %7968 = vmatpush.bf16.msra.mxu0 %v7841
        %7969 = vmatpush.bf16.msra.mxu0 %v7837
        %7970 = vmatpush.bf16.msra.mxu0 %v7833
        %7971 = vmatpush.bf16.msra.mxu0 %v7829
        %7972 = vmatpush.bf16.msra.mxu0 %v7825
        %7973 = vmatmul.bf16.gmra.mxu0 %v7870
        %v7974 = vpop.f32.mrf.mxu0
        %v7975 = vadd.f32 0.0, %v7974
        %v7976 = vpop.f32.mrf.mxu0
        %v7977 = vadd.f32 0.0, %v7976
        %7978 = vmatmul.bf16.gmra.mxu0 %v7871
        %v7979 = vpop.f32.mrf.mxu0
        %v7980 = vadd.f32 0.0, %v7979
        %v7981 = vpop.f32.mrf.mxu0
        %v7982 = vadd.f32 0.0, %v7981
        %7983 = vmatmul.bf16.gmra.mxu0 %v7872
        %v7984 = vpop.f32.mrf.mxu0
        %v7985 = vadd.f32 0.0, %v7984
        %v7986 = vpop.f32.mrf.mxu0
        %v7987 = vadd.f32 0.0, %v7986
        %7988 = vmatmul.bf16.gmra.mxu0 %v7873
        %v7989 = vpop.f32.mrf.mxu0
        %v7990 = vadd.f32 0.0, %v7989
        %v7991 = vpop.f32.mrf.mxu0
        %v7992 = vadd.f32 0.0, %v7991
        %7993 = vdwg.mxu0
        %v7994 = vadd.f32 %v6447, %v7888
        %v7995 = vadd.f32 %v6448, %v7917
        %v7996 = vadd.f32 %v6449, %v7946
        %v7997 = vadd.f32 %v6450, %v7975
        %v7998 = vadd.f32 %v6451, %v7890
        %v7999 = vadd.f32 %v6452, %v7919
        %v8000 = vadd.f32 %v6453, %v7948
        %v8001 = vadd.f32 %v6454, %v7977
        %v8002 = vadd.f32 %v6455, %v7893
        %v8003 = vadd.f32 %v6456, %v7922
        %v8004 = vadd.f32 %v6457, %v7951
        %v8005 = vadd.f32 %v6458, %v7980
        %v8006 = vadd.f32 %v6459, %v7895
        %v8007 = vadd.f32 %v6460, %v7924
        %v8008 = vadd.f32 %v6461, %v7953
        %v8009 = vadd.f32 %v6462, %v7982
        %v8010 = vadd.f32 %v6463, %v7898
        %v8011 = vadd.f32 %v6464, %v7927
        %v8012 = vadd.f32 %v6465, %v7956
        %v8013 = vadd.f32 %v6466, %v7985
        %v8014 = vadd.f32 %v6467, %v7900
        %v8015 = vadd.f32 %v6468, %v7929
        %v8016 = vadd.f32 %v6469, %v7958
        %v8017 = vadd.f32 %v6470, %v7987
        %v8018 = vadd.f32 %v6471, %v7903
        %v8019 = vadd.f32 %v6472, %v7932
        %v8020 = vadd.f32 %v6473, %v7961
        %v8021 = vadd.f32 %v6474, %v7990
        %v8022 = vadd.f32 %v6475, %v7905
        %v8023 = vadd.f32 %v6476, %v7934
        %v8024 = vadd.f32 %v6477, %v7963
        %v8025 = vadd.f32 %v6478, %v7992
        %8026 = vset.pattern.permute.xlu0 5
        %8027 = vperm.xlu0 %8026, %v530
        %v8028 = vpop.permute.xlu0 %8027
        %8030 = vset.pattern.permute.xlu0 5
        %8031 = vperm.xlu0 %8030, %v531
        %v8032 = vpop.permute.xlu0 %8031
        %8034 = vset.pattern.permute.xlu0 5
        %8035 = vperm.xlu0 %8034, %v532
        %v8036 = vpop.permute.xlu0 %8035
        %8038 = vset.pattern.permute.xlu0 5
        %8039 = vperm.xlu0 %8038, %v533
        %v8040 = vpop.permute.xlu0 %8039
        %8042 = vset.pattern.permute.xlu0 5
        %8043 = vperm.xlu0 %8042, %v534
        %v8044 = vpop.permute.xlu0 %8043
        %8046 = vset.pattern.permute.xlu0 5
        %8047 = vperm.xlu0 %8046, %v535
        %v8048 = vpop.permute.xlu0 %8047
        %8050 = vset.pattern.permute.xlu0 5
        %8051 = vperm.xlu0 %8050, %v536
        %v8052 = vpop.permute.xlu0 %8051
        %8054 = vset.pattern.permute.xlu0 5
        %8055 = vperm.xlu0 %8054, %v537
        %v8056 = vpop.permute.xlu0 %8055
        %v8058 = vadd.f32 %v7994, %v8028
        %v8059 = vadd.f32 %v7995, %v8028
        %v8060 = vadd.f32 %v7996, %v8028
        %v8061 = vadd.f32 %v7997, %v8028
        %v8062 = vadd.f32 %v7998, %v8032
        %v8063 = vadd.f32 %v7999, %v8032
        %v8064 = vadd.f32 %v8000, %v8032
        %v8065 = vadd.f32 %v8001, %v8032
        %v8066 = vadd.f32 %v8002, %v8036
        %v8067 = vadd.f32 %v8003, %v8036
        %v8068 = vadd.f32 %v8004, %v8036
        %v8069 = vadd.f32 %v8005, %v8036
        %v8070 = vadd.f32 %v8006, %v8040
        %v8071 = vadd.f32 %v8007, %v8040
        %v8072 = vadd.f32 %v8008, %v8040
        %v8073 = vadd.f32 %v8009, %v8040
        %v8074 = vadd.f32 %v8010, %v8044
        %v8075 = vadd.f32 %v8011, %v8044
        %v8076 = vadd.f32 %v8012, %v8044
        %v8077 = vadd.f32 %v8013, %v8044
        %v8078 = vadd.f32 %v8014, %v8048
        %v8079 = vadd.f32 %v8015, %v8048
        %v8080 = vadd.f32 %v8016, %v8048
        %v8081 = vadd.f32 %v8017, %v8048
        %v8082 = vadd.f32 %v8018, %v8052
        %v8083 = vadd.f32 %v8019, %v8052
        %v8084 = vadd.f32 %v8020, %v8052
        %v8085 = vadd.f32 %v8021, %v8052
        %v8086 = vadd.f32 %v8022, %v8056
        %v8087 = vadd.f32 %v8023, %v8056
        %v8088 = vadd.f32 %v8024, %v8056
        %v8089 = vadd.f32 %v8025, %v8056
        %8090 = vset.pattern.permute.xlu0 11
        %8091 = vperm.xlu0 %8090, %v530
        %v8092 = vpop.permute.xlu0 %8091
        %8094 = vset.pattern.permute.xlu0 11
        %8095 = vperm.xlu0 %8094, %v531
        %v8096 = vpop.permute.xlu0 %8095
        %8098 = vset.pattern.permute.xlu0 11
        %8099 = vperm.xlu0 %8098, %v532
        %v8100 = vpop.permute.xlu0 %8099
        %8102 = vset.pattern.permute.xlu0 11
        %8103 = vperm.xlu0 %8102, %v533
        %v8104 = vpop.permute.xlu0 %8103
        %8106 = vset.pattern.permute.xlu0 11
        %8107 = vperm.xlu0 %8106, %v534
        %v8108 = vpop.permute.xlu0 %8107
        %8110 = vset.pattern.permute.xlu0 11
        %8111 = vperm.xlu0 %8110, %v535
        %v8112 = vpop.permute.xlu0 %8111
        %8114 = vset.pattern.permute.xlu0 11
        %8115 = vperm.xlu0 %8114, %v536
        %v8116 = vpop.permute.xlu0 %8115
        %8118 = vset.pattern.permute.xlu0 11
        %8119 = vperm.xlu0 %8118, %v537
        %v8120 = vpop.permute.xlu0 %8119
        %v8122 = vmul.f32 %v8092, %v8058
        %v8123 = vmul.f32 %v8092, %v8059
        %v8124 = vmul.f32 %v8092, %v8060
        %v8125 = vmul.f32 %v8092, %v8061
        %v8126 = vmul.f32 %v8096, %v8062
        %v8127 = vmul.f32 %v8096, %v8063
        %v8128 = vmul.f32 %v8096, %v8064
        %v8129 = vmul.f32 %v8096, %v8065
        %v8130 = vmul.f32 %v8100, %v8066
        %v8131 = vmul.f32 %v8100, %v8067
        %v8132 = vmul.f32 %v8100, %v8068
        %v8133 = vmul.f32 %v8100, %v8069
        %v8134 = vmul.f32 %v8104, %v8070
        %v8135 = vmul.f32 %v8104, %v8071
        %v8136 = vmul.f32 %v8104, %v8072
        %v8137 = vmul.f32 %v8104, %v8073
        %v8138 = vmul.f32 %v8108, %v8074
        %v8139 = vmul.f32 %v8108, %v8075
        %v8140 = vmul.f32 %v8108, %v8076
        %v8141 = vmul.f32 %v8108, %v8077
        %v8142 = vmul.f32 %v8112, %v8078
        %v8143 = vmul.f32 %v8112, %v8079
        %v8144 = vmul.f32 %v8112, %v8080
        %v8145 = vmul.f32 %v8112, %v8081
        %v8146 = vmul.f32 %v8116, %v8082
        %v8147 = vmul.f32 %v8116, %v8083
        %v8148 = vmul.f32 %v8116, %v8084
        %v8149 = vmul.f32 %v8116, %v8085
        %v8150 = vmul.f32 %v8120, %v8086
        %v8151 = vmul.f32 %v8120, %v8087
        %v8152 = vmul.f32 %v8120, %v8088
        %v8153 = vmul.f32 %v8120, %v8089
        %v8154 = vadd.f32 %v8122, %v8126
        %v8155 = vadd.f32 %v8154, %v8130
        %v8156 = vadd.f32 %v8155, %v8134
        %v8157 = vadd.f32 %v8156, %v8138
        %v8158 = vadd.f32 %v8157, %v8142
        %v8159 = vadd.f32 %v8158, %v8146
        %v8160 = vadd.f32 %v8159, %v8150
        %v8161 = vrot.slane %v8160, 4
        %v8162 = vadd.f32 %v8160, %v8161
        %v8163 = vrot.slane %v8162, 2
        %v8164 = vadd.f32 %v8162, %v8163
        %v8165 = vrot.slane %v8164, 1
        %v8166 = vadd.f32 %v8164, %v8165
        %v8167 = vadd.f32 %v8123, %v8127
        %v8168 = vadd.f32 %v8167, %v8131
        %v8169 = vadd.f32 %v8168, %v8135
        %v8170 = vadd.f32 %v8169, %v8139
        %v8171 = vadd.f32 %v8170, %v8143
        %v8172 = vadd.f32 %v8171, %v8147
        %v8173 = vadd.f32 %v8172, %v8151
        %v8174 = vrot.slane %v8173, 4
        %v8175 = vadd.f32 %v8173, %v8174
        %v8176 = vrot.slane %v8175, 2
        %v8177 = vadd.f32 %v8175, %v8176
        %v8178 = vrot.slane %v8177, 1
        %v8179 = vadd.f32 %v8177, %v8178
        %v8180 = vadd.f32 %v8124, %v8128
        %v8181 = vadd.f32 %v8180, %v8132
        %v8182 = vadd.f32 %v8181, %v8136
        %v8183 = vadd.f32 %v8182, %v8140
        %v8184 = vadd.f32 %v8183, %v8144
        %v8185 = vadd.f32 %v8184, %v8148
        %v8186 = vadd.f32 %v8185, %v8152
        %v8187 = vrot.slane %v8186, 4
        %v8188 = vadd.f32 %v8186, %v8187
        %v8189 = vrot.slane %v8188, 2
        %v8190 = vadd.f32 %v8188, %v8189
        %v8191 = vrot.slane %v8190, 1
        %v8192 = vadd.f32 %v8190, %v8191
        %v8193 = vadd.f32 %v8125, %v8129
        %v8194 = vadd.f32 %v8193, %v8133
        %v8195 = vadd.f32 %v8194, %v8137
        %v8196 = vadd.f32 %v8195, %v8141
        %v8197 = vadd.f32 %v8196, %v8145
        %v8198 = vadd.f32 %v8197, %v8149
        %v8199 = vadd.f32 %v8198, %v8153
        %v8200 = vrot.slane %v8199, 4
        %v8201 = vadd.f32 %v8199, %v8200
        %v8202 = vrot.slane %v8201, 2
        %v8203 = vadd.f32 %v8201, %v8202
        %v8204 = vrot.slane %v8203, 1
        %v8205 = vadd.f32 %v8203, %v8204
        %8206 = vset.pattern.permute.xlu0 7
        %8207 = vperm.xlu0 %8206, %v530
        %v8208 = vpop.permute.xlu0 %8207
        %v8210 = vadd.f32 %v8166, %v8208
        %v8211 = vadd.f32 %v8179, %v8208
        %v8212 = vadd.f32 %v8192, %v8208
        %v8213 = vadd.f32 %v8205, %v8208
        %v8218 = vrot.slane %v8211, 7
        %v8219 = vrot.slane %v8212, 6
        %v8220 = vrot.slane %v8213, 5
        %vm8221 = vcmask 1040384
        %v8222 = vsel %vm8221, %v8210, %v8218
        %vm8223 = vcmask 1042434
        %v8224 = vsel %vm8223, %v8219, %v8220
        %vm8225 = vcmask 1041408
        %v8226 = vsel %vm8225, %v8222, %v8224
        %v8228 = vlaneseq
        %vm8229 = vcmp.ge.s32.totalorder %v8228, 0
        %vm8230 = vcmp.lt.s32.totalorder %v8228, 512
        %vm8231 = vmand %vm8229, %vm8230
        %8232 = vst.msk [vmem:[%s527] sm:$0xf] %vm8231, %v8226
        %s8233 = smul.u32 4, %s24
        %p8234 = scmp.lt.s32.totalorder %s23, 1
        %s8235 = scalar_select %p8234, %s23, 1
        %p8236 = scmp.lt.s32.totalorder %s8233, 7
        %s8237 = scalar_select %p8236, %s8233, 7
        %s8238 = smul.addr %s8235, 8
        %s8239 = sadd.s32 %s8237, %s8238
        %s8240 = scalar_lea.vmem %s8, %s8239
        // Predicated region
        $region99: #{model_wrapper_forward.3} parent=89 // pred_check
          %p8241 = pneg %p243
        $region100: #{model_wrapper_forward.3} parent=89 // pred_check_branch
          %8243 = sbr.rel (%p8241) target = $region102
        $region101: #{model_wrapper_forward.3} parent=89 // pred_region
          %s8244 = smul.u32 4, %s24
        $region102: #{model_wrapper_forward.3} parent=89 // pred_fallthru
          _
      $region90: #{model_wrapper_forward.3} parent=5 // pred_fallthru
        _
      %p8245 = scmp.le.s32.totalorder 2, %s14
      // Predicated region
      $region103: #{model_wrapper_forward.3} parent=5 // pred_check
        %p8246 = pneg %p8245
      $region104: #{model_wrapper_forward.3} parent=5 // pred_check_branch
        %8248 = sbr.rel (%p8246) target = $region106
      $region105: #{model_wrapper_forward.3} parent=5 // pred_region
        %s8249 = ssub.s32 %s14, 2
        // Predicated region
        $region107: #{model_wrapper_forward.3} parent=105 // pred_check
          %p8250 = pneg %p249
        $region108: #{model_wrapper_forward.3} parent=105 // pred_check_branch
          %8252 = sbr.rel (%p8250) target = $region110
        $region109: #{model_wrapper_forward.3} parent=105 // pred_region
          %s8253 = smul.u32 4, %s26
          %p8254 = scmp.lt.s32.totalorder %s25, 1
          %s8255 = scalar_select %p8254, %s25, 1
          %p8256 = scmp.lt.s32.totalorder %s8253, 7
          %s8257 = scalar_select %p8256, %s8253, 7
          %s8258 = smul.addr %s8255, 8
          %s8259 = sadd.s32 %s8257, %s8258
          %s8260 = scalar_lea.vmem %s8, %s8259
        $region110: #{model_wrapper_forward.3} parent=105 // pred_fallthru
          _
      $region106: #{model_wrapper_forward.3} parent=5 // pred_fallthru
        _
    $region6: #{model_wrapper_forward.3} parent=1 // loop_footer
      %s18 = sadd.s32 1, %s14
    $region7: #{model_wrapper_forward.3} parent=1 // loop_footer_branch
      %13 = sbr.rel target = $region3
    $region8: #{model_wrapper_forward.3} parent=1 // loop_exit
      _

</llo_original>
